<compile_context>
chip_gen: v5e
topology: v5e:2x2
jax: 0.10.0
libtpu: 0.0.40
codegen_flags: <defaults>
</compile_context>

<pallas_src>
import math
import numpy as np

import jax
import jax.numpy as jnp
from jax import lax
from jax.experimental import pallas as pl
from jax.experimental.pallas import tpu as pltpu


ZIGZAG = {
    4: [(0, 0), (0, 1), (1, 0), (2, 0), (1, 1), (0, 2), (0, 3), (1, 2),
        (2, 1), (3, 0), (3, 1), (2, 2), (1, 3), (2, 3), (3, 2), (3, 3)],
    8: [(0, 0), (0, 1), (1, 0), (2, 0), (1, 1), (0, 2), (0, 3), (1, 2),
        (2, 1), (3, 0), (4, 0), (3, 1), (2, 2), (1, 3), (0, 4), (0, 5),
        (1, 4), (2, 3), (3, 2), (4, 1), (5, 0), (6, 0), (5, 1), (4, 2),
        (3, 3), (2, 4), (1, 5), (0, 6), (0, 7), (1, 6), (2, 5), (3, 4),
        (4, 3), (5, 2), (6, 1), (7, 0), (7, 1), (6, 2), (5, 3), (4, 4),
        (3, 5), (2, 6), (1, 7), (2, 7), (3, 6), (4, 5), (5, 4), (6, 3),
        (7, 2), (7, 3), (6, 4), (5, 5), (4, 6), (3, 7), (4, 7), (5, 6),
        (6, 5), (7, 4), (7, 5), (6, 6), (5, 7), (6, 7), (7, 6), (7, 7)],
}


def make_Q(bs):
    Q = np.zeros((bs, bs), dtype=np.float32)
    Q[0, :] = math.sqrt(1.0 / float(bs))
    for i in range(1, bs):
        for j in range(bs):
            Q[i, j] = math.sqrt(2.0 / float(bs)) * math.cos(
                float((2 * j + 1) * math.pi * i) / float(2.0 * bs))
    return Q


def build_constants(block_size, H, W):
    """Small host-side constants (no per-frequency (H,H)/(W,W) streaming)."""
    bs = block_size
    Q = make_Q(bs)
    loc = ZIGZAG[bs]
    a, nb = H // bs, W // bs
    tst = bs * bs

    # Grouped 1-D DCT factors (rows grouped by frequency, then block index):
    #   QL2[m*a + i, i*bs + u] = Q[m, u]
    #   QR2[n*nb + j, j*bs + v] = Q[n, v]
    QL2 = np.zeros((H, H), np.float32)
    for m in range(bs):
        for i in range(a):
            QL2[m * a + i, i * bs:(i + 1) * bs] = Q[m]
    QR2 = np.zeros((W, W), np.float32)
    for n in range(bs):
        for j in range(nb):
            QR2[n * nb + j, j * bs:(j + 1) * bs] = Q[n]

    # k-independent 0/1 block->pixel expansion matrix (stays VMEM resident):
    #   E[i*nb + j, h*W + w] = 1  iff  (h//bs, w//bs) == (i, j)
    EL = np.kron(np.eye(a, dtype=np.float32), np.ones((1, bs), np.float32))
    ER = np.kron(np.eye(nb, dtype=np.float32), np.ones((1, bs), np.float32))
    E = np.kron(EL, ER)                                        # (a*nb, H*W)

    # Per-frequency basis image, tiled over all blocks, flattened lane-dense:
    #   basis[k, (i*bs+u)*W + j*bs+v] = Q[m_k, u] * Q[n_k, v]
    basis = np.zeros((tst, H * W), np.float32)
    for k, (m, n) in enumerate(loc):
        basis[k] = np.tile(np.outer(Q[m], Q[n]), (a, nb)).reshape(-1)

    # zig-zag permutation of the (m, n) frequency grid
    perm = np.array([m * bs + n for (m, n) in loc], dtype=np.int32)
    return QL2, QR2.T.copy(), E, basis, perm


def _choose_kb(tst, BC, NBLK, HW, budget_bytes=6 * 1024 * 1024):
    """Frequencies per grid step for pass 2.

    Candidates are divisors of tst that satisfy Mosaic's (8, 128) block rule
    on the (KB, HW) basis block (KB % 8 == 0 or KB == tst).  Pick the largest
    whose double-buffered per-step VMEM footprint fits the budget, so small
    problems collapse to very few grid steps while large ones still pipeline.
    """
    cands = [d for d in range(1, tst + 1)
             if tst % d == 0 and (d % 8 == 0 or d == tst)]

    def footprint(kb):
        return 4 * (2 * kb * BC * NBLK      # tz blocks (double buffered)
                    + 2 * kb * HW           # basis blocks
                    + 2 * kb * BC * HW      # output blocks
                    + 2 * NBLK * HW)        # E (index-invariant, resident)

    fitting = [d for d in cands if footprint(d) <= budget_bytes]
    return max(fitting) if fitting else min(cands)


# ----------------------------- pass 1 kernel --------------------------------
def _ycbcr_dct_kernel(x_ref, ql_ref, qrt_ref, t_ref):
    # x_ref:   (B, 3, H, W)  RGB input in [0, 1]
    # ql_ref:  (H, H)        grouped left DCT factor  QL2
    # qrt_ref: (W, W)        grouped right DCT factor QR2^T
    # t_ref:   (B*3, H, W)   blockwise DCT coeffs, t[bc, m*a + i, n*nb + j]
    ql = ql_ref[...]
    qrt = qrt_ref[...]

    # RGB -> YCbCr, computed exactly once (hoisted out of the frequency loop).
    x = x_ref[...] * 255.0
    r = x[:, 0, :, :]
    g = x[:, 1, :, :]
    b = x[:, 2, :, :]
    chans = (
        (r * 0.299 + g * 0.587 + b * 0.114) / 255.0,
        (r * (-0.168736) - g * 0.331264 + b * 0.5 + 128.0) / 255.0,
        (r * 0.5 - g * 0.418688 - b * 0.081312 + 128.0) / 255.0,
    )

    bn, hh, ww = r.shape
    for c in range(3):
        yc = chans[c]                                          # (B, H, W)
        # Right factor: fold (B, H) into the matmul M dimension (one 2-D dot).
        z = jnp.dot(yc.reshape(bn * hh, ww), qrt,
                    preferred_element_type=jnp.float32,
                    precision=lax.Precision.HIGHEST)           # (B*H, W)
        z = z.reshape(bn, hh, ww)
        # Left factor: tiny static unroll over batch (runs once per call).
        for bi in range(bn):
            t_ref[bi * 3 + c] = jnp.dot(
                ql, z[bi],
                preferred_element_type=jnp.float32,
                precision=lax.Precision.HIGHEST)               # (H, W)


# ----------------------------- pass 2 kernel --------------------------------
def _expand_kernel(t_ref, e_ref, basis_ref, o_ref):
    # t_ref:     (KB, B*C, nblk)  zig-zag DCT coefficients for KB frequencies
    #                             (gathered purely by the BlockSpec index_map)
    # e_ref:     (nblk, H*W)      constant 0/1 block->pixel expansion matrix
    # basis_ref: (KB, H*W)        tiled outer(Q[m], Q[n]) basis images
    # o_ref:     (KB, B*C, H*W)   lane-dense output slab
    e = e_ref[...]
    kb = t_ref.shape[0]
    for kk in range(kb):                                       # static unroll
        coeff = t_ref[kk]                                      # (B*C, nblk)
        spread = jnp.dot(coeff, e,
                         preferred_element_type=jnp.float32)   # (B*C, H*W)
        o_ref[kk] = spread * basis_ref[kk]


# ------------------------------- wrapper -------------------------------------
def sampled_dct2(x, block_size=8):
    B, C, H, W = x.shape
    assert C == 3 and H % block_size == 0 and W % block_size == 0
    bs = block_size
    tst = bs * bs
    a, nb = H // bs, W // bs
    BC, HW, NBLK = B * C, H * W, a * nb

    QL2_np, QR2T_np, E_np, basis_np, perm = build_constants(bs, H, W)
    QL2, QR2T = jnp.asarray(QL2_np), jnp.asarray(QR2T_np)
    E, basis = jnp.asarray(E_np), jnp.asarray(basis_np)

    # ---- pass 1: YCbCr + blockwise DCT (one shot, ~1/tst of total work) ----
    t3 = pl.pallas_call(
        _ycbcr_dct_kernel,
        out_shape=jax.ShapeDtypeStruct((BC, H, W), jnp.float32),
    )(x, QL2, QR2T)

    # Tiny wrapper-side layout plumbing on the (B*C, H, W) intermediate:
    # (bc, m*a+i, n*nb+j) -> zig-zag ordered (tst, bc, i*nb+j)
    tz = t3.reshape(BC, bs, a, bs, nb).transpose(1, 3, 0, 2, 4)
    tz = tz.reshape(tst, BC, NBLK)[perm]

    # ---- pass 2: per-frequency rank-1 expansion, KB frequencies per step ----
    KB = _choose_kb(tst, BC, NBLK, HW)
    out_flat = pl.pallas_call(
        _expand_kernel,
        out_shape=jax.ShapeDtypeStruct((tst, BC, HW), jnp.float32),
        grid_spec=pltpu.PrefetchScalarGridSpec(
            num_scalar_prefetch=0,
            grid=(tst // KB,),
            in_specs=[
                pl.BlockSpec((KB, BC, NBLK), lambda s: (s, 0, 0)),
                pl.BlockSpec((NBLK, HW), lambda s: (0, 0)),      # resident
                pl.BlockSpec((KB, HW), lambda s: (s, 0)),
            ],
            out_specs=pl.BlockSpec((KB, BC, HW), lambda s: (s, 0, 0)),
        ),
        compiler_params=pltpu.CompilerParams(
            dimension_semantics=("parallel",)),
    )(tz, E, basis)

    return out_flat.reshape(tst, B, C, H, W)


# ------------------------------ reference ------------------------------------
def _reference_np(x_np, block_size):
    """Direct numpy transcription of the PyTorch forward (block loops)."""
    B, C, H, W = x_np.shape
    bs = block_size
    Q = make_Q(bs)
    loc = ZIGZAG[bs]
    tst = bs * bs

    x255 = x_np.astype(np.float32) * 255.0
    y = np.zeros_like(x255)
    y[:, 0] = x255[:, 0] * 0.299 + x255[:, 1] * 0.587 + x255[:, 2] * 0.114
    y[:, 1] = x255[:, 0] * (-0.168736) - x255[:, 1] * 0.331264 + x255[:, 2] * 0.5 + 128.0
    y[:, 2] = x255[:, 0] * 0.5 - x255[:, 1] * 0.418688 - x255[:, 2] * 0.081312 + 128.0
    y = y / 255.0

    bases = np.zeros((bs, bs, bs, bs), dtype=np.float32)
    for m in range(bs):
        for n in range(bs):
            bases[m, n] = np.outer(Q[m], Q[n])

    out = np.zeros((tst, B, C, H, W), dtype=np.float32)
    a, b = H // bs, W // bs
    for i in range(a):
        for j in range(b):
            blk = y[:, :, i * bs:(i + 1) * bs, j * bs:(j + 1) * bs]
            dct = np.einsum('mh,bchw,nw->bcmn', Q, blk, Q)
            for k, (m, n) in enumerate(loc):
                out[k, :, :, i * bs:(i + 1) * bs, j * bs:(j + 1) * bs] = \
                    np.einsum('bc,uv->bcuv', dct[:, :, m, n], bases[m, n])
    return out


if __name__ == "__main__":
    block_size = 8
    B, C, H, W = 2, 3, 16, 16
    key = jax.random.PRNGKey(0)
    x = jax.random.uniform(key, (B, C, H, W), dtype=jnp.float32)

    fn = jax.jit(lambda xx: sampled_dct2(xx, block_size=block_size))
    out = jax.block_until_ready(fn(x))

    ref = _reference_np(np.asarray(x), block_size)
    np.testing.assert_allclose(np.asarray(out), ref, rtol=5e-3, atol=5e-3)

    print("KERNEL_OK")
</pallas_src>

<mosaic_0001>
module attributes {stable_mosaic.version = 11 : i64} {
  func.func @_ycbcr_dct_kernel(%arg0: memref<2x3x16x16xf32, #tpu.memory_space<vmem>>, %arg1: memref<16x16xf32, #tpu.memory_space<vmem>>, %arg2: memref<16x16xf32, #tpu.memory_space<vmem>>, %arg3: memref<6x16x16xf32, #tpu.memory_space<vmem>>) attributes {dimension_semantics = [], scalar_prefetch = 0 : i64, scratch_operands = 0 : i64, tpu.core_type = #tpu.core_type<tc>} {
    %c0 = arith.constant 0 : index
    %c0_0 = arith.constant 0 : index
    %0 = vector.load %arg1[%c0, %c0_0] : memref<16x16xf32, #tpu.memory_space<vmem>>, vector<16x16xf32>
    %c0_1 = arith.constant 0 : index
    %c0_2 = arith.constant 0 : index
    %1 = vector.load %arg2[%c0_1, %c0_2] : memref<16x16xf32, #tpu.memory_space<vmem>>, vector<16x16xf32>
    %c0_3 = arith.constant 0 : index
    %c0_4 = arith.constant 0 : index
    %c0_5 = arith.constant 0 : index
    %c0_6 = arith.constant 0 : index
    %2 = vector.load %arg0[%c0_3, %c0_4, %c0_5, %c0_6] : memref<2x3x16x16xf32, #tpu.memory_space<vmem>>, vector<2x3x16x16xf32>
    %cst = arith.constant 2.550000e+02 : f32
    %3 = vector.broadcast %cst : f32 to vector<2x3x16x16xf32>
    %4 = arith.mulf %2, %3 : vector<2x3x16x16xf32>
    %5 = vector.extract_strided_slice %4 {offsets = [0, 0, 0, 0], sizes = [2, 1, 16, 16], strides = [1, 1, 1, 1]} : vector<2x3x16x16xf32> to vector<2x1x16x16xf32>
    %6 = vector.shape_cast %5 : vector<2x1x16x16xf32> to vector<2x16x16xf32>
    %7 = vector.extract_strided_slice %4 {offsets = [0, 1, 0, 0], sizes = [2, 1, 16, 16], strides = [1, 1, 1, 1]} : vector<2x3x16x16xf32> to vector<2x1x16x16xf32>
    %8 = vector.shape_cast %7 : vector<2x1x16x16xf32> to vector<2x16x16xf32>
    %9 = vector.extract_strided_slice %4 {offsets = [0, 2, 0, 0], sizes = [2, 1, 16, 16], strides = [1, 1, 1, 1]} : vector<2x3x16x16xf32> to vector<2x1x16x16xf32>
    %10 = vector.shape_cast %9 : vector<2x1x16x16xf32> to vector<2x16x16xf32>
    %cst_7 = arith.constant 2.990000e-01 : f32
    %11 = vector.broadcast %cst_7 : f32 to vector<2x16x16xf32>
    %12 = arith.mulf %6, %11 : vector<2x16x16xf32>
    %cst_8 = arith.constant 5.870000e-01 : f32
    %13 = vector.broadcast %cst_8 : f32 to vector<2x16x16xf32>
    %14 = arith.mulf %8, %13 : vector<2x16x16xf32>
    %15 = arith.addf %12, %14 : vector<2x16x16xf32>
    %cst_9 = arith.constant 1.140000e-01 : f32
    %16 = vector.broadcast %cst_9 : f32 to vector<2x16x16xf32>
    %17 = arith.mulf %10, %16 : vector<2x16x16xf32>
    %18 = arith.addf %15, %17 : vector<2x16x16xf32>
    %cst_10 = arith.constant 2.550000e+02 : f32
    %19 = vector.broadcast %cst_10 : f32 to vector<2x16x16xf32>
    %20 = arith.divf %18, %19 : vector<2x16x16xf32>
    %cst_11 = arith.constant -1.687360e-01 : f32
    %21 = vector.broadcast %cst_11 : f32 to vector<2x16x16xf32>
    %22 = arith.mulf %6, %21 : vector<2x16x16xf32>
    %cst_12 = arith.constant 3.312640e-01 : f32
    %23 = vector.broadcast %cst_12 : f32 to vector<2x16x16xf32>
    %24 = arith.mulf %8, %23 : vector<2x16x16xf32>
    %25 = arith.subf %22, %24 : vector<2x16x16xf32>
    %cst_13 = arith.constant 5.000000e-01 : f32
    %26 = vector.broadcast %cst_13 : f32 to vector<2x16x16xf32>
    %27 = arith.mulf %10, %26 : vector<2x16x16xf32>
    %28 = arith.addf %25, %27 : vector<2x16x16xf32>
    %cst_14 = arith.constant 1.280000e+02 : f32
    %29 = vector.broadcast %cst_14 : f32 to vector<2x16x16xf32>
    %30 = arith.addf %28, %29 : vector<2x16x16xf32>
    %cst_15 = arith.constant 2.550000e+02 : f32
    %31 = vector.broadcast %cst_15 : f32 to vector<2x16x16xf32>
    %32 = arith.divf %30, %31 : vector<2x16x16xf32>
    %cst_16 = arith.constant 5.000000e-01 : f32
    %33 = vector.broadcast %cst_16 : f32 to vector<2x16x16xf32>
    %34 = arith.mulf %6, %33 : vector<2x16x16xf32>
    %cst_17 = arith.constant 4.186880e-01 : f32
    %35 = vector.broadcast %cst_17 : f32 to vector<2x16x16xf32>
    %36 = arith.mulf %8, %35 : vector<2x16x16xf32>
    %37 = arith.subf %34, %36 : vector<2x16x16xf32>
    %cst_18 = arith.constant 8.131200e-02 : f32
    %38 = vector.broadcast %cst_18 : f32 to vector<2x16x16xf32>
    %39 = arith.mulf %10, %38 : vector<2x16x16xf32>
    %40 = arith.subf %37, %39 : vector<2x16x16xf32>
    %cst_19 = arith.constant 1.280000e+02 : f32
    %41 = vector.broadcast %cst_19 : f32 to vector<2x16x16xf32>
    %42 = arith.addf %40, %41 : vector<2x16x16xf32>
    %cst_20 = arith.constant 2.550000e+02 : f32
    %43 = vector.broadcast %cst_20 : f32 to vector<2x16x16xf32>
    %44 = arith.divf %42, %43 : vector<2x16x16xf32>
    %45 = vector.shape_cast %20 : vector<2x16x16xf32> to vector<32x16xf32>
    %cst_21 = arith.constant dense<0.000000e+00> : vector<32x16xf32>
    %46 = tpu.matmul %45, %1, %cst_21 {dimension_numbers = #tpu.dot_dimension_numbers<[1], [0], [0], [1], [0, 0, 1, 1], [], []>, precision = #tpu.contract_precision<fp32>} : vector<32x16xf32>, vector<16x16xf32>, vector<32x16xf32> -> vector<32x16xf32>
    %47 = vector.shape_cast %46 : vector<32x16xf32> to vector<2x16x16xf32>
    %48 = vector.extract_strided_slice %47 {offsets = [0, 0, 0], sizes = [1, 16, 16], strides = [1, 1, 1]} : vector<2x16x16xf32> to vector<1x16x16xf32>
    %49 = vector.shape_cast %48 : vector<1x16x16xf32> to vector<16x16xf32>
    %cst_22 = arith.constant dense<0.000000e+00> : vector<16x16xf32>
    %50 = tpu.matmul %0, %49, %cst_22 {dimension_numbers = #tpu.dot_dimension_numbers<[1], [0], [0], [1], [0, 0, 1, 1], [], []>, precision = #tpu.contract_precision<fp32>} : vector<16x16xf32>, vector<16x16xf32>, vector<16x16xf32> -> vector<16x16xf32>
    %c0_23 = arith.constant 0 : index
    %c0_24 = arith.constant 0 : index
    %c0_25 = arith.constant 0 : index
    %51 = vector.load %arg3[%c0_23, %c0_24, %c0_25] : memref<6x16x16xf32, #tpu.memory_space<vmem>>, vector<1x16x16xf32>
    %52 = vector.shape_cast %51 : vector<1x16x16xf32> to vector<16x16xf32>
    %53 = vector.shape_cast %50 : vector<16x16xf32> to vector<1x16x16xf32>
    tpu.vector_store %arg3[%c0_23, %c0_24, %c0_25], %53 {strides = array<i32>} : memref<6x16x16xf32, #tpu.memory_space<vmem>>, vector<1x16x16xf32>,
    %54 = vector.extract_strided_slice %47 {offsets = [1, 0, 0], sizes = [1, 16, 16], strides = [1, 1, 1]} : vector<2x16x16xf32> to vector<1x16x16xf32>
    %55 = vector.shape_cast %54 : vector<1x16x16xf32> to vector<16x16xf32>
    %cst_26 = arith.constant dense<0.000000e+00> : vector<16x16xf32>
    %56 = tpu.matmul %0, %55, %cst_26 {dimension_numbers = #tpu.dot_dimension_numbers<[1], [0], [0], [1], [0, 0, 1, 1], [], []>, precision = #tpu.contract_precision<fp32>} : vector<16x16xf32>, vector<16x16xf32>, vector<16x16xf32> -> vector<16x16xf32>
    %c3 = arith.constant 3 : index
    %c0_27 = arith.constant 0 : index
    %c0_28 = arith.constant 0 : index
    %57 = vector.load %arg3[%c3, %c0_27, %c0_28] : memref<6x16x16xf32, #tpu.memory_space<vmem>>, vector<1x16x16xf32>
    %58 = vector.shape_cast %57 : vector<1x16x16xf32> to vector<16x16xf32>
    %59 = vector.shape_cast %56 : vector<16x16xf32> to vector<1x16x16xf32>
    tpu.vector_store %arg3[%c3, %c0_27, %c0_28], %59 {strides = array<i32>} : memref<6x16x16xf32, #tpu.memory_space<vmem>>, vector<1x16x16xf32>,
    %60 = vector.shape_cast %32 : vector<2x16x16xf32> to vector<32x16xf32>
    %cst_29 = arith.constant dense<0.000000e+00> : vector<32x16xf32>
    %61 = tpu.matmul %60, %1, %cst_29 {dimension_numbers = #tpu.dot_dimension_numbers<[1], [0], [0], [1], [0, 0, 1, 1], [], []>, precision = #tpu.contract_precision<fp32>} : vector<32x16xf32>, vector<16x16xf32>, vector<32x16xf32> -> vector<32x16xf32>
    %62 = vector.shape_cast %61 : vector<32x16xf32> to vector<2x16x16xf32>
    %63 = vector.extract_strided_slice %62 {offsets = [0, 0, 0], sizes = [1, 16, 16], strides = [1, 1, 1]} : vector<2x16x16xf32> to vector<1x16x16xf32>
    %64 = vector.shape_cast %63 : vector<1x16x16xf32> to vector<16x16xf32>
    %cst_30 = arith.constant dense<0.000000e+00> : vector<16x16xf32>
    %65 = tpu.matmul %0, %64, %cst_30 {dimension_numbers = #tpu.dot_dimension_numbers<[1], [0], [0], [1], [0, 0, 1, 1], [], []>, precision = #tpu.contract_precision<fp32>} : vector<16x16xf32>, vector<16x16xf32>, vector<16x16xf32> -> vector<16x16xf32>
    %c1 = arith.constant 1 : index
    %c0_31 = arith.constant 0 : index
    %c0_32 = arith.constant 0 : index
    %66 = vector.load %arg3[%c1, %c0_31, %c0_32] : memref<6x16x16xf32, #tpu.memory_space<vmem>>, vector<1x16x16xf32>
    %67 = vector.shape_cast %66 : vector<1x16x16xf32> to vector<16x16xf32>
    %68 = vector.shape_cast %65 : vector<16x16xf32> to vector<1x16x16xf32>
    tpu.vector_store %arg3[%c1, %c0_31, %c0_32], %68 {strides = array<i32>} : memref<6x16x16xf32, #tpu.memory_space<vmem>>, vector<1x16x16xf32>,
    %69 = vector.extract_strided_slice %62 {offsets = [1, 0, 0], sizes = [1, 16, 16], strides = [1, 1, 1]} : vector<2x16x16xf32> to vector<1x16x16xf32>
    %70 = vector.shape_cast %69 : vector<1x16x16xf32> to vector<16x16xf32>
    %cst_33 = arith.constant dense<0.000000e+00> : vector<16x16xf32>
    %71 = tpu.matmul %0, %70, %cst_33 {dimension_numbers = #tpu.dot_dimension_numbers<[1], [0], [0], [1], [0, 0, 1, 1], [], []>, precision = #tpu.contract_precision<fp32>} : vector<16x16xf32>, vector<16x16xf32>, vector<16x16xf32> -> vector<16x16xf32>
    %c4 = arith.constant 4 : index
    %c0_34 = arith.constant 0 : index
    %c0_35 = arith.constant 0 : index
    %72 = vector.load %arg3[%c4, %c0_34, %c0_35] : memref<6x16x16xf32, #tpu.memory_space<vmem>>, vector<1x16x16xf32>
    %73 = vector.shape_cast %72 : vector<1x16x16xf32> to vector<16x16xf32>
    %74 = vector.shape_cast %71 : vector<16x16xf32> to vector<1x16x16xf32>
    tpu.vector_store %arg3[%c4, %c0_34, %c0_35], %74 {strides = array<i32>} : memref<6x16x16xf32, #tpu.memory_space<vmem>>, vector<1x16x16xf32>,
    %75 = vector.shape_cast %44 : vector<2x16x16xf32> to vector<32x16xf32>
    %cst_36 = arith.constant dense<0.000000e+00> : vector<32x16xf32>
    %76 = tpu.matmul %75, %1, %cst_36 {dimension_numbers = #tpu.dot_dimension_numbers<[1], [0], [0], [1], [0, 0, 1, 1], [], []>, precision = #tpu.contract_precision<fp32>} : vector<32x16xf32>, vector<16x16xf32>, vector<32x16xf32> -> vector<32x16xf32>
    %77 = vector.shape_cast %76 : vector<32x16xf32> to vector<2x16x16xf32>
    %78 = vector.extract_strided_slice %77 {offsets = [0, 0, 0], sizes = [1, 16, 16], strides = [1, 1, 1]} : vector<2x16x16xf32> to vector<1x16x16xf32>
    %79 = vector.shape_cast %78 : vector<1x16x16xf32> to vector<16x16xf32>
    %cst_37 = arith.constant dense<0.000000e+00> : vector<16x16xf32>
    %80 = tpu.matmul %0, %79, %cst_37 {dimension_numbers = #tpu.dot_dimension_numbers<[1], [0], [0], [1], [0, 0, 1, 1], [], []>, precision = #tpu.contract_precision<fp32>} : vector<16x16xf32>, vector<16x16xf32>, vector<16x16xf32> -> vector<16x16xf32>
    %c2 = arith.constant 2 : index
    %c0_38 = arith.constant 0 : index
    %c0_39 = arith.constant 0 : index
    %81 = vector.load %arg3[%c2, %c0_38, %c0_39] : memref<6x16x16xf32, #tpu.memory_space<vmem>>, vector<1x16x16xf32>
    %82 = vector.shape_cast %81 : vector<1x16x16xf32> to vector<16x16xf32>
    %83 = vector.shape_cast %80 : vector<16x16xf32> to vector<1x16x16xf32>
    tpu.vector_store %arg3[%c2, %c0_38, %c0_39], %83 {strides = array<i32>} : memref<6x16x16xf32, #tpu.memory_space<vmem>>, vector<1x16x16xf32>,
    %84 = vector.extract_strided_slice %77 {offsets = [1, 0, 0], sizes = [1, 16, 16], strides = [1, 1, 1]} : vector<2x16x16xf32> to vector<1x16x16xf32>
    %85 = vector.shape_cast %84 : vector<1x16x16xf32> to vector<16x16xf32>
    %cst_40 = arith.constant dense<0.000000e+00> : vector<16x16xf32>
    %86 = tpu.matmul %0, %85, %cst_40 {dimension_numbers = #tpu.dot_dimension_numbers<[1], [0], [0], [1], [0, 0, 1, 1], [], []>, precision = #tpu.contract_precision<fp32>} : vector<16x16xf32>, vector<16x16xf32>, vector<16x16xf32> -> vector<16x16xf32>
    %c5 = arith.constant 5 : index
    %c0_41 = arith.constant 0 : index
    %c0_42 = arith.constant 0 : index
    %87 = vector.load %arg3[%c5, %c0_41, %c0_42] : memref<6x16x16xf32, #tpu.memory_space<vmem>>, vector<1x16x16xf32>
    %88 = vector.shape_cast %87 : vector<1x16x16xf32> to vector<16x16xf32>
    %89 = vector.shape_cast %86 : vector<16x16xf32> to vector<1x16x16xf32>
    tpu.vector_store %arg3[%c5, %c0_41, %c0_42], %89 {strides = array<i32>} : memref<6x16x16xf32, #tpu.memory_space<vmem>>, vector<1x16x16xf32>,
    return
  }
}

module attributes {stable_mosaic.version = 11 : i64} {
  func.func @_expand_kernel(%arg0: i32, %arg1: memref<64x6x4xf32, #tpu.memory_space<vmem>>, %arg2: memref<4x256xf32, #tpu.memory_space<vmem>>, %arg3: memref<64x256xf32, #tpu.memory_space<vmem>>, %arg4: memref<64x6x256xf32, #tpu.memory_space<vmem>>) attributes {dimension_semantics = [#tpu.dimension_semantics<parallel>], iteration_bounds = array<i64: 1>, scalar_prefetch = 0 : i64, scratch_operands = 0 : i64, tpu.core_type = #tpu.core_type<tc>, window_params = [{transform_indices = @transform_0, window_bounds = array<i64: 64, 6, 4>}, {pipeline_mode = #tpu.pipeline_mode<synchronous>, transform_indices = @transform_1, window_bounds = array<i64: 4, 256>}, {transform_indices = @transform_2, window_bounds = array<i64: 64, 256>}, {transform_indices = @transform_3, window_bounds = array<i64: 64, 6, 256>}]} {
    %c0 = arith.constant 0 : index
    %c0_0 = arith.constant 0 : index
    %0 = vector.load %arg2[%c0, %c0_0] : memref<4x256xf32, #tpu.memory_space<vmem>>, vector<4x256xf32>
    %c0_1 = arith.constant 0 : index
    %c0_2 = arith.constant 0 : index
    %c0_3 = arith.constant 0 : index
    %1 = vector.load %arg1[%c0_1, %c0_2, %c0_3] : memref<64x6x4xf32, #tpu.memory_space<vmem>>, vector<1x6x4xf32>
    %2 = vector.shape_cast %1 : vector<1x6x4xf32> to vector<6x4xf32>
    %cst = arith.constant dense<0.000000e+00> : vector<6x256xf32>
    %3 = tpu.matmul %2, %0, %cst {dimension_numbers = #tpu.dot_dimension_numbers<[1], [0], [0], [1], [0, 0, 1, 1], [], []>} : vector<6x4xf32>, vector<4x256xf32>, vector<6x256xf32> -> vector<6x256xf32>
    %c0_4 = arith.constant 0 : index
    %c0_5 = arith.constant 0 : index
    %4 = vector.load %arg3[%c0_4, %c0_5] : memref<64x256xf32, #tpu.memory_space<vmem>>, vector<1x256xf32>
    %5 = vector.shape_cast %4 : vector<1x256xf32> to vector<256xf32>
    %6 = vector.shape_cast %5 : vector<256xf32> to vector<1x256xf32>
    %7 = vector.broadcast %6 : vector<1x256xf32> to vector<6x256xf32>
    %8 = arith.mulf %3, %7 : vector<6x256xf32>
    %c0_6 = arith.constant 0 : index
    %c0_7 = arith.constant 0 : index
    %c0_8 = arith.constant 0 : index
    %9 = vector.load %arg4[%c0_6, %c0_7, %c0_8] : memref<64x6x256xf32, #tpu.memory_space<vmem>>, vector<1x6x256xf32>
    %10 = vector.shape_cast %9 : vector<1x6x256xf32> to vector<6x256xf32>
    %11 = vector.shape_cast %8 : vector<6x256xf32> to vector<1x6x256xf32>
    tpu.vector_store %arg4[%c0_6, %c0_7, %c0_8], %11 {strides = array<i32>} : memref<64x6x256xf32, #tpu.memory_space<vmem>>, vector<1x6x256xf32>,
    %c1 = arith.constant 1 : index
    %c0_9 = arith.constant 0 : index
    %c0_10 = arith.constant 0 : index
    %12 = vector.load %arg1[%c1, %c0_9, %c0_10] : memref<64x6x4xf32, #tpu.memory_space<vmem>>, vector<1x6x4xf32>
    %13 = vector.shape_cast %12 : vector<1x6x4xf32> to vector<6x4xf32>
    %cst_11 = arith.constant dense<0.000000e+00> : vector<6x256xf32>
    %14 = tpu.matmul %13, %0, %cst_11 {dimension_numbers = #tpu.dot_dimension_numbers<[1], [0], [0], [1], [0, 0, 1, 1], [], []>} : vector<6x4xf32>, vector<4x256xf32>, vector<6x256xf32> -> vector<6x256xf32>
    %c1_12 = arith.constant 1 : index
    %c0_13 = arith.constant 0 : index
    %15 = vector.load %arg3[%c1_12, %c0_13] : memref<64x256xf32, #tpu.memory_space<vmem>>, vector<1x256xf32>
    %16 = vector.shape_cast %15 : vector<1x256xf32> to vector<256xf32>
    %17 = vector.shape_cast %16 : vector<256xf32> to vector<1x256xf32>
    %18 = vector.broadcast %17 : vector<1x256xf32> to vector<6x256xf32>
    %19 = arith.mulf %14, %18 : vector<6x256xf32>
    %c1_14 = arith.constant 1 : index
    %c0_15 = arith.constant 0 : index
    %c0_16 = arith.constant 0 : index
    %20 = vector.load %arg4[%c1_14, %c0_15, %c0_16] : memref<64x6x256xf32, #tpu.memory_space<vmem>>, vector<1x6x256xf32>
    %21 = vector.shape_cast %20 : vector<1x6x256xf32> to vector<6x256xf32>
    %22 = vector.shape_cast %19 : vector<6x256xf32> to vector<1x6x256xf32>
    tpu.vector_store %arg4[%c1_14, %c0_15, %c0_16], %22 {strides = array<i32>} : memref<64x6x256xf32, #tpu.memory_space<vmem>>, vector<1x6x256xf32>,
    %c2 = arith.constant 2 : index
    %c0_17 = arith.constant 0 : index
    %c0_18 = arith.constant 0 : index
    %23 = vector.load %arg1[%c2, %c0_17, %c0_18] : memref<64x6x4xf32, #tpu.memory_space<vmem>>, vector<1x6x4xf32>
    %24 = vector.shape_cast %23 : vector<1x6x4xf32> to vector<6x4xf32>
    %cst_19 = arith.constant dense<0.000000e+00> : vector<6x256xf32>
    %25 = tpu.matmul %24, %0, %cst_19 {dimension_numbers = #tpu.dot_dimension_numbers<[1], [0], [0], [1], [0, 0, 1, 1], [], []>} : vector<6x4xf32>, vector<4x256xf32>, vector<6x256xf32> -> vector<6x256xf32>
    %c2_20 = arith.constant 2 : index
    %c0_21 = arith.constant 0 : index
    %26 = vector.load %arg3[%c2_20, %c0_21] : memref<64x256xf32, #tpu.memory_space<vmem>>, vector<1x256xf32>
    %27 = vector.shape_cast %26 : vector<1x256xf32> to vector<256xf32>
    %28 = vector.shape_cast %27 : vector<256xf32> to vector<1x256xf32>
    %29 = vector.broadcast %28 : vector<1x256xf32> to vector<6x256xf32>
    %30 = arith.mulf %25, %29 : vector<6x256xf32>
    %c2_22 = arith.constant 2 : index
    %c0_23 = arith.constant 0 : index
    %c0_24 = arith.constant 0 : index
    %31 = vector.load %arg4[%c2_22, %c0_23, %c0_24] : memref<64x6x256xf32, #tpu.memory_space<vmem>>, vector<1x6x256xf32>
    %32 = vector.shape_cast %31 : vector<1x6x256xf32> to vector<6x256xf32>
    %33 = vector.shape_cast %30 : vector<6x256xf32> to vector<1x6x256xf32>
    tpu.vector_store %arg4[%c2_22, %c0_23, %c0_24], %33 {strides = array<i32>} : memref<64x6x256xf32, #tpu.memory_space<vmem>>, vector<1x6x256xf32>,
    %c3 = arith.constant 3 : index
    %c0_25 = arith.constant 0 : index
    %c0_26 = arith.constant 0 : index
    %34 = vector.load %arg1[%c3, %c0_25, %c0_26] : memref<64x6x4xf32, #tpu.memory_space<vmem>>, vector<1x6x4xf32>
    %35 = vector.shape_cast %34 : vector<1x6x4xf32> to vector<6x4xf32>
    %cst_27 = arith.constant dense<0.000000e+00> : vector<6x256xf32>
    %36 = tpu.matmul %35, %0, %cst_27 {dimension_numbers = #tpu.dot_dimension_numbers<[1], [0], [0], [1], [0, 0, 1, 1], [], []>} : vector<6x4xf32>, vector<4x256xf32>, vector<6x256xf32> -> vector<6x256xf32>
    %c3_28 = arith.constant 3 : index
    %c0_29 = arith.constant 0 : index
    %37 = vector.load %arg3[%c3_28, %c0_29] : memref<64x256xf32, #tpu.memory_space<vmem>>, vector<1x256xf32>
    %38 = vector.shape_cast %37 : vector<1x256xf32> to vector<256xf32>
    %39 = vector.shape_cast %38 : vector<256xf32> to vector<1x256xf32>
    %40 = vector.broadcast %39 : vector<1x256xf32> to vector<6x256xf32>
    %41 = arith.mulf %36, %40 : vector<6x256xf32>
    %c3_30 = arith.constant 3 : index
    %c0_31 = arith.constant 0 : index
    %c0_32 = arith.constant 0 : index
    %42 = vector.load %arg4[%c3_30, %c0_31, %c0_32] : memref<64x6x256xf32, #tpu.memory_space<vmem>>, vector<1x6x256xf32>
    %43 = vector.shape_cast %42 : vector<1x6x256xf32> to vector<6x256xf32>
    %44 = vector.shape_cast %41 : vector<6x256xf32> to vector<1x6x256xf32>
    tpu.vector_store %arg4[%c3_30, %c0_31, %c0_32], %44 {strides = array<i32>} : memref<64x6x256xf32, #tpu.memory_space<vmem>>, vector<1x6x256xf32>,
    %c4 = arith.constant 4 : index
    %c0_33 = arith.constant 0 : index
    %c0_34 = arith.constant 0 : index
    %45 = vector.load %arg1[%c4, %c0_33, %c0_34] : memref<64x6x4xf32, #tpu.memory_space<vmem>>, vector<1x6x4xf32>
    %46 = vector.shape_cast %45 : vector<1x6x4xf32> to vector<6x4xf32>
    %cst_35 = arith.constant dense<0.000000e+00> : vector<6x256xf32>
    %47 = tpu.matmul %46, %0, %cst_35 {dimension_numbers = #tpu.dot_dimension_numbers<[1], [0], [0], [1], [0, 0, 1, 1], [], []>} : vector<6x4xf32>, vector<4x256xf32>, vector<6x256xf32> -> vector<6x256xf32>
    %c4_36 = arith.constant 4 : index
    %c0_37 = arith.constant 0 : index
    %48 = vector.load %arg3[%c4_36, %c0_37] : memref<64x256xf32, #tpu.memory_space<vmem>>, vector<1x256xf32>
    %49 = vector.shape_cast %48 : vector<1x256xf32> to vector<256xf32>
    %50 = vector.shape_cast %49 : vector<256xf32> to vector<1x256xf32>
    %51 = vector.broadcast %50 : vector<1x256xf32> to vector<6x256xf32>
    %52 = arith.mulf %47, %51 : vector<6x256xf32>
    %c4_38 = arith.constant 4 : index
    %c0_39 = arith.constant 0 : index
    %c0_40 = arith.constant 0 : index
    %53 = vector.load %arg4[%c4_38, %c0_39, %c0_40] : memref<64x6x256xf32, #tpu.memory_space<vmem>>, vector<1x6x256xf32>
    %54 = vector.shape_cast %53 : vector<1x6x256xf32> to vector<6x256xf32>
    %55 = vector.shape_cast %52 : vector<6x256xf32> to vector<1x6x256xf32>
    tpu.vector_store %arg4[%c4_38, %c0_39, %c0_40], %55 {strides = array<i32>} : memref<64x6x256xf32, #tpu.memory_space<vmem>>, vector<1x6x256xf32>,
    %c5 = arith.constant 5 : index
    %c0_41 = arith.constant 0 : index
    %c0_42 = arith.constant 0 : index
    %56 = vector.load %arg1[%c5, %c0_41, %c0_42] : memref<64x6x4xf32, #tpu.memory_space<vmem>>, vector<1x6x4xf32>
    %57 = vector.shape_cast %56 : vector<1x6x4xf32> to vector<6x4xf32>
    %cst_43 = arith.constant dense<0.000000e+00> : vector<6x256xf32>
    %58 = tpu.matmul %57, %0, %cst_43 {dimension_numbers = #tpu.dot_dimension_numbers<[1], [0], [0], [1], [0, 0, 1, 1], [], []>} : vector<6x4xf32>, vector<4x256xf32>, vector<6x256xf32> -> vector<6x256xf32>
    %c5_44 = arith.constant 5 : index
    %c0_45 = arith.constant 0 : index
    %59 = vector.load %arg3[%c5_44, %c0_45] : memref<64x256xf32, #tpu.memory_space<vmem>>, vector<1x256xf32>
    %60 = vector.shape_cast %59 : vector<1x256xf32> to vector<256xf32>
    %61 = vector.shape_cast %60 : vector<256xf32> to vector<1x256xf32>
    %62 = vector.broadcast %61 : vector<1x256xf32> to vector<6x256xf32>
    %63 = arith.mulf %58, %62 : vector<6x256xf32>
    %c5_46 = arith.constant 5 : index
    %c0_47 = arith.constant 0 : index
    %c0_48 = arith.constant 0 : index
    %64 = vector.load %arg4[%c5_46, %c0_47, %c0_48] : memref<64x6x256xf32, #tpu.memory_space<vmem>>, vector<1x6x256xf32>
    %65 = vector.shape_cast %64 : vector<1x6x256xf32> to vector<6x256xf32>
    %66 = vector.shape_cast %63 : vector<6x256xf32> to vector<1x6x256xf32>
    tpu.vector_store %arg4[%c5_46, %c0_47, %c0_48], %66 {strides = array<i32>} : memref<64x6x256xf32, #tpu.memory_space<vmem>>, vector<1x6x256xf32>,
    %c6 = arith.constant 6 : index
    %c0_49 = arith.constant 0 : index
    %c0_50 = arith.constant 0 : index
    %67 = vector.load %arg1[%c6, %c0_49, %c0_50] : memref<64x6x4xf32, #tpu.memory_space<vmem>>, vector<1x6x4xf32>
    %68 = vector.shape_cast %67 : vector<1x6x4xf32> to vector<6x4xf32>
    %cst_51 = arith.constant dense<0.000000e+00> : vector<6x256xf32>
    %69 = tpu.matmul %68, %0, %cst_51 {dimension_numbers = #tpu.dot_dimension_numbers<[1], [0], [0], [1], [0, 0, 1, 1], [], []>} : vector<6x4xf32>, vector<4x256xf32>, vector<6x256xf32> -> vector<6x256xf32>
    %c6_52 = arith.constant 6 : index
    %c0_53 = arith.constant 0 : index
    %70 = vector.load %arg3[%c6_52, %c0_53] : memref<64x256xf32, #tpu.memory_space<vmem>>, vector<1x256xf32>
    %71 = vector.shape_cast %70 : vector<1x256xf32> to vector<256xf32>
    %72 = vector.shape_cast %71 : vector<256xf32> to vector<1x256xf32>
    %73 = vector.broadcast %72 : vector<1x256xf32> to vector<6x256xf32>
    %74 = arith.mulf %69, %73 : vector<6x256xf32>
    %c6_54 = arith.constant 6 : index
    %c0_55 = arith.constant 0 : index
    %c0_56 = arith.constant 0 : index
    %75 = vector.load %arg4[%c6_54, %c0_55, %c0_56] : memref<64x6x256xf32, #tpu.memory_space<vmem>>, vector<1x6x256xf32>
    %76 = vector.shape_cast %75 : vector<1x6x256xf32> to vector<6x256xf32>
    %77 = vector.shape_cast %74 : vector<6x256xf32> to vector<1x6x256xf32>
    tpu.vector_store %arg4[%c6_54, %c0_55, %c0_56], %77 {strides = array<i32>} : memref<64x6x256xf32, #tpu.memory_space<vmem>>, vector<1x6x256xf32>,
    %c7 = arith.constant 7 : index
    %c0_57 = arith.constant 0 : index
    %c0_58 = arith.constant 0 : index
    %78 = vector.load %arg1[%c7, %c0_57, %c0_58] : memref<64x6x4xf32, #tpu.memory_space<vmem>>, vector<1x6x4xf32>
    %79 = vector.shape_cast %78 : vector<1x6x4xf32> to vector<6x4xf32>
    %cst_59 = arith.constant dense<0.000000e+00> : vector<6x256xf32>
    %80 = tpu.matmul %79, %0, %cst_59 {dimension_numbers = #tpu.dot_dimension_numbers<[1], [0], [0], [1], [0, 0, 1, 1], [], []>} : vector<6x4xf32>, vector<4x256xf32>, vector<6x256xf32> -> vector<6x256xf32>
    %c7_60 = arith.constant 7 : index
    %c0_61 = arith.constant 0 : index
    %81 = vector.load %arg3[%c7_60, %c0_61] : memref<64x256xf32, #tpu.memory_space<vmem>>, vector<1x256xf32>
    %82 = vector.shape_cast %81 : vector<1x256xf32> to vector<256xf32>
    %83 = vector.shape_cast %82 : vector<256xf32> to vector<1x256xf32>
    %84 = vector.broadcast %83 : vector<1x256xf32> to vector<6x256xf32>
    %85 = arith.mulf %80, %84 : vector<6x256xf32>
    %c7_62 = arith.constant 7 : index
    %c0_63 = arith.constant 0 : index
    %c0_64 = arith.constant 0 : index
    %86 = vector.load %arg4[%c7_62, %c0_63, %c0_64] : memref<64x6x256xf32, #tpu.memory_space<vmem>>, vector<1x6x256xf32>
    %87 = vector.shape_cast %86 : vector<1x6x256xf32> to vector<6x256xf32>
    %88 = vector.shape_cast %85 : vector<6x256xf32> to vector<1x6x256xf32>
    tpu.vector_store %arg4[%c7_62, %c0_63, %c0_64], %88 {strides = array<i32>} : memref<64x6x256xf32, #tpu.memory_space<vmem>>, vector<1x6x256xf32>,
    %c8 = arith.constant 8 : index
    %c0_65 = arith.constant 0 : index
    %c0_66 = arith.constant 0 : index
    %89 = vector.load %arg1[%c8, %c0_65, %c0_66] : memref<64x6x4xf32, #tpu.memory_space<vmem>>, vector<1x6x4xf32>
    %90 = vector.shape_cast %89 : vector<1x6x4xf32> to vector<6x4xf32>
    %cst_67 = arith.constant dense<0.000000e+00> : vector<6x256xf32>
    %91 = tpu.matmul %90, %0, %cst_67 {dimension_numbers = #tpu.dot_dimension_numbers<[1], [0], [0], [1], [0, 0, 1, 1], [], []>} : vector<6x4xf32>, vector<4x256xf32>, vector<6x256xf32> -> vector<6x256xf32>
    %c8_68 = arith.constant 8 : index
    %c0_69 = arith.constant 0 : index
    %92 = vector.load %arg3[%c8_68, %c0_69] : memref<64x256xf32, #tpu.memory_space<vmem>>, vector<1x256xf32>
    %93 = vector.shape_cast %92 : vector<1x256xf32> to vector<256xf32>
    %94 = vector.shape_cast %93 : vector<256xf32> to vector<1x256xf32>
    %95 = vector.broadcast %94 : vector<1x256xf32> to vector<6x256xf32>
    %96 = arith.mulf %91, %95 : vector<6x256xf32>
    %c8_70 = arith.constant 8 : index
    %c0_71 = arith.constant 0 : index
    %c0_72 = arith.constant 0 : index
    %97 = vector.load %arg4[%c8_70, %c0_71, %c0_72] : memref<64x6x256xf32, #tpu.memory_space<vmem>>, vector<1x6x256xf32>
    %98 = vector.shape_cast %97 : vector<1x6x256xf32> to vector<6x256xf32>
    %99 = vector.shape_cast %96 : vector<6x256xf32> to vector<1x6x256xf32>
    tpu.vector_store %arg4[%c8_70, %c0_71, %c0_72], %99 {strides = array<i32>} : memref<64x6x256xf32, #tpu.memory_space<vmem>>, vector<1x6x256xf32>,
    %c9 = arith.constant 9 : index
    %c0_73 = arith.constant 0 : index
    %c0_74 = arith.constant 0 : index
    %100 = vector.load %arg1[%c9, %c0_73, %c0_74] : memref<64x6x4xf32, #tpu.memory_space<vmem>>, vector<1x6x4xf32>
    %101 = vector.shape_cast %100 : vector<1x6x4xf32> to vector<6x4xf32>
    %cst_75 = arith.constant dense<0.000000e+00> : vector<6x256xf32>
    %102 = tpu.matmul %101, %0, %cst_75 {dimension_numbers = #tpu.dot_dimension_numbers<[1], [0], [0], [1], [0, 0, 1, 1], [], []>} : vector<6x4xf32>, vector<4x256xf32>, vector<6x256xf32> -> vector<6x256xf32>
    %c9_76 = arith.constant 9 : index
    %c0_77 = arith.constant 0 : index
    %103 = vector.load %arg3[%c9_76, %c0_77] : memref<64x256xf32, #tpu.memory_space<vmem>>, vector<1x256xf32>
    %104 = vector.shape_cast %103 : vector<1x256xf32> to vector<256xf32>
    %105 = vector.shape_cast %104 : vector<256xf32> to vector<1x256xf32>
    %106 = vector.broadcast %105 : vector<1x256xf32> to vector<6x256xf32>
    %107 = arith.mulf %102, %106 : vector<6x256xf32>
    %c9_78 = arith.constant 9 : index
    %c0_79 = arith.constant 0 : index
    %c0_80 = arith.constant 0 : index
    %108 = vector.load %arg4[%c9_78, %c0_79, %c0_80] : memref<64x6x256xf32, #tpu.memory_space<vmem>>, vector<1x6x256xf32>
    %109 = vector.shape_cast %108 : vector<1x6x256xf32> to vector<6x256xf32>
    %110 = vector.shape_cast %107 : vector<6x256xf32> to vector<1x6x256xf32>
    tpu.vector_store %arg4[%c9_78, %c0_79, %c0_80], %110 {strides = array<i32>} : memref<64x6x256xf32, #tpu.memory_space<vmem>>, vector<1x6x256xf32>,
    %c10 = arith.constant 10 : index
    %c0_81 = arith.constant 0 : index
    %c0_82 = arith.constant 0 : index
    %111 = vector.load %arg1[%c10, %c0_81, %c0_82] : memref<64x6x4xf32, #tpu.memory_space<vmem>>, vector<1x6x4xf32>
    %112 = vector.shape_cast %111 : vector<1x6x4xf32> to vector<6x4xf32>
    %cst_83 = arith.constant dense<0.000000e+00> : vector<6x256xf32>
    %113 = tpu.matmul %112, %0, %cst_83 {dimension_numbers = #tpu.dot_dimension_numbers<[1], [0], [0], [1], [0, 0, 1, 1], [], []>} : vector<6x4xf32>, vector<4x256xf32>, vector<6x256xf32> -> vector<6x256xf32>
    %c10_84 = arith.constant 10 : index
    %c0_85 = arith.constant 0 : index
    %114 = vector.load %arg3[%c10_84, %c0_85] : memref<64x256xf32, #tpu.memory_space<vmem>>, vector<1x256xf32>
    %115 = vector.shape_cast %114 : vector<1x256xf32> to vector<256xf32>
    %116 = vector.shape_cast %115 : vector<256xf32> to vector<1x256xf32>
    %117 = vector.broadcast %116 : vector<1x256xf32> to vector<6x256xf32>
    %118 = arith.mulf %113, %117 : vector<6x256xf32>
    %c10_86 = arith.constant 10 : index
    %c0_87 = arith.constant 0 : index
    %c0_88 = arith.constant 0 : index
    %119 = vector.load %arg4[%c10_86, %c0_87, %c0_88] : memref<64x6x256xf32, #tpu.memory_space<vmem>>, vector<1x6x256xf32>
    %120 = vector.shape_cast %119 : vector<1x6x256xf32> to vector<6x256xf32>
    %121 = vector.shape_cast %118 : vector<6x256xf32> to vector<1x6x256xf32>
    tpu.vector_store %arg4[%c10_86, %c0_87, %c0_88], %121 {strides = array<i32>} : memref<64x6x256xf32, #tpu.memory_space<vmem>>, vector<1x6x256xf32>,
    %c11 = arith.constant 11 : index
    %c0_89 = arith.constant 0 : index
    %c0_90 = arith.constant 0 : index
    %122 = vector.load %arg1[%c11, %c0_89, %c0_90] : memref<64x6x4xf32, #tpu.memory_space<vmem>>, vector<1x6x4xf32>
    %123 = vector.shape_cast %122 : vector<1x6x4xf32> to vector<6x4xf32>
    %cst_91 = arith.constant dense<0.000000e+00> : vector<6x256xf32>
    %124 = tpu.matmul %123, %0, %cst_91 {dimension_numbers = #tpu.dot_dimension_numbers<[1], [0], [0], [1], [0, 0, 1, 1], [], []>} : vector<6x4xf32>, vector<4x256xf32>, vector<6x256xf32> -> vector<6x256xf32>
    %c11_92 = arith.constant 11 : index
    %c0_93 = arith.constant 0 : index
    %125 = vector.load %arg3[%c11_92, %c0_93] : memref<64x256xf32, #tpu.memory_space<vmem>>, vector<1x256xf32>
    %126 = vector.shape_cast %125 : vector<1x256xf32> to vector<256xf32>
    %127 = vector.shape_cast %126 : vector<256xf32> to vector<1x256xf32>
    %128 = vector.broadcast %127 : vector<1x256xf32> to vector<6x256xf32>
    %129 = arith.mulf %124, %128 : vector<6x256xf32>
    %c11_94 = arith.constant 11 : index
    %c0_95 = arith.constant 0 : index
    %c0_96 = arith.constant 0 : index
    %130 = vector.load %arg4[%c11_94, %c0_95, %c0_96] : memref<64x6x256xf32, #tpu.memory_space<vmem>>, vector<1x6x256xf32>
    %131 = vector.shape_cast %130 : vector<1x6x256xf32> to vector<6x256xf32>
    %132 = vector.shape_cast %129 : vector<6x256xf32> to vector<1x6x256xf32>
    tpu.vector_store %arg4[%c11_94, %c0_95, %c0_96], %132 {strides = array<i32>} : memref<64x6x256xf32, #tpu.memory_space<vmem>>, vector<1x6x256xf32>,
    %c12 = arith.constant 12 : index
    %c0_97 = arith.constant 0 : index
    %c0_98 = arith.constant 0 : index
    %133 = vector.load %arg1[%c12, %c0_97, %c0_98] : memref<64x6x4xf32, #tpu.memory_space<vmem>>, vector<1x6x4xf32>
    %134 = vector.shape_cast %133 : vector<1x6x4xf32> to vector<6x4xf32>
    %cst_99 = arith.constant dense<0.000000e+00> : vector<6x256xf32>
    %135 = tpu.matmul %134, %0, %cst_99 {dimension_numbers = #tpu.dot_dimension_numbers<[1], [0], [0], [1], [0, 0, 1, 1], [], []>} : vector<6x4xf32>, vector<4x256xf32>, vector<6x256xf32> -> vector<6x256xf32>
    %c12_100 = arith.constant 12 : index
    %c0_101 = arith.constant 0 : index
    %136 = vector.load %arg3[%c12_100, %c0_101] : memref<64x256xf32, #tpu.memory_space<vmem>>, vector<1x256xf32>
    %137 = vector.shape_cast %136 : vector<1x256xf32> to vector<256xf32>
    %138 = vector.shape_cast %137 : vector<256xf32> to vector<1x256xf32>
    %139 = vector.broadcast %138 : vector<1x256xf32> to vector<6x256xf32>
    %140 = arith.mulf %135, %139 : vector<6x256xf32>
    %c12_102 = arith.constant 12 : index
    %c0_103 = arith.constant 0 : index
    %c0_104 = arith.constant 0 : index
    %141 = vector.load %arg4[%c12_102, %c0_103, %c0_104] : memref<64x6x256xf32, #tpu.memory_space<vmem>>, vector<1x6x256xf32>
    %142 = vector.shape_cast %141 : vector<1x6x256xf32> to vector<6x256xf32>
    %143 = vector.shape_cast %140 : vector<6x256xf32> to vector<1x6x256xf32>
    tpu.vector_store %arg4[%c12_102, %c0_103, %c0_104], %143 {strides = array<i32>} : memref<64x6x256xf32, #tpu.memory_space<vmem>>, vector<1x6x256xf32>,
    %c13 = arith.constant 13 : index
    %c0_105 = arith.constant 0 : index
    %c0_106 = arith.constant 0 : index
    %144 = vector.load %arg1[%c13, %c0_105, %c0_106] : memref<64x6x4xf32, #tpu.memory_space<vmem>>, vector<1x6x4xf32>
    %145 = vector.shape_cast %144 : vector<1x6x4xf32> to vector<6x4xf32>
    %cst_107 = arith.constant dense<0.000000e+00> : vector<6x256xf32>
    %146 = tpu.matmul %145, %0, %cst_107 {dimension_numbers = #tpu.dot_dimension_numbers<[1], [0], [0], [1], [0, 0, 1, 1], [], []>} : vector<6x4xf32>, vector<4x256xf32>, vector<6x256xf32> -> vector<6x256xf32>
    %c13_108 = arith.constant 13 : index
    %c0_109 = arith.constant 0 : index
    %147 = vector.load %arg3[%c13_108, %c0_109] : memref<64x256xf32, #tpu.memory_space<vmem>>, vector<1x256xf32>
    %148 = vector.shape_cast %147 : vector<1x256xf32> to vector<256xf32>
    %149 = vector.shape_cast %148 : vector<256xf32> to vector<1x256xf32>
    %150 = vector.broadcast %149 : vector<1x256xf32> to vector<6x256xf32>
    %151 = arith.mulf %146, %150 : vector<6x256xf32>
    %c13_110 = arith.constant 13 : index
    %c0_111 = arith.constant 0 : index
    %c0_112 = arith.constant 0 : index
    %152 = vector.load %arg4[%c13_110, %c0_111, %c0_112] : memref<64x6x256xf32, #tpu.memory_space<vmem>>, vector<1x6x256xf32>
    %153 = vector.shape_cast %152 : vector<1x6x256xf32> to vector<6x256xf32>
    %154 = vector.shape_cast %151 : vector<6x256xf32> to vector<1x6x256xf32>
    tpu.vector_store %arg4[%c13_110, %c0_111, %c0_112], %154 {strides = array<i32>} : memref<64x6x256xf32, #tpu.memory_space<vmem>>, vector<1x6x256xf32>,
    %c14 = arith.constant 14 : index
    %c0_113 = arith.constant 0 : index
    %c0_114 = arith.constant 0 : index
    %155 = vector.load %arg1[%c14, %c0_113, %c0_114] : memref<64x6x4xf32, #tpu.memory_space<vmem>>, vector<1x6x4xf32>
    %156 = vector.shape_cast %155 : vector<1x6x4xf32> to vector<6x4xf32>
    %cst_115 = arith.constant dense<0.000000e+00> : vector<6x256xf32>
    %157 = tpu.matmul %156, %0, %cst_115 {dimension_numbers = #tpu.dot_dimension_numbers<[1], [0], [0], [1], [0, 0, 1, 1], [], []>} : vector<6x4xf32>, vector<4x256xf32>, vector<6x256xf32> -> vector<6x256xf32>
    %c14_116 = arith.constant 14 : index
    %c0_117 = arith.constant 0 : index
    %158 = vector.load %arg3[%c14_116, %c0_117] : memref<64x256xf32, #tpu.memory_space<vmem>>, vector<1x256xf32>
    %159 = vector.shape_cast %158 : vector<1x256xf32> to vector<256xf32>
    %160 = vector.shape_cast %159 : vector<256xf32> to vector<1x256xf32>
    %161 = vector.broadcast %160 : vector<1x256xf32> to vector<6x256xf32>
    %162 = arith.mulf %157, %161 : vector<6x256xf32>
    %c14_118 = arith.constant 14 : index
    %c0_119 = arith.constant 0 : index
    %c0_120 = arith.constant 0 : index
    %163 = vector.load %arg4[%c14_118, %c0_119, %c0_120] : memref<64x6x256xf32, #tpu.memory_space<vmem>>, vector<1x6x256xf32>
    %164 = vector.shape_cast %163 : vector<1x6x256xf32> to vector<6x256xf32>
    %165 = vector.shape_cast %162 : vector<6x256xf32> to vector<1x6x256xf32>
    tpu.vector_store %arg4[%c14_118, %c0_119, %c0_120], %165 {strides = array<i32>} : memref<64x6x256xf32, #tpu.memory_space<vmem>>, vector<1x6x256xf32>,
    %c15 = arith.constant 15 : index
    %c0_121 = arith.constant 0 : index
    %c0_122 = arith.constant 0 : index
    %166 = vector.load %arg1[%c15, %c0_121, %c0_122] : memref<64x6x4xf32, #tpu.memory_space<vmem>>, vector<1x6x4xf32>
    %167 = vector.shape_cast %166 : vector<1x6x4xf32> to vector<6x4xf32>
    %cst_123 = arith.constant dense<0.000000e+00> : vector<6x256xf32>
    %168 = tpu.matmul %167, %0, %cst_123 {dimension_numbers = #tpu.dot_dimension_numbers<[1], [0], [0], [1], [0, 0, 1, 1], [], []>} : vector<6x4xf32>, vector<4x256xf32>, vector<6x256xf32> -> vector<6x256xf32>
    %c15_124 = arith.constant 15 : index
    %c0_125 = arith.constant 0 : index
    %169 = vector.load %arg3[%c15_124, %c0_125] : memref<64x256xf32, #tpu.memory_space<vmem>>, vector<1x256xf32>
    %170 = vector.shape_cast %169 : vector<1x256xf32> to vector<256xf32>
    %171 = vector.shape_cast %170 : vector<256xf32> to vector<1x256xf32>
    %172 = vector.broadcast %171 : vector<1x256xf32> to vector<6x256xf32>
    %173 = arith.mulf %168, %172 : vector<6x256xf32>
    %c15_126 = arith.constant 15 : index
    %c0_127 = arith.constant 0 : index
    %c0_128 = arith.constant 0 : index
    %174 = vector.load %arg4[%c15_126, %c0_127, %c0_128] : memref<64x6x256xf32, #tpu.memory_space<vmem>>, vector<1x6x256xf32>
    %175 = vector.shape_cast %174 : vector<1x6x256xf32> to vector<6x256xf32>
    %176 = vector.shape_cast %173 : vector<6x256xf32> to vector<1x6x256xf32>
    tpu.vector_store %arg4[%c15_126, %c0_127, %c0_128], %176 {strides = array<i32>} : memref<64x6x256xf32, #tpu.memory_space<vmem>>, vector<1x6x256xf32>,
    %c16 = arith.constant 16 : index
    %c0_129 = arith.constant 0 : index
    %c0_130 = arith.constant 0 : index
    %177 = vector.load %arg1[%c16, %c0_129, %c0_130] : memref<64x6x4xf32, #tpu.memory_space<vmem>>, vector<1x6x4xf32>
    %178 = vector.shape_cast %177 : vector<1x6x4xf32> to vector<6x4xf32>
    %cst_131 = arith.constant dense<0.000000e+00> : vector<6x256xf32>
    %179 = tpu.matmul %178, %0, %cst_131 {dimension_numbers = #tpu.dot_dimension_numbers<[1], [0], [0], [1], [0, 0, 1, 1], [], []>} : vector<6x4xf32>, vector<4x256xf32>, vector<6x256xf32> -> vector<6x256xf32>
    %c16_132 = arith.constant 16 : index
    %c0_133 = arith.constant 0 : index
    %180 = vector.load %arg3[%c16_132, %c0_133] : memref<64x256xf32, #tpu.memory_space<vmem>>, vector<1x256xf32>
    %181 = vector.shape_cast %180 : vector<1x256xf32> to vector<256xf32>
    %182 = vector.shape_cast %181 : vector<256xf32> to vector<1x256xf32>
    %183 = vector.broadcast %182 : vector<1x256xf32> to vector<6x256xf32>
    %184 = arith.mulf %179, %183 : vector<6x256xf32>
    %c16_134 = arith.constant 16 : index
    %c0_135 = arith.constant 0 : index
    %c0_136 = arith.constant 0 : index
    %185 = vector.load %arg4[%c16_134, %c0_135, %c0_136] : memref<64x6x256xf32, #tpu.memory_space<vmem>>, vector<1x6x256xf32>
    %186 = vector.shape_cast %185 : vector<1x6x256xf32> to vector<6x256xf32>
    %187 = vector.shape_cast %184 : vector<6x256xf32> to vector<1x6x256xf32>
    tpu.vector_store %arg4[%c16_134, %c0_135, %c0_136], %187 {strides = array<i32>} : memref<64x6x256xf32, #tpu.memory_space<vmem>>, vector<1x6x256xf32>,
    %c17 = arith.constant 17 : index
    %c0_137 = arith.constant 0 : index
    %c0_138 = arith.constant 0 : index
    %188 = vector.load %arg1[%c17, %c0_137, %c0_138] : memref<64x6x4xf32, #tpu.memory_space<vmem>>, vector<1x6x4xf32>
    %189 = vector.shape_cast %188 : vector<1x6x4xf32> to vector<6x4xf32>
    %cst_139 = arith.constant dense<0.000000e+00> : vector<6x256xf32>
    %190 = tpu.matmul %189, %0, %cst_139 {dimension_numbers = #tpu.dot_dimension_numbers<[1], [0], [0], [1], [0, 0, 1, 1], [], []>} : vector<6x4xf32>, vector<4x256xf32>, vector<6x256xf32> -> vector<6x256xf32>
    %c17_140 = arith.constant 17 : index
    %c0_141 = arith.constant 0 : index
    %191 = vector.load %arg3[%c17_140, %c0_141] : memref<64x256xf32, #tpu.memory_space<vmem>>, vector<1x256xf32>
    %192 = vector.shape_cast %191 : vector<1x256xf32> to vector<256xf32>
    %193 = vector.shape_cast %192 : vector<256xf32> to vector<1x256xf32>
    %194 = vector.broadcast %193 : vector<1x256xf32> to vector<6x256xf32>
    %195 = arith.mulf %190, %194 : vector<6x256xf32>
    %c17_142 = arith.constant 17 : index
    %c0_143 = arith.constant 0 : index
    %c0_144 = arith.constant 0 : index
    %196 = vector.load %arg4[%c17_142, %c0_143, %c0_144] : memref<64x6x256xf32, #tpu.memory_space<vmem>>, vector<1x6x256xf32>
    %197 = vector.shape_cast %196 : vector<1x6x256xf32> to vector<6x256xf32>
    %198 = vector.shape_cast %195 : vector<6x256xf32> to vector<1x6x256xf32>
    tpu.vector_store %arg4[%c17_142, %c0_143, %c0_144], %198 {strides = array<i32>} : memref<64x6x256xf32, #tpu.memory_space<vmem>>, vector<1x6x256xf32>,
    %c18 = arith.constant 18 : index
    %c0_145 = arith.constant 0 : index
    %c0_146 = arith.constant 0 : index
    %199 = vector.load %arg1[%c18, %c0_145, %c0_146] : memref<64x6x4xf32, #tpu.memory_space<vmem>>, vector<1x6x4xf32>
    %200 = vector.shape_cast %199 : vector<1x6x4xf32> to vector<6x4xf32>
    %cst_147 = arith.constant dense<0.000000e+00> : vector<6x256xf32>
    %201 = tpu.matmul %200, %0, %cst_147 {dimension_numbers = #tpu.dot_dimension_numbers<[1], [0], [0], [1], [0, 0, 1, 1], [], []>} : vector<6x4xf32>, vector<4x256xf32>, vector<6x256xf32> -> vector<6x256xf32>
    %c18_148 = arith.constant 18 : index
    %c0_149 = arith.constant 0 : index
    %202 = vector.load %arg3[%c18_148, %c0_149] : memref<64x256xf32, #tpu.memory_space<vmem>>, vector<1x256xf32>
    %203 = vector.shape_cast %202 : vector<1x256xf32> to vector<256xf32>
    %204 = vector.shape_cast %203 : vector<256xf32> to vector<1x256xf32>
    %205 = vector.broadcast %204 : vector<1x256xf32> to vector<6x256xf32>
    %206 = arith.mulf %201, %205 : vector<6x256xf32>
    %c18_150 = arith.constant 18 : index
    %c0_151 = arith.constant 0 : index
    %c0_152 = arith.constant 0 : index
    %207 = vector.load %arg4[%c18_150, %c0_151, %c0_152] : memref<64x6x256xf32, #tpu.memory_space<vmem>>, vector<1x6x256xf32>
    %208 = vector.shape_cast %207 : vector<1x6x256xf32> to vector<6x256xf32>
    %209 = vector.shape_cast %206 : vector<6x256xf32> to vector<1x6x256xf32>
    tpu.vector_store %arg4[%c18_150, %c0_151, %c0_152], %209 {strides = array<i32>} : memref<64x6x256xf32, #tpu.memory_space<vmem>>, vector<1x6x256xf32>,
    %c19 = arith.constant 19 : index
    %c0_153 = arith.constant 0 : index
    %c0_154 = arith.constant 0 : index
    %210 = vector.load %arg1[%c19, %c0_153, %c0_154] : memref<64x6x4xf32, #tpu.memory_space<vmem>>, vector<1x6x4xf32>
    %211 = vector.shape_cast %210 : vector<1x6x4xf32> to vector<6x4xf32>
    %cst_155 = arith.constant dense<0.000000e+00> : vector<6x256xf32>
    %212 = tpu.matmul %211, %0, %cst_155 {dimension_numbers = #tpu.dot_dimension_numbers<[1], [0], [0], [1], [0, 0, 1, 1], [], []>} : vector<6x4xf32>, vector<4x256xf32>, vector<6x256xf32> -> vector<6x256xf32>
    %c19_156 = arith.constant 19 : index
    %c0_157 = arith.constant 0 : index
    %213 = vector.load %arg3[%c19_156, %c0_157] : memref<64x256xf32, #tpu.memory_space<vmem>>, vector<1x256xf32>
    %214 = vector.shape_cast %213 : vector<1x256xf32> to vector<256xf32>
    %215 = vector.shape_cast %214 : vector<256xf32> to vector<1x256xf32>
    %216 = vector.broadcast %215 : vector<1x256xf32> to vector<6x256xf32>
    %217 = arith.mulf %212, %216 : vector<6x256xf32>
    %c19_158 = arith.constant 19 : index
    %c0_159 = arith.constant 0 : index
    %c0_160 = arith.constant 0 : index
    %218 = vector.load %arg4[%c19_158, %c0_159, %c0_160] : memref<64x6x256xf32, #tpu.memory_space<vmem>>, vector<1x6x256xf32>
    %219 = vector.shape_cast %218 : vector<1x6x256xf32> to vector<6x256xf32>
    %220 = vector.shape_cast %217 : vector<6x256xf32> to vector<1x6x256xf32>
    tpu.vector_store %arg4[%c19_158, %c0_159, %c0_160], %220 {strides = array<i32>} : memref<64x6x256xf32, #tpu.memory_space<vmem>>, vector<1x6x256xf32>,
    %c20 = arith.constant 20 : index
    %c0_161 = arith.constant 0 : index
    %c0_162 = arith.constant 0 : index
    %221 = vector.load %arg1[%c20, %c0_161, %c0_162] : memref<64x6x4xf32, #tpu.memory_space<vmem>>, vector<1x6x4xf32>
    %222 = vector.shape_cast %221 : vector<1x6x4xf32> to vector<6x4xf32>
    %cst_163 = arith.constant dense<0.000000e+00> : vector<6x256xf32>
    %223 = tpu.matmul %222, %0, %cst_163 {dimension_numbers = #tpu.dot_dimension_numbers<[1], [0], [0], [1], [0, 0, 1, 1], [], []>} : vector<6x4xf32>, vector<4x256xf32>, vector<6x256xf32> -> vector<6x256xf32>
    %c20_164 = arith.constant 20 : index
    %c0_165 = arith.constant 0 : index
    %224 = vector.load %arg3[%c20_164, %c0_165] : memref<64x256xf32, #tpu.memory_space<vmem>>, vector<1x256xf32>
    %225 = vector.shape_cast %224 : vector<1x256xf32> to vector<256xf32>
    %226 = vector.shape_cast %225 : vector<256xf32> to vector<1x256xf32>
    %227 = vector.broadcast %226 : vector<1x256xf32> to vector<6x256xf32>
    %228 = arith.mulf %223, %227 : vector<6x256xf32>
    %c20_166 = arith.constant 20 : index
    %c0_167 = arith.constant 0 : index
    %c0_168 = arith.constant 0 : index
    %229 = vector.load %arg4[%c20_166, %c0_167, %c0_168] : memref<64x6x256xf32, #tpu.memory_space<vmem>>, vector<1x6x256xf32>
    %230 = vector.shape_cast %229 : vector<1x6x256xf32> to vector<6x256xf32>
    %231 = vector.shape_cast %228 : vector<6x256xf32> to vector<1x6x256xf32>
    tpu.vector_store %arg4[%c20_166, %c0_167, %c0_168], %231 {strides = array<i32>} : memref<64x6x256xf32, #tpu.memory_space<vmem>>, vector<1x6x256xf32>,
    %c21 = arith.constant 21 : index
    %c0_169 = arith.constant 0 : index
    %c0_170 = arith.constant 0 : index
    %232 = vector.load %arg1[%c21, %c0_169, %c0_170] : memref<64x6x4xf32, #tpu.memory_space<vmem>>, vector<1x6x4xf32>
    %233 = vector.shape_cast %232 : vector<1x6x4xf32> to vector<6x4xf32>
    %cst_171 = arith.constant dense<0.000000e+00> : vector<6x256xf32>
    %234 = tpu.matmul %233, %0, %cst_171 {dimension_numbers = #tpu.dot_dimension_numbers<[1], [0], [0], [1], [0, 0, 1, 1], [], []>} : vector<6x4xf32>, vector<4x256xf32>, vector<6x256xf32> -> vector<6x256xf32>
    %c21_172 = arith.constant 21 : index
    %c0_173 = arith.constant 0 : index
    %235 = vector.load %arg3[%c21_172, %c0_173] : memref<64x256xf32, #tpu.memory_space<vmem>>, vector<1x256xf32>
    %236 = vector.shape_cast %235 : vector<1x256xf32> to vector<256xf32>
    %237 = vector.shape_cast %236 : vector<256xf32> to vector<1x256xf32>
    %238 = vector.broadcast %237 : vector<1x256xf32> to vector<6x256xf32>
    %239 = arith.mulf %234, %238 : vector<6x256xf32>
    %c21_174 = arith.constant 21 : index
    %c0_175 = arith.constant 0 : index
    %c0_176 = arith.constant 0 : index
    %240 = vector.load %arg4[%c21_174, %c0_175, %c0_176] : memref<64x6x256xf32, #tpu.memory_space<vmem>>, vector<1x6x256xf32>
    %241 = vector.shape_cast %240 : vector<1x6x256xf32> to vector<6x256xf32>
    %242 = vector.shape_cast %239 : vector<6x256xf32> to vector<1x6x256xf32>
    tpu.vector_store %arg4[%c21_174, %c0_175, %c0_176], %242 {strides = array<i32>} : memref<64x6x256xf32, #tpu.memory_space<vmem>>, vector<1x6x256xf32>,
    %c22 = arith.constant 22 : index
    %c0_177 = arith.constant 0 : index
    %c0_178 = arith.constant 0 : index
    %243 = vector.load %arg1[%c22, %c0_177, %c0_178] : memref<64x6x4xf32, #tpu.memory_space<vmem>>, vector<1x6x4xf32>
    %244 = vector.shape_cast %243 : vector<1x6x4xf32> to vector<6x4xf32>
    %cst_179 = arith.constant dense<0.000000e+00> : vector<6x256xf32>
    %245 = tpu.matmul %244, %0, %cst_179 {dimension_numbers = #tpu.dot_dimension_numbers<[1], [0], [0], [1], [0, 0, 1, 1], [], []>} : vector<6x4xf32>, vector<4x256xf32>, vector<6x256xf32> -> vector<6x256xf32>
    %c22_180 = arith.constant 22 : index
    %c0_181 = arith.constant 0 : index
    %246 = vector.load %arg3[%c22_180, %c0_181] : memref<64x256xf32, #tpu.memory_space<vmem>>, vector<1x256xf32>
    %247 = vector.shape_cast %246 : vector<1x256xf32> to vector<256xf32>
    %248 = vector.shape_cast %247 : vector<256xf32> to vector<1x256xf32>
    %249 = vector.broadcast %248 : vector<1x256xf32> to vector<6x256xf32>
    %250 = arith.mulf %245, %249 : vector<6x256xf32>
    %c22_182 = arith.constant 22 : index
    %c0_183 = arith.constant 0 : index
    %c0_184 = arith.constant 0 : index
    %251 = vector.load %arg4[%c22_182, %c0_183, %c0_184] : memref<64x6x256xf32, #tpu.memory_space<vmem>>, vector<1x6x256xf32>
    %252 = vector.shape_cast %251 : vector<1x6x256xf32> to vector<6x256xf32>
    %253 = vector.shape_cast %250 : vector<6x256xf32> to vector<1x6x256xf32>
    tpu.vector_store %arg4[%c22_182, %c0_183, %c0_184], %253 {strides = array<i32>} : memref<64x6x256xf32, #tpu.memory_space<vmem>>, vector<1x6x256xf32>,
    %c23 = arith.constant 23 : index
    %c0_185 = arith.constant 0 : index
    %c0_186 = arith.constant 0 : index
    %254 = vector.load %arg1[%c23, %c0_185, %c0_186] : memref<64x6x4xf32, #tpu.memory_space<vmem>>, vector<1x6x4xf32>
    %255 = vector.shape_cast %254 : vector<1x6x4xf32> to vector<6x4xf32>
    %cst_187 = arith.constant dense<0.000000e+00> : vector<6x256xf32>
    %256 = tpu.matmul %255, %0, %cst_187 {dimension_numbers = #tpu.dot_dimension_numbers<[1], [0], [0], [1], [0, 0, 1, 1], [], []>} : vector<6x4xf32>, vector<4x256xf32>, vector<6x256xf32> -> vector<6x256xf32>
    %c23_188 = arith.constant 23 : index
    %c0_189 = arith.constant 0 : index
    %257 = vector.load %arg3[%c23_188, %c0_189] : memref<64x256xf32, #tpu.memory_space<vmem>>, vector<1x256xf32>
    %258 = vector.shape_cast %257 : vector<1x256xf32> to vector<256xf32>
    %259 = vector.shape_cast %258 : vector<256xf32> to vector<1x256xf32>
    %260 = vector.broadcast %259 : vector<1x256xf32> to vector<6x256xf32>
    %261 = arith.mulf %256, %260 : vector<6x256xf32>
    %c23_190 = arith.constant 23 : index
    %c0_191 = arith.constant 0 : index
    %c0_192 = arith.constant 0 : index
    %262 = vector.load %arg4[%c23_190, %c0_191, %c0_192] : memref<64x6x256xf32, #tpu.memory_space<vmem>>, vector<1x6x256xf32>
    %263 = vector.shape_cast %262 : vector<1x6x256xf32> to vector<6x256xf32>
    %264 = vector.shape_cast %261 : vector<6x256xf32> to vector<1x6x256xf32>
    tpu.vector_store %arg4[%c23_190, %c0_191, %c0_192], %264 {strides = array<i32>} : memref<64x6x256xf32, #tpu.memory_space<vmem>>, vector<1x6x256xf32>,
    %c24 = arith.constant 24 : index
    %c0_193 = arith.constant 0 : index
    %c0_194 = arith.constant 0 : index
    %265 = vector.load %arg1[%c24, %c0_193, %c0_194] : memref<64x6x4xf32, #tpu.memory_space<vmem>>, vector<1x6x4xf32>
    %266 = vector.shape_cast %265 : vector<1x6x4xf32> to vector<6x4xf32>
    %cst_195 = arith.constant dense<0.000000e+00> : vector<6x256xf32>
    %267 = tpu.matmul %266, %0, %cst_195 {dimension_numbers = #tpu.dot_dimension_numbers<[1], [0], [0], [1], [0, 0, 1, 1], [], []>} : vector<6x4xf32>, vector<4x256xf32>, vector<6x256xf32> -> vector<6x256xf32>
    %c24_196 = arith.constant 24 : index
    %c0_197 = arith.constant 0 : index
    %268 = vector.load %arg3[%c24_196, %c0_197] : memref<64x256xf32, #tpu.memory_space<vmem>>, vector<1x256xf32>
    %269 = vector.shape_cast %268 : vector<1x256xf32> to vector<256xf32>
    %270 = vector.shape_cast %269 : vector<256xf32> to vector<1x256xf32>
    %271 = vector.broadcast %270 : vector<1x256xf32> to vector<6x256xf32>
    %272 = arith.mulf %267, %271 : vector<6x256xf32>
    %c24_198 = arith.constant 24 : index
    %c0_199 = arith.constant 0 : index
    %c0_200 = arith.constant 0 : index
    %273 = vector.load %arg4[%c24_198, %c0_199, %c0_200] : memref<64x6x256xf32, #tpu.memory_space<vmem>>, vector<1x6x256xf32>
    %274 = vector.shape_cast %273 : vector<1x6x256xf32> to vector<6x256xf32>
    %275 = vector.shape_cast %272 : vector<6x256xf32> to vector<1x6x256xf32>
    tpu.vector_store %arg4[%c24_198, %c0_199, %c0_200], %275 {strides = array<i32>} : memref<64x6x256xf32, #tpu.memory_space<vmem>>, vector<1x6x256xf32>,
    %c25 = arith.constant 25 : index
    %c0_201 = arith.constant 0 : index
    %c0_202 = arith.constant 0 : index
    %276 = vector.load %arg1[%c25, %c0_201, %c0_202] : memref<64x6x4xf32, #tpu.memory_space<vmem>>, vector<1x6x4xf32>
    %277 = vector.shape_cast %276 : vector<1x6x4xf32> to vector<6x4xf32>
    %cst_203 = arith.constant dense<0.000000e+00> : vector<6x256xf32>
    %278 = tpu.matmul %277, %0, %cst_203 {dimension_numbers = #tpu.dot_dimension_numbers<[1], [0], [0], [1], [0, 0, 1, 1], [], []>} : vector<6x4xf32>, vector<4x256xf32>, vector<6x256xf32> -> vector<6x256xf32>
    %c25_204 = arith.constant 25 : index
    %c0_205 = arith.constant 0 : index
    %279 = vector.load %arg3[%c25_204, %c0_205] : memref<64x256xf32, #tpu.memory_space<vmem>>, vector<1x256xf32>
    %280 = vector.shape_cast %279 : vector<1x256xf32> to vector<256xf32>
    %281 = vector.shape_cast %280 : vector<256xf32> to vector<1x256xf32>
    %282 = vector.broadcast %281 : vector<1x256xf32> to vector<6x256xf32>
    %283 = arith.mulf %278, %282 : vector<6x256xf32>
    %c25_206 = arith.constant 25 : index
    %c0_207 = arith.constant 0 : index
    %c0_208 = arith.constant 0 : index
    %284 = vector.load %arg4[%c25_206, %c0_207, %c0_208] : memref<64x6x256xf32, #tpu.memory_space<vmem>>, vector<1x6x256xf32>
    %285 = vector.shape_cast %284 : vector<1x6x256xf32> to vector<6x256xf32>
    %286 = vector.shape_cast %283 : vector<6x256xf32> to vector<1x6x256xf32>
    tpu.vector_store %arg4[%c25_206, %c0_207, %c0_208], %286 {strides = array<i32>} : memref<64x6x256xf32, #tpu.memory_space<vmem>>, vector<1x6x256xf32>,
    %c26 = arith.constant 26 : index
    %c0_209 = arith.constant 0 : index
    %c0_210 = arith.constant 0 : index
    %287 = vector.load %arg1[%c26, %c0_209, %c0_210] : memref<64x6x4xf32, #tpu.memory_space<vmem>>, vector<1x6x4xf32>
    %288 = vector.shape_cast %287 : vector<1x6x4xf32> to vector<6x4xf32>
    %cst_211 = arith.constant dense<0.000000e+00> : vector<6x256xf32>
    %289 = tpu.matmul %288, %0, %cst_211 {dimension_numbers = #tpu.dot_dimension_numbers<[1], [0], [0], [1], [0, 0, 1, 1], [], []>} : vector<6x4xf32>, vector<4x256xf32>, vector<6x256xf32> -> vector<6x256xf32>
    %c26_212 = arith.constant 26 : index
    %c0_213 = arith.constant 0 : index
    %290 = vector.load %arg3[%c26_212, %c0_213] : memref<64x256xf32, #tpu.memory_space<vmem>>, vector<1x256xf32>
    %291 = vector.shape_cast %290 : vector<1x256xf32> to vector<256xf32>
    %292 = vector.shape_cast %291 : vector<256xf32> to vector<1x256xf32>
    %293 = vector.broadcast %292 : vector<1x256xf32> to vector<6x256xf32>
    %294 = arith.mulf %289, %293 : vector<6x256xf32>
    %c26_214 = arith.constant 26 : index
    %c0_215 = arith.constant 0 : index
    %c0_216 = arith.constant 0 : index
    %295 = vector.load %arg4[%c26_214, %c0_215, %c0_216] : memref<64x6x256xf32, #tpu.memory_space<vmem>>, vector<1x6x256xf32>
    %296 = vector.shape_cast %295 : vector<1x6x256xf32> to vector<6x256xf32>
    %297 = vector.shape_cast %294 : vector<6x256xf32> to vector<1x6x256xf32>
    tpu.vector_store %arg4[%c26_214, %c0_215, %c0_216], %297 {strides = array<i32>} : memref<64x6x256xf32, #tpu.memory_space<vmem>>, vector<1x6x256xf32>,
    %c27 = arith.constant 27 : index
    %c0_217 = arith.constant 0 : index
    %c0_218 = arith.constant 0 : index
    %298 = vector.load %arg1[%c27, %c0_217, %c0_218] : memref<64x6x4xf32, #tpu.memory_space<vmem>>, vector<1x6x4xf32>
    %299 = vector.shape_cast %298 : vector<1x6x4xf32> to vector<6x4xf32>
    %cst_219 = arith.constant dense<0.000000e+00> : vector<6x256xf32>
    %300 = tpu.matmul %299, %0, %cst_219 {dimension_numbers = #tpu.dot_dimension_numbers<[1], [0], [0], [1], [0, 0, 1, 1], [], []>} : vector<6x4xf32>, vector<4x256xf32>, vector<6x256xf32> -> vector<6x256xf32>
    %c27_220 = arith.constant 27 : index
    %c0_221 = arith.constant 0 : index
    %301 = vector.load %arg3[%c27_220, %c0_221] : memref<64x256xf32, #tpu.memory_space<vmem>>, vector<1x256xf32>
    %302 = vector.shape_cast %301 : vector<1x256xf32> to vector<256xf32>
    %303 = vector.shape_cast %302 : vector<256xf32> to vector<1x256xf32>
    %304 = vector.broadcast %303 : vector<1x256xf32> to vector<6x256xf32>
    %305 = arith.mulf %300, %304 : vector<6x256xf32>
    %c27_222 = arith.constant 27 : index
    %c0_223 = arith.constant 0 : index
    %c0_224 = arith.constant 0 : index
    %306 = vector.load %arg4[%c27_222, %c0_223, %c0_224] : memref<64x6x256xf32, #tpu.memory_space<vmem>>, vector<1x6x256xf32>
    %307 = vector.shape_cast %306 : vector<1x6x256xf32> to vector<6x256xf32>
    %308 = vector.shape_cast %305 : vector<6x256xf32> to vector<1x6x256xf32>
    tpu.vector_store %arg4[%c27_222, %c0_223, %c0_224], %308 {strides = array<i32>} : memref<64x6x256xf32, #tpu.memory_space<vmem>>, vector<1x6x256xf32>,
    %c28 = arith.constant 28 : index
    %c0_225 = arith.constant 0 : index
    %c0_226 = arith.constant 0 : index
    %309 = vector.load %arg1[%c28, %c0_225, %c0_226] : memref<64x6x4xf32, #tpu.memory_space<vmem>>, vector<1x6x4xf32>
    %310 = vector.shape_cast %309 : vector<1x6x4xf32> to vector<6x4xf32>
    %cst_227 = arith.constant dense<0.000000e+00> : vector<6x256xf32>
    %311 = tpu.matmul %310, %0, %cst_227 {dimension_numbers = #tpu.dot_dimension_numbers<[1], [0], [0], [1], [0, 0, 1, 1], [], []>} : vector<6x4xf32>, vector<4x256xf32>, vector<6x256xf32> -> vector<6x256xf32>
    %c28_228 = arith.constant 28 : index
    %c0_229 = arith.constant 0 : index
    %312 = vector.load %arg3[%c28_228, %c0_229] : memref<64x256xf32, #tpu.memory_space<vmem>>, vector<1x256xf32>
    %313 = vector.shape_cast %312 : vector<1x256xf32> to vector<256xf32>
    %314 = vector.shape_cast %313 : vector<256xf32> to vector<1x256xf32>
    %315 = vector.broadcast %314 : vector<1x256xf32> to vector<6x256xf32>
    %316 = arith.mulf %311, %315 : vector<6x256xf32>
    %c28_230 = arith.constant 28 : index
    %c0_231 = arith.constant 0 : index
    %c0_232 = arith.constant 0 : index
    %317 = vector.load %arg4[%c28_230, %c0_231, %c0_232] : memref<64x6x256xf32, #tpu.memory_space<vmem>>, vector<1x6x256xf32>
    %318 = vector.shape_cast %317 : vector<1x6x256xf32> to vector<6x256xf32>
    %319 = vector.shape_cast %316 : vector<6x256xf32> to vector<1x6x256xf32>
    tpu.vector_store %arg4[%c28_230, %c0_231, %c0_232], %319 {strides = array<i32>} : memref<64x6x256xf32, #tpu.memory_space<vmem>>, vector<1x6x256xf32>,
    %c29 = arith.constant 29 : index
    %c0_233 = arith.constant 0 : index
    %c0_234 = arith.constant 0 : index
    %320 = vector.load %arg1[%c29, %c0_233, %c0_234] : memref<64x6x4xf32, #tpu.memory_space<vmem>>, vector<1x6x4xf32>
    %321 = vector.shape_cast %320 : vector<1x6x4xf32> to vector<6x4xf32>
    %cst_235 = arith.constant dense<0.000000e+00> : vector<6x256xf32>
    %322 = tpu.matmul %321, %0, %cst_235 {dimension_numbers = #tpu.dot_dimension_numbers<[1], [0], [0], [1], [0, 0, 1, 1], [], []>} : vector<6x4xf32>, vector<4x256xf32>, vector<6x256xf32> -> vector<6x256xf32>
    %c29_236 = arith.constant 29 : index
    %c0_237 = arith.constant 0 : index
    %323 = vector.load %arg3[%c29_236, %c0_237] : memref<64x256xf32, #tpu.memory_space<vmem>>, vector<1x256xf32>
    %324 = vector.shape_cast %323 : vector<1x256xf32> to vector<256xf32>
    %325 = vector.shape_cast %324 : vector<256xf32> to vector<1x256xf32>
    %326 = vector.broadcast %325 : vector<1x256xf32> to vector<6x256xf32>
    %327 = arith.mulf %322, %326 : vector<6x256xf32>
    %c29_238 = arith.constant 29 : index
    %c0_239 = arith.constant 0 : index
    %c0_240 = arith.constant 0 : index
    %328 = vector.load %arg4[%c29_238, %c0_239, %c0_240] : memref<64x6x256xf32, #tpu.memory_space<vmem>>, vector<1x6x256xf32>
    %329 = vector.shape_cast %328 : vector<1x6x256xf32> to vector<6x256xf32>
    %330 = vector.shape_cast %327 : vector<6x256xf32> to vector<1x6x256xf32>
    tpu.vector_store %arg4[%c29_238, %c0_239, %c0_240], %330 {strides = array<i32>} : memref<64x6x256xf32, #tpu.memory_space<vmem>>, vector<1x6x256xf32>,
    %c30 = arith.constant 30 : index
    %c0_241 = arith.constant 0 : index
    %c0_242 = arith.constant 0 : index
    %331 = vector.load %arg1[%c30, %c0_241, %c0_242] : memref<64x6x4xf32, #tpu.memory_space<vmem>>, vector<1x6x4xf32>
    %332 = vector.shape_cast %331 : vector<1x6x4xf32> to vector<6x4xf32>
    %cst_243 = arith.constant dense<0.000000e+00> : vector<6x256xf32>
    %333 = tpu.matmul %332, %0, %cst_243 {dimension_numbers = #tpu.dot_dimension_numbers<[1], [0], [0], [1], [0, 0, 1, 1], [], []>} : vector<6x4xf32>, vector<4x256xf32>, vector<6x256xf32> -> vector<6x256xf32>
    %c30_244 = arith.constant 30 : index
    %c0_245 = arith.constant 0 : index
    %334 = vector.load %arg3[%c30_244, %c0_245] : memref<64x256xf32, #tpu.memory_space<vmem>>, vector<1x256xf32>
    %335 = vector.shape_cast %334 : vector<1x256xf32> to vector<256xf32>
    %336 = vector.shape_cast %335 : vector<256xf32> to vector<1x256xf32>
    %337 = vector.broadcast %336 : vector<1x256xf32> to vector<6x256xf32>
    %338 = arith.mulf %333, %337 : vector<6x256xf32>
    %c30_246 = arith.constant 30 : index
    %c0_247 = arith.constant 0 : index
    %c0_248 = arith.constant 0 : index
    %339 = vector.load %arg4[%c30_246, %c0_247, %c0_248] : memref<64x6x256xf32, #tpu.memory_space<vmem>>, vector<1x6x256xf32>
    %340 = vector.shape_cast %339 : vector<1x6x256xf32> to vector<6x256xf32>
    %341 = vector.shape_cast %338 : vector<6x256xf32> to vector<1x6x256xf32>
    tpu.vector_store %arg4[%c30_246, %c0_247, %c0_248], %341 {strides = array<i32>} : memref<64x6x256xf32, #tpu.memory_space<vmem>>, vector<1x6x256xf32>,
    %c31 = arith.constant 31 : index
    %c0_249 = arith.constant 0 : index
    %c0_250 = arith.constant 0 : index
    %342 = vector.load %arg1[%c31, %c0_249, %c0_250] : memref<64x6x4xf32, #tpu.memory_space<vmem>>, vector<1x6x4xf32>
    %343 = vector.shape_cast %342 : vector<1x6x4xf32> to vector<6x4xf32>
    %cst_251 = arith.constant dense<0.000000e+00> : vector<6x256xf32>
    %344 = tpu.matmul %343, %0, %cst_251 {dimension_numbers = #tpu.dot_dimension_numbers<[1], [0], [0], [1], [0, 0, 1, 1], [], []>} : vector<6x4xf32>, vector<4x256xf32>, vector<6x256xf32> -> vector<6x256xf32>
    %c31_252 = arith.constant 31 : index
    %c0_253 = arith.constant 0 : index
    %345 = vector.load %arg3[%c31_252, %c0_253] : memref<64x256xf32, #tpu.memory_space<vmem>>, vector<1x256xf32>
    %346 = vector.shape_cast %345 : vector<1x256xf32> to vector<256xf32>
    %347 = vector.shape_cast %346 : vector<256xf32> to vector<1x256xf32>
    %348 = vector.broadcast %347 : vector<1x256xf32> to vector<6x256xf32>
    %349 = arith.mulf %344, %348 : vector<6x256xf32>
    %c31_254 = arith.constant 31 : index
    %c0_255 = arith.constant 0 : index
    %c0_256 = arith.constant 0 : index
    %350 = vector.load %arg4[%c31_254, %c0_255, %c0_256] : memref<64x6x256xf32, #tpu.memory_space<vmem>>, vector<1x6x256xf32>
    %351 = vector.shape_cast %350 : vector<1x6x256xf32> to vector<6x256xf32>
    %352 = vector.shape_cast %349 : vector<6x256xf32> to vector<1x6x256xf32>
    tpu.vector_store %arg4[%c31_254, %c0_255, %c0_256], %352 {strides = array<i32>} : memref<64x6x256xf32, #tpu.memory_space<vmem>>, vector<1x6x256xf32>,
    %c32 = arith.constant 32 : index
    %c0_257 = arith.constant 0 : index
    %c0_258 = arith.constant 0 : index
    %353 = vector.load %arg1[%c32, %c0_257, %c0_258] : memref<64x6x4xf32, #tpu.memory_space<vmem>>, vector<1x6x4xf32>
    %354 = vector.shape_cast %353 : vector<1x6x4xf32> to vector<6x4xf32>
    %cst_259 = arith.constant dense<0.000000e+00> : vector<6x256xf32>
    %355 = tpu.matmul %354, %0, %cst_259 {dimension_numbers = #tpu.dot_dimension_numbers<[1], [0], [0], [1], [0, 0, 1, 1], [], []>} : vector<6x4xf32>, vector<4x256xf32>, vector<6x256xf32> -> vector<6x256xf32>
    %c32_260 = arith.constant 32 : index
    %c0_261 = arith.constant 0 : index
    %356 = vector.load %arg3[%c32_260, %c0_261] : memref<64x256xf32, #tpu.memory_space<vmem>>, vector<1x256xf32>
    %357 = vector.shape_cast %356 : vector<1x256xf32> to vector<256xf32>
    %358 = vector.shape_cast %357 : vector<256xf32> to vector<1x256xf32>
    %359 = vector.broadcast %358 : vector<1x256xf32> to vector<6x256xf32>
    %360 = arith.mulf %355, %359 : vector<6x256xf32>
    %c32_262 = arith.constant 32 : index
    %c0_263 = arith.constant 0 : index
    %c0_264 = arith.constant 0 : index
    %361 = vector.load %arg4[%c32_262, %c0_263, %c0_264] : memref<64x6x256xf32, #tpu.memory_space<vmem>>, vector<1x6x256xf32>
    %362 = vector.shape_cast %361 : vector<1x6x256xf32> to vector<6x256xf32>
    %363 = vector.shape_cast %360 : vector<6x256xf32> to vector<1x6x256xf32>
    tpu.vector_store %arg4[%c32_262, %c0_263, %c0_264], %363 {strides = array<i32>} : memref<64x6x256xf32, #tpu.memory_space<vmem>>, vector<1x6x256xf32>,
    %c33 = arith.constant 33 : index
    %c0_265 = arith.constant 0 : index
    %c0_266 = arith.constant 0 : index
    %364 = vector.load %arg1[%c33, %c0_265, %c0_266] : memref<64x6x4xf32, #tpu.memory_space<vmem>>, vector<1x6x4xf32>
    %365 = vector.shape_cast %364 : vector<1x6x4xf32> to vector<6x4xf32>
    %cst_267 = arith.constant dense<0.000000e+00> : vector<6x256xf32>
    %366 = tpu.matmul %365, %0, %cst_267 {dimension_numbers = #tpu.dot_dimension_numbers<[1], [0], [0], [1], [0, 0, 1, 1], [], []>} : vector<6x4xf32>, vector<4x256xf32>, vector<6x256xf32> -> vector<6x256xf32>
    %c33_268 = arith.constant 33 : index
    %c0_269 = arith.constant 0 : index
    %367 = vector.load %arg3[%c33_268, %c0_269] : memref<64x256xf32, #tpu.memory_space<vmem>>, vector<1x256xf32>
    %368 = vector.shape_cast %367 : vector<1x256xf32> to vector<256xf32>
    %369 = vector.shape_cast %368 : vector<256xf32> to vector<1x256xf32>
    %370 = vector.broadcast %369 : vector<1x256xf32> to vector<6x256xf32>
    %371 = arith.mulf %366, %370 : vector<6x256xf32>
    %c33_270 = arith.constant 33 : index
    %c0_271 = arith.constant 0 : index
    %c0_272 = arith.constant 0 : index
    %372 = vector.load %arg4[%c33_270, %c0_271, %c0_272] : memref<64x6x256xf32, #tpu.memory_space<vmem>>, vector<1x6x256xf32>
    %373 = vector.shape_cast %372 : vector<1x6x256xf32> to vector<6x256xf32>
    %374 = vector.shape_cast %371 : vector<6x256xf32> to vector<1x6x256xf32>
    tpu.vector_store %arg4[%c33_270, %c0_271, %c0_272], %374 {strides = array<i32>} : memref<64x6x256xf32, #tpu.memory_space<vmem>>, vector<1x6x256xf32>,
    %c34 = arith.constant 34 : index
    %c0_273 = arith.constant 0 : index
    %c0_274 = arith.constant 0 : index
    %375 = vector.load %arg1[%c34, %c0_273, %c0_274] : memref<64x6x4xf32, #tpu.memory_space<vmem>>, vector<1x6x4xf32>
    %376 = vector.shape_cast %375 : vector<1x6x4xf32> to vector<6x4xf32>
    %cst_275 = arith.constant dense<0.000000e+00> : vector<6x256xf32>
    %377 = tpu.matmul %376, %0, %cst_275 {dimension_numbers = #tpu.dot_dimension_numbers<[1], [0], [0], [1], [0, 0, 1, 1], [], []>} : vector<6x4xf32>, vector<4x256xf32>, vector<6x256xf32> -> vector<6x256xf32>
    %c34_276 = arith.constant 34 : index
    %c0_277 = arith.constant 0 : index
    %378 = vector.load %arg3[%c34_276, %c0_277] : memref<64x256xf32, #tpu.memory_space<vmem>>, vector<1x256xf32>
    %379 = vector.shape_cast %378 : vector<1x256xf32> to vector<256xf32>
    %380 = vector.shape_cast %379 : vector<256xf32> to vector<1x256xf32>
    %381 = vector.broadcast %380 : vector<1x256xf32> to vector<6x256xf32>
    %382 = arith.mulf %377, %381 : vector<6x256xf32>
    %c34_278 = arith.constant 34 : index
    %c0_279 = arith.constant 0 : index
    %c0_280 = arith.constant 0 : index
    %383 = vector.load %arg4[%c34_278, %c0_279, %c0_280] : memref<64x6x256xf32, #tpu.memory_space<vmem>>, vector<1x6x256xf32>
    %384 = vector.shape_cast %383 : vector<1x6x256xf32> to vector<6x256xf32>
    %385 = vector.shape_cast %382 : vector<6x256xf32> to vector<1x6x256xf32>
    tpu.vector_store %arg4[%c34_278, %c0_279, %c0_280], %385 {strides = array<i32>} : memref<64x6x256xf32, #tpu.memory_space<vmem>>, vector<1x6x256xf32>,
    %c35 = arith.constant 35 : index
    %c0_281 = arith.constant 0 : index
    %c0_282 = arith.constant 0 : index
    %386 = vector.load %arg1[%c35, %c0_281, %c0_282] : memref<64x6x4xf32, #tpu.memory_space<vmem>>, vector<1x6x4xf32>
    %387 = vector.shape_cast %386 : vector<1x6x4xf32> to vector<6x4xf32>
    %cst_283 = arith.constant dense<0.000000e+00> : vector<6x256xf32>
    %388 = tpu.matmul %387, %0, %cst_283 {dimension_numbers = #tpu.dot_dimension_numbers<[1], [0], [0], [1], [0, 0, 1, 1], [], []>} : vector<6x4xf32>, vector<4x256xf32>, vector<6x256xf32> -> vector<6x256xf32>
    %c35_284 = arith.constant 35 : index
    %c0_285 = arith.constant 0 : index
    %389 = vector.load %arg3[%c35_284, %c0_285] : memref<64x256xf32, #tpu.memory_space<vmem>>, vector<1x256xf32>
    %390 = vector.shape_cast %389 : vector<1x256xf32> to vector<256xf32>
    %391 = vector.shape_cast %390 : vector<256xf32> to vector<1x256xf32>
    %392 = vector.broadcast %391 : vector<1x256xf32> to vector<6x256xf32>
    %393 = arith.mulf %388, %392 : vector<6x256xf32>
    %c35_286 = arith.constant 35 : index
    %c0_287 = arith.constant 0 : index
    %c0_288 = arith.constant 0 : index
    %394 = vector.load %arg4[%c35_286, %c0_287, %c0_288] : memref<64x6x256xf32, #tpu.memory_space<vmem>>, vector<1x6x256xf32>
    %395 = vector.shape_cast %394 : vector<1x6x256xf32> to vector<6x256xf32>
    %396 = vector.shape_cast %393 : vector<6x256xf32> to vector<1x6x256xf32>
    tpu.vector_store %arg4[%c35_286, %c0_287, %c0_288], %396 {strides = array<i32>} : memref<64x6x256xf32, #tpu.memory_space<vmem>>, vector<1x6x256xf32>,
    %c36 = arith.constant 36 : index
    %c0_289 = arith.constant 0 : index
    %c0_290 = arith.constant 0 : index
    %397 = vector.load %arg1[%c36, %c0_289, %c0_290] : memref<64x6x4xf32, #tpu.memory_space<vmem>>, vector<1x6x4xf32>
    %398 = vector.shape_cast %397 : vector<1x6x4xf32> to vector<6x4xf32>
    %cst_291 = arith.constant dense<0.000000e+00> : vector<6x256xf32>
    %399 = tpu.matmul %398, %0, %cst_291 {dimension_numbers = #tpu.dot_dimension_numbers<[1], [0], [0], [1], [0, 0, 1, 1], [], []>} : vector<6x4xf32>, vector<4x256xf32>, vector<6x256xf32> -> vector<6x256xf32>
    %c36_292 = arith.constant 36 : index
    %c0_293 = arith.constant 0 : index
    %400 = vector.load %arg3[%c36_292, %c0_293] : memref<64x256xf32, #tpu.memory_space<vmem>>, vector<1x256xf32>
    %401 = vector.shape_cast %400 : vector<1x256xf32> to vector<256xf32>
    %402 = vector.shape_cast %401 : vector<256xf32> to vector<1x256xf32>
    %403 = vector.broadcast %402 : vector<1x256xf32> to vector<6x256xf32>
    %404 = arith.mulf %399, %403 : vector<6x256xf32>
    %c36_294 = arith.constant 36 : index
    %c0_295 = arith.constant 0 : index
    %c0_296 = arith.constant 0 : index
    %405 = vector.load %arg4[%c36_294, %c0_295, %c0_296] : memref<64x6x256xf32, #tpu.memory_space<vmem>>, vector<1x6x256xf32>
    %406 = vector.shape_cast %405 : vector<1x6x256xf32> to vector<6x256xf32>
    %407 = vector.shape_cast %404 : vector<6x256xf32> to vector<1x6x256xf32>
    tpu.vector_store %arg4[%c36_294, %c0_295, %c0_296], %407 {strides = array<i32>} : memref<64x6x256xf32, #tpu.memory_space<vmem>>, vector<1x6x256xf32>,
    %c37 = arith.constant 37 : index
    %c0_297 = arith.constant 0 : index
    %c0_298 = arith.constant 0 : index
    %408 = vector.load %arg1[%c37, %c0_297, %c0_298] : memref<64x6x4xf32, #tpu.memory_space<vmem>>, vector<1x6x4xf32>
    %409 = vector.shape_cast %408 : vector<1x6x4xf32> to vector<6x4xf32>
    %cst_299 = arith.constant dense<0.000000e+00> : vector<6x256xf32>
    %410 = tpu.matmul %409, %0, %cst_299 {dimension_numbers = #tpu.dot_dimension_numbers<[1], [0], [0], [1], [0, 0, 1, 1], [], []>} : vector<6x4xf32>, vector<4x256xf32>, vector<6x256xf32> -> vector<6x256xf32>
    %c37_300 = arith.constant 37 : index
    %c0_301 = arith.constant 0 : index
    %411 = vector.load %arg3[%c37_300, %c0_301] : memref<64x256xf32, #tpu.memory_space<vmem>>, vector<1x256xf32>
    %412 = vector.shape_cast %411 : vector<1x256xf32> to vector<256xf32>
    %413 = vector.shape_cast %412 : vector<256xf32> to vector<1x256xf32>
    %414 = vector.broadcast %413 : vector<1x256xf32> to vector<6x256xf32>
    %415 = arith.mulf %410, %414 : vector<6x256xf32>
    %c37_302 = arith.constant 37 : index
    %c0_303 = arith.constant 0 : index
    %c0_304 = arith.constant 0 : index
    %416 = vector.load %arg4[%c37_302, %c0_303, %c0_304] : memref<64x6x256xf32, #tpu.memory_space<vmem>>, vector<1x6x256xf32>
    %417 = vector.shape_cast %416 : vector<1x6x256xf32> to vector<6x256xf32>
    %418 = vector.shape_cast %415 : vector<6x256xf32> to vector<1x6x256xf32>
    tpu.vector_store %arg4[%c37_302, %c0_303, %c0_304], %418 {strides = array<i32>} : memref<64x6x256xf32, #tpu.memory_space<vmem>>, vector<1x6x256xf32>,
    %c38 = arith.constant 38 : index
    %c0_305 = arith.constant 0 : index
    %c0_306 = arith.constant 0 : index
    %419 = vector.load %arg1[%c38, %c0_305, %c0_306] : memref<64x6x4xf32, #tpu.memory_space<vmem>>, vector<1x6x4xf32>
    %420 = vector.shape_cast %419 : vector<1x6x4xf32> to vector<6x4xf32>
    %cst_307 = arith.constant dense<0.000000e+00> : vector<6x256xf32>
    %421 = tpu.matmul %420, %0, %cst_307 {dimension_numbers = #tpu.dot_dimension_numbers<[1], [0], [0], [1], [0, 0, 1, 1], [], []>} : vector<6x4xf32>, vector<4x256xf32>, vector<6x256xf32> -> vector<6x256xf32>
    %c38_308 = arith.constant 38 : index
    %c0_309 = arith.constant 0 : index
    %422 = vector.load %arg3[%c38_308, %c0_309] : memref<64x256xf32, #tpu.memory_space<vmem>>, vector<1x256xf32>
    %423 = vector.shape_cast %422 : vector<1x256xf32> to vector<256xf32>
    %424 = vector.shape_cast %423 : vector<256xf32> to vector<1x256xf32>
    %425 = vector.broadcast %424 : vector<1x256xf32> to vector<6x256xf32>
    %426 = arith.mulf %421, %425 : vector<6x256xf32>
    %c38_310 = arith.constant 38 : index
    %c0_311 = arith.constant 0 : index
    %c0_312 = arith.constant 0 : index
    %427 = vector.load %arg4[%c38_310, %c0_311, %c0_312] : memref<64x6x256xf32, #tpu.memory_space<vmem>>, vector<1x6x256xf32>
    %428 = vector.shape_cast %427 : vector<1x6x256xf32> to vector<6x256xf32>
    %429 = vector.shape_cast %426 : vector<6x256xf32> to vector<1x6x256xf32>
    tpu.vector_store %arg4[%c38_310, %c0_311, %c0_312], %429 {strides = array<i32>} : memref<64x6x256xf32, #tpu.memory_space<vmem>>, vector<1x6x256xf32>,
    %c39 = arith.constant 39 : index
    %c0_313 = arith.constant 0 : index
    %c0_314 = arith.constant 0 : index
    %430 = vector.load %arg1[%c39, %c0_313, %c0_314] : memref<64x6x4xf32, #tpu.memory_space<vmem>>, vector<1x6x4xf32>
    %431 = vector.shape_cast %430 : vector<1x6x4xf32> to vector<6x4xf32>
    %cst_315 = arith.constant dense<0.000000e+00> : vector<6x256xf32>
    %432 = tpu.matmul %431, %0, %cst_315 {dimension_numbers = #tpu.dot_dimension_numbers<[1], [0], [0], [1], [0, 0, 1, 1], [], []>} : vector<6x4xf32>, vector<4x256xf32>, vector<6x256xf32> -> vector<6x256xf32>
    %c39_316 = arith.constant 39 : index
    %c0_317 = arith.constant 0 : index
    %433 = vector.load %arg3[%c39_316, %c0_317] : memref<64x256xf32, #tpu.memory_space<vmem>>, vector<1x256xf32>
    %434 = vector.shape_cast %433 : vector<1x256xf32> to vector<256xf32>
    %435 = vector.shape_cast %434 : vector<256xf32> to vector<1x256xf32>
    %436 = vector.broadcast %435 : vector<1x256xf32> to vector<6x256xf32>
    %437 = arith.mulf %432, %436 : vector<6x256xf32>
    %c39_318 = arith.constant 39 : index
    %c0_319 = arith.constant 0 : index
    %c0_320 = arith.constant 0 : index
    %438 = vector.load %arg4[%c39_318, %c0_319, %c0_320] : memref<64x6x256xf32, #tpu.memory_space<vmem>>, vector<1x6x256xf32>
    %439 = vector.shape_cast %438 : vector<1x6x256xf32> to vector<6x256xf32>
    %440 = vector.shape_cast %437 : vector<6x256xf32> to vector<1x6x256xf32>
    tpu.vector_store %arg4[%c39_318, %c0_319, %c0_320], %440 {strides = array<i32>} : memref<64x6x256xf32, #tpu.memory_space<vmem>>, vector<1x6x256xf32>,
    %c40 = arith.constant 40 : index
    %c0_321 = arith.constant 0 : index
    %c0_322 = arith.constant 0 : index
    %441 = vector.load %arg1[%c40, %c0_321, %c0_322] : memref<64x6x4xf32, #tpu.memory_space<vmem>>, vector<1x6x4xf32>
    %442 = vector.shape_cast %441 : vector<1x6x4xf32> to vector<6x4xf32>
    %cst_323 = arith.constant dense<0.000000e+00> : vector<6x256xf32>
    %443 = tpu.matmul %442, %0, %cst_323 {dimension_numbers = #tpu.dot_dimension_numbers<[1], [0], [0], [1], [0, 0, 1, 1], [], []>} : vector<6x4xf32>, vector<4x256xf32>, vector<6x256xf32> -> vector<6x256xf32>
    %c40_324 = arith.constant 40 : index
    %c0_325 = arith.constant 0 : index
    %444 = vector.load %arg3[%c40_324, %c0_325] : memref<64x256xf32, #tpu.memory_space<vmem>>, vector<1x256xf32>
    %445 = vector.shape_cast %444 : vector<1x256xf32> to vector<256xf32>
    %446 = vector.shape_cast %445 : vector<256xf32> to vector<1x256xf32>
    %447 = vector.broadcast %446 : vector<1x256xf32> to vector<6x256xf32>
    %448 = arith.mulf %443, %447 : vector<6x256xf32>
    %c40_326 = arith.constant 40 : index
    %c0_327 = arith.constant 0 : index
    %c0_328 = arith.constant 0 : index
    %449 = vector.load %arg4[%c40_326, %c0_327, %c0_328] : memref<64x6x256xf32, #tpu.memory_space<vmem>>, vector<1x6x256xf32>
    %450 = vector.shape_cast %449 : vector<1x6x256xf32> to vector<6x256xf32>
    %451 = vector.shape_cast %448 : vector<6x256xf32> to vector<1x6x256xf32>
    tpu.vector_store %arg4[%c40_326, %c0_327, %c0_328], %451 {strides = array<i32>} : memref<64x6x256xf32, #tpu.memory_space<vmem>>, vector<1x6x256xf32>,
    %c41 = arith.constant 41 : index
    %c0_329 = arith.constant 0 : index
    %c0_330 = arith.constant 0 : index
    %452 = vector.load %arg1[%c41, %c0_329, %c0_330] : memref<64x6x4xf32, #tpu.memory_space<vmem>>, vector<1x6x4xf32>
    %453 = vector.shape_cast %452 : vector<1x6x4xf32> to vector<6x4xf32>
    %cst_331 = arith.constant dense<0.000000e+00> : vector<6x256xf32>
    %454 = tpu.matmul %453, %0, %cst_331 {dimension_numbers = #tpu.dot_dimension_numbers<[1], [0], [0], [1], [0, 0, 1, 1], [], []>} : vector<6x4xf32>, vector<4x256xf32>, vector<6x256xf32> -> vector<6x256xf32>
    %c41_332 = arith.constant 41 : index
    %c0_333 = arith.constant 0 : index
    %455 = vector.load %arg3[%c41_332, %c0_333] : memref<64x256xf32, #tpu.memory_space<vmem>>, vector<1x256xf32>
    %456 = vector.shape_cast %455 : vector<1x256xf32> to vector<256xf32>
    %457 = vector.shape_cast %456 : vector<256xf32> to vector<1x256xf32>
    %458 = vector.broadcast %457 : vector<1x256xf32> to vector<6x256xf32>
    %459 = arith.mulf %454, %458 : vector<6x256xf32>
    %c41_334 = arith.constant 41 : index
    %c0_335 = arith.constant 0 : index
    %c0_336 = arith.constant 0 : index
    %460 = vector.load %arg4[%c41_334, %c0_335, %c0_336] : memref<64x6x256xf32, #tpu.memory_space<vmem>>, vector<1x6x256xf32>
    %461 = vector.shape_cast %460 : vector<1x6x256xf32> to vector<6x256xf32>
    %462 = vector.shape_cast %459 : vector<6x256xf32> to vector<1x6x256xf32>
    tpu.vector_store %arg4[%c41_334, %c0_335, %c0_336], %462 {strides = array<i32>} : memref<64x6x256xf32, #tpu.memory_space<vmem>>, vector<1x6x256xf32>,
    %c42 = arith.constant 42 : index
    %c0_337 = arith.constant 0 : index
    %c0_338 = arith.constant 0 : index
    %463 = vector.load %arg1[%c42, %c0_337, %c0_338] : memref<64x6x4xf32, #tpu.memory_space<vmem>>, vector<1x6x4xf32>
    %464 = vector.shape_cast %463 : vector<1x6x4xf32> to vector<6x4xf32>
    %cst_339 = arith.constant dense<0.000000e+00> : vector<6x256xf32>
    %465 = tpu.matmul %464, %0, %cst_339 {dimension_numbers = #tpu.dot_dimension_numbers<[1], [0], [0], [1], [0, 0, 1, 1], [], []>} : vector<6x4xf32>, vector<4x256xf32>, vector<6x256xf32> -> vector<6x256xf32>
    %c42_340 = arith.constant 42 : index
    %c0_341 = arith.constant 0 : index
    %466 = vector.load %arg3[%c42_340, %c0_341] : memref<64x256xf32, #tpu.memory_space<vmem>>, vector<1x256xf32>
    %467 = vector.shape_cast %466 : vector<1x256xf32> to vector<256xf32>
    %468 = vector.shape_cast %467 : vector<256xf32> to vector<1x256xf32>
    %469 = vector.broadcast %468 : vector<1x256xf32> to vector<6x256xf32>
    %470 = arith.mulf %465, %469 : vector<6x256xf32>
    %c42_342 = arith.constant 42 : index
    %c0_343 = arith.constant 0 : index
    %c0_344 = arith.constant 0 : index
    %471 = vector.load %arg4[%c42_342, %c0_343, %c0_344] : memref<64x6x256xf32, #tpu.memory_space<vmem>>, vector<1x6x256xf32>
    %472 = vector.shape_cast %471 : vector<1x6x256xf32> to vector<6x256xf32>
    %473 = vector.shape_cast %470 : vector<6x256xf32> to vector<1x6x256xf32>
    tpu.vector_store %arg4[%c42_342, %c0_343, %c0_344], %473 {strides = array<i32>} : memref<64x6x256xf32, #tpu.memory_space<vmem>>, vector<1x6x256xf32>,
    %c43 = arith.constant 43 : index
    %c0_345 = arith.constant 0 : index
    %c0_346 = arith.constant 0 : index
    %474 = vector.load %arg1[%c43, %c0_345, %c0_346] : memref<64x6x4xf32, #tpu.memory_space<vmem>>, vector<1x6x4xf32>
    %475 = vector.shape_cast %474 : vector<1x6x4xf32> to vector<6x4xf32>
    %cst_347 = arith.constant dense<0.000000e+00> : vector<6x256xf32>
    %476 = tpu.matmul %475, %0, %cst_347 {dimension_numbers = #tpu.dot_dimension_numbers<[1], [0], [0], [1], [0, 0, 1, 1], [], []>} : vector<6x4xf32>, vector<4x256xf32>, vector<6x256xf32> -> vector<6x256xf32>
    %c43_348 = arith.constant 43 : index
    %c0_349 = arith.constant 0 : index
    %477 = vector.load %arg3[%c43_348, %c0_349] : memref<64x256xf32, #tpu.memory_space<vmem>>, vector<1x256xf32>
    %478 = vector.shape_cast %477 : vector<1x256xf32> to vector<256xf32>
    %479 = vector.shape_cast %478 : vector<256xf32> to vector<1x256xf32>
    %480 = vector.broadcast %479 : vector<1x256xf32> to vector<6x256xf32>
    %481 = arith.mulf %476, %480 : vector<6x256xf32>
    %c43_350 = arith.constant 43 : index
    %c0_351 = arith.constant 0 : index
    %c0_352 = arith.constant 0 : index
    %482 = vector.load %arg4[%c43_350, %c0_351, %c0_352] : memref<64x6x256xf32, #tpu.memory_space<vmem>>, vector<1x6x256xf32>
    %483 = vector.shape_cast %482 : vector<1x6x256xf32> to vector<6x256xf32>
    %484 = vector.shape_cast %481 : vector<6x256xf32> to vector<1x6x256xf32>
    tpu.vector_store %arg4[%c43_350, %c0_351, %c0_352], %484 {strides = array<i32>} : memref<64x6x256xf32, #tpu.memory_space<vmem>>, vector<1x6x256xf32>,
    %c44 = arith.constant 44 : index
    %c0_353 = arith.constant 0 : index
    %c0_354 = arith.constant 0 : index
    %485 = vector.load %arg1[%c44, %c0_353, %c0_354] : memref<64x6x4xf32, #tpu.memory_space<vmem>>, vector<1x6x4xf32>
    %486 = vector.shape_cast %485 : vector<1x6x4xf32> to vector<6x4xf32>
    %cst_355 = arith.constant dense<0.000000e+00> : vector<6x256xf32>
    %487 = tpu.matmul %486, %0, %cst_355 {dimension_numbers = #tpu.dot_dimension_numbers<[1], [0], [0], [1], [0, 0, 1, 1], [], []>} : vector<6x4xf32>, vector<4x256xf32>, vector<6x256xf32> -> vector<6x256xf32>
    %c44_356 = arith.constant 44 : index
    %c0_357 = arith.constant 0 : index
    %488 = vector.load %arg3[%c44_356, %c0_357] : memref<64x256xf32, #tpu.memory_space<vmem>>, vector<1x256xf32>
    %489 = vector.shape_cast %488 : vector<1x256xf32> to vector<256xf32>
    %490 = vector.shape_cast %489 : vector<256xf32> to vector<1x256xf32>
    %491 = vector.broadcast %490 : vector<1x256xf32> to vector<6x256xf32>
    %492 = arith.mulf %487, %491 : vector<6x256xf32>
    %c44_358 = arith.constant 44 : index
    %c0_359 = arith.constant 0 : index
    %c0_360 = arith.constant 0 : index
    %493 = vector.load %arg4[%c44_358, %c0_359, %c0_360] : memref<64x6x256xf32, #tpu.memory_space<vmem>>, vector<1x6x256xf32>
    %494 = vector.shape_cast %493 : vector<1x6x256xf32> to vector<6x256xf32>
    %495 = vector.shape_cast %492 : vector<6x256xf32> to vector<1x6x256xf32>
    tpu.vector_store %arg4[%c44_358, %c0_359, %c0_360], %495 {strides = array<i32>} : memref<64x6x256xf32, #tpu.memory_space<vmem>>, vector<1x6x256xf32>,
    %c45 = arith.constant 45 : index
    %c0_361 = arith.constant 0 : index
    %c0_362 = arith.constant 0 : index
    %496 = vector.load %arg1[%c45, %c0_361, %c0_362] : memref<64x6x4xf32, #tpu.memory_space<vmem>>, vector<1x6x4xf32>
    %497 = vector.shape_cast %496 : vector<1x6x4xf32> to vector<6x4xf32>
    %cst_363 = arith.constant dense<0.000000e+00> : vector<6x256xf32>
    %498 = tpu.matmul %497, %0, %cst_363 {dimension_numbers = #tpu.dot_dimension_numbers<[1], [0], [0], [1], [0, 0, 1, 1], [], []>} : vector<6x4xf32>, vector<4x256xf32>, vector<6x256xf32> -> vector<6x256xf32>
    %c45_364 = arith.constant 45 : index
    %c0_365 = arith.constant 0 : index
    %499 = vector.load %arg3[%c45_364, %c0_365] : memref<64x256xf32, #tpu.memory_space<vmem>>, vector<1x256xf32>
    %500 = vector.shape_cast %499 : vector<1x256xf32> to vector<256xf32>
    %501 = vector.shape_cast %500 : vector<256xf32> to vector<1x256xf32>
    %502 = vector.broadcast %501 : vector<1x256xf32> to vector<6x256xf32>
    %503 = arith.mulf %498, %502 : vector<6x256xf32>
    %c45_366 = arith.constant 45 : index
    %c0_367 = arith.constant 0 : index
    %c0_368 = arith.constant 0 : index
    %504 = vector.load %arg4[%c45_366, %c0_367, %c0_368] : memref<64x6x256xf32, #tpu.memory_space<vmem>>, vector<1x6x256xf32>
    %505 = vector.shape_cast %504 : vector<1x6x256xf32> to vector<6x256xf32>
    %506 = vector.shape_cast %503 : vector<6x256xf32> to vector<1x6x256xf32>
    tpu.vector_store %arg4[%c45_366, %c0_367, %c0_368], %506 {strides = array<i32>} : memref<64x6x256xf32, #tpu.memory_space<vmem>>, vector<1x6x256xf32>,
    %c46 = arith.constant 46 : index
    %c0_369 = arith.constant 0 : index
    %c0_370 = arith.constant 0 : index
    %507 = vector.load %arg1[%c46, %c0_369, %c0_370] : memref<64x6x4xf32, #tpu.memory_space<vmem>>, vector<1x6x4xf32>
    %508 = vector.shape_cast %507 : vector<1x6x4xf32> to vector<6x4xf32>
    %cst_371 = arith.constant dense<0.000000e+00> : vector<6x256xf32>
    %509 = tpu.matmul %508, %0, %cst_371 {dimension_numbers = #tpu.dot_dimension_numbers<[1], [0], [0], [1], [0, 0, 1, 1], [], []>} : vector<6x4xf32>, vector<4x256xf32>, vector<6x256xf32> -> vector<6x256xf32>
    %c46_372 = arith.constant 46 : index
    %c0_373 = arith.constant 0 : index
    %510 = vector.load %arg3[%c46_372, %c0_373] : memref<64x256xf32, #tpu.memory_space<vmem>>, vector<1x256xf32>
    %511 = vector.shape_cast %510 : vector<1x256xf32> to vector<256xf32>
    %512 = vector.shape_cast %511 : vector<256xf32> to vector<1x256xf32>
    %513 = vector.broadcast %512 : vector<1x256xf32> to vector<6x256xf32>
    %514 = arith.mulf %509, %513 : vector<6x256xf32>
    %c46_374 = arith.constant 46 : index
    %c0_375 = arith.constant 0 : index
    %c0_376 = arith.constant 0 : index
    %515 = vector.load %arg4[%c46_374, %c0_375, %c0_376] : memref<64x6x256xf32, #tpu.memory_space<vmem>>, vector<1x6x256xf32>
    %516 = vector.shape_cast %515 : vector<1x6x256xf32> to vector<6x256xf32>
    %517 = vector.shape_cast %514 : vector<6x256xf32> to vector<1x6x256xf32>
    tpu.vector_store %arg4[%c46_374, %c0_375, %c0_376], %517 {strides = array<i32>} : memref<64x6x256xf32, #tpu.memory_space<vmem>>, vector<1x6x256xf32>,
    %c47 = arith.constant 47 : index
    %c0_377 = arith.constant 0 : index
    %c0_378 = arith.constant 0 : index
    %518 = vector.load %arg1[%c47, %c0_377, %c0_378] : memref<64x6x4xf32, #tpu.memory_space<vmem>>, vector<1x6x4xf32>
    %519 = vector.shape_cast %518 : vector<1x6x4xf32> to vector<6x4xf32>
    %cst_379 = arith.constant dense<0.000000e+00> : vector<6x256xf32>
    %520 = tpu.matmul %519, %0, %cst_379 {dimension_numbers = #tpu.dot_dimension_numbers<[1], [0], [0], [1], [0, 0, 1, 1], [], []>} : vector<6x4xf32>, vector<4x256xf32>, vector<6x256xf32> -> vector<6x256xf32>
    %c47_380 = arith.constant 47 : index
    %c0_381 = arith.constant 0 : index
    %521 = vector.load %arg3[%c47_380, %c0_381] : memref<64x256xf32, #tpu.memory_space<vmem>>, vector<1x256xf32>
    %522 = vector.shape_cast %521 : vector<1x256xf32> to vector<256xf32>
    %523 = vector.shape_cast %522 : vector<256xf32> to vector<1x256xf32>
    %524 = vector.broadcast %523 : vector<1x256xf32> to vector<6x256xf32>
    %525 = arith.mulf %520, %524 : vector<6x256xf32>
    %c47_382 = arith.constant 47 : index
    %c0_383 = arith.constant 0 : index
    %c0_384 = arith.constant 0 : index
    %526 = vector.load %arg4[%c47_382, %c0_383, %c0_384] : memref<64x6x256xf32, #tpu.memory_space<vmem>>, vector<1x6x256xf32>
    %527 = vector.shape_cast %526 : vector<1x6x256xf32> to vector<6x256xf32>
    %528 = vector.shape_cast %525 : vector<6x256xf32> to vector<1x6x256xf32>
    tpu.vector_store %arg4[%c47_382, %c0_383, %c0_384], %528 {strides = array<i32>} : memref<64x6x256xf32, #tpu.memory_space<vmem>>, vector<1x6x256xf32>,
    %c48 = arith.constant 48 : index
    %c0_385 = arith.constant 0 : index
    %c0_386 = arith.constant 0 : index
    %529 = vector.load %arg1[%c48, %c0_385, %c0_386] : memref<64x6x4xf32, #tpu.memory_space<vmem>>, vector<1x6x4xf32>
    %530 = vector.shape_cast %529 : vector<1x6x4xf32> to vector<6x4xf32>
    %cst_387 = arith.constant dense<0.000000e+00> : vector<6x256xf32>
    %531 = tpu.matmul %530, %0, %cst_387 {dimension_numbers = #tpu.dot_dimension_numbers<[1], [0], [0], [1], [0, 0, 1, 1], [], []>} : vector<6x4xf32>, vector<4x256xf32>, vector<6x256xf32> -> vector<6x256xf32>
    %c48_388 = arith.constant 48 : index
    %c0_389 = arith.constant 0 : index
    %532 = vector.load %arg3[%c48_388, %c0_389] : memref<64x256xf32, #tpu.memory_space<vmem>>, vector<1x256xf32>
    %533 = vector.shape_cast %532 : vector<1x256xf32> to vector<256xf32>
    %534 = vector.shape_cast %533 : vector<256xf32> to vector<1x256xf32>
    %535 = vector.broadcast %534 : vector<1x256xf32> to vector<6x256xf32>
    %536 = arith.mulf %531, %535 : vector<6x256xf32>
    %c48_390 = arith.constant 48 : index
    %c0_391 = arith.constant 0 : index
    %c0_392 = arith.constant 0 : index
    %537 = vector.load %arg4[%c48_390, %c0_391, %c0_392] : memref<64x6x256xf32, #tpu.memory_space<vmem>>, vector<1x6x256xf32>
    %538 = vector.shape_cast %537 : vector<1x6x256xf32> to vector<6x256xf32>
    %539 = vector.shape_cast %536 : vector<6x256xf32> to vector<1x6x256xf32>
    tpu.vector_store %arg4[%c48_390, %c0_391, %c0_392], %539 {strides = array<i32>} : memref<64x6x256xf32, #tpu.memory_space<vmem>>, vector<1x6x256xf32>,
    %c49 = arith.constant 49 : index
    %c0_393 = arith.constant 0 : index
    %c0_394 = arith.constant 0 : index
    %540 = vector.load %arg1[%c49, %c0_393, %c0_394] : memref<64x6x4xf32, #tpu.memory_space<vmem>>, vector<1x6x4xf32>
    %541 = vector.shape_cast %540 : vector<1x6x4xf32> to vector<6x4xf32>
    %cst_395 = arith.constant dense<0.000000e+00> : vector<6x256xf32>
    %542 = tpu.matmul %541, %0, %cst_395 {dimension_numbers = #tpu.dot_dimension_numbers<[1], [0], [0], [1], [0, 0, 1, 1], [], []>} : vector<6x4xf32>, vector<4x256xf32>, vector<6x256xf32> -> vector<6x256xf32>
    %c49_396 = arith.constant 49 : index
    %c0_397 = arith.constant 0 : index
    %543 = vector.load %arg3[%c49_396, %c0_397] : memref<64x256xf32, #tpu.memory_space<vmem>>, vector<1x256xf32>
    %544 = vector.shape_cast %543 : vector<1x256xf32> to vector<256xf32>
    %545 = vector.shape_cast %544 : vector<256xf32> to vector<1x256xf32>
    %546 = vector.broadcast %545 : vector<1x256xf32> to vector<6x256xf32>
    %547 = arith.mulf %542, %546 : vector<6x256xf32>
    %c49_398 = arith.constant 49 : index
    %c0_399 = arith.constant 0 : index
    %c0_400 = arith.constant 0 : index
    %548 = vector.load %arg4[%c49_398, %c0_399, %c0_400] : memref<64x6x256xf32, #tpu.memory_space<vmem>>, vector<1x6x256xf32>
    %549 = vector.shape_cast %548 : vector<1x6x256xf32> to vector<6x256xf32>
    %550 = vector.shape_cast %547 : vector<6x256xf32> to vector<1x6x256xf32>
    tpu.vector_store %arg4[%c49_398, %c0_399, %c0_400], %550 {strides = array<i32>} : memref<64x6x256xf32, #tpu.memory_space<vmem>>, vector<1x6x256xf32>,
    %c50 = arith.constant 50 : index
    %c0_401 = arith.constant 0 : index
    %c0_402 = arith.constant 0 : index
    %551 = vector.load %arg1[%c50, %c0_401, %c0_402] : memref<64x6x4xf32, #tpu.memory_space<vmem>>, vector<1x6x4xf32>
    %552 = vector.shape_cast %551 : vector<1x6x4xf32> to vector<6x4xf32>
    %cst_403 = arith.constant dense<0.000000e+00> : vector<6x256xf32>
    %553 = tpu.matmul %552, %0, %cst_403 {dimension_numbers = #tpu.dot_dimension_numbers<[1], [0], [0], [1], [0, 0, 1, 1], [], []>} : vector<6x4xf32>, vector<4x256xf32>, vector<6x256xf32> -> vector<6x256xf32>
    %c50_404 = arith.constant 50 : index
    %c0_405 = arith.constant 0 : index
    %554 = vector.load %arg3[%c50_404, %c0_405] : memref<64x256xf32, #tpu.memory_space<vmem>>, vector<1x256xf32>
    %555 = vector.shape_cast %554 : vector<1x256xf32> to vector<256xf32>
    %556 = vector.shape_cast %555 : vector<256xf32> to vector<1x256xf32>
    %557 = vector.broadcast %556 : vector<1x256xf32> to vector<6x256xf32>
    %558 = arith.mulf %553, %557 : vector<6x256xf32>
    %c50_406 = arith.constant 50 : index
    %c0_407 = arith.constant 0 : index
    %c0_408 = arith.constant 0 : index
    %559 = vector.load %arg4[%c50_406, %c0_407, %c0_408] : memref<64x6x256xf32, #tpu.memory_space<vmem>>, vector<1x6x256xf32>
    %560 = vector.shape_cast %559 : vector<1x6x256xf32> to vector<6x256xf32>
    %561 = vector.shape_cast %558 : vector<6x256xf32> to vector<1x6x256xf32>
    tpu.vector_store %arg4[%c50_406, %c0_407, %c0_408], %561 {strides = array<i32>} : memref<64x6x256xf32, #tpu.memory_space<vmem>>, vector<1x6x256xf32>,
    %c51 = arith.constant 51 : index
    %c0_409 = arith.constant 0 : index
    %c0_410 = arith.constant 0 : index
    %562 = vector.load %arg1[%c51, %c0_409, %c0_410] : memref<64x6x4xf32, #tpu.memory_space<vmem>>, vector<1x6x4xf32>
    %563 = vector.shape_cast %562 : vector<1x6x4xf32> to vector<6x4xf32>
    %cst_411 = arith.constant dense<0.000000e+00> : vector<6x256xf32>
    %564 = tpu.matmul %563, %0, %cst_411 {dimension_numbers = #tpu.dot_dimension_numbers<[1], [0], [0], [1], [0, 0, 1, 1], [], []>} : vector<6x4xf32>, vector<4x256xf32>, vector<6x256xf32> -> vector<6x256xf32>
    %c51_412 = arith.constant 51 : index
    %c0_413 = arith.constant 0 : index
    %565 = vector.load %arg3[%c51_412, %c0_413] : memref<64x256xf32, #tpu.memory_space<vmem>>, vector<1x256xf32>
    %566 = vector.shape_cast %565 : vector<1x256xf32> to vector<256xf32>
    %567 = vector.shape_cast %566 : vector<256xf32> to vector<1x256xf32>
    %568 = vector.broadcast %567 : vector<1x256xf32> to vector<6x256xf32>
    %569 = arith.mulf %564, %568 : vector<6x256xf32>
    %c51_414 = arith.constant 51 : index
    %c0_415 = arith.constant 0 : index
    %c0_416 = arith.constant 0 : index
    %570 = vector.load %arg4[%c51_414, %c0_415, %c0_416] : memref<64x6x256xf32, #tpu.memory_space<vmem>>, vector<1x6x256xf32>
    %571 = vector.shape_cast %570 : vector<1x6x256xf32> to vector<6x256xf32>
    %572 = vector.shape_cast %569 : vector<6x256xf32> to vector<1x6x256xf32>
    tpu.vector_store %arg4[%c51_414, %c0_415, %c0_416], %572 {strides = array<i32>} : memref<64x6x256xf32, #tpu.memory_space<vmem>>, vector<1x6x256xf32>,
    %c52 = arith.constant 52 : index
    %c0_417 = arith.constant 0 : index
    %c0_418 = arith.constant 0 : index
    %573 = vector.load %arg1[%c52, %c0_417, %c0_418] : memref<64x6x4xf32, #tpu.memory_space<vmem>>, vector<1x6x4xf32>
    %574 = vector.shape_cast %573 : vector<1x6x4xf32> to vector<6x4xf32>
    %cst_419 = arith.constant dense<0.000000e+00> : vector<6x256xf32>
    %575 = tpu.matmul %574, %0, %cst_419 {dimension_numbers = #tpu.dot_dimension_numbers<[1], [0], [0], [1], [0, 0, 1, 1], [], []>} : vector<6x4xf32>, vector<4x256xf32>, vector<6x256xf32> -> vector<6x256xf32>
    %c52_420 = arith.constant 52 : index
    %c0_421 = arith.constant 0 : index
    %576 = vector.load %arg3[%c52_420, %c0_421] : memref<64x256xf32, #tpu.memory_space<vmem>>, vector<1x256xf32>
    %577 = vector.shape_cast %576 : vector<1x256xf32> to vector<256xf32>
    %578 = vector.shape_cast %577 : vector<256xf32> to vector<1x256xf32>
    %579 = vector.broadcast %578 : vector<1x256xf32> to vector<6x256xf32>
    %580 = arith.mulf %575, %579 : vector<6x256xf32>
    %c52_422 = arith.constant 52 : index
    %c0_423 = arith.constant 0 : index
    %c0_424 = arith.constant 0 : index
    %581 = vector.load %arg4[%c52_422, %c0_423, %c0_424] : memref<64x6x256xf32, #tpu.memory_space<vmem>>, vector<1x6x256xf32>
    %582 = vector.shape_cast %581 : vector<1x6x256xf32> to vector<6x256xf32>
    %583 = vector.shape_cast %580 : vector<6x256xf32> to vector<1x6x256xf32>
    tpu.vector_store %arg4[%c52_422, %c0_423, %c0_424], %583 {strides = array<i32>} : memref<64x6x256xf32, #tpu.memory_space<vmem>>, vector<1x6x256xf32>,
    %c53 = arith.constant 53 : index
    %c0_425 = arith.constant 0 : index
    %c0_426 = arith.constant 0 : index
    %584 = vector.load %arg1[%c53, %c0_425, %c0_426] : memref<64x6x4xf32, #tpu.memory_space<vmem>>, vector<1x6x4xf32>
    %585 = vector.shape_cast %584 : vector<1x6x4xf32> to vector<6x4xf32>
    %cst_427 = arith.constant dense<0.000000e+00> : vector<6x256xf32>
    %586 = tpu.matmul %585, %0, %cst_427 {dimension_numbers = #tpu.dot_dimension_numbers<[1], [0], [0], [1], [0, 0, 1, 1], [], []>} : vector<6x4xf32>, vector<4x256xf32>, vector<6x256xf32> -> vector<6x256xf32>
    %c53_428 = arith.constant 53 : index
    %c0_429 = arith.constant 0 : index
    %587 = vector.load %arg3[%c53_428, %c0_429] : memref<64x256xf32, #tpu.memory_space<vmem>>, vector<1x256xf32>
    %588 = vector.shape_cast %587 : vector<1x256xf32> to vector<256xf32>
    %589 = vector.shape_cast %588 : vector<256xf32> to vector<1x256xf32>
    %590 = vector.broadcast %589 : vector<1x256xf32> to vector<6x256xf32>
    %591 = arith.mulf %586, %590 : vector<6x256xf32>
    %c53_430 = arith.constant 53 : index
    %c0_431 = arith.constant 0 : index
    %c0_432 = arith.constant 0 : index
    %592 = vector.load %arg4[%c53_430, %c0_431, %c0_432] : memref<64x6x256xf32, #tpu.memory_space<vmem>>, vector<1x6x256xf32>
    %593 = vector.shape_cast %592 : vector<1x6x256xf32> to vector<6x256xf32>
    %594 = vector.shape_cast %591 : vector<6x256xf32> to vector<1x6x256xf32>
    tpu.vector_store %arg4[%c53_430, %c0_431, %c0_432], %594 {strides = array<i32>} : memref<64x6x256xf32, #tpu.memory_space<vmem>>, vector<1x6x256xf32>,
    %c54 = arith.constant 54 : index
    %c0_433 = arith.constant 0 : index
    %c0_434 = arith.constant 0 : index
    %595 = vector.load %arg1[%c54, %c0_433, %c0_434] : memref<64x6x4xf32, #tpu.memory_space<vmem>>, vector<1x6x4xf32>
    %596 = vector.shape_cast %595 : vector<1x6x4xf32> to vector<6x4xf32>
    %cst_435 = arith.constant dense<0.000000e+00> : vector<6x256xf32>
    %597 = tpu.matmul %596, %0, %cst_435 {dimension_numbers = #tpu.dot_dimension_numbers<[1], [0], [0], [1], [0, 0, 1, 1], [], []>} : vector<6x4xf32>, vector<4x256xf32>, vector<6x256xf32> -> vector<6x256xf32>
    %c54_436 = arith.constant 54 : index
    %c0_437 = arith.constant 0 : index
    %598 = vector.load %arg3[%c54_436, %c0_437] : memref<64x256xf32, #tpu.memory_space<vmem>>, vector<1x256xf32>
    %599 = vector.shape_cast %598 : vector<1x256xf32> to vector<256xf32>
    %600 = vector.shape_cast %599 : vector<256xf32> to vector<1x256xf32>
    %601 = vector.broadcast %600 : vector<1x256xf32> to vector<6x256xf32>
    %602 = arith.mulf %597, %601 : vector<6x256xf32>
    %c54_438 = arith.constant 54 : index
    %c0_439 = arith.constant 0 : index
    %c0_440 = arith.constant 0 : index
    %603 = vector.load %arg4[%c54_438, %c0_439, %c0_440] : memref<64x6x256xf32, #tpu.memory_space<vmem>>, vector<1x6x256xf32>
    %604 = vector.shape_cast %603 : vector<1x6x256xf32> to vector<6x256xf32>
    %605 = vector.shape_cast %602 : vector<6x256xf32> to vector<1x6x256xf32>
    tpu.vector_store %arg4[%c54_438, %c0_439, %c0_440], %605 {strides = array<i32>} : memref<64x6x256xf32, #tpu.memory_space<vmem>>, vector<1x6x256xf32>,
    %c55 = arith.constant 55 : index
    %c0_441 = arith.constant 0 : index
    %c0_442 = arith.constant 0 : index
    %606 = vector.load %arg1[%c55, %c0_441, %c0_442] : memref<64x6x4xf32, #tpu.memory_space<vmem>>, vector<1x6x4xf32>
    %607 = vector.shape_cast %606 : vector<1x6x4xf32> to vector<6x4xf32>
    %cst_443 = arith.constant dense<0.000000e+00> : vector<6x256xf32>
    %608 = tpu.matmul %607, %0, %cst_443 {dimension_numbers = #tpu.dot_dimension_numbers<[1], [0], [0], [1], [0, 0, 1, 1], [], []>} : vector<6x4xf32>, vector<4x256xf32>, vector<6x256xf32> -> vector<6x256xf32>
    %c55_444 = arith.constant 55 : index
    %c0_445 = arith.constant 0 : index
    %609 = vector.load %arg3[%c55_444, %c0_445] : memref<64x256xf32, #tpu.memory_space<vmem>>, vector<1x256xf32>
    %610 = vector.shape_cast %609 : vector<1x256xf32> to vector<256xf32>
    %611 = vector.shape_cast %610 : vector<256xf32> to vector<1x256xf32>
    %612 = vector.broadcast %611 : vector<1x256xf32> to vector<6x256xf32>
    %613 = arith.mulf %608, %612 : vector<6x256xf32>
    %c55_446 = arith.constant 55 : index
    %c0_447 = arith.constant 0 : index
    %c0_448 = arith.constant 0 : index
    %614 = vector.load %arg4[%c55_446, %c0_447, %c0_448] : memref<64x6x256xf32, #tpu.memory_space<vmem>>, vector<1x6x256xf32>
    %615 = vector.shape_cast %614 : vector<1x6x256xf32> to vector<6x256xf32>
    %616 = vector.shape_cast %613 : vector<6x256xf32> to vector<1x6x256xf32>
    tpu.vector_store %arg4[%c55_446, %c0_447, %c0_448], %616 {strides = array<i32>} : memref<64x6x256xf32, #tpu.memory_space<vmem>>, vector<1x6x256xf32>,
    %c56 = arith.constant 56 : index
    %c0_449 = arith.constant 0 : index
    %c0_450 = arith.constant 0 : index
    %617 = vector.load %arg1[%c56, %c0_449, %c0_450] : memref<64x6x4xf32, #tpu.memory_space<vmem>>, vector<1x6x4xf32>
    %618 = vector.shape_cast %617 : vector<1x6x4xf32> to vector<6x4xf32>
    %cst_451 = arith.constant dense<0.000000e+00> : vector<6x256xf32>
    %619 = tpu.matmul %618, %0, %cst_451 {dimension_numbers = #tpu.dot_dimension_numbers<[1], [0], [0], [1], [0, 0, 1, 1], [], []>} : vector<6x4xf32>, vector<4x256xf32>, vector<6x256xf32> -> vector<6x256xf32>
    %c56_452 = arith.constant 56 : index
    %c0_453 = arith.constant 0 : index
    %620 = vector.load %arg3[%c56_452, %c0_453] : memref<64x256xf32, #tpu.memory_space<vmem>>, vector<1x256xf32>
    %621 = vector.shape_cast %620 : vector<1x256xf32> to vector<256xf32>
    %622 = vector.shape_cast %621 : vector<256xf32> to vector<1x256xf32>
    %623 = vector.broadcast %622 : vector<1x256xf32> to vector<6x256xf32>
    %624 = arith.mulf %619, %623 : vector<6x256xf32>
    %c56_454 = arith.constant 56 : index
    %c0_455 = arith.constant 0 : index
    %c0_456 = arith.constant 0 : index
    %625 = vector.load %arg4[%c56_454, %c0_455, %c0_456] : memref<64x6x256xf32, #tpu.memory_space<vmem>>, vector<1x6x256xf32>
    %626 = vector.shape_cast %625 : vector<1x6x256xf32> to vector<6x256xf32>
    %627 = vector.shape_cast %624 : vector<6x256xf32> to vector<1x6x256xf32>
    tpu.vector_store %arg4[%c56_454, %c0_455, %c0_456], %627 {strides = array<i32>} : memref<64x6x256xf32, #tpu.memory_space<vmem>>, vector<1x6x256xf32>,
    %c57 = arith.constant 57 : index
    %c0_457 = arith.constant 0 : index
    %c0_458 = arith.constant 0 : index
    %628 = vector.load %arg1[%c57, %c0_457, %c0_458] : memref<64x6x4xf32, #tpu.memory_space<vmem>>, vector<1x6x4xf32>
    %629 = vector.shape_cast %628 : vector<1x6x4xf32> to vector<6x4xf32>
    %cst_459 = arith.constant dense<0.000000e+00> : vector<6x256xf32>
    %630 = tpu.matmul %629, %0, %cst_459 {dimension_numbers = #tpu.dot_dimension_numbers<[1], [0], [0], [1], [0, 0, 1, 1], [], []>} : vector<6x4xf32>, vector<4x256xf32>, vector<6x256xf32> -> vector<6x256xf32>
    %c57_460 = arith.constant 57 : index
    %c0_461 = arith.constant 0 : index
    %631 = vector.load %arg3[%c57_460, %c0_461] : memref<64x256xf32, #tpu.memory_space<vmem>>, vector<1x256xf32>
    %632 = vector.shape_cast %631 : vector<1x256xf32> to vector<256xf32>
    %633 = vector.shape_cast %632 : vector<256xf32> to vector<1x256xf32>
    %634 = vector.broadcast %633 : vector<1x256xf32> to vector<6x256xf32>
    %635 = arith.mulf %630, %634 : vector<6x256xf32>
    %c57_462 = arith.constant 57 : index
    %c0_463 = arith.constant 0 : index
    %c0_464 = arith.constant 0 : index
    %636 = vector.load %arg4[%c57_462, %c0_463, %c0_464] : memref<64x6x256xf32, #tpu.memory_space<vmem>>, vector<1x6x256xf32>
    %637 = vector.shape_cast %636 : vector<1x6x256xf32> to vector<6x256xf32>
    %638 = vector.shape_cast %635 : vector<6x256xf32> to vector<1x6x256xf32>
    tpu.vector_store %arg4[%c57_462, %c0_463, %c0_464], %638 {strides = array<i32>} : memref<64x6x256xf32, #tpu.memory_space<vmem>>, vector<1x6x256xf32>,
    %c58 = arith.constant 58 : index
    %c0_465 = arith.constant 0 : index
    %c0_466 = arith.constant 0 : index
    %639 = vector.load %arg1[%c58, %c0_465, %c0_466] : memref<64x6x4xf32, #tpu.memory_space<vmem>>, vector<1x6x4xf32>
    %640 = vector.shape_cast %639 : vector<1x6x4xf32> to vector<6x4xf32>
    %cst_467 = arith.constant dense<0.000000e+00> : vector<6x256xf32>
    %641 = tpu.matmul %640, %0, %cst_467 {dimension_numbers = #tpu.dot_dimension_numbers<[1], [0], [0], [1], [0, 0, 1, 1], [], []>} : vector<6x4xf32>, vector<4x256xf32>, vector<6x256xf32> -> vector<6x256xf32>
    %c58_468 = arith.constant 58 : index
    %c0_469 = arith.constant 0 : index
    %642 = vector.load %arg3[%c58_468, %c0_469] : memref<64x256xf32, #tpu.memory_space<vmem>>, vector<1x256xf32>
    %643 = vector.shape_cast %642 : vector<1x256xf32> to vector<256xf32>
    %644 = vector.shape_cast %643 : vector<256xf32> to vector<1x256xf32>
    %645 = vector.broadcast %644 : vector<1x256xf32> to vector<6x256xf32>
    %646 = arith.mulf %641, %645 : vector<6x256xf32>
    %c58_470 = arith.constant 58 : index
    %c0_471 = arith.constant 0 : index
    %c0_472 = arith.constant 0 : index
    %647 = vector.load %arg4[%c58_470, %c0_471, %c0_472] : memref<64x6x256xf32, #tpu.memory_space<vmem>>, vector<1x6x256xf32>
    %648 = vector.shape_cast %647 : vector<1x6x256xf32> to vector<6x256xf32>
    %649 = vector.shape_cast %646 : vector<6x256xf32> to vector<1x6x256xf32>
    tpu.vector_store %arg4[%c58_470, %c0_471, %c0_472], %649 {strides = array<i32>} : memref<64x6x256xf32, #tpu.memory_space<vmem>>, vector<1x6x256xf32>,
    %c59 = arith.constant 59 : index
    %c0_473 = arith.constant 0 : index
    %c0_474 = arith.constant 0 : index
    %650 = vector.load %arg1[%c59, %c0_473, %c0_474] : memref<64x6x4xf32, #tpu.memory_space<vmem>>, vector<1x6x4xf32>
    %651 = vector.shape_cast %650 : vector<1x6x4xf32> to vector<6x4xf32>
    %cst_475 = arith.constant dense<0.000000e+00> : vector<6x256xf32>
    %652 = tpu.matmul %651, %0, %cst_475 {dimension_numbers = #tpu.dot_dimension_numbers<[1], [0], [0], [1], [0, 0, 1, 1], [], []>} : vector<6x4xf32>, vector<4x256xf32>, vector<6x256xf32> -> vector<6x256xf32>
    %c59_476 = arith.constant 59 : index
    %c0_477 = arith.constant 0 : index
    %653 = vector.load %arg3[%c59_476, %c0_477] : memref<64x256xf32, #tpu.memory_space<vmem>>, vector<1x256xf32>
    %654 = vector.shape_cast %653 : vector<1x256xf32> to vector<256xf32>
    %655 = vector.shape_cast %654 : vector<256xf32> to vector<1x256xf32>
    %656 = vector.broadcast %655 : vector<1x256xf32> to vector<6x256xf32>
    %657 = arith.mulf %652, %656 : vector<6x256xf32>
    %c59_478 = arith.constant 59 : index
    %c0_479 = arith.constant 0 : index
    %c0_480 = arith.constant 0 : index
    %658 = vector.load %arg4[%c59_478, %c0_479, %c0_480] : memref<64x6x256xf32, #tpu.memory_space<vmem>>, vector<1x6x256xf32>
    %659 = vector.shape_cast %658 : vector<1x6x256xf32> to vector<6x256xf32>
    %660 = vector.shape_cast %657 : vector<6x256xf32> to vector<1x6x256xf32>
    tpu.vector_store %arg4[%c59_478, %c0_479, %c0_480], %660 {strides = array<i32>} : memref<64x6x256xf32, #tpu.memory_space<vmem>>, vector<1x6x256xf32>,
    %c60 = arith.constant 60 : index
    %c0_481 = arith.constant 0 : index
    %c0_482 = arith.constant 0 : index
    %661 = vector.load %arg1[%c60, %c0_481, %c0_482] : memref<64x6x4xf32, #tpu.memory_space<vmem>>, vector<1x6x4xf32>
    %662 = vector.shape_cast %661 : vector<1x6x4xf32> to vector<6x4xf32>
    %cst_483 = arith.constant dense<0.000000e+00> : vector<6x256xf32>
    %663 = tpu.matmul %662, %0, %cst_483 {dimension_numbers = #tpu.dot_dimension_numbers<[1], [0], [0], [1], [0, 0, 1, 1], [], []>} : vector<6x4xf32>, vector<4x256xf32>, vector<6x256xf32> -> vector<6x256xf32>
    %c60_484 = arith.constant 60 : index
    %c0_485 = arith.constant 0 : index
    %664 = vector.load %arg3[%c60_484, %c0_485] : memref<64x256xf32, #tpu.memory_space<vmem>>, vector<1x256xf32>
    %665 = vector.shape_cast %664 : vector<1x256xf32> to vector<256xf32>
    %666 = vector.shape_cast %665 : vector<256xf32> to vector<1x256xf32>
    %667 = vector.broadcast %666 : vector<1x256xf32> to vector<6x256xf32>
    %668 = arith.mulf %663, %667 : vector<6x256xf32>
    %c60_486 = arith.constant 60 : index
    %c0_487 = arith.constant 0 : index
    %c0_488 = arith.constant 0 : index
    %669 = vector.load %arg4[%c60_486, %c0_487, %c0_488] : memref<64x6x256xf32, #tpu.memory_space<vmem>>, vector<1x6x256xf32>
    %670 = vector.shape_cast %669 : vector<1x6x256xf32> to vector<6x256xf32>
    %671 = vector.shape_cast %668 : vector<6x256xf32> to vector<1x6x256xf32>
    tpu.vector_store %arg4[%c60_486, %c0_487, %c0_488], %671 {strides = array<i32>} : memref<64x6x256xf32, #tpu.memory_space<vmem>>, vector<1x6x256xf32>,
    %c61 = arith.constant 61 : index
    %c0_489 = arith.constant 0 : index
    %c0_490 = arith.constant 0 : index
    %672 = vector.load %arg1[%c61, %c0_489, %c0_490] : memref<64x6x4xf32, #tpu.memory_space<vmem>>, vector<1x6x4xf32>
    %673 = vector.shape_cast %672 : vector<1x6x4xf32> to vector<6x4xf32>
    %cst_491 = arith.constant dense<0.000000e+00> : vector<6x256xf32>
    %674 = tpu.matmul %673, %0, %cst_491 {dimension_numbers = #tpu.dot_dimension_numbers<[1], [0], [0], [1], [0, 0, 1, 1], [], []>} : vector<6x4xf32>, vector<4x256xf32>, vector<6x256xf32> -> vector<6x256xf32>
    %c61_492 = arith.constant 61 : index
    %c0_493 = arith.constant 0 : index
    %675 = vector.load %arg3[%c61_492, %c0_493] : memref<64x256xf32, #tpu.memory_space<vmem>>, vector<1x256xf32>
    %676 = vector.shape_cast %675 : vector<1x256xf32> to vector<256xf32>
    %677 = vector.shape_cast %676 : vector<256xf32> to vector<1x256xf32>
    %678 = vector.broadcast %677 : vector<1x256xf32> to vector<6x256xf32>
    %679 = arith.mulf %674, %678 : vector<6x256xf32>
    %c61_494 = arith.constant 61 : index
    %c0_495 = arith.constant 0 : index
    %c0_496 = arith.constant 0 : index
    %680 = vector.load %arg4[%c61_494, %c0_495, %c0_496] : memref<64x6x256xf32, #tpu.memory_space<vmem>>, vector<1x6x256xf32>
    %681 = vector.shape_cast %680 : vector<1x6x256xf32> to vector<6x256xf32>
    %682 = vector.shape_cast %679 : vector<6x256xf32> to vector<1x6x256xf32>
    tpu.vector_store %arg4[%c61_494, %c0_495, %c0_496], %682 {strides = array<i32>} : memref<64x6x256xf32, #tpu.memory_space<vmem>>, vector<1x6x256xf32>,
    %c62 = arith.constant 62 : index
    %c0_497 = arith.constant 0 : index
    %c0_498 = arith.constant 0 : index
    %683 = vector.load %arg1[%c62, %c0_497, %c0_498] : memref<64x6x4xf32, #tpu.memory_space<vmem>>, vector<1x6x4xf32>
    %684 = vector.shape_cast %683 : vector<1x6x4xf32> to vector<6x4xf32>
    %cst_499 = arith.constant dense<0.000000e+00> : vector<6x256xf32>
    %685 = tpu.matmul %684, %0, %cst_499 {dimension_numbers = #tpu.dot_dimension_numbers<[1], [0], [0], [1], [0, 0, 1, 1], [], []>} : vector<6x4xf32>, vector<4x256xf32>, vector<6x256xf32> -> vector<6x256xf32>
    %c62_500 = arith.constant 62 : index
    %c0_501 = arith.constant 0 : index
    %686 = vector.load %arg3[%c62_500, %c0_501] : memref<64x256xf32, #tpu.memory_space<vmem>>, vector<1x256xf32>
    %687 = vector.shape_cast %686 : vector<1x256xf32> to vector<256xf32>
    %688 = vector.shape_cast %687 : vector<256xf32> to vector<1x256xf32>
    %689 = vector.broadcast %688 : vector<1x256xf32> to vector<6x256xf32>
    %690 = arith.mulf %685, %689 : vector<6x256xf32>
    %c62_502 = arith.constant 62 : index
    %c0_503 = arith.constant 0 : index
    %c0_504 = arith.constant 0 : index
    %691 = vector.load %arg4[%c62_502, %c0_503, %c0_504] : memref<64x6x256xf32, #tpu.memory_space<vmem>>, vector<1x6x256xf32>
    %692 = vector.shape_cast %691 : vector<1x6x256xf32> to vector<6x256xf32>
    %693 = vector.shape_cast %690 : vector<6x256xf32> to vector<1x6x256xf32>
    tpu.vector_store %arg4[%c62_502, %c0_503, %c0_504], %693 {strides = array<i32>} : memref<64x6x256xf32, #tpu.memory_space<vmem>>, vector<1x6x256xf32>,
    %c63 = arith.constant 63 : index
    %c0_505 = arith.constant 0 : index
    %c0_506 = arith.constant 0 : index
    %694 = vector.load %arg1[%c63, %c0_505, %c0_506] : memref<64x6x4xf32, #tpu.memory_space<vmem>>, vector<1x6x4xf32>
    %695 = vector.shape_cast %694 : vector<1x6x4xf32> to vector<6x4xf32>
    %cst_507 = arith.constant dense<0.000000e+00> : vector<6x256xf32>
    %696 = tpu.matmul %695, %0, %cst_507 {dimension_numbers = #tpu.dot_dimension_numbers<[1], [0], [0], [1], [0, 0, 1, 1], [], []>} : vector<6x4xf32>, vector<4x256xf32>, vector<6x256xf32> -> vector<6x256xf32>
    %c63_508 = arith.constant 63 : index
    %c0_509 = arith.constant 0 : index
    %697 = vector.load %arg3[%c63_508, %c0_509] : memref<64x256xf32, #tpu.memory_space<vmem>>, vector<1x256xf32>
    %698 = vector.shape_cast %697 : vector<1x256xf32> to vector<256xf32>
    %699 = vector.shape_cast %698 : vector<256xf32> to vector<1x256xf32>
    %700 = vector.broadcast %699 : vector<1x256xf32> to vector<6x256xf32>
    %701 = arith.mulf %696, %700 : vector<6x256xf32>
    %c63_510 = arith.constant 63 : index
    %c0_511 = arith.constant 0 : index
    %c0_512 = arith.constant 0 : index
    %702 = vector.load %arg4[%c63_510, %c0_511, %c0_512] : memref<64x6x256xf32, #tpu.memory_space<vmem>>, vector<1x6x256xf32>
    %703 = vector.shape_cast %702 : vector<1x6x256xf32> to vector<6x256xf32>
    %704 = vector.shape_cast %701 : vector<6x256xf32> to vector<1x6x256xf32>
    tpu.vector_store %arg4[%c63_510, %c0_511, %c0_512], %704 {strides = array<i32>} : memref<64x6x256xf32, #tpu.memory_space<vmem>>, vector<1x6x256xf32>,
    return
  }
  func.func @transform_0(%arg0: i32) -> (i32, i32, i32) {
    %c0_i32 = arith.constant 0 : i32
    %c0_i32_0 = arith.constant 0 : i32
    %c0_i32_1 = arith.constant 0 : i32
    return %arg0, %c0_i32, %c0_i32_0 : i32, i32, i32
  }
  func.func @transform_1(%arg0: i32) -> (i32, i32) {
    %c0_i32 = arith.constant 0 : i32
    %c0_i32_0 = arith.constant 0 : i32
    %c0_i32_1 = arith.constant 0 : i32
    return %c0_i32, %c0_i32_0 : i32, i32
  }
  func.func @transform_2(%arg0: i32) -> (i32, i32) {
    %c0_i32 = arith.constant 0 : i32
    %c0_i32_0 = arith.constant 0 : i32
    return %arg0, %c0_i32 : i32, i32
  }
  func.func @transform_3(%arg0: i32) -> (i32, i32, i32) {
    %c0_i32 = arith.constant 0 : i32
    %c0_i32_0 = arith.constant 0 : i32
    %c0_i32_1 = arith.constant 0 : i32
    return %arg0, %c0_i32, %c0_i32_0 : i32, i32, i32
  }
}

</mosaic_0001>

<llo_original>
// kernel: _lambda_.2
$region0: #{_lambda_.2}
  #allocation0 [shape = 'u32[]', space=smem, size = 0x4, offset = 0x4, fixed_abs, tag = 'smem constant byte address 0x4 - core index']
  #allocation1 [shape = 'u32[72,128]{1,0:T(1,128)}', space=vmem, size = 0x9000, scoped, tag = 'internal scratch']
  %s0 = inlined_call_operand.hbm [shape: f32[2,3,16,16], index: 0, kind: input, shape index: {}]
  %s1 = inlined_call_operand.hbm [shape: f32[16,16], index: 1, kind: input, shape index: {}]
  %s2 = inlined_call_operand.hbm [shape: f32[16,16], index: 2, kind: input, shape index: {}]
  %s3 = inlined_call_operand.vmem [shape: f32[6,16,16], index: 3, kind: output, shape index: {}]
  %s4 = sld [smem:[#allocation0]]
  $region34: #{_lambda_.2} parent=0
    _
  %s6 = ssub.s32 1, %s4
  %s7 = scalar_select 0, %s6, %s4
  $region1: #{_lambda_.2} parent=0
    #allocation2 [shape = 'u8[49152]{0}', space=vmem, size = 0xc000, scoped, tag = 'input window, operand 0, single buffered']
    #allocation3 [shape = 's32[1]{0}', space=sflag, size = 0x4, scoped, tag = 'scoped memory for _lambda_.2']
    #allocation4 [shape = 'u8[8192]{0}', space=vmem, size = 0x2000, scoped, tag = 'input window, operand 1, single buffered']
    #allocation5 [shape = 's32[1]{0}', space=sflag, size = 0x4, scoped, tag = 'scoped memory for _lambda_.2']
    #allocation6 [shape = 'u8[8192]{0}', space=vmem, size = 0x2000, scoped, tag = 'input window, operand 2, single buffered']
    %8 = vsyncpa [#allocation3], 0
    %9 = vsyncpa [#allocation5], 0
    // Predicated region
    $region2: #{_lambda_.2} parent=1 // pred_check
      _
    $region3: #{_lambda_.2} parent=1 // pred_check_branch
      %11 = sbr.rel (0) target = $region5
    $region4: #{_lambda_.2} parent=1 // pred_region
      %13 = vsyncadd [#allocation3], 0
      %s14 = sshll.u32 %s0, 4
      %s15 = int_to_ptr.hbm [resolvable:$true] %s14
      %s16 = sshll.u32 [#allocation2], 4
      %s17 = int_to_ptr.vmem [resolvable:$true] %s16
      %22 = dma.hbm_to_vmem [thread:$0]  %s15, 1536, %s17, [#allocation3], 128, 128, 8
    $region5: #{_lambda_.2} parent=1 // pred_fallthru
      _
    // Predicated region
    $region6: #{_lambda_.2} parent=1 // pred_check
      _
    $region7: #{_lambda_.2} parent=1 // pred_check_branch
      %24 = sbr.rel (0) target = $region9
    $region8: #{_lambda_.2} parent=1 // pred_region
      %26 = vsyncadd [#allocation5], 0
      %s27 = sshll.u32 %s1, 4
      %s28 = int_to_ptr.hbm [resolvable:$true] %s27
      %s29 = sshll.u32 [#allocation4], 4
      %s30 = int_to_ptr.vmem [resolvable:$true] %s29
      %35 = dma.hbm_to_vmem [thread:$0]  %s28, 256, %s30, [#allocation5], 128, 128, 8
    $region9: #{_lambda_.2} parent=1 // pred_fallthru
      _
    // Predicated region
    $region10: #{_lambda_.2} parent=1 // pred_check
      _
    $region11: #{_lambda_.2} parent=1 // pred_check_branch
      %37 = sbr.rel (0) target = $region13
    $region12: #{_lambda_.2} parent=1 // pred_region
      %39 = vsyncadd [#allocation5], 0
      %s40 = sshll.u32 %s2, 4
      %s41 = int_to_ptr.hbm [resolvable:$true] %s40
      %s42 = sshll.u32 [#allocation6], 4
      %s43 = int_to_ptr.vmem [resolvable:$true] %s42
      %48 = dma.hbm_to_vmem [thread:$0]  %s41, 256, %s43, [#allocation5], 128, 128, 8
    $region13: #{_lambda_.2} parent=1 // pred_fallthru
      _
    // Predicated region
    $region14: #{_lambda_.2} parent=1 // pred_check
      _
    $region15: #{_lambda_.2} parent=1 // pred_check_branch
      %50 = sbr.rel (0) target = $region17
    $region16: #{_lambda_.2} parent=1 // pred_region
      %52 = dma.done [#allocation3], 1536
    $region17: #{_lambda_.2} parent=1 // pred_fallthru
      _
    // Predicated region
    $region18: #{_lambda_.2} parent=1 // pred_check
      _
    $region19: #{_lambda_.2} parent=1 // pred_check_branch
      %54 = sbr.rel (0) target = $region21
    $region20: #{_lambda_.2} parent=1 // pred_region
      %56 = dma.done [#allocation5], 256
    $region21: #{_lambda_.2} parent=1 // pred_fallthru
      _
    // Predicated region
    $region22: #{_lambda_.2} parent=1 // pred_check
      _
    $region23: #{_lambda_.2} parent=1 // pred_check_branch
      %58 = sbr.rel (0) target = $region25
    $region24: #{_lambda_.2} parent=1 // pred_region
      %60 = dma.done [#allocation5], 256
    $region25: #{_lambda_.2} parent=1 // pred_fallthru
      _
    %v61 = vld [vmem:[#allocation4] sm:$0xff]
    %v62 = vld [vmem:[#allocation4 + $0x8] sm:$0xff]
    %v63 = vld [vmem:[#allocation6] sm:$0xff]
    %v64 = vld [vmem:[#allocation6 + $0x8] sm:$0xff]
    %v65 = vld [vmem:[#allocation2] sm:$0xff]
    %v66 = vld [vmem:[#allocation2 + $0x8] sm:$0xff]
    %v67 = vld [vmem:[#allocation2 + $0x10] sm:$0xff]
    %v68 = vld [vmem:[#allocation2 + $0x18] sm:$0xff]
    %v69 = vld [vmem:[#allocation2 + $0x20] sm:$0xff]
    %v70 = vld [vmem:[#allocation2 + $0x28] sm:$0xff]
    %v71 = vld [vmem:[#allocation2 + $0x30] sm:$0xff]
    %v72 = vld [vmem:[#allocation2 + $0x38] sm:$0xff]
    %v73 = vld [vmem:[#allocation2 + $0x40] sm:$0xff]
    %v74 = vld [vmem:[#allocation2 + $0x48] sm:$0xff]
    %v75 = vld [vmem:[#allocation2 + $0x50] sm:$0xff]
    %v76 = vld [vmem:[#allocation2 + $0x58] sm:$0xff]
    %v77 = vmul.f32 %v65, 255.0
    %v78 = vmul.f32 %v66, 255.0
    %v79 = vmul.f32 %v67, 255.0
    %v80 = vmul.f32 %v68, 255.0
    %v81 = vmul.f32 %v69, 255.0
    %v82 = vmul.f32 %v70, 255.0
    %v83 = vmul.f32 %v71, 255.0
    %v84 = vmul.f32 %v72, 255.0
    %v85 = vmul.f32 %v73, 255.0
    %v86 = vmul.f32 %v74, 255.0
    %v87 = vmul.f32 %v75, 255.0
    %v88 = vmul.f32 %v76, 255.0
    %v89 = vmul.f32 %v77, 0.299
    %v90 = vmul.f32 %v78, 0.299
    %v91 = vmul.f32 %v83, 0.299
    %v92 = vmul.f32 %v84, 0.299
    %v93 = vmul.f32 %v79, 0.587
    %v94 = vmul.f32 %v80, 0.587
    %v95 = vmul.f32 %v85, 0.587
    %v96 = vmul.f32 %v86, 0.587
    %v97 = vadd.f32 %v89, %v93
    %v98 = vadd.f32 %v90, %v94
    %v99 = vadd.f32 %v91, %v95
    %v100 = vadd.f32 %v92, %v96
    %v101 = vmul.f32 %v81, 0.114
    %v102 = vmul.f32 %v82, 0.114
    %v103 = vmul.f32 %v87, 0.114
    %v104 = vmul.f32 %v88, 0.114
    %v105 = vadd.f32 %v97, %v101
    %v106 = vadd.f32 %v98, %v102
    %v107 = vadd.f32 %v99, %v103
    %v108 = vadd.f32 %v100, %v104
    %v109 = vrcp.pop 255.0
    %v110 = vmul.f32 255.0, %v109
    %v111 = vsub.f32 1.0, %v110
    %v112 = vmul.f32 %v109, %v111
    %v113 = vadd.f32 %v109, %v112
    %vm114 = vweird.f32 %v109
    %v115 = vsel %vm114, %v109, %v113
    %v116 = vmul.f32 %v105, %v115
    %v117 = vmul.f32 %v106, %v115
    %v118 = vmul.f32 %v107, %v115
    %v119 = vmul.f32 %v108, %v115
    %v120 = vmul.f32 %v77, -0.168736
    %v121 = vmul.f32 %v78, -0.168736
    %v122 = vmul.f32 %v83, -0.168736
    %v123 = vmul.f32 %v84, -0.168736
    %v124 = vmul.f32 %v79, 0.331264
    %v125 = vmul.f32 %v80, 0.331264
    %v126 = vmul.f32 %v85, 0.331264
    %v127 = vmul.f32 %v86, 0.331264
    %v128 = vsub.f32 %v120, %v124
    %v129 = vsub.f32 %v121, %v125
    %v130 = vsub.f32 %v122, %v126
    %v131 = vsub.f32 %v123, %v127
    %v132 = vmul.f32 %v81, 0.5
    %v133 = vmul.f32 %v82, 0.5
    %v134 = vmul.f32 %v87, 0.5
    %v135 = vmul.f32 %v88, 0.5
    %v136 = vadd.f32 %v128, %v132
    %v137 = vadd.f32 %v129, %v133
    %v138 = vadd.f32 %v130, %v134
    %v139 = vadd.f32 %v131, %v135
    %v140 = vadd.f32 %v136, 128.0
    %v141 = vadd.f32 %v137, 128.0
    %v142 = vadd.f32 %v138, 128.0
    %v143 = vadd.f32 %v139, 128.0
    %v144 = vmul.f32 %v140, %v115
    %v145 = vmul.f32 %v141, %v115
    %v146 = vmul.f32 %v142, %v115
    %v147 = vmul.f32 %v143, %v115
    %v148 = vmul.f32 %v77, 0.5
    %v149 = vmul.f32 %v78, 0.5
    %v150 = vmul.f32 %v83, 0.5
    %v151 = vmul.f32 %v84, 0.5
    %v152 = vmul.f32 %v79, 0.418688
    %v153 = vmul.f32 %v80, 0.418688
    %v154 = vmul.f32 %v85, 0.418688
    %v155 = vmul.f32 %v86, 0.418688
    %v156 = vsub.f32 %v148, %v152
    %v157 = vsub.f32 %v149, %v153
    %v158 = vsub.f32 %v150, %v154
    %v159 = vsub.f32 %v151, %v155
    %v160 = vmul.f32 %v81, 0.081312
    %v161 = vmul.f32 %v82, 0.081312
    %v162 = vmul.f32 %v87, 0.081312
    %v163 = vmul.f32 %v88, 0.081312
    %v164 = vsub.f32 %v156, %v160
    %v165 = vsub.f32 %v157, %v161
    %v166 = vsub.f32 %v158, %v162
    %v167 = vsub.f32 %v159, %v163
    %v168 = vadd.f32 %v164, 128.0
    %v169 = vadd.f32 %v165, 128.0
    %v170 = vadd.f32 %v166, 128.0
    %v171 = vadd.f32 %v167, 128.0
    %v172 = vmul.f32 %v168, %v115
    %v173 = vmul.f32 %v169, %v115
    %v174 = vmul.f32 %v170, %v115
    %v175 = vmul.f32 %v171, %v115
    %vm176 = vcmask 130048
    %v178 = vsel %vm176, %v116, 0
    %v181 = vsel %vm176, %v117, 0
    %v184 = vsel %vm176, %v118, 0
    %v187 = vsel %vm176, %v119, 0
    %189 = vmatpush.msra.mxu0 0.0
    %190 = vmatpush.msra.mxu0 0.0
    %191 = vmatpush.msra.mxu0 0.0
    %192 = vmatpush.msra.mxu0 0.0
    %193 = vmatpush.msra.mxu0 0.0
    %194 = vmatpush.msra.mxu0 0.0
    %195 = vmatpush.msra.mxu0 0.0
    %196 = vmatpush.msra.mxu0 0.0
    %197 = vmatpush.msra.mxu0 0.0
    %198 = vmatpush.msra.mxu0 0.0
    %199 = vmatpush.msra.mxu0 0.0
    %200 = vmatpush.msra.mxu0 0.0
    %201 = vmatpush.msra.mxu0 0.0
    %202 = vmatpush.msra.mxu0 0.0
    %v203 = vand.u32 %v64, 4294901760
    %204 = vmatpush.msra.mxu0 %v203
    %v205 = vand.u32 %v63, 4294901760
    %206 = vmatpush.msra.mxu0 %v205
    %v207 = vand.u32 %v178, 4294901760
    %v208 = vsub.f32 %v178, %v207
    %v209 = vand.u32 %v208, 4294901760
    %v210 = vsub.f32 %v208, %v209
    %v211 = vand.u32 %v210, 4294901760
    %212 = vmatmul.f32.gmra.mxu0 %v211
    %v213 = vpop.f32.mrf.mxu0
    %v214 = vadd.f32 0.0, %v213
    %v215 = vand.u32 %v181, 4294901760
    %v216 = vsub.f32 %v181, %v215
    %v217 = vand.u32 %v216, 4294901760
    %v218 = vsub.f32 %v216, %v217
    %v219 = vand.u32 %v218, 4294901760
    %220 = vmatmul.f32.gmra.mxu0 %v219
    %v221 = vpop.f32.mrf.mxu0
    %v222 = vadd.f32 0.0, %v221
    %v223 = vand.u32 %v184, 4294901760
    %v224 = vsub.f32 %v184, %v223
    %v225 = vand.u32 %v224, 4294901760
    %v226 = vsub.f32 %v224, %v225
    %v227 = vand.u32 %v226, 4294901760
    %228 = vmatmul.f32.gmra.mxu0 %v227
    %v229 = vpop.f32.mrf.mxu0
    %v230 = vadd.f32 0.0, %v229
    %v231 = vand.u32 %v187, 4294901760
    %v232 = vsub.f32 %v187, %v231
    %v233 = vand.u32 %v232, 4294901760
    %v234 = vsub.f32 %v232, %v233
    %v235 = vand.u32 %v234, 4294901760
    %236 = vmatmul.f32.gmra.mxu0 %v235
    %v237 = vpop.f32.mrf.mxu0
    %v238 = vadd.f32 0.0, %v237
    %239 = vdwg.mxu0
    %240 = vmatpush.msra.mxu0 0.0
    %241 = vmatpush.msra.mxu0 0.0
    %242 = vmatpush.msra.mxu0 0.0
    %243 = vmatpush.msra.mxu0 0.0
    %244 = vmatpush.msra.mxu0 0.0
    %245 = vmatpush.msra.mxu0 0.0
    %246 = vmatpush.msra.mxu0 0.0
    %247 = vmatpush.msra.mxu0 0.0
    %248 = vmatpush.msra.mxu0 0.0
    %249 = vmatpush.msra.mxu0 0.0
    %250 = vmatpush.msra.mxu0 0.0
    %251 = vmatpush.msra.mxu0 0.0
    %252 = vmatpush.msra.mxu0 0.0
    %253 = vmatpush.msra.mxu0 0.0
    %v254 = vand.u32 %v64, 4294901760
    %v255 = vsub.f32 %v64, %v254
    %v256 = vand.u32 %v255, 4294901760
    %v257 = vsub.f32 %v255, %v256
    %v258 = vand.u32 %v257, 4294901760
    %259 = vmatpush.msra.mxu0 %v258
    %v260 = vand.u32 %v63, 4294901760
    %v261 = vsub.f32 %v63, %v260
    %v262 = vand.u32 %v261, 4294901760
    %v263 = vsub.f32 %v261, %v262
    %v264 = vand.u32 %v263, 4294901760
    %265 = vmatpush.msra.mxu0 %v264
    %v266 = vand.u32 %v178, 4294901760
    %267 = vmatmul.f32.gmra.mxu0 %v266
    %v268 = vpop.f32.mrf.mxu0
    %v269 = vadd.f32 %v214, %v268
    %v270 = vand.u32 %v181, 4294901760
    %271 = vmatmul.f32.gmra.mxu0 %v270
    %v272 = vpop.f32.mrf.mxu0
    %v273 = vadd.f32 %v222, %v272
    %v274 = vand.u32 %v184, 4294901760
    %275 = vmatmul.f32.gmra.mxu0 %v274
    %v276 = vpop.f32.mrf.mxu0
    %v277 = vadd.f32 %v230, %v276
    %v278 = vand.u32 %v187, 4294901760
    %279 = vmatmul.f32.gmra.mxu0 %v278
    %v280 = vpop.f32.mrf.mxu0
    %v281 = vadd.f32 %v238, %v280
    %282 = vdwg.mxu0
    %283 = vmatpush.msra.mxu0 0.0
    %284 = vmatpush.msra.mxu0 0.0
    %285 = vmatpush.msra.mxu0 0.0
    %286 = vmatpush.msra.mxu0 0.0
    %287 = vmatpush.msra.mxu0 0.0
    %288 = vmatpush.msra.mxu0 0.0
    %289 = vmatpush.msra.mxu0 0.0
    %290 = vmatpush.msra.mxu0 0.0
    %291 = vmatpush.msra.mxu0 0.0
    %292 = vmatpush.msra.mxu0 0.0
    %293 = vmatpush.msra.mxu0 0.0
    %294 = vmatpush.msra.mxu0 0.0
    %295 = vmatpush.msra.mxu0 0.0
    %296 = vmatpush.msra.mxu0 0.0
    %v297 = vand.u32 %v64, 4294901760
    %v298 = vsub.f32 %v64, %v297
    %299 = vmatpush.msra.mxu0 %v298
    %v300 = vand.u32 %v63, 4294901760
    %v301 = vsub.f32 %v63, %v300
    %302 = vmatpush.msra.mxu0 %v301
    %v303 = vand.u32 %v178, 4294901760
    %v304 = vsub.f32 %v178, %v303
    %305 = vmatmul.f32.gmra.mxu0 %v304
    %v306 = vpop.f32.mrf.mxu0
    %v307 = vadd.f32 %v269, %v306
    %v308 = vand.u32 %v181, 4294901760
    %v309 = vsub.f32 %v181, %v308
    %310 = vmatmul.f32.gmra.mxu0 %v309
    %v311 = vpop.f32.mrf.mxu0
    %v312 = vadd.f32 %v273, %v311
    %v313 = vand.u32 %v184, 4294901760
    %v314 = vsub.f32 %v184, %v313
    %315 = vmatmul.f32.gmra.mxu0 %v314
    %v316 = vpop.f32.mrf.mxu0
    %v317 = vadd.f32 %v277, %v316
    %v318 = vand.u32 %v187, 4294901760
    %v319 = vsub.f32 %v187, %v318
    %320 = vmatmul.f32.gmra.mxu0 %v319
    %v321 = vpop.f32.mrf.mxu0
    %v322 = vadd.f32 %v281, %v321
    %323 = vdwg.mxu0
    %324 = vmatpush.msra.mxu0 0.0
    %325 = vmatpush.msra.mxu0 0.0
    %326 = vmatpush.msra.mxu0 0.0
    %327 = vmatpush.msra.mxu0 0.0
    %328 = vmatpush.msra.mxu0 0.0
    %329 = vmatpush.msra.mxu0 0.0
    %330 = vmatpush.msra.mxu0 0.0
    %331 = vmatpush.msra.mxu0 0.0
    %332 = vmatpush.msra.mxu0 0.0
    %333 = vmatpush.msra.mxu0 0.0
    %334 = vmatpush.msra.mxu0 0.0
    %335 = vmatpush.msra.mxu0 0.0
    %336 = vmatpush.msra.mxu0 0.0
    %337 = vmatpush.msra.mxu0 0.0
    %v338 = vand.u32 %v64, 4294901760
    %339 = vmatpush.msra.mxu0 %v338
    %v340 = vand.u32 %v63, 4294901760
    %341 = vmatpush.msra.mxu0 %v340
    %v342 = vand.u32 %v178, 4294901760
    %v343 = vsub.f32 %v178, %v342
    %v344 = vand.u32 %v343, 4294901760
    %345 = vmatmul.f32.gmra.mxu0 %v344
    %v346 = vpop.f32.mrf.mxu0
    %v347 = vadd.f32 %v307, %v346
    %v348 = vand.u32 %v181, 4294901760
    %v349 = vsub.f32 %v181, %v348
    %v350 = vand.u32 %v349, 4294901760
    %351 = vmatmul.f32.gmra.mxu0 %v350
    %v352 = vpop.f32.mrf.mxu0
    %v353 = vadd.f32 %v312, %v352
    %v354 = vand.u32 %v184, 4294901760
    %v355 = vsub.f32 %v184, %v354
    %v356 = vand.u32 %v355, 4294901760
    %357 = vmatmul.f32.gmra.mxu0 %v356
    %v358 = vpop.f32.mrf.mxu0
    %v359 = vadd.f32 %v317, %v358
    %v360 = vand.u32 %v187, 4294901760
    %v361 = vsub.f32 %v187, %v360
    %v362 = vand.u32 %v361, 4294901760
    %363 = vmatmul.f32.gmra.mxu0 %v362
    %v364 = vpop.f32.mrf.mxu0
    %v365 = vadd.f32 %v322, %v364
    %366 = vdwg.mxu0
    %367 = vmatpush.msra.mxu0 0.0
    %368 = vmatpush.msra.mxu0 0.0
    %369 = vmatpush.msra.mxu0 0.0
    %370 = vmatpush.msra.mxu0 0.0
    %371 = vmatpush.msra.mxu0 0.0
    %372 = vmatpush.msra.mxu0 0.0
    %373 = vmatpush.msra.mxu0 0.0
    %374 = vmatpush.msra.mxu0 0.0
    %375 = vmatpush.msra.mxu0 0.0
    %376 = vmatpush.msra.mxu0 0.0
    %377 = vmatpush.msra.mxu0 0.0
    %378 = vmatpush.msra.mxu0 0.0
    %379 = vmatpush.msra.mxu0 0.0
    %380 = vmatpush.msra.mxu0 0.0
    %v381 = vand.u32 %v64, 4294901760
    %v382 = vsub.f32 %v64, %v381
    %v383 = vand.u32 %v382, 4294901760
    %384 = vmatpush.msra.mxu0 %v383
    %v385 = vand.u32 %v63, 4294901760
    %v386 = vsub.f32 %v63, %v385
    %v387 = vand.u32 %v386, 4294901760
    %388 = vmatpush.msra.mxu0 %v387
    %v389 = vand.u32 %v178, 4294901760
    %390 = vmatmul.f32.gmra.mxu0 %v389
    %v391 = vpop.f32.mrf.mxu0
    %v392 = vadd.f32 %v347, %v391
    %v393 = vand.u32 %v181, 4294901760
    %394 = vmatmul.f32.gmra.mxu0 %v393
    %v395 = vpop.f32.mrf.mxu0
    %v396 = vadd.f32 %v353, %v395
    %v397 = vand.u32 %v184, 4294901760
    %398 = vmatmul.f32.gmra.mxu0 %v397
    %v399 = vpop.f32.mrf.mxu0
    %v400 = vadd.f32 %v359, %v399
    %v401 = vand.u32 %v187, 4294901760
    %402 = vmatmul.f32.gmra.mxu0 %v401
    %v403 = vpop.f32.mrf.mxu0
    %v404 = vadd.f32 %v365, %v403
    %405 = vdwg.mxu0
    %406 = vmatpush.msra.mxu0 0.0
    %407 = vmatpush.msra.mxu0 0.0
    %408 = vmatpush.msra.mxu0 0.0
    %409 = vmatpush.msra.mxu0 0.0
    %410 = vmatpush.msra.mxu0 0.0
    %411 = vmatpush.msra.mxu0 0.0
    %412 = vmatpush.msra.mxu0 0.0
    %413 = vmatpush.msra.mxu0 0.0
    %414 = vmatpush.msra.mxu0 0.0
    %415 = vmatpush.msra.mxu0 0.0
    %416 = vmatpush.msra.mxu0 0.0
    %417 = vmatpush.msra.mxu0 0.0
    %418 = vmatpush.msra.mxu0 0.0
    %419 = vmatpush.msra.mxu0 0.0
    %v420 = vand.u32 %v64, 4294901760
    %421 = vmatpush.msra.mxu0 %v420
    %v422 = vand.u32 %v63, 4294901760
    %423 = vmatpush.msra.mxu0 %v422
    %v424 = vand.u32 %v178, 4294901760
    %425 = vmatmul.f32.gmra.mxu0 %v424
    %v426 = vpop.f32.mrf.mxu0
    %v427 = vadd.f32 %v392, %v426
    %v428 = vand.u32 %v181, 4294901760
    %429 = vmatmul.f32.gmra.mxu0 %v428
    %v430 = vpop.f32.mrf.mxu0
    %v431 = vadd.f32 %v396, %v430
    %v432 = vand.u32 %v184, 4294901760
    %433 = vmatmul.f32.gmra.mxu0 %v432
    %v434 = vpop.f32.mrf.mxu0
    %v435 = vadd.f32 %v400, %v434
    %v436 = vand.u32 %v187, 4294901760
    %437 = vmatmul.f32.gmra.mxu0 %v436
    %v438 = vpop.f32.mrf.mxu0
    %v439 = vadd.f32 %v404, %v438
    %440 = vdwg.mxu0
    %v442 = vsel %vm176, %v61, 0
    %v445 = vsel %vm176, %v62, 0
    %447 = vmatpush.msra.mxu0 0.0
    %448 = vmatpush.msra.mxu0 0.0
    %449 = vmatpush.msra.mxu0 0.0
    %450 = vmatpush.msra.mxu0 0.0
    %451 = vmatpush.msra.mxu0 0.0
    %452 = vmatpush.msra.mxu0 0.0
    %453 = vmatpush.msra.mxu0 0.0
    %454 = vmatpush.msra.mxu0 0.0
    %455 = vmatpush.msra.mxu0 0.0
    %456 = vmatpush.msra.mxu0 0.0
    %457 = vmatpush.msra.mxu0 0.0
    %458 = vmatpush.msra.mxu0 0.0
    %459 = vmatpush.msra.mxu0 0.0
    %460 = vmatpush.msra.mxu0 0.0
    %v461 = vand.u32 %v431, 4294901760
    %462 = vmatpush.msra.mxu0 %v461
    %v463 = vand.u32 %v427, 4294901760
    %464 = vmatpush.msra.mxu0 %v463
    %v465 = vand.u32 %v442, 4294901760
    %v466 = vsub.f32 %v442, %v465
    %v467 = vand.u32 %v466, 4294901760
    %v468 = vsub.f32 %v466, %v467
    %v469 = vand.u32 %v468, 4294901760
    %470 = vmatmul.f32.gmra.mxu0 %v469
    %v471 = vpop.f32.mrf.mxu0
    %v472 = vadd.f32 0.0, %v471
    %v473 = vand.u32 %v445, 4294901760
    %v474 = vsub.f32 %v445, %v473
    %v475 = vand.u32 %v474, 4294901760
    %v476 = vsub.f32 %v474, %v475
    %v477 = vand.u32 %v476, 4294901760
    %478 = vmatmul.f32.gmra.mxu0 %v477
    %v479 = vpop.f32.mrf.mxu0
    %v480 = vadd.f32 0.0, %v479
    %481 = vdwg.mxu0
    %482 = vmatpush.msra.mxu0 0.0
    %483 = vmatpush.msra.mxu0 0.0
    %484 = vmatpush.msra.mxu0 0.0
    %485 = vmatpush.msra.mxu0 0.0
    %486 = vmatpush.msra.mxu0 0.0
    %487 = vmatpush.msra.mxu0 0.0
    %488 = vmatpush.msra.mxu0 0.0
    %489 = vmatpush.msra.mxu0 0.0
    %490 = vmatpush.msra.mxu0 0.0
    %491 = vmatpush.msra.mxu0 0.0
    %492 = vmatpush.msra.mxu0 0.0
    %493 = vmatpush.msra.mxu0 0.0
    %494 = vmatpush.msra.mxu0 0.0
    %495 = vmatpush.msra.mxu0 0.0
    %v496 = vand.u32 %v431, 4294901760
    %v497 = vsub.f32 %v431, %v496
    %v498 = vand.u32 %v497, 4294901760
    %v499 = vsub.f32 %v497, %v498
    %v500 = vand.u32 %v499, 4294901760
    %501 = vmatpush.msra.mxu0 %v500
    %v502 = vand.u32 %v427, 4294901760
    %v503 = vsub.f32 %v427, %v502
    %v504 = vand.u32 %v503, 4294901760
    %v505 = vsub.f32 %v503, %v504
    %v506 = vand.u32 %v505, 4294901760
    %507 = vmatpush.msra.mxu0 %v506
    %v508 = vand.u32 %v442, 4294901760
    %509 = vmatmul.f32.gmra.mxu0 %v508
    %v510 = vpop.f32.mrf.mxu0
    %v511 = vadd.f32 %v472, %v510
    %v512 = vand.u32 %v445, 4294901760
    %513 = vmatmul.f32.gmra.mxu0 %v512
    %v514 = vpop.f32.mrf.mxu0
    %v515 = vadd.f32 %v480, %v514
    %516 = vdwg.mxu0
    %517 = vmatpush.msra.mxu0 0.0
    %518 = vmatpush.msra.mxu0 0.0
    %519 = vmatpush.msra.mxu0 0.0
    %520 = vmatpush.msra.mxu0 0.0
    %521 = vmatpush.msra.mxu0 0.0
    %522 = vmatpush.msra.mxu0 0.0
    %523 = vmatpush.msra.mxu0 0.0
    %524 = vmatpush.msra.mxu0 0.0
    %525 = vmatpush.msra.mxu0 0.0
    %526 = vmatpush.msra.mxu0 0.0
    %527 = vmatpush.msra.mxu0 0.0
    %528 = vmatpush.msra.mxu0 0.0
    %529 = vmatpush.msra.mxu0 0.0
    %530 = vmatpush.msra.mxu0 0.0
    %v531 = vand.u32 %v431, 4294901760
    %v532 = vsub.f32 %v431, %v531
    %533 = vmatpush.msra.mxu0 %v532
    %v534 = vand.u32 %v427, 4294901760
    %v535 = vsub.f32 %v427, %v534
    %536 = vmatpush.msra.mxu0 %v535
    %v537 = vand.u32 %v442, 4294901760
    %v538 = vsub.f32 %v442, %v537
    %539 = vmatmul.f32.gmra.mxu0 %v538
    %v540 = vpop.f32.mrf.mxu0
    %v541 = vadd.f32 %v511, %v540
    %v542 = vand.u32 %v445, 4294901760
    %v543 = vsub.f32 %v445, %v542
    %544 = vmatmul.f32.gmra.mxu0 %v543
    %v545 = vpop.f32.mrf.mxu0
    %v546 = vadd.f32 %v515, %v545
    %547 = vdwg.mxu0
    %548 = vmatpush.msra.mxu0 0.0
    %549 = vmatpush.msra.mxu0 0.0
    %550 = vmatpush.msra.mxu0 0.0
    %551 = vmatpush.msra.mxu0 0.0
    %552 = vmatpush.msra.mxu0 0.0
    %553 = vmatpush.msra.mxu0 0.0
    %554 = vmatpush.msra.mxu0 0.0
    %555 = vmatpush.msra.mxu0 0.0
    %556 = vmatpush.msra.mxu0 0.0
    %557 = vmatpush.msra.mxu0 0.0
    %558 = vmatpush.msra.mxu0 0.0
    %559 = vmatpush.msra.mxu0 0.0
    %560 = vmatpush.msra.mxu0 0.0
    %561 = vmatpush.msra.mxu0 0.0
    %v562 = vand.u32 %v431, 4294901760
    %563 = vmatpush.msra.mxu0 %v562
    %v564 = vand.u32 %v427, 4294901760
    %565 = vmatpush.msra.mxu0 %v564
    %v566 = vand.u32 %v442, 4294901760
    %v567 = vsub.f32 %v442, %v566
    %v568 = vand.u32 %v567, 4294901760
    %569 = vmatmul.f32.gmra.mxu0 %v568
    %v570 = vpop.f32.mrf.mxu0
    %v571 = vadd.f32 %v541, %v570
    %v572 = vand.u32 %v445, 4294901760
    %v573 = vsub.f32 %v445, %v572
    %v574 = vand.u32 %v573, 4294901760
    %575 = vmatmul.f32.gmra.mxu0 %v574
    %v576 = vpop.f32.mrf.mxu0
    %v577 = vadd.f32 %v546, %v576
    %578 = vdwg.mxu0
    %579 = vmatpush.msra.mxu0 0.0
    %580 = vmatpush.msra.mxu0 0.0
    %581 = vmatpush.msra.mxu0 0.0
    %582 = vmatpush.msra.mxu0 0.0
    %583 = vmatpush.msra.mxu0 0.0
    %584 = vmatpush.msra.mxu0 0.0
    %585 = vmatpush.msra.mxu0 0.0
    %586 = vmatpush.msra.mxu0 0.0
    %587 = vmatpush.msra.mxu0 0.0
    %588 = vmatpush.msra.mxu0 0.0
    %589 = vmatpush.msra.mxu0 0.0
    %590 = vmatpush.msra.mxu0 0.0
    %591 = vmatpush.msra.mxu0 0.0
    %592 = vmatpush.msra.mxu0 0.0
    %v593 = vand.u32 %v431, 4294901760
    %v594 = vsub.f32 %v431, %v593
    %v595 = vand.u32 %v594, 4294901760
    %596 = vmatpush.msra.mxu0 %v595
    %v597 = vand.u32 %v427, 4294901760
    %v598 = vsub.f32 %v427, %v597
    %v599 = vand.u32 %v598, 4294901760
    %600 = vmatpush.msra.mxu0 %v599
    %v601 = vand.u32 %v442, 4294901760
    %602 = vmatmul.f32.gmra.mxu0 %v601
    %v603 = vpop.f32.mrf.mxu0
    %v604 = vadd.f32 %v571, %v603
    %v605 = vand.u32 %v445, 4294901760
    %606 = vmatmul.f32.gmra.mxu0 %v605
    %v607 = vpop.f32.mrf.mxu0
    %v608 = vadd.f32 %v577, %v607
    %609 = vdwg.mxu0
    %610 = vmatpush.msra.mxu0 0.0
    %611 = vmatpush.msra.mxu0 0.0
    %612 = vmatpush.msra.mxu0 0.0
    %613 = vmatpush.msra.mxu0 0.0
    %614 = vmatpush.msra.mxu0 0.0
    %615 = vmatpush.msra.mxu0 0.0
    %616 = vmatpush.msra.mxu0 0.0
    %617 = vmatpush.msra.mxu0 0.0
    %618 = vmatpush.msra.mxu0 0.0
    %619 = vmatpush.msra.mxu0 0.0
    %620 = vmatpush.msra.mxu0 0.0
    %621 = vmatpush.msra.mxu0 0.0
    %622 = vmatpush.msra.mxu0 0.0
    %623 = vmatpush.msra.mxu0 0.0
    %v624 = vand.u32 %v431, 4294901760
    %625 = vmatpush.msra.mxu0 %v624
    %v626 = vand.u32 %v427, 4294901760
    %627 = vmatpush.msra.mxu0 %v626
    %v628 = vand.u32 %v442, 4294901760
    %629 = vmatmul.f32.gmra.mxu0 %v628
    %v630 = vpop.f32.mrf.mxu0
    %v631 = vadd.f32 %v604, %v630
    %v632 = vand.u32 %v445, 4294901760
    %633 = vmatmul.f32.gmra.mxu0 %v632
    %v634 = vpop.f32.mrf.mxu0
    %v635 = vadd.f32 %v608, %v634
    %636 = vdwg.mxu0
    %637 = vst.msk [vmem:[%s3] sm:$0xff] %vm176, %v631
    %638 = vst.msk [vmem:[%s3 + $0x8] sm:$0xff] %vm176, %v635
    %639 = vmatpush.msra.mxu0 0.0
    %640 = vmatpush.msra.mxu0 0.0
    %641 = vmatpush.msra.mxu0 0.0
    %642 = vmatpush.msra.mxu0 0.0
    %643 = vmatpush.msra.mxu0 0.0
    %644 = vmatpush.msra.mxu0 0.0
    %645 = vmatpush.msra.mxu0 0.0
    %646 = vmatpush.msra.mxu0 0.0
    %647 = vmatpush.msra.mxu0 0.0
    %648 = vmatpush.msra.mxu0 0.0
    %649 = vmatpush.msra.mxu0 0.0
    %650 = vmatpush.msra.mxu0 0.0
    %651 = vmatpush.msra.mxu0 0.0
    %652 = vmatpush.msra.mxu0 0.0
    %v653 = vand.u32 %v439, 4294901760
    %654 = vmatpush.msra.mxu0 %v653
    %v655 = vand.u32 %v435, 4294901760
    %656 = vmatpush.msra.mxu0 %v655
    %v657 = vand.u32 %v442, 4294901760
    %v658 = vsub.f32 %v442, %v657
    %v659 = vand.u32 %v658, 4294901760
    %v660 = vsub.f32 %v658, %v659
    %v661 = vand.u32 %v660, 4294901760
    %662 = vmatmul.f32.gmra.mxu0 %v661
    %v663 = vpop.f32.mrf.mxu0
    %v664 = vadd.f32 0.0, %v663
    %v665 = vand.u32 %v445, 4294901760
    %v666 = vsub.f32 %v445, %v665
    %v667 = vand.u32 %v666, 4294901760
    %v668 = vsub.f32 %v666, %v667
    %v669 = vand.u32 %v668, 4294901760
    %670 = vmatmul.f32.gmra.mxu0 %v669
    %v671 = vpop.f32.mrf.mxu0
    %v672 = vadd.f32 0.0, %v671
    %673 = vdwg.mxu0
    %674 = vmatpush.msra.mxu0 0.0
    %675 = vmatpush.msra.mxu0 0.0
    %676 = vmatpush.msra.mxu0 0.0
    %677 = vmatpush.msra.mxu0 0.0
    %678 = vmatpush.msra.mxu0 0.0
    %679 = vmatpush.msra.mxu0 0.0
    %680 = vmatpush.msra.mxu0 0.0
    %681 = vmatpush.msra.mxu0 0.0
    %682 = vmatpush.msra.mxu0 0.0
    %683 = vmatpush.msra.mxu0 0.0
    %684 = vmatpush.msra.mxu0 0.0
    %685 = vmatpush.msra.mxu0 0.0
    %686 = vmatpush.msra.mxu0 0.0
    %687 = vmatpush.msra.mxu0 0.0
    %v688 = vand.u32 %v439, 4294901760
    %v689 = vsub.f32 %v439, %v688
    %v690 = vand.u32 %v689, 4294901760
    %v691 = vsub.f32 %v689, %v690
    %v692 = vand.u32 %v691, 4294901760
    %693 = vmatpush.msra.mxu0 %v692
    %v694 = vand.u32 %v435, 4294901760
    %v695 = vsub.f32 %v435, %v694
    %v696 = vand.u32 %v695, 4294901760
    %v697 = vsub.f32 %v695, %v696
    %v698 = vand.u32 %v697, 4294901760
    %699 = vmatpush.msra.mxu0 %v698
    %v700 = vand.u32 %v442, 4294901760
    %701 = vmatmul.f32.gmra.mxu0 %v700
    %v702 = vpop.f32.mrf.mxu0
    %v703 = vadd.f32 %v664, %v702
    %v704 = vand.u32 %v445, 4294901760
    %705 = vmatmul.f32.gmra.mxu0 %v704
    %v706 = vpop.f32.mrf.mxu0
    %v707 = vadd.f32 %v672, %v706
    %708 = vdwg.mxu0
    %709 = vmatpush.msra.mxu0 0.0
    %710 = vmatpush.msra.mxu0 0.0
    %711 = vmatpush.msra.mxu0 0.0
    %712 = vmatpush.msra.mxu0 0.0
    %713 = vmatpush.msra.mxu0 0.0
    %714 = vmatpush.msra.mxu0 0.0
    %715 = vmatpush.msra.mxu0 0.0
    %716 = vmatpush.msra.mxu0 0.0
    %717 = vmatpush.msra.mxu0 0.0
    %718 = vmatpush.msra.mxu0 0.0
    %719 = vmatpush.msra.mxu0 0.0
    %720 = vmatpush.msra.mxu0 0.0
    %721 = vmatpush.msra.mxu0 0.0
    %722 = vmatpush.msra.mxu0 0.0
    %v723 = vand.u32 %v439, 4294901760
    %v724 = vsub.f32 %v439, %v723
    %725 = vmatpush.msra.mxu0 %v724
    %v726 = vand.u32 %v435, 4294901760
    %v727 = vsub.f32 %v435, %v726
    %728 = vmatpush.msra.mxu0 %v727
    %v729 = vand.u32 %v442, 4294901760
    %v730 = vsub.f32 %v442, %v729
    %731 = vmatmul.f32.gmra.mxu0 %v730
    %v732 = vpop.f32.mrf.mxu0
    %v733 = vadd.f32 %v703, %v732
    %v734 = vand.u32 %v445, 4294901760
    %v735 = vsub.f32 %v445, %v734
    %736 = vmatmul.f32.gmra.mxu0 %v735
    %v737 = vpop.f32.mrf.mxu0
    %v738 = vadd.f32 %v707, %v737
    %739 = vdwg.mxu0
    %740 = vmatpush.msra.mxu0 0.0
    %741 = vmatpush.msra.mxu0 0.0
    %742 = vmatpush.msra.mxu0 0.0
    %743 = vmatpush.msra.mxu0 0.0
    %744 = vmatpush.msra.mxu0 0.0
    %745 = vmatpush.msra.mxu0 0.0
    %746 = vmatpush.msra.mxu0 0.0
    %747 = vmatpush.msra.mxu0 0.0
    %748 = vmatpush.msra.mxu0 0.0
    %749 = vmatpush.msra.mxu0 0.0
    %750 = vmatpush.msra.mxu0 0.0
    %751 = vmatpush.msra.mxu0 0.0
    %752 = vmatpush.msra.mxu0 0.0
    %753 = vmatpush.msra.mxu0 0.0
    %v754 = vand.u32 %v439, 4294901760
    %755 = vmatpush.msra.mxu0 %v754
    %v756 = vand.u32 %v435, 4294901760
    %757 = vmatpush.msra.mxu0 %v756
    %v758 = vand.u32 %v442, 4294901760
    %v759 = vsub.f32 %v442, %v758
    %v760 = vand.u32 %v759, 4294901760
    %761 = vmatmul.f32.gmra.mxu0 %v760
    %v762 = vpop.f32.mrf.mxu0
    %v763 = vadd.f32 %v733, %v762
    %v764 = vand.u32 %v445, 4294901760
    %v765 = vsub.f32 %v445, %v764
    %v766 = vand.u32 %v765, 4294901760
    %767 = vmatmul.f32.gmra.mxu0 %v766
    %v768 = vpop.f32.mrf.mxu0
    %v769 = vadd.f32 %v738, %v768
    %770 = vdwg.mxu0
    %771 = vmatpush.msra.mxu0 0.0
    %772 = vmatpush.msra.mxu0 0.0
    %773 = vmatpush.msra.mxu0 0.0
    %774 = vmatpush.msra.mxu0 0.0
    %775 = vmatpush.msra.mxu0 0.0
    %776 = vmatpush.msra.mxu0 0.0
    %777 = vmatpush.msra.mxu0 0.0
    %778 = vmatpush.msra.mxu0 0.0
    %779 = vmatpush.msra.mxu0 0.0
    %780 = vmatpush.msra.mxu0 0.0
    %781 = vmatpush.msra.mxu0 0.0
    %782 = vmatpush.msra.mxu0 0.0
    %783 = vmatpush.msra.mxu0 0.0
    %784 = vmatpush.msra.mxu0 0.0
    %v785 = vand.u32 %v439, 4294901760
    %v786 = vsub.f32 %v439, %v785
    %v787 = vand.u32 %v786, 4294901760
    %788 = vmatpush.msra.mxu0 %v787
    %v789 = vand.u32 %v435, 4294901760
    %v790 = vsub.f32 %v435, %v789
    %v791 = vand.u32 %v790, 4294901760
    %792 = vmatpush.msra.mxu0 %v791
    %v793 = vand.u32 %v442, 4294901760
    %794 = vmatmul.f32.gmra.mxu0 %v793
    %v795 = vpop.f32.mrf.mxu0
    %v796 = vadd.f32 %v763, %v795
    %v797 = vand.u32 %v445, 4294901760
    %798 = vmatmul.f32.gmra.mxu0 %v797
    %v799 = vpop.f32.mrf.mxu0
    %v800 = vadd.f32 %v769, %v799
    %801 = vdwg.mxu0
    %802 = vmatpush.msra.mxu0 0.0
    %803 = vmatpush.msra.mxu0 0.0
    %804 = vmatpush.msra.mxu0 0.0
    %805 = vmatpush.msra.mxu0 0.0
    %806 = vmatpush.msra.mxu0 0.0
    %807 = vmatpush.msra.mxu0 0.0
    %808 = vmatpush.msra.mxu0 0.0
    %809 = vmatpush.msra.mxu0 0.0
    %810 = vmatpush.msra.mxu0 0.0
    %811 = vmatpush.msra.mxu0 0.0
    %812 = vmatpush.msra.mxu0 0.0
    %813 = vmatpush.msra.mxu0 0.0
    %814 = vmatpush.msra.mxu0 0.0
    %815 = vmatpush.msra.mxu0 0.0
    %v816 = vand.u32 %v439, 4294901760
    %817 = vmatpush.msra.mxu0 %v816
    %v818 = vand.u32 %v435, 4294901760
    %819 = vmatpush.msra.mxu0 %v818
    %v820 = vand.u32 %v442, 4294901760
    %821 = vmatmul.f32.gmra.mxu0 %v820
    %v822 = vpop.f32.mrf.mxu0
    %v823 = vadd.f32 %v796, %v822
    %v824 = vand.u32 %v445, 4294901760
    %825 = vmatmul.f32.gmra.mxu0 %v824
    %v826 = vpop.f32.mrf.mxu0
    %v827 = vadd.f32 %v800, %v826
    %828 = vdwg.mxu0
    %s829 = scalar_lea.vmem %s3, 48
    %830 = vst.msk [vmem:[%s829] sm:$0xff] %vm176, %v823
    %831 = vst.msk [vmem:[%s829 + $0x8] sm:$0xff] %vm176, %v827
    %v833 = vsel %vm176, %v144, 0
    %v836 = vsel %vm176, %v145, 0
    %v839 = vsel %vm176, %v146, 0
    %v842 = vsel %vm176, %v147, 0
    %844 = vmatpush.msra.mxu0 0.0
    %845 = vmatpush.msra.mxu0 0.0
    %846 = vmatpush.msra.mxu0 0.0
    %847 = vmatpush.msra.mxu0 0.0
    %848 = vmatpush.msra.mxu0 0.0
    %849 = vmatpush.msra.mxu0 0.0
    %850 = vmatpush.msra.mxu0 0.0
    %851 = vmatpush.msra.mxu0 0.0
    %852 = vmatpush.msra.mxu0 0.0
    %853 = vmatpush.msra.mxu0 0.0
    %854 = vmatpush.msra.mxu0 0.0
    %855 = vmatpush.msra.mxu0 0.0
    %856 = vmatpush.msra.mxu0 0.0
    %857 = vmatpush.msra.mxu0 0.0
    %v858 = vand.u32 %v64, 4294901760
    %859 = vmatpush.msra.mxu0 %v858
    %v860 = vand.u32 %v63, 4294901760
    %861 = vmatpush.msra.mxu0 %v860
    %v862 = vand.u32 %v833, 4294901760
    %v863 = vsub.f32 %v833, %v862
    %v864 = vand.u32 %v863, 4294901760
    %v865 = vsub.f32 %v863, %v864
    %v866 = vand.u32 %v865, 4294901760
    %867 = vmatmul.f32.gmra.mxu0 %v866
    %v868 = vpop.f32.mrf.mxu0
    %v869 = vadd.f32 0.0, %v868
    %v870 = vand.u32 %v836, 4294901760
    %v871 = vsub.f32 %v836, %v870
    %v872 = vand.u32 %v871, 4294901760
    %v873 = vsub.f32 %v871, %v872
    %v874 = vand.u32 %v873, 4294901760
    %875 = vmatmul.f32.gmra.mxu0 %v874
    %v876 = vpop.f32.mrf.mxu0
    %v877 = vadd.f32 0.0, %v876
    %v878 = vand.u32 %v839, 4294901760
    %v879 = vsub.f32 %v839, %v878
    %v880 = vand.u32 %v879, 4294901760
    %v881 = vsub.f32 %v879, %v880
    %v882 = vand.u32 %v881, 4294901760
    %883 = vmatmul.f32.gmra.mxu0 %v882
    %v884 = vpop.f32.mrf.mxu0
    %v885 = vadd.f32 0.0, %v884
    %v886 = vand.u32 %v842, 4294901760
    %v887 = vsub.f32 %v842, %v886
    %v888 = vand.u32 %v887, 4294901760
    %v889 = vsub.f32 %v887, %v888
    %v890 = vand.u32 %v889, 4294901760
    %891 = vmatmul.f32.gmra.mxu0 %v890
    %v892 = vpop.f32.mrf.mxu0
    %v893 = vadd.f32 0.0, %v892
    %894 = vdwg.mxu0
    %895 = vmatpush.msra.mxu0 0.0
    %896 = vmatpush.msra.mxu0 0.0
    %897 = vmatpush.msra.mxu0 0.0
    %898 = vmatpush.msra.mxu0 0.0
    %899 = vmatpush.msra.mxu0 0.0
    %900 = vmatpush.msra.mxu0 0.0
    %901 = vmatpush.msra.mxu0 0.0
    %902 = vmatpush.msra.mxu0 0.0
    %903 = vmatpush.msra.mxu0 0.0
    %904 = vmatpush.msra.mxu0 0.0
    %905 = vmatpush.msra.mxu0 0.0
    %906 = vmatpush.msra.mxu0 0.0
    %907 = vmatpush.msra.mxu0 0.0
    %908 = vmatpush.msra.mxu0 0.0
    %v909 = vand.u32 %v64, 4294901760
    %v910 = vsub.f32 %v64, %v909
    %v911 = vand.u32 %v910, 4294901760
    %v912 = vsub.f32 %v910, %v911
    %v913 = vand.u32 %v912, 4294901760
    %914 = vmatpush.msra.mxu0 %v913
    %v915 = vand.u32 %v63, 4294901760
    %v916 = vsub.f32 %v63, %v915
    %v917 = vand.u32 %v916, 4294901760
    %v918 = vsub.f32 %v916, %v917
    %v919 = vand.u32 %v918, 4294901760
    %920 = vmatpush.msra.mxu0 %v919
    %v921 = vand.u32 %v833, 4294901760
    %922 = vmatmul.f32.gmra.mxu0 %v921
    %v923 = vpop.f32.mrf.mxu0
    %v924 = vadd.f32 %v869, %v923
    %v925 = vand.u32 %v836, 4294901760
    %926 = vmatmul.f32.gmra.mxu0 %v925
    %v927 = vpop.f32.mrf.mxu0
    %v928 = vadd.f32 %v877, %v927
    %v929 = vand.u32 %v839, 4294901760
    %930 = vmatmul.f32.gmra.mxu0 %v929
    %v931 = vpop.f32.mrf.mxu0
    %v932 = vadd.f32 %v885, %v931
    %v933 = vand.u32 %v842, 4294901760
    %934 = vmatmul.f32.gmra.mxu0 %v933
    %v935 = vpop.f32.mrf.mxu0
    %v936 = vadd.f32 %v893, %v935
    %937 = vdwg.mxu0
    %938 = vmatpush.msra.mxu0 0.0
    %939 = vmatpush.msra.mxu0 0.0
    %940 = vmatpush.msra.mxu0 0.0
    %941 = vmatpush.msra.mxu0 0.0
    %942 = vmatpush.msra.mxu0 0.0
    %943 = vmatpush.msra.mxu0 0.0
    %944 = vmatpush.msra.mxu0 0.0
    %945 = vmatpush.msra.mxu0 0.0
    %946 = vmatpush.msra.mxu0 0.0
    %947 = vmatpush.msra.mxu0 0.0
    %948 = vmatpush.msra.mxu0 0.0
    %949 = vmatpush.msra.mxu0 0.0
    %950 = vmatpush.msra.mxu0 0.0
    %951 = vmatpush.msra.mxu0 0.0
    %v952 = vand.u32 %v64, 4294901760
    %v953 = vsub.f32 %v64, %v952
    %954 = vmatpush.msra.mxu0 %v953
    %v955 = vand.u32 %v63, 4294901760
    %v956 = vsub.f32 %v63, %v955
    %957 = vmatpush.msra.mxu0 %v956
    %v958 = vand.u32 %v833, 4294901760
    %v959 = vsub.f32 %v833, %v958
    %960 = vmatmul.f32.gmra.mxu0 %v959
    %v961 = vpop.f32.mrf.mxu0
    %v962 = vadd.f32 %v924, %v961
    %v963 = vand.u32 %v836, 4294901760
    %v964 = vsub.f32 %v836, %v963
    %965 = vmatmul.f32.gmra.mxu0 %v964
    %v966 = vpop.f32.mrf.mxu0
    %v967 = vadd.f32 %v928, %v966
    %v968 = vand.u32 %v839, 4294901760
    %v969 = vsub.f32 %v839, %v968
    %970 = vmatmul.f32.gmra.mxu0 %v969
    %v971 = vpop.f32.mrf.mxu0
    %v972 = vadd.f32 %v932, %v971
    %v973 = vand.u32 %v842, 4294901760
    %v974 = vsub.f32 %v842, %v973
    %975 = vmatmul.f32.gmra.mxu0 %v974
    %v976 = vpop.f32.mrf.mxu0
    %v977 = vadd.f32 %v936, %v976
    %978 = vdwg.mxu0
    %979 = vmatpush.msra.mxu0 0.0
    %980 = vmatpush.msra.mxu0 0.0
    %981 = vmatpush.msra.mxu0 0.0
    %982 = vmatpush.msra.mxu0 0.0
    %983 = vmatpush.msra.mxu0 0.0
    %984 = vmatpush.msra.mxu0 0.0
    %985 = vmatpush.msra.mxu0 0.0
    %986 = vmatpush.msra.mxu0 0.0
    %987 = vmatpush.msra.mxu0 0.0
    %988 = vmatpush.msra.mxu0 0.0
    %989 = vmatpush.msra.mxu0 0.0
    %990 = vmatpush.msra.mxu0 0.0
    %991 = vmatpush.msra.mxu0 0.0
    %992 = vmatpush.msra.mxu0 0.0
    %v993 = vand.u32 %v64, 4294901760
    %994 = vmatpush.msra.mxu0 %v993
    %v995 = vand.u32 %v63, 4294901760
    %996 = vmatpush.msra.mxu0 %v995
    %v997 = vand.u32 %v833, 4294901760
    %v998 = vsub.f32 %v833, %v997
    %v999 = vand.u32 %v998, 4294901760
    %1000 = vmatmul.f32.gmra.mxu0 %v999
    %v1001 = vpop.f32.mrf.mxu0
    %v1002 = vadd.f32 %v962, %v1001
    %v1003 = vand.u32 %v836, 4294901760
    %v1004 = vsub.f32 %v836, %v1003
    %v1005 = vand.u32 %v1004, 4294901760
    %1006 = vmatmul.f32.gmra.mxu0 %v1005
    %v1007 = vpop.f32.mrf.mxu0
    %v1008 = vadd.f32 %v967, %v1007
    %v1009 = vand.u32 %v839, 4294901760
    %v1010 = vsub.f32 %v839, %v1009
    %v1011 = vand.u32 %v1010, 4294901760
    %1012 = vmatmul.f32.gmra.mxu0 %v1011
    %v1013 = vpop.f32.mrf.mxu0
    %v1014 = vadd.f32 %v972, %v1013
    %v1015 = vand.u32 %v842, 4294901760
    %v1016 = vsub.f32 %v842, %v1015
    %v1017 = vand.u32 %v1016, 4294901760
    %1018 = vmatmul.f32.gmra.mxu0 %v1017
    %v1019 = vpop.f32.mrf.mxu0
    %v1020 = vadd.f32 %v977, %v1019
    %1021 = vdwg.mxu0
    %1022 = vmatpush.msra.mxu0 0.0
    %1023 = vmatpush.msra.mxu0 0.0
    %1024 = vmatpush.msra.mxu0 0.0
    %1025 = vmatpush.msra.mxu0 0.0
    %1026 = vmatpush.msra.mxu0 0.0
    %1027 = vmatpush.msra.mxu0 0.0
    %1028 = vmatpush.msra.mxu0 0.0
    %1029 = vmatpush.msra.mxu0 0.0
    %1030 = vmatpush.msra.mxu0 0.0
    %1031 = vmatpush.msra.mxu0 0.0
    %1032 = vmatpush.msra.mxu0 0.0
    %1033 = vmatpush.msra.mxu0 0.0
    %1034 = vmatpush.msra.mxu0 0.0
    %1035 = vmatpush.msra.mxu0 0.0
    %v1036 = vand.u32 %v64, 4294901760
    %v1037 = vsub.f32 %v64, %v1036
    %v1038 = vand.u32 %v1037, 4294901760
    %1039 = vmatpush.msra.mxu0 %v1038
    %v1040 = vand.u32 %v63, 4294901760
    %v1041 = vsub.f32 %v63, %v1040
    %v1042 = vand.u32 %v1041, 4294901760
    %1043 = vmatpush.msra.mxu0 %v1042
    %v1044 = vand.u32 %v833, 4294901760
    %1045 = vmatmul.f32.gmra.mxu0 %v1044
    %v1046 = vpop.f32.mrf.mxu0
    %v1047 = vadd.f32 %v1002, %v1046
    %v1048 = vand.u32 %v836, 4294901760
    %1049 = vmatmul.f32.gmra.mxu0 %v1048
    %v1050 = vpop.f32.mrf.mxu0
    %v1051 = vadd.f32 %v1008, %v1050
    %v1052 = vand.u32 %v839, 4294901760
    %1053 = vmatmul.f32.gmra.mxu0 %v1052
    %v1054 = vpop.f32.mrf.mxu0
    %v1055 = vadd.f32 %v1014, %v1054
    %v1056 = vand.u32 %v842, 4294901760
    %1057 = vmatmul.f32.gmra.mxu0 %v1056
    %v1058 = vpop.f32.mrf.mxu0
    %v1059 = vadd.f32 %v1020, %v1058
    %1060 = vdwg.mxu0
    %1061 = vmatpush.msra.mxu0 0.0
    %1062 = vmatpush.msra.mxu0 0.0
    %1063 = vmatpush.msra.mxu0 0.0
    %1064 = vmatpush.msra.mxu0 0.0
    %1065 = vmatpush.msra.mxu0 0.0
    %1066 = vmatpush.msra.mxu0 0.0
    %1067 = vmatpush.msra.mxu0 0.0
    %1068 = vmatpush.msra.mxu0 0.0
    %1069 = vmatpush.msra.mxu0 0.0
    %1070 = vmatpush.msra.mxu0 0.0
    %1071 = vmatpush.msra.mxu0 0.0
    %1072 = vmatpush.msra.mxu0 0.0
    %1073 = vmatpush.msra.mxu0 0.0
    %1074 = vmatpush.msra.mxu0 0.0
    %v1075 = vand.u32 %v64, 4294901760
    %1076 = vmatpush.msra.mxu0 %v1075
    %v1077 = vand.u32 %v63, 4294901760
    %1078 = vmatpush.msra.mxu0 %v1077
    %v1079 = vand.u32 %v833, 4294901760
    %1080 = vmatmul.f32.gmra.mxu0 %v1079
    %v1081 = vpop.f32.mrf.mxu0
    %v1082 = vadd.f32 %v1047, %v1081
    %v1083 = vand.u32 %v836, 4294901760
    %1084 = vmatmul.f32.gmra.mxu0 %v1083
    %v1085 = vpop.f32.mrf.mxu0
    %v1086 = vadd.f32 %v1051, %v1085
    %v1087 = vand.u32 %v839, 4294901760
    %1088 = vmatmul.f32.gmra.mxu0 %v1087
    %v1089 = vpop.f32.mrf.mxu0
    %v1090 = vadd.f32 %v1055, %v1089
    %v1091 = vand.u32 %v842, 4294901760
    %1092 = vmatmul.f32.gmra.mxu0 %v1091
    %v1093 = vpop.f32.mrf.mxu0
    %v1094 = vadd.f32 %v1059, %v1093
    %1095 = vdwg.mxu0
    %1096 = vmatpush.msra.mxu0 0.0
    %1097 = vmatpush.msra.mxu0 0.0
    %1098 = vmatpush.msra.mxu0 0.0
    %1099 = vmatpush.msra.mxu0 0.0
    %1100 = vmatpush.msra.mxu0 0.0
    %1101 = vmatpush.msra.mxu0 0.0
    %1102 = vmatpush.msra.mxu0 0.0
    %1103 = vmatpush.msra.mxu0 0.0
    %1104 = vmatpush.msra.mxu0 0.0
    %1105 = vmatpush.msra.mxu0 0.0
    %1106 = vmatpush.msra.mxu0 0.0
    %1107 = vmatpush.msra.mxu0 0.0
    %1108 = vmatpush.msra.mxu0 0.0
    %1109 = vmatpush.msra.mxu0 0.0
    %v1110 = vand.u32 %v1086, 4294901760
    %1111 = vmatpush.msra.mxu0 %v1110
    %v1112 = vand.u32 %v1082, 4294901760
    %1113 = vmatpush.msra.mxu0 %v1112
    %v1114 = vand.u32 %v442, 4294901760
    %v1115 = vsub.f32 %v442, %v1114
    %v1116 = vand.u32 %v1115, 4294901760
    %v1117 = vsub.f32 %v1115, %v1116
    %v1118 = vand.u32 %v1117, 4294901760
    %1119 = vmatmul.f32.gmra.mxu0 %v1118
    %v1120 = vpop.f32.mrf.mxu0
    %v1121 = vadd.f32 0.0, %v1120
    %v1122 = vand.u32 %v445, 4294901760
    %v1123 = vsub.f32 %v445, %v1122
    %v1124 = vand.u32 %v1123, 4294901760
    %v1125 = vsub.f32 %v1123, %v1124
    %v1126 = vand.u32 %v1125, 4294901760
    %1127 = vmatmul.f32.gmra.mxu0 %v1126
    %v1128 = vpop.f32.mrf.mxu0
    %v1129 = vadd.f32 0.0, %v1128
    %1130 = vdwg.mxu0
    %1131 = vmatpush.msra.mxu0 0.0
    %1132 = vmatpush.msra.mxu0 0.0
    %1133 = vmatpush.msra.mxu0 0.0
    %1134 = vmatpush.msra.mxu0 0.0
    %1135 = vmatpush.msra.mxu0 0.0
    %1136 = vmatpush.msra.mxu0 0.0
    %1137 = vmatpush.msra.mxu0 0.0
    %1138 = vmatpush.msra.mxu0 0.0
    %1139 = vmatpush.msra.mxu0 0.0
    %1140 = vmatpush.msra.mxu0 0.0
    %1141 = vmatpush.msra.mxu0 0.0
    %1142 = vmatpush.msra.mxu0 0.0
    %1143 = vmatpush.msra.mxu0 0.0
    %1144 = vmatpush.msra.mxu0 0.0
    %v1145 = vand.u32 %v1086, 4294901760
    %v1146 = vsub.f32 %v1086, %v1145
    %v1147 = vand.u32 %v1146, 4294901760
    %v1148 = vsub.f32 %v1146, %v1147
    %v1149 = vand.u32 %v1148, 4294901760
    %1150 = vmatpush.msra.mxu0 %v1149
    %v1151 = vand.u32 %v1082, 4294901760
    %v1152 = vsub.f32 %v1082, %v1151
    %v1153 = vand.u32 %v1152, 4294901760
    %v1154 = vsub.f32 %v1152, %v1153
    %v1155 = vand.u32 %v1154, 4294901760
    %1156 = vmatpush.msra.mxu0 %v1155
    %v1157 = vand.u32 %v442, 4294901760
    %1158 = vmatmul.f32.gmra.mxu0 %v1157
    %v1159 = vpop.f32.mrf.mxu0
    %v1160 = vadd.f32 %v1121, %v1159
    %v1161 = vand.u32 %v445, 4294901760
    %1162 = vmatmul.f32.gmra.mxu0 %v1161
    %v1163 = vpop.f32.mrf.mxu0
    %v1164 = vadd.f32 %v1129, %v1163
    %1165 = vdwg.mxu0
    %1166 = vmatpush.msra.mxu0 0.0
    %1167 = vmatpush.msra.mxu0 0.0
    %1168 = vmatpush.msra.mxu0 0.0
    %1169 = vmatpush.msra.mxu0 0.0
    %1170 = vmatpush.msra.mxu0 0.0
    %1171 = vmatpush.msra.mxu0 0.0
    %1172 = vmatpush.msra.mxu0 0.0
    %1173 = vmatpush.msra.mxu0 0.0
    %1174 = vmatpush.msra.mxu0 0.0
    %1175 = vmatpush.msra.mxu0 0.0
    %1176 = vmatpush.msra.mxu0 0.0
    %1177 = vmatpush.msra.mxu0 0.0
    %1178 = vmatpush.msra.mxu0 0.0
    %1179 = vmatpush.msra.mxu0 0.0
    %v1180 = vand.u32 %v1086, 4294901760
    %v1181 = vsub.f32 %v1086, %v1180
    %1182 = vmatpush.msra.mxu0 %v1181
    %v1183 = vand.u32 %v1082, 4294901760
    %v1184 = vsub.f32 %v1082, %v1183
    %1185 = vmatpush.msra.mxu0 %v1184
    %v1186 = vand.u32 %v442, 4294901760
    %v1187 = vsub.f32 %v442, %v1186
    %1188 = vmatmul.f32.gmra.mxu0 %v1187
    %v1189 = vpop.f32.mrf.mxu0
    %v1190 = vadd.f32 %v1160, %v1189
    %v1191 = vand.u32 %v445, 4294901760
    %v1192 = vsub.f32 %v445, %v1191
    %1193 = vmatmul.f32.gmra.mxu0 %v1192
    %v1194 = vpop.f32.mrf.mxu0
    %v1195 = vadd.f32 %v1164, %v1194
    %1196 = vdwg.mxu0
    %1197 = vmatpush.msra.mxu0 0.0
    %1198 = vmatpush.msra.mxu0 0.0
    %1199 = vmatpush.msra.mxu0 0.0
    %1200 = vmatpush.msra.mxu0 0.0
    %1201 = vmatpush.msra.mxu0 0.0
    %1202 = vmatpush.msra.mxu0 0.0
    %1203 = vmatpush.msra.mxu0 0.0
    %1204 = vmatpush.msra.mxu0 0.0
    %1205 = vmatpush.msra.mxu0 0.0
    %1206 = vmatpush.msra.mxu0 0.0
    %1207 = vmatpush.msra.mxu0 0.0
    %1208 = vmatpush.msra.mxu0 0.0
    %1209 = vmatpush.msra.mxu0 0.0
    %1210 = vmatpush.msra.mxu0 0.0
    %v1211 = vand.u32 %v1086, 4294901760
    %1212 = vmatpush.msra.mxu0 %v1211
    %v1213 = vand.u32 %v1082, 4294901760
    %1214 = vmatpush.msra.mxu0 %v1213
    %v1215 = vand.u32 %v442, 4294901760
    %v1216 = vsub.f32 %v442, %v1215
    %v1217 = vand.u32 %v1216, 4294901760
    %1218 = vmatmul.f32.gmra.mxu0 %v1217
    %v1219 = vpop.f32.mrf.mxu0
    %v1220 = vadd.f32 %v1190, %v1219
    %v1221 = vand.u32 %v445, 4294901760
    %v1222 = vsub.f32 %v445, %v1221
    %v1223 = vand.u32 %v1222, 4294901760
    %1224 = vmatmul.f32.gmra.mxu0 %v1223
    %v1225 = vpop.f32.mrf.mxu0
    %v1226 = vadd.f32 %v1195, %v1225
    %1227 = vdwg.mxu0
    %1228 = vmatpush.msra.mxu0 0.0
    %1229 = vmatpush.msra.mxu0 0.0
    %1230 = vmatpush.msra.mxu0 0.0
    %1231 = vmatpush.msra.mxu0 0.0
    %1232 = vmatpush.msra.mxu0 0.0
    %1233 = vmatpush.msra.mxu0 0.0
    %1234 = vmatpush.msra.mxu0 0.0
    %1235 = vmatpush.msra.mxu0 0.0
    %1236 = vmatpush.msra.mxu0 0.0
    %1237 = vmatpush.msra.mxu0 0.0
    %1238 = vmatpush.msra.mxu0 0.0
    %1239 = vmatpush.msra.mxu0 0.0
    %1240 = vmatpush.msra.mxu0 0.0
    %1241 = vmatpush.msra.mxu0 0.0
    %v1242 = vand.u32 %v1086, 4294901760
    %v1243 = vsub.f32 %v1086, %v1242
    %v1244 = vand.u32 %v1243, 4294901760
    %1245 = vmatpush.msra.mxu0 %v1244
    %v1246 = vand.u32 %v1082, 4294901760
    %v1247 = vsub.f32 %v1082, %v1246
    %v1248 = vand.u32 %v1247, 4294901760
    %1249 = vmatpush.msra.mxu0 %v1248
    %v1250 = vand.u32 %v442, 4294901760
    %1251 = vmatmul.f32.gmra.mxu0 %v1250
    %v1252 = vpop.f32.mrf.mxu0
    %v1253 = vadd.f32 %v1220, %v1252
    %v1254 = vand.u32 %v445, 4294901760
    %1255 = vmatmul.f32.gmra.mxu0 %v1254
    %v1256 = vpop.f32.mrf.mxu0
    %v1257 = vadd.f32 %v1226, %v1256
    %1258 = vdwg.mxu0
    %1259 = vmatpush.msra.mxu0 0.0
    %1260 = vmatpush.msra.mxu0 0.0
    %1261 = vmatpush.msra.mxu0 0.0
    %1262 = vmatpush.msra.mxu0 0.0
    %1263 = vmatpush.msra.mxu0 0.0
    %1264 = vmatpush.msra.mxu0 0.0
    %1265 = vmatpush.msra.mxu0 0.0
    %1266 = vmatpush.msra.mxu0 0.0
    %1267 = vmatpush.msra.mxu0 0.0
    %1268 = vmatpush.msra.mxu0 0.0
    %1269 = vmatpush.msra.mxu0 0.0
    %1270 = vmatpush.msra.mxu0 0.0
    %1271 = vmatpush.msra.mxu0 0.0
    %1272 = vmatpush.msra.mxu0 0.0
    %v1273 = vand.u32 %v1086, 4294901760
    %1274 = vmatpush.msra.mxu0 %v1273
    %v1275 = vand.u32 %v1082, 4294901760
    %1276 = vmatpush.msra.mxu0 %v1275
    %v1277 = vand.u32 %v442, 4294901760
    %1278 = vmatmul.f32.gmra.mxu0 %v1277
    %v1279 = vpop.f32.mrf.mxu0
    %v1280 = vadd.f32 %v1253, %v1279
    %v1281 = vand.u32 %v445, 4294901760
    %1282 = vmatmul.f32.gmra.mxu0 %v1281
    %v1283 = vpop.f32.mrf.mxu0
    %v1284 = vadd.f32 %v1257, %v1283
    %1285 = vdwg.mxu0
    %s1286 = scalar_lea.vmem %s3, 16
    %1287 = vst.msk [vmem:[%s1286] sm:$0xff] %vm176, %v1280
    %1288 = vst.msk [vmem:[%s1286 + $0x8] sm:$0xff] %vm176, %v1284
    %1289 = vmatpush.msra.mxu0 0.0
    %1290 = vmatpush.msra.mxu0 0.0
    %1291 = vmatpush.msra.mxu0 0.0
    %1292 = vmatpush.msra.mxu0 0.0
    %1293 = vmatpush.msra.mxu0 0.0
    %1294 = vmatpush.msra.mxu0 0.0
    %1295 = vmatpush.msra.mxu0 0.0
    %1296 = vmatpush.msra.mxu0 0.0
    %1297 = vmatpush.msra.mxu0 0.0
    %1298 = vmatpush.msra.mxu0 0.0
    %1299 = vmatpush.msra.mxu0 0.0
    %1300 = vmatpush.msra.mxu0 0.0
    %1301 = vmatpush.msra.mxu0 0.0
    %1302 = vmatpush.msra.mxu0 0.0
    %v1303 = vand.u32 %v1094, 4294901760
    %1304 = vmatpush.msra.mxu0 %v1303
    %v1305 = vand.u32 %v1090, 4294901760
    %1306 = vmatpush.msra.mxu0 %v1305
    %v1307 = vand.u32 %v442, 4294901760
    %v1308 = vsub.f32 %v442, %v1307
    %v1309 = vand.u32 %v1308, 4294901760
    %v1310 = vsub.f32 %v1308, %v1309
    %v1311 = vand.u32 %v1310, 4294901760
    %1312 = vmatmul.f32.gmra.mxu0 %v1311
    %v1313 = vpop.f32.mrf.mxu0
    %v1314 = vadd.f32 0.0, %v1313
    %v1315 = vand.u32 %v445, 4294901760
    %v1316 = vsub.f32 %v445, %v1315
    %v1317 = vand.u32 %v1316, 4294901760
    %v1318 = vsub.f32 %v1316, %v1317
    %v1319 = vand.u32 %v1318, 4294901760
    %1320 = vmatmul.f32.gmra.mxu0 %v1319
    %v1321 = vpop.f32.mrf.mxu0
    %v1322 = vadd.f32 0.0, %v1321
    %1323 = vdwg.mxu0
    %1324 = vmatpush.msra.mxu0 0.0
    %1325 = vmatpush.msra.mxu0 0.0
    %1326 = vmatpush.msra.mxu0 0.0
    %1327 = vmatpush.msra.mxu0 0.0
    %1328 = vmatpush.msra.mxu0 0.0
    %1329 = vmatpush.msra.mxu0 0.0
    %1330 = vmatpush.msra.mxu0 0.0
    %1331 = vmatpush.msra.mxu0 0.0
    %1332 = vmatpush.msra.mxu0 0.0
    %1333 = vmatpush.msra.mxu0 0.0
    %1334 = vmatpush.msra.mxu0 0.0
    %1335 = vmatpush.msra.mxu0 0.0
    %1336 = vmatpush.msra.mxu0 0.0
    %1337 = vmatpush.msra.mxu0 0.0
    %v1338 = vand.u32 %v1094, 4294901760
    %v1339 = vsub.f32 %v1094, %v1338
    %v1340 = vand.u32 %v1339, 4294901760
    %v1341 = vsub.f32 %v1339, %v1340
    %v1342 = vand.u32 %v1341, 4294901760
    %1343 = vmatpush.msra.mxu0 %v1342
    %v1344 = vand.u32 %v1090, 4294901760
    %v1345 = vsub.f32 %v1090, %v1344
    %v1346 = vand.u32 %v1345, 4294901760
    %v1347 = vsub.f32 %v1345, %v1346
    %v1348 = vand.u32 %v1347, 4294901760
    %1349 = vmatpush.msra.mxu0 %v1348
    %v1350 = vand.u32 %v442, 4294901760
    %1351 = vmatmul.f32.gmra.mxu0 %v1350
    %v1352 = vpop.f32.mrf.mxu0
    %v1353 = vadd.f32 %v1314, %v1352
    %v1354 = vand.u32 %v445, 4294901760
    %1355 = vmatmul.f32.gmra.mxu0 %v1354
    %v1356 = vpop.f32.mrf.mxu0
    %v1357 = vadd.f32 %v1322, %v1356
    %1358 = vdwg.mxu0
    %1359 = vmatpush.msra.mxu0 0.0
    %1360 = vmatpush.msra.mxu0 0.0
    %1361 = vmatpush.msra.mxu0 0.0
    %1362 = vmatpush.msra.mxu0 0.0
    %1363 = vmatpush.msra.mxu0 0.0
    %1364 = vmatpush.msra.mxu0 0.0
    %1365 = vmatpush.msra.mxu0 0.0
    %1366 = vmatpush.msra.mxu0 0.0
    %1367 = vmatpush.msra.mxu0 0.0
    %1368 = vmatpush.msra.mxu0 0.0
    %1369 = vmatpush.msra.mxu0 0.0
    %1370 = vmatpush.msra.mxu0 0.0
    %1371 = vmatpush.msra.mxu0 0.0
    %1372 = vmatpush.msra.mxu0 0.0
    %v1373 = vand.u32 %v1094, 4294901760
    %v1374 = vsub.f32 %v1094, %v1373
    %1375 = vmatpush.msra.mxu0 %v1374
    %v1376 = vand.u32 %v1090, 4294901760
    %v1377 = vsub.f32 %v1090, %v1376
    %1378 = vmatpush.msra.mxu0 %v1377
    %v1379 = vand.u32 %v442, 4294901760
    %v1380 = vsub.f32 %v442, %v1379
    %1381 = vmatmul.f32.gmra.mxu0 %v1380
    %v1382 = vpop.f32.mrf.mxu0
    %v1383 = vadd.f32 %v1353, %v1382
    %v1384 = vand.u32 %v445, 4294901760
    %v1385 = vsub.f32 %v445, %v1384
    %1386 = vmatmul.f32.gmra.mxu0 %v1385
    %v1387 = vpop.f32.mrf.mxu0
    %v1388 = vadd.f32 %v1357, %v1387
    %1389 = vdwg.mxu0
    %1390 = vmatpush.msra.mxu0 0.0
    %1391 = vmatpush.msra.mxu0 0.0
    %1392 = vmatpush.msra.mxu0 0.0
    %1393 = vmatpush.msra.mxu0 0.0
    %1394 = vmatpush.msra.mxu0 0.0
    %1395 = vmatpush.msra.mxu0 0.0
    %1396 = vmatpush.msra.mxu0 0.0
    %1397 = vmatpush.msra.mxu0 0.0
    %1398 = vmatpush.msra.mxu0 0.0
    %1399 = vmatpush.msra.mxu0 0.0
    %1400 = vmatpush.msra.mxu0 0.0
    %1401 = vmatpush.msra.mxu0 0.0
    %1402 = vmatpush.msra.mxu0 0.0
    %1403 = vmatpush.msra.mxu0 0.0
    %v1404 = vand.u32 %v1094, 4294901760
    %1405 = vmatpush.msra.mxu0 %v1404
    %v1406 = vand.u32 %v1090, 4294901760
    %1407 = vmatpush.msra.mxu0 %v1406
    %v1408 = vand.u32 %v442, 4294901760
    %v1409 = vsub.f32 %v442, %v1408
    %v1410 = vand.u32 %v1409, 4294901760
    %1411 = vmatmul.f32.gmra.mxu0 %v1410
    %v1412 = vpop.f32.mrf.mxu0
    %v1413 = vadd.f32 %v1383, %v1412
    %v1414 = vand.u32 %v445, 4294901760
    %v1415 = vsub.f32 %v445, %v1414
    %v1416 = vand.u32 %v1415, 4294901760
    %1417 = vmatmul.f32.gmra.mxu0 %v1416
    %v1418 = vpop.f32.mrf.mxu0
    %v1419 = vadd.f32 %v1388, %v1418
    %1420 = vdwg.mxu0
    %1421 = vmatpush.msra.mxu0 0.0
    %1422 = vmatpush.msra.mxu0 0.0
    %1423 = vmatpush.msra.mxu0 0.0
    %1424 = vmatpush.msra.mxu0 0.0
    %1425 = vmatpush.msra.mxu0 0.0
    %1426 = vmatpush.msra.mxu0 0.0
    %1427 = vmatpush.msra.mxu0 0.0
    %1428 = vmatpush.msra.mxu0 0.0
    %1429 = vmatpush.msra.mxu0 0.0
    %1430 = vmatpush.msra.mxu0 0.0
    %1431 = vmatpush.msra.mxu0 0.0
    %1432 = vmatpush.msra.mxu0 0.0
    %1433 = vmatpush.msra.mxu0 0.0
    %1434 = vmatpush.msra.mxu0 0.0
    %v1435 = vand.u32 %v1094, 4294901760
    %v1436 = vsub.f32 %v1094, %v1435
    %v1437 = vand.u32 %v1436, 4294901760
    %1438 = vmatpush.msra.mxu0 %v1437
    %v1439 = vand.u32 %v1090, 4294901760
    %v1440 = vsub.f32 %v1090, %v1439
    %v1441 = vand.u32 %v1440, 4294901760
    %1442 = vmatpush.msra.mxu0 %v1441
    %v1443 = vand.u32 %v442, 4294901760
    %1444 = vmatmul.f32.gmra.mxu0 %v1443
    %v1445 = vpop.f32.mrf.mxu0
    %v1446 = vadd.f32 %v1413, %v1445
    %v1447 = vand.u32 %v445, 4294901760
    %1448 = vmatmul.f32.gmra.mxu0 %v1447
    %v1449 = vpop.f32.mrf.mxu0
    %v1450 = vadd.f32 %v1419, %v1449
    %1451 = vdwg.mxu0
    %1452 = vmatpush.msra.mxu0 0.0
    %1453 = vmatpush.msra.mxu0 0.0
    %1454 = vmatpush.msra.mxu0 0.0
    %1455 = vmatpush.msra.mxu0 0.0
    %1456 = vmatpush.msra.mxu0 0.0
    %1457 = vmatpush.msra.mxu0 0.0
    %1458 = vmatpush.msra.mxu0 0.0
    %1459 = vmatpush.msra.mxu0 0.0
    %1460 = vmatpush.msra.mxu0 0.0
    %1461 = vmatpush.msra.mxu0 0.0
    %1462 = vmatpush.msra.mxu0 0.0
    %1463 = vmatpush.msra.mxu0 0.0
    %1464 = vmatpush.msra.mxu0 0.0
    %1465 = vmatpush.msra.mxu0 0.0
    %v1466 = vand.u32 %v1094, 4294901760
    %1467 = vmatpush.msra.mxu0 %v1466
    %v1468 = vand.u32 %v1090, 4294901760
    %1469 = vmatpush.msra.mxu0 %v1468
    %v1470 = vand.u32 %v442, 4294901760
    %1471 = vmatmul.f32.gmra.mxu0 %v1470
    %v1472 = vpop.f32.mrf.mxu0
    %v1473 = vadd.f32 %v1446, %v1472
    %v1474 = vand.u32 %v445, 4294901760
    %1475 = vmatmul.f32.gmra.mxu0 %v1474
    %v1476 = vpop.f32.mrf.mxu0
    %v1477 = vadd.f32 %v1450, %v1476
    %1478 = vdwg.mxu0
    %s1479 = scalar_lea.vmem %s3, 64
    %1480 = vst.msk [vmem:[%s1479] sm:$0xff] %vm176, %v1473
    %1481 = vst.msk [vmem:[%s1479 + $0x8] sm:$0xff] %vm176, %v1477
    %v1483 = vsel %vm176, %v172, 0
    %v1486 = vsel %vm176, %v173, 0
    %v1489 = vsel %vm176, %v174, 0
    %v1492 = vsel %vm176, %v175, 0
    %1494 = vmatpush.msra.mxu0 0.0
    %1495 = vmatpush.msra.mxu0 0.0
    %1496 = vmatpush.msra.mxu0 0.0
    %1497 = vmatpush.msra.mxu0 0.0
    %1498 = vmatpush.msra.mxu0 0.0
    %1499 = vmatpush.msra.mxu0 0.0
    %1500 = vmatpush.msra.mxu0 0.0
    %1501 = vmatpush.msra.mxu0 0.0
    %1502 = vmatpush.msra.mxu0 0.0
    %1503 = vmatpush.msra.mxu0 0.0
    %1504 = vmatpush.msra.mxu0 0.0
    %1505 = vmatpush.msra.mxu0 0.0
    %1506 = vmatpush.msra.mxu0 0.0
    %1507 = vmatpush.msra.mxu0 0.0
    %v1508 = vand.u32 %v64, 4294901760
    %1509 = vmatpush.msra.mxu0 %v1508
    %v1510 = vand.u32 %v63, 4294901760
    %1511 = vmatpush.msra.mxu0 %v1510
    %v1512 = vand.u32 %v1483, 4294901760
    %v1513 = vsub.f32 %v1483, %v1512
    %v1514 = vand.u32 %v1513, 4294901760
    %v1515 = vsub.f32 %v1513, %v1514
    %v1516 = vand.u32 %v1515, 4294901760
    %1517 = vmatmul.f32.gmra.mxu0 %v1516
    %v1518 = vpop.f32.mrf.mxu0
    %v1519 = vadd.f32 0.0, %v1518
    %v1520 = vand.u32 %v1486, 4294901760
    %v1521 = vsub.f32 %v1486, %v1520
    %v1522 = vand.u32 %v1521, 4294901760
    %v1523 = vsub.f32 %v1521, %v1522
    %v1524 = vand.u32 %v1523, 4294901760
    %1525 = vmatmul.f32.gmra.mxu0 %v1524
    %v1526 = vpop.f32.mrf.mxu0
    %v1527 = vadd.f32 0.0, %v1526
    %v1528 = vand.u32 %v1489, 4294901760
    %v1529 = vsub.f32 %v1489, %v1528
    %v1530 = vand.u32 %v1529, 4294901760
    %v1531 = vsub.f32 %v1529, %v1530
    %v1532 = vand.u32 %v1531, 4294901760
    %1533 = vmatmul.f32.gmra.mxu0 %v1532
    %v1534 = vpop.f32.mrf.mxu0
    %v1535 = vadd.f32 0.0, %v1534
    %v1536 = vand.u32 %v1492, 4294901760
    %v1537 = vsub.f32 %v1492, %v1536
    %v1538 = vand.u32 %v1537, 4294901760
    %v1539 = vsub.f32 %v1537, %v1538
    %v1540 = vand.u32 %v1539, 4294901760
    %1541 = vmatmul.f32.gmra.mxu0 %v1540
    %v1542 = vpop.f32.mrf.mxu0
    %v1543 = vadd.f32 0.0, %v1542
    %1544 = vdwg.mxu0
    %1545 = vmatpush.msra.mxu0 0.0
    %1546 = vmatpush.msra.mxu0 0.0
    %1547 = vmatpush.msra.mxu0 0.0
    %1548 = vmatpush.msra.mxu0 0.0
    %1549 = vmatpush.msra.mxu0 0.0
    %1550 = vmatpush.msra.mxu0 0.0
    %1551 = vmatpush.msra.mxu0 0.0
    %1552 = vmatpush.msra.mxu0 0.0
    %1553 = vmatpush.msra.mxu0 0.0
    %1554 = vmatpush.msra.mxu0 0.0
    %1555 = vmatpush.msra.mxu0 0.0
    %1556 = vmatpush.msra.mxu0 0.0
    %1557 = vmatpush.msra.mxu0 0.0
    %1558 = vmatpush.msra.mxu0 0.0
    %v1559 = vand.u32 %v64, 4294901760
    %v1560 = vsub.f32 %v64, %v1559
    %v1561 = vand.u32 %v1560, 4294901760
    %v1562 = vsub.f32 %v1560, %v1561
    %v1563 = vand.u32 %v1562, 4294901760
    %1564 = vmatpush.msra.mxu0 %v1563
    %v1565 = vand.u32 %v63, 4294901760
    %v1566 = vsub.f32 %v63, %v1565
    %v1567 = vand.u32 %v1566, 4294901760
    %v1568 = vsub.f32 %v1566, %v1567
    %v1569 = vand.u32 %v1568, 4294901760
    %1570 = vmatpush.msra.mxu0 %v1569
    %v1571 = vand.u32 %v1483, 4294901760
    %1572 = vmatmul.f32.gmra.mxu0 %v1571
    %v1573 = vpop.f32.mrf.mxu0
    %v1574 = vadd.f32 %v1519, %v1573
    %v1575 = vand.u32 %v1486, 4294901760
    %1576 = vmatmul.f32.gmra.mxu0 %v1575
    %v1577 = vpop.f32.mrf.mxu0
    %v1578 = vadd.f32 %v1527, %v1577
    %v1579 = vand.u32 %v1489, 4294901760
    %1580 = vmatmul.f32.gmra.mxu0 %v1579
    %v1581 = vpop.f32.mrf.mxu0
    %v1582 = vadd.f32 %v1535, %v1581
    %v1583 = vand.u32 %v1492, 4294901760
    %1584 = vmatmul.f32.gmra.mxu0 %v1583
    %v1585 = vpop.f32.mrf.mxu0
    %v1586 = vadd.f32 %v1543, %v1585
    %1587 = vdwg.mxu0
    %1588 = vmatpush.msra.mxu0 0.0
    %1589 = vmatpush.msra.mxu0 0.0
    %1590 = vmatpush.msra.mxu0 0.0
    %1591 = vmatpush.msra.mxu0 0.0
    %1592 = vmatpush.msra.mxu0 0.0
    %1593 = vmatpush.msra.mxu0 0.0
    %1594 = vmatpush.msra.mxu0 0.0
    %1595 = vmatpush.msra.mxu0 0.0
    %1596 = vmatpush.msra.mxu0 0.0
    %1597 = vmatpush.msra.mxu0 0.0
    %1598 = vmatpush.msra.mxu0 0.0
    %1599 = vmatpush.msra.mxu0 0.0
    %1600 = vmatpush.msra.mxu0 0.0
    %1601 = vmatpush.msra.mxu0 0.0
    %v1602 = vand.u32 %v64, 4294901760
    %v1603 = vsub.f32 %v64, %v1602
    %1604 = vmatpush.msra.mxu0 %v1603
    %v1605 = vand.u32 %v63, 4294901760
    %v1606 = vsub.f32 %v63, %v1605
    %1607 = vmatpush.msra.mxu0 %v1606
    %v1608 = vand.u32 %v1483, 4294901760
    %v1609 = vsub.f32 %v1483, %v1608
    %1610 = vmatmul.f32.gmra.mxu0 %v1609
    %v1611 = vpop.f32.mrf.mxu0
    %v1612 = vadd.f32 %v1574, %v1611
    %v1613 = vand.u32 %v1486, 4294901760
    %v1614 = vsub.f32 %v1486, %v1613
    %1615 = vmatmul.f32.gmra.mxu0 %v1614
    %v1616 = vpop.f32.mrf.mxu0
    %v1617 = vadd.f32 %v1578, %v1616
    %v1618 = vand.u32 %v1489, 4294901760
    %v1619 = vsub.f32 %v1489, %v1618
    %1620 = vmatmul.f32.gmra.mxu0 %v1619
    %v1621 = vpop.f32.mrf.mxu0
    %v1622 = vadd.f32 %v1582, %v1621
    %v1623 = vand.u32 %v1492, 4294901760
    %v1624 = vsub.f32 %v1492, %v1623
    %1625 = vmatmul.f32.gmra.mxu0 %v1624
    %v1626 = vpop.f32.mrf.mxu0
    %v1627 = vadd.f32 %v1586, %v1626
    %1628 = vdwg.mxu0
    %1629 = vmatpush.msra.mxu0 0.0
    %1630 = vmatpush.msra.mxu0 0.0
    %1631 = vmatpush.msra.mxu0 0.0
    %1632 = vmatpush.msra.mxu0 0.0
    %1633 = vmatpush.msra.mxu0 0.0
    %1634 = vmatpush.msra.mxu0 0.0
    %1635 = vmatpush.msra.mxu0 0.0
    %1636 = vmatpush.msra.mxu0 0.0
    %1637 = vmatpush.msra.mxu0 0.0
    %1638 = vmatpush.msra.mxu0 0.0
    %1639 = vmatpush.msra.mxu0 0.0
    %1640 = vmatpush.msra.mxu0 0.0
    %1641 = vmatpush.msra.mxu0 0.0
    %1642 = vmatpush.msra.mxu0 0.0
    %v1643 = vand.u32 %v64, 4294901760
    %1644 = vmatpush.msra.mxu0 %v1643
    %v1645 = vand.u32 %v63, 4294901760
    %1646 = vmatpush.msra.mxu0 %v1645
    %v1647 = vand.u32 %v1483, 4294901760
    %v1648 = vsub.f32 %v1483, %v1647
    %v1649 = vand.u32 %v1648, 4294901760
    %1650 = vmatmul.f32.gmra.mxu0 %v1649
    %v1651 = vpop.f32.mrf.mxu0
    %v1652 = vadd.f32 %v1612, %v1651
    %v1653 = vand.u32 %v1486, 4294901760
    %v1654 = vsub.f32 %v1486, %v1653
    %v1655 = vand.u32 %v1654, 4294901760
    %1656 = vmatmul.f32.gmra.mxu0 %v1655
    %v1657 = vpop.f32.mrf.mxu0
    %v1658 = vadd.f32 %v1617, %v1657
    %v1659 = vand.u32 %v1489, 4294901760
    %v1660 = vsub.f32 %v1489, %v1659
    %v1661 = vand.u32 %v1660, 4294901760
    %1662 = vmatmul.f32.gmra.mxu0 %v1661
    %v1663 = vpop.f32.mrf.mxu0
    %v1664 = vadd.f32 %v1622, %v1663
    %v1665 = vand.u32 %v1492, 4294901760
    %v1666 = vsub.f32 %v1492, %v1665
    %v1667 = vand.u32 %v1666, 4294901760
    %1668 = vmatmul.f32.gmra.mxu0 %v1667
    %v1669 = vpop.f32.mrf.mxu0
    %v1670 = vadd.f32 %v1627, %v1669
    %1671 = vdwg.mxu0
    %1672 = vmatpush.msra.mxu0 0.0
    %1673 = vmatpush.msra.mxu0 0.0
    %1674 = vmatpush.msra.mxu0 0.0
    %1675 = vmatpush.msra.mxu0 0.0
    %1676 = vmatpush.msra.mxu0 0.0
    %1677 = vmatpush.msra.mxu0 0.0
    %1678 = vmatpush.msra.mxu0 0.0
    %1679 = vmatpush.msra.mxu0 0.0
    %1680 = vmatpush.msra.mxu0 0.0
    %1681 = vmatpush.msra.mxu0 0.0
    %1682 = vmatpush.msra.mxu0 0.0
    %1683 = vmatpush.msra.mxu0 0.0
    %1684 = vmatpush.msra.mxu0 0.0
    %1685 = vmatpush.msra.mxu0 0.0
    %v1686 = vand.u32 %v64, 4294901760
    %v1687 = vsub.f32 %v64, %v1686
    %v1688 = vand.u32 %v1687, 4294901760
    %1689 = vmatpush.msra.mxu0 %v1688
    %v1690 = vand.u32 %v63, 4294901760
    %v1691 = vsub.f32 %v63, %v1690
    %v1692 = vand.u32 %v1691, 4294901760
    %1693 = vmatpush.msra.mxu0 %v1692
    %v1694 = vand.u32 %v1483, 4294901760
    %1695 = vmatmul.f32.gmra.mxu0 %v1694
    %v1696 = vpop.f32.mrf.mxu0
    %v1697 = vadd.f32 %v1652, %v1696
    %v1698 = vand.u32 %v1486, 4294901760
    %1699 = vmatmul.f32.gmra.mxu0 %v1698
    %v1700 = vpop.f32.mrf.mxu0
    %v1701 = vadd.f32 %v1658, %v1700
    %v1702 = vand.u32 %v1489, 4294901760
    %1703 = vmatmul.f32.gmra.mxu0 %v1702
    %v1704 = vpop.f32.mrf.mxu0
    %v1705 = vadd.f32 %v1664, %v1704
    %v1706 = vand.u32 %v1492, 4294901760
    %1707 = vmatmul.f32.gmra.mxu0 %v1706
    %v1708 = vpop.f32.mrf.mxu0
    %v1709 = vadd.f32 %v1670, %v1708
    %1710 = vdwg.mxu0
    %1711 = vmatpush.msra.mxu0 0.0
    %1712 = vmatpush.msra.mxu0 0.0
    %1713 = vmatpush.msra.mxu0 0.0
    %1714 = vmatpush.msra.mxu0 0.0
    %1715 = vmatpush.msra.mxu0 0.0
    %1716 = vmatpush.msra.mxu0 0.0
    %1717 = vmatpush.msra.mxu0 0.0
    %1718 = vmatpush.msra.mxu0 0.0
    %1719 = vmatpush.msra.mxu0 0.0
    %1720 = vmatpush.msra.mxu0 0.0
    %1721 = vmatpush.msra.mxu0 0.0
    %1722 = vmatpush.msra.mxu0 0.0
    %1723 = vmatpush.msra.mxu0 0.0
    %1724 = vmatpush.msra.mxu0 0.0
    %v1725 = vand.u32 %v64, 4294901760
    %1726 = vmatpush.msra.mxu0 %v1725
    %v1727 = vand.u32 %v63, 4294901760
    %1728 = vmatpush.msra.mxu0 %v1727
    %v1729 = vand.u32 %v1483, 4294901760
    %1730 = vmatmul.f32.gmra.mxu0 %v1729
    %v1731 = vpop.f32.mrf.mxu0
    %v1732 = vadd.f32 %v1697, %v1731
    %v1733 = vand.u32 %v1486, 4294901760
    %1734 = vmatmul.f32.gmra.mxu0 %v1733
    %v1735 = vpop.f32.mrf.mxu0
    %v1736 = vadd.f32 %v1701, %v1735
    %v1737 = vand.u32 %v1489, 4294901760
    %1738 = vmatmul.f32.gmra.mxu0 %v1737
    %v1739 = vpop.f32.mrf.mxu0
    %v1740 = vadd.f32 %v1705, %v1739
    %v1741 = vand.u32 %v1492, 4294901760
    %1742 = vmatmul.f32.gmra.mxu0 %v1741
    %v1743 = vpop.f32.mrf.mxu0
    %v1744 = vadd.f32 %v1709, %v1743
    %1745 = vdwg.mxu0
    %1746 = vmatpush.msra.mxu0 0.0
    %1747 = vmatpush.msra.mxu0 0.0
    %1748 = vmatpush.msra.mxu0 0.0
    %1749 = vmatpush.msra.mxu0 0.0
    %1750 = vmatpush.msra.mxu0 0.0
    %1751 = vmatpush.msra.mxu0 0.0
    %1752 = vmatpush.msra.mxu0 0.0
    %1753 = vmatpush.msra.mxu0 0.0
    %1754 = vmatpush.msra.mxu0 0.0
    %1755 = vmatpush.msra.mxu0 0.0
    %1756 = vmatpush.msra.mxu0 0.0
    %1757 = vmatpush.msra.mxu0 0.0
    %1758 = vmatpush.msra.mxu0 0.0
    %1759 = vmatpush.msra.mxu0 0.0
    %v1760 = vand.u32 %v1736, 4294901760
    %1761 = vmatpush.msra.mxu0 %v1760
    %v1762 = vand.u32 %v1732, 4294901760
    %1763 = vmatpush.msra.mxu0 %v1762
    %v1764 = vand.u32 %v442, 4294901760
    %v1765 = vsub.f32 %v442, %v1764
    %v1766 = vand.u32 %v1765, 4294901760
    %v1767 = vsub.f32 %v1765, %v1766
    %v1768 = vand.u32 %v1767, 4294901760
    %1769 = vmatmul.f32.gmra.mxu0 %v1768
    %v1770 = vpop.f32.mrf.mxu0
    %v1771 = vadd.f32 0.0, %v1770
    %v1772 = vand.u32 %v445, 4294901760
    %v1773 = vsub.f32 %v445, %v1772
    %v1774 = vand.u32 %v1773, 4294901760
    %v1775 = vsub.f32 %v1773, %v1774
    %v1776 = vand.u32 %v1775, 4294901760
    %1777 = vmatmul.f32.gmra.mxu0 %v1776
    %v1778 = vpop.f32.mrf.mxu0
    %v1779 = vadd.f32 0.0, %v1778
    %1780 = vdwg.mxu0
    %1781 = vmatpush.msra.mxu0 0.0
    %1782 = vmatpush.msra.mxu0 0.0
    %1783 = vmatpush.msra.mxu0 0.0
    %1784 = vmatpush.msra.mxu0 0.0
    %1785 = vmatpush.msra.mxu0 0.0
    %1786 = vmatpush.msra.mxu0 0.0
    %1787 = vmatpush.msra.mxu0 0.0
    %1788 = vmatpush.msra.mxu0 0.0
    %1789 = vmatpush.msra.mxu0 0.0
    %1790 = vmatpush.msra.mxu0 0.0
    %1791 = vmatpush.msra.mxu0 0.0
    %1792 = vmatpush.msra.mxu0 0.0
    %1793 = vmatpush.msra.mxu0 0.0
    %1794 = vmatpush.msra.mxu0 0.0
    %v1795 = vand.u32 %v1736, 4294901760
    %v1796 = vsub.f32 %v1736, %v1795
    %v1797 = vand.u32 %v1796, 4294901760
    %v1798 = vsub.f32 %v1796, %v1797
    %v1799 = vand.u32 %v1798, 4294901760
    %1800 = vmatpush.msra.mxu0 %v1799
    %v1801 = vand.u32 %v1732, 4294901760
    %v1802 = vsub.f32 %v1732, %v1801
    %v1803 = vand.u32 %v1802, 4294901760
    %v1804 = vsub.f32 %v1802, %v1803
    %v1805 = vand.u32 %v1804, 4294901760
    %1806 = vmatpush.msra.mxu0 %v1805
    %v1807 = vand.u32 %v442, 4294901760
    %1808 = vmatmul.f32.gmra.mxu0 %v1807
    %v1809 = vpop.f32.mrf.mxu0
    %v1810 = vadd.f32 %v1771, %v1809
    %v1811 = vand.u32 %v445, 4294901760
    %1812 = vmatmul.f32.gmra.mxu0 %v1811
    %v1813 = vpop.f32.mrf.mxu0
    %v1814 = vadd.f32 %v1779, %v1813
    %1815 = vdwg.mxu0
    %1816 = vmatpush.msra.mxu0 0.0
    %1817 = vmatpush.msra.mxu0 0.0
    %1818 = vmatpush.msra.mxu0 0.0
    %1819 = vmatpush.msra.mxu0 0.0
    %1820 = vmatpush.msra.mxu0 0.0
    %1821 = vmatpush.msra.mxu0 0.0
    %1822 = vmatpush.msra.mxu0 0.0
    %1823 = vmatpush.msra.mxu0 0.0
    %1824 = vmatpush.msra.mxu0 0.0
    %1825 = vmatpush.msra.mxu0 0.0
    %1826 = vmatpush.msra.mxu0 0.0
    %1827 = vmatpush.msra.mxu0 0.0
    %1828 = vmatpush.msra.mxu0 0.0
    %1829 = vmatpush.msra.mxu0 0.0
    %v1830 = vand.u32 %v1736, 4294901760
    %v1831 = vsub.f32 %v1736, %v1830
    %1832 = vmatpush.msra.mxu0 %v1831
    %v1833 = vand.u32 %v1732, 4294901760
    %v1834 = vsub.f32 %v1732, %v1833
    %1835 = vmatpush.msra.mxu0 %v1834
    %v1836 = vand.u32 %v442, 4294901760
    %v1837 = vsub.f32 %v442, %v1836
    %1838 = vmatmul.f32.gmra.mxu0 %v1837
    %v1839 = vpop.f32.mrf.mxu0
    %v1840 = vadd.f32 %v1810, %v1839
    %v1841 = vand.u32 %v445, 4294901760
    %v1842 = vsub.f32 %v445, %v1841
    %1843 = vmatmul.f32.gmra.mxu0 %v1842
    %v1844 = vpop.f32.mrf.mxu0
    %v1845 = vadd.f32 %v1814, %v1844
    %1846 = vdwg.mxu0
    %1847 = vmatpush.msra.mxu0 0.0
    %1848 = vmatpush.msra.mxu0 0.0
    %1849 = vmatpush.msra.mxu0 0.0
    %1850 = vmatpush.msra.mxu0 0.0
    %1851 = vmatpush.msra.mxu0 0.0
    %1852 = vmatpush.msra.mxu0 0.0
    %1853 = vmatpush.msra.mxu0 0.0
    %1854 = vmatpush.msra.mxu0 0.0
    %1855 = vmatpush.msra.mxu0 0.0
    %1856 = vmatpush.msra.mxu0 0.0
    %1857 = vmatpush.msra.mxu0 0.0
    %1858 = vmatpush.msra.mxu0 0.0
    %1859 = vmatpush.msra.mxu0 0.0
    %1860 = vmatpush.msra.mxu0 0.0
    %v1861 = vand.u32 %v1736, 4294901760
    %1862 = vmatpush.msra.mxu0 %v1861
    %v1863 = vand.u32 %v1732, 4294901760
    %1864 = vmatpush.msra.mxu0 %v1863
    %v1865 = vand.u32 %v442, 4294901760
    %v1866 = vsub.f32 %v442, %v1865
    %v1867 = vand.u32 %v1866, 4294901760
    %1868 = vmatmul.f32.gmra.mxu0 %v1867
    %v1869 = vpop.f32.mrf.mxu0
    %v1870 = vadd.f32 %v1840, %v1869
    %v1871 = vand.u32 %v445, 4294901760
    %v1872 = vsub.f32 %v445, %v1871
    %v1873 = vand.u32 %v1872, 4294901760
    %1874 = vmatmul.f32.gmra.mxu0 %v1873
    %v1875 = vpop.f32.mrf.mxu0
    %v1876 = vadd.f32 %v1845, %v1875
    %1877 = vdwg.mxu0
    %1878 = vmatpush.msra.mxu0 0.0
    %1879 = vmatpush.msra.mxu0 0.0
    %1880 = vmatpush.msra.mxu0 0.0
    %1881 = vmatpush.msra.mxu0 0.0
    %1882 = vmatpush.msra.mxu0 0.0
    %1883 = vmatpush.msra.mxu0 0.0
    %1884 = vmatpush.msra.mxu0 0.0
    %1885 = vmatpush.msra.mxu0 0.0
    %1886 = vmatpush.msra.mxu0 0.0
    %1887 = vmatpush.msra.mxu0 0.0
    %1888 = vmatpush.msra.mxu0 0.0
    %1889 = vmatpush.msra.mxu0 0.0
    %1890 = vmatpush.msra.mxu0 0.0
    %1891 = vmatpush.msra.mxu0 0.0
    %v1892 = vand.u32 %v1736, 4294901760
    %v1893 = vsub.f32 %v1736, %v1892
    %v1894 = vand.u32 %v1893, 4294901760
    %1895 = vmatpush.msra.mxu0 %v1894
    %v1896 = vand.u32 %v1732, 4294901760
    %v1897 = vsub.f32 %v1732, %v1896
    %v1898 = vand.u32 %v1897, 4294901760
    %1899 = vmatpush.msra.mxu0 %v1898
    %v1900 = vand.u32 %v442, 4294901760
    %1901 = vmatmul.f32.gmra.mxu0 %v1900
    %v1902 = vpop.f32.mrf.mxu0
    %v1903 = vadd.f32 %v1870, %v1902
    %v1904 = vand.u32 %v445, 4294901760
    %1905 = vmatmul.f32.gmra.mxu0 %v1904
    %v1906 = vpop.f32.mrf.mxu0
    %v1907 = vadd.f32 %v1876, %v1906
    %1908 = vdwg.mxu0
    %1909 = vmatpush.msra.mxu0 0.0
    %1910 = vmatpush.msra.mxu0 0.0
    %1911 = vmatpush.msra.mxu0 0.0
    %1912 = vmatpush.msra.mxu0 0.0
    %1913 = vmatpush.msra.mxu0 0.0
    %1914 = vmatpush.msra.mxu0 0.0
    %1915 = vmatpush.msra.mxu0 0.0
    %1916 = vmatpush.msra.mxu0 0.0
    %1917 = vmatpush.msra.mxu0 0.0
    %1918 = vmatpush.msra.mxu0 0.0
    %1919 = vmatpush.msra.mxu0 0.0
    %1920 = vmatpush.msra.mxu0 0.0
    %1921 = vmatpush.msra.mxu0 0.0
    %1922 = vmatpush.msra.mxu0 0.0
    %v1923 = vand.u32 %v1736, 4294901760
    %1924 = vmatpush.msra.mxu0 %v1923
    %v1925 = vand.u32 %v1732, 4294901760
    %1926 = vmatpush.msra.mxu0 %v1925
    %v1927 = vand.u32 %v442, 4294901760
    %1928 = vmatmul.f32.gmra.mxu0 %v1927
    %v1929 = vpop.f32.mrf.mxu0
    %v1930 = vadd.f32 %v1903, %v1929
    %v1931 = vand.u32 %v445, 4294901760
    %1932 = vmatmul.f32.gmra.mxu0 %v1931
    %v1933 = vpop.f32.mrf.mxu0
    %v1934 = vadd.f32 %v1907, %v1933
    %1935 = vdwg.mxu0
    %s1936 = scalar_lea.vmem %s3, 32
    %1937 = vst.msk [vmem:[%s1936] sm:$0xff] %vm176, %v1930
    %1938 = vst.msk [vmem:[%s1936 + $0x8] sm:$0xff] %vm176, %v1934
    %1939 = vmatpush.msra.mxu0 0.0
    %1940 = vmatpush.msra.mxu0 0.0
    %1941 = vmatpush.msra.mxu0 0.0
    %1942 = vmatpush.msra.mxu0 0.0
    %1943 = vmatpush.msra.mxu0 0.0
    %1944 = vmatpush.msra.mxu0 0.0
    %1945 = vmatpush.msra.mxu0 0.0
    %1946 = vmatpush.msra.mxu0 0.0
    %1947 = vmatpush.msra.mxu0 0.0
    %1948 = vmatpush.msra.mxu0 0.0
    %1949 = vmatpush.msra.mxu0 0.0
    %1950 = vmatpush.msra.mxu0 0.0
    %1951 = vmatpush.msra.mxu0 0.0
    %1952 = vmatpush.msra.mxu0 0.0
    %v1953 = vand.u32 %v1744, 4294901760
    %1954 = vmatpush.msra.mxu0 %v1953
    %v1955 = vand.u32 %v1740, 4294901760
    %1956 = vmatpush.msra.mxu0 %v1955
    %v1957 = vand.u32 %v442, 4294901760
    %v1958 = vsub.f32 %v442, %v1957
    %v1959 = vand.u32 %v1958, 4294901760
    %v1960 = vsub.f32 %v1958, %v1959
    %v1961 = vand.u32 %v1960, 4294901760
    %1962 = vmatmul.f32.gmra.mxu0 %v1961
    %v1963 = vpop.f32.mrf.mxu0
    %v1964 = vadd.f32 0.0, %v1963
    %v1965 = vand.u32 %v445, 4294901760
    %v1966 = vsub.f32 %v445, %v1965
    %v1967 = vand.u32 %v1966, 4294901760
    %v1968 = vsub.f32 %v1966, %v1967
    %v1969 = vand.u32 %v1968, 4294901760
    %1970 = vmatmul.f32.gmra.mxu0 %v1969
    %v1971 = vpop.f32.mrf.mxu0
    %v1972 = vadd.f32 0.0, %v1971
    %1973 = vdwg.mxu0
    %1974 = vmatpush.msra.mxu0 0.0
    %1975 = vmatpush.msra.mxu0 0.0
    %1976 = vmatpush.msra.mxu0 0.0
    %1977 = vmatpush.msra.mxu0 0.0
    %1978 = vmatpush.msra.mxu0 0.0
    %1979 = vmatpush.msra.mxu0 0.0
    %1980 = vmatpush.msra.mxu0 0.0
    %1981 = vmatpush.msra.mxu0 0.0
    %1982 = vmatpush.msra.mxu0 0.0
    %1983 = vmatpush.msra.mxu0 0.0
    %1984 = vmatpush.msra.mxu0 0.0
    %1985 = vmatpush.msra.mxu0 0.0
    %1986 = vmatpush.msra.mxu0 0.0
    %1987 = vmatpush.msra.mxu0 0.0
    %v1988 = vand.u32 %v1744, 4294901760
    %v1989 = vsub.f32 %v1744, %v1988
    %v1990 = vand.u32 %v1989, 4294901760
    %v1991 = vsub.f32 %v1989, %v1990
    %v1992 = vand.u32 %v1991, 4294901760
    %1993 = vmatpush.msra.mxu0 %v1992
    %v1994 = vand.u32 %v1740, 4294901760
    %v1995 = vsub.f32 %v1740, %v1994
    %v1996 = vand.u32 %v1995, 4294901760
    %v1997 = vsub.f32 %v1995, %v1996
    %v1998 = vand.u32 %v1997, 4294901760
    %1999 = vmatpush.msra.mxu0 %v1998
    %v2000 = vand.u32 %v442, 4294901760
    %2001 = vmatmul.f32.gmra.mxu0 %v2000
    %v2002 = vpop.f32.mrf.mxu0
    %v2003 = vadd.f32 %v1964, %v2002
    %v2004 = vand.u32 %v445, 4294901760
    %2005 = vmatmul.f32.gmra.mxu0 %v2004
    %v2006 = vpop.f32.mrf.mxu0
    %v2007 = vadd.f32 %v1972, %v2006
    %2008 = vdwg.mxu0
    %2009 = vmatpush.msra.mxu0 0.0
    %2010 = vmatpush.msra.mxu0 0.0
    %2011 = vmatpush.msra.mxu0 0.0
    %2012 = vmatpush.msra.mxu0 0.0
    %2013 = vmatpush.msra.mxu0 0.0
    %2014 = vmatpush.msra.mxu0 0.0
    %2015 = vmatpush.msra.mxu0 0.0
    %2016 = vmatpush.msra.mxu0 0.0
    %2017 = vmatpush.msra.mxu0 0.0
    %2018 = vmatpush.msra.mxu0 0.0
    %2019 = vmatpush.msra.mxu0 0.0
    %2020 = vmatpush.msra.mxu0 0.0
    %2021 = vmatpush.msra.mxu0 0.0
    %2022 = vmatpush.msra.mxu0 0.0
    %v2023 = vand.u32 %v1744, 4294901760
    %v2024 = vsub.f32 %v1744, %v2023
    %2025 = vmatpush.msra.mxu0 %v2024
    %v2026 = vand.u32 %v1740, 4294901760
    %v2027 = vsub.f32 %v1740, %v2026
    %2028 = vmatpush.msra.mxu0 %v2027
    %v2029 = vand.u32 %v442, 4294901760
    %v2030 = vsub.f32 %v442, %v2029
    %2031 = vmatmul.f32.gmra.mxu0 %v2030
    %v2032 = vpop.f32.mrf.mxu0
    %v2033 = vadd.f32 %v2003, %v2032
    %v2034 = vand.u32 %v445, 4294901760
    %v2035 = vsub.f32 %v445, %v2034
    %2036 = vmatmul.f32.gmra.mxu0 %v2035
    %v2037 = vpop.f32.mrf.mxu0
    %v2038 = vadd.f32 %v2007, %v2037
    %2039 = vdwg.mxu0
    %2040 = vmatpush.msra.mxu0 0.0
    %2041 = vmatpush.msra.mxu0 0.0
    %2042 = vmatpush.msra.mxu0 0.0
    %2043 = vmatpush.msra.mxu0 0.0
    %2044 = vmatpush.msra.mxu0 0.0
    %2045 = vmatpush.msra.mxu0 0.0
    %2046 = vmatpush.msra.mxu0 0.0
    %2047 = vmatpush.msra.mxu0 0.0
    %2048 = vmatpush.msra.mxu0 0.0
    %2049 = vmatpush.msra.mxu0 0.0
    %2050 = vmatpush.msra.mxu0 0.0
    %2051 = vmatpush.msra.mxu0 0.0
    %2052 = vmatpush.msra.mxu0 0.0
    %2053 = vmatpush.msra.mxu0 0.0
    %v2054 = vand.u32 %v1744, 4294901760
    %2055 = vmatpush.msra.mxu0 %v2054
    %v2056 = vand.u32 %v1740, 4294901760
    %2057 = vmatpush.msra.mxu0 %v2056
    %v2058 = vand.u32 %v442, 4294901760
    %v2059 = vsub.f32 %v442, %v2058
    %v2060 = vand.u32 %v2059, 4294901760
    %2061 = vmatmul.f32.gmra.mxu0 %v2060
    %v2062 = vpop.f32.mrf.mxu0
    %v2063 = vadd.f32 %v2033, %v2062
    %v2064 = vand.u32 %v445, 4294901760
    %v2065 = vsub.f32 %v445, %v2064
    %v2066 = vand.u32 %v2065, 4294901760
    %2067 = vmatmul.f32.gmra.mxu0 %v2066
    %v2068 = vpop.f32.mrf.mxu0
    %v2069 = vadd.f32 %v2038, %v2068
    %2070 = vdwg.mxu0
    %2071 = vmatpush.msra.mxu0 0.0
    %2072 = vmatpush.msra.mxu0 0.0
    %2073 = vmatpush.msra.mxu0 0.0
    %2074 = vmatpush.msra.mxu0 0.0
    %2075 = vmatpush.msra.mxu0 0.0
    %2076 = vmatpush.msra.mxu0 0.0
    %2077 = vmatpush.msra.mxu0 0.0
    %2078 = vmatpush.msra.mxu0 0.0
    %2079 = vmatpush.msra.mxu0 0.0
    %2080 = vmatpush.msra.mxu0 0.0
    %2081 = vmatpush.msra.mxu0 0.0
    %2082 = vmatpush.msra.mxu0 0.0
    %2083 = vmatpush.msra.mxu0 0.0
    %2084 = vmatpush.msra.mxu0 0.0
    %v2085 = vand.u32 %v1744, 4294901760
    %v2086 = vsub.f32 %v1744, %v2085
    %v2087 = vand.u32 %v2086, 4294901760
    %2088 = vmatpush.msra.mxu0 %v2087
    %v2089 = vand.u32 %v1740, 4294901760
    %v2090 = vsub.f32 %v1740, %v2089
    %v2091 = vand.u32 %v2090, 4294901760
    %2092 = vmatpush.msra.mxu0 %v2091
    %v2093 = vand.u32 %v442, 4294901760
    %2094 = vmatmul.f32.gmra.mxu0 %v2093
    %v2095 = vpop.f32.mrf.mxu0
    %v2096 = vadd.f32 %v2063, %v2095
    %v2097 = vand.u32 %v445, 4294901760
    %2098 = vmatmul.f32.gmra.mxu0 %v2097
    %v2099 = vpop.f32.mrf.mxu0
    %v2100 = vadd.f32 %v2069, %v2099
    %2101 = vdwg.mxu0
    %2102 = vmatpush.msra.mxu0 0.0
    %2103 = vmatpush.msra.mxu0 0.0
    %2104 = vmatpush.msra.mxu0 0.0
    %2105 = vmatpush.msra.mxu0 0.0
    %2106 = vmatpush.msra.mxu0 0.0
    %2107 = vmatpush.msra.mxu0 0.0
    %2108 = vmatpush.msra.mxu0 0.0
    %2109 = vmatpush.msra.mxu0 0.0
    %2110 = vmatpush.msra.mxu0 0.0
    %2111 = vmatpush.msra.mxu0 0.0
    %2112 = vmatpush.msra.mxu0 0.0
    %2113 = vmatpush.msra.mxu0 0.0
    %2114 = vmatpush.msra.mxu0 0.0
    %2115 = vmatpush.msra.mxu0 0.0
    %v2116 = vand.u32 %v1744, 4294901760
    %2117 = vmatpush.msra.mxu0 %v2116
    %v2118 = vand.u32 %v1740, 4294901760
    %2119 = vmatpush.msra.mxu0 %v2118
    %v2120 = vand.u32 %v442, 4294901760
    %2121 = vmatmul.f32.gmra.mxu0 %v2120
    %v2122 = vpop.f32.mrf.mxu0
    %v2123 = vadd.f32 %v2096, %v2122
    %v2124 = vand.u32 %v445, 4294901760
    %2125 = vmatmul.f32.gmra.mxu0 %v2124
    %v2126 = vpop.f32.mrf.mxu0
    %v2127 = vadd.f32 %v2100, %v2126
    %2128 = vdwg.mxu0
    %s2129 = scalar_lea.vmem %s3, 80
    %2130 = vst.msk [vmem:[%s2129] sm:$0xff] %vm176, %v2123
    %2131 = vst.msk [vmem:[%s2129 + $0x8] sm:$0xff] %vm176, %v2127
    // Predicated region
    $region26: #{_lambda_.2} parent=1 // pred_check
      _
    $region27: #{_lambda_.2} parent=1 // pred_check_branch
      %2133 = sbr.rel (0) target = $region29
    $region28: #{_lambda_.2} parent=1 // pred_region
      _
    $region29: #{_lambda_.2} parent=1 // pred_fallthru
      _
    // Predicated region
    $region30: #{_lambda_.2} parent=1 // pred_check
      _
    $region31: #{_lambda_.2} parent=1 // pred_check_branch
      %2135 = sbr.rel (0) target = $region33
    $region32: #{_lambda_.2} parent=1 // pred_region
      _
    $region33: #{_lambda_.2} parent=1 // pred_fallthru
      _
    %2136 = vsyncpa [#allocation3], 1
    %2137 = vsyncpa [#allocation5], 1

// kernel: _lambda_.3
$region0: #{_lambda_.3}
  #allocation0 [shape = 'u32[]', space=smem, size = 0x4, offset = 0x4, fixed_abs, tag = 'smem constant byte address 0x4 - core index']
  #allocation1 [shape = 'u32[72,128]{1,0:T(1,128)}', space=vmem, size = 0x9000, scoped, tag = 'internal scratch']
  %s0 = inlined_call_operand.vmem [shape: f32[64,6,4], index: 0, kind: input, shape index: {}]
  %s1 = inlined_call_operand.vmem [shape: f32[4,256], index: 1, kind: input, shape index: {}]
  %s2 = inlined_call_operand.vmem [shape: f32[64,256], index: 2, kind: input, shape index: {}]
  %s3 = inlined_call_operand.vmem [shape: f32[64,6,256], index: 3, kind: output, shape index: {}]
  %s4 = sld [smem:[#allocation0]]
  $region22: #{_lambda_.3} parent=0
    _
  %s6 = ssub.s32 1, %s4
  %s7 = scalar_select 0, %s6, %s4
  // Predicated region
  $region2: #{_lambda_.3} parent=0 // pred_check
    _
  $region3: #{_lambda_.3} parent=0 // pred_check_branch
    %9 = sbr.rel (0) target = $region5
  $region4: #{_lambda_.3} parent=0 // pred_region
    _
  $region5: #{_lambda_.3} parent=0 // pred_fallthru
    _
  // Predicated region
  $region6: #{_lambda_.3} parent=0 // pred_check
    _
  $region7: #{_lambda_.3} parent=0 // pred_check_branch
    %11 = sbr.rel (0) target = $region9
  $region8: #{_lambda_.3} parent=0 // pred_region
    _
  $region9: #{_lambda_.3} parent=0 // pred_fallthru
    _
  // Predicated region
  $region10: #{_lambda_.3} parent=0 // pred_check
    _
  $region11: #{_lambda_.3} parent=0 // pred_check_branch
    %13 = sbr.rel (0) target = $region13
  $region12: #{_lambda_.3} parent=0 // pred_region
    _
  $region13: #{_lambda_.3} parent=0 // pred_fallthru
    _
  %v14 = vld [vmem:[%s1] sm:$0xff]
  %v15 = vld [vmem:[%s0] sm:$0x3f]
  %17 = vst [vmem:[#allocation1] ss:$2 sm:$0xff] %v14
  %v18 = vld.sshfl [vmem:[#allocation1] sm:$0xff pattern:$0x75316420]
  %v19 = vld.sshfl [vmem:[#allocation1 + $0x8] sm:$0xff pattern:$0x75316420]
  %vm20 = vcmask 31744
  %v22 = vsel %vm20, %v15, 0
  %vm24 = vcmask 1043456
  %v25 = vsel %vm24, %v18, 0
  %v27 = vsel %vm24, %v19, 0
  %29 = vmatpush.msra.mxu0 0.0
  %30 = vmatpush.msra.mxu0 0.0
  %31 = vmatpush.msra.mxu0 0.0
  %32 = vmatpush.msra.mxu0 0.0
  %33 = vmatpush.msra.mxu0 0.0
  %34 = vmatpush.msra.mxu0 0.0
  %35 = vmatpush.msra.mxu0 0.0
  %36 = vmatpush.msra.mxu0 0.0
  %37 = vmatpush.msra.mxu0 0.0
  %38 = vmatpush.msra.mxu0 0.0
  %39 = vmatpush.msra.mxu0 0.0
  %40 = vmatpush.msra.mxu0 0.0
  %41 = vmatpush.msra.mxu0 0.0
  %42 = vmatpush.msra.mxu0 0.0
  %43 = vmatpush.msra.mxu0 0.0
  %44 = vmatpush.msra.mxu0 %v25
  %45 = vmatmul.f32.gmra.mxu0 %v22
  %v46 = vpop.f32.mrf.mxu0
  %v47 = vadd.f32 0.0, %v46
  %48 = vdwg.mxu0
  %49 = vmatpush.msra.mxu0 0.0
  %50 = vmatpush.msra.mxu0 0.0
  %51 = vmatpush.msra.mxu0 0.0
  %52 = vmatpush.msra.mxu0 0.0
  %53 = vmatpush.msra.mxu0 0.0
  %54 = vmatpush.msra.mxu0 0.0
  %55 = vmatpush.msra.mxu0 0.0
  %56 = vmatpush.msra.mxu0 0.0
  %57 = vmatpush.msra.mxu0 0.0
  %58 = vmatpush.msra.mxu0 0.0
  %59 = vmatpush.msra.mxu0 0.0
  %60 = vmatpush.msra.mxu0 0.0
  %61 = vmatpush.msra.mxu0 0.0
  %62 = vmatpush.msra.mxu0 0.0
  %63 = vmatpush.msra.mxu0 0.0
  %64 = vmatpush.msra.mxu0 %v27
  %65 = vmatmul.f32.gmra.mxu0 %v22
  %v66 = vpop.f32.mrf.mxu0
  %v67 = vadd.f32 0.0, %v66
  %68 = vdwg.mxu0
  %v69 = vld [vmem:[%s2] ss:$8 sm:$0x3]
  %v71 = vperm.slane %v69, 0
  %v72 = vperm.slane %v69, 1
  %v75 = vmul.f32 %v47, %v71
  %v76 = vmul.f32 %v67, %v72
  %77 = vst [vmem:[%s3] sm:$0x3f] %v75
  %78 = vst [vmem:[%s3 + $0x8] sm:$0x3f] %v76
  %s79 = scalar_lea.vmem %s0, 8
  %v80 = vld [vmem:[%s79] sm:$0x3f]
  %81 = vst [vmem:[#allocation1] ss:$2 sm:$0xff] %v14
  %v82 = vld.sshfl [vmem:[#allocation1] sm:$0xff pattern:$0x75316420]
  %v83 = vld.sshfl [vmem:[#allocation1 + $0x8] sm:$0xff pattern:$0x75316420]
  %v85 = vsel %vm20, %v80, 0
  %v87 = vsel %vm24, %v82, 0
  %v89 = vsel %vm24, %v83, 0
  %91 = vmatpush.msra.mxu0 0.0
  %92 = vmatpush.msra.mxu0 0.0
  %93 = vmatpush.msra.mxu0 0.0
  %94 = vmatpush.msra.mxu0 0.0
  %95 = vmatpush.msra.mxu0 0.0
  %96 = vmatpush.msra.mxu0 0.0
  %97 = vmatpush.msra.mxu0 0.0
  %98 = vmatpush.msra.mxu0 0.0
  %99 = vmatpush.msra.mxu0 0.0
  %100 = vmatpush.msra.mxu0 0.0
  %101 = vmatpush.msra.mxu0 0.0
  %102 = vmatpush.msra.mxu0 0.0
  %103 = vmatpush.msra.mxu0 0.0
  %104 = vmatpush.msra.mxu0 0.0
  %105 = vmatpush.msra.mxu0 0.0
  %106 = vmatpush.msra.mxu0 %v87
  %107 = vmatmul.f32.gmra.mxu0 %v85
  %v108 = vpop.f32.mrf.mxu0
  %v109 = vadd.f32 0.0, %v108
  %110 = vdwg.mxu0
  %111 = vmatpush.msra.mxu0 0.0
  %112 = vmatpush.msra.mxu0 0.0
  %113 = vmatpush.msra.mxu0 0.0
  %114 = vmatpush.msra.mxu0 0.0
  %115 = vmatpush.msra.mxu0 0.0
  %116 = vmatpush.msra.mxu0 0.0
  %117 = vmatpush.msra.mxu0 0.0
  %118 = vmatpush.msra.mxu0 0.0
  %119 = vmatpush.msra.mxu0 0.0
  %120 = vmatpush.msra.mxu0 0.0
  %121 = vmatpush.msra.mxu0 0.0
  %122 = vmatpush.msra.mxu0 0.0
  %123 = vmatpush.msra.mxu0 0.0
  %124 = vmatpush.msra.mxu0 0.0
  %125 = vmatpush.msra.mxu0 0.0
  %126 = vmatpush.msra.mxu0 %v89
  %127 = vmatmul.f32.gmra.mxu0 %v85
  %v128 = vpop.f32.mrf.mxu0
  %v129 = vadd.f32 0.0, %v128
  %130 = vdwg.mxu0
  %s131 = scalar_lea.vmem %s2, 1
  %v132 = vld [vmem:[%s131] ss:$8 sm:$0x3]
  %v134 = vperm.slane %v132, 0
  %v135 = vperm.slane %v132, 1
  %v138 = vmul.f32 %v109, %v134
  %v139 = vmul.f32 %v129, %v135
  %s140 = scalar_lea.vmem %s3, 16
  %141 = vst [vmem:[%s140] sm:$0x3f] %v138
  %142 = vst [vmem:[%s140 + $0x8] sm:$0x3f] %v139
  %s143 = scalar_lea.vmem %s0, 16
  %v144 = vld [vmem:[%s143] sm:$0x3f]
  %145 = vst [vmem:[#allocation1] ss:$2 sm:$0xff] %v14
  %v146 = vld.sshfl [vmem:[#allocation1] sm:$0xff pattern:$0x75316420]
  %v147 = vld.sshfl [vmem:[#allocation1 + $0x8] sm:$0xff pattern:$0x75316420]
  %v149 = vsel %vm20, %v144, 0
  %v151 = vsel %vm24, %v146, 0
  %v153 = vsel %vm24, %v147, 0
  %155 = vmatpush.msra.mxu0 0.0
  %156 = vmatpush.msra.mxu0 0.0
  %157 = vmatpush.msra.mxu0 0.0
  %158 = vmatpush.msra.mxu0 0.0
  %159 = vmatpush.msra.mxu0 0.0
  %160 = vmatpush.msra.mxu0 0.0
  %161 = vmatpush.msra.mxu0 0.0
  %162 = vmatpush.msra.mxu0 0.0
  %163 = vmatpush.msra.mxu0 0.0
  %164 = vmatpush.msra.mxu0 0.0
  %165 = vmatpush.msra.mxu0 0.0
  %166 = vmatpush.msra.mxu0 0.0
  %167 = vmatpush.msra.mxu0 0.0
  %168 = vmatpush.msra.mxu0 0.0
  %169 = vmatpush.msra.mxu0 0.0
  %170 = vmatpush.msra.mxu0 %v151
  %171 = vmatmul.f32.gmra.mxu0 %v149
  %v172 = vpop.f32.mrf.mxu0
  %v173 = vadd.f32 0.0, %v172
  %174 = vdwg.mxu0
  %175 = vmatpush.msra.mxu0 0.0
  %176 = vmatpush.msra.mxu0 0.0
  %177 = vmatpush.msra.mxu0 0.0
  %178 = vmatpush.msra.mxu0 0.0
  %179 = vmatpush.msra.mxu0 0.0
  %180 = vmatpush.msra.mxu0 0.0
  %181 = vmatpush.msra.mxu0 0.0
  %182 = vmatpush.msra.mxu0 0.0
  %183 = vmatpush.msra.mxu0 0.0
  %184 = vmatpush.msra.mxu0 0.0
  %185 = vmatpush.msra.mxu0 0.0
  %186 = vmatpush.msra.mxu0 0.0
  %187 = vmatpush.msra.mxu0 0.0
  %188 = vmatpush.msra.mxu0 0.0
  %189 = vmatpush.msra.mxu0 0.0
  %190 = vmatpush.msra.mxu0 %v153
  %191 = vmatmul.f32.gmra.mxu0 %v149
  %v192 = vpop.f32.mrf.mxu0
  %v193 = vadd.f32 0.0, %v192
  %194 = vdwg.mxu0
  %s195 = scalar_lea.vmem %s2, 2
  %v196 = vld [vmem:[%s195] ss:$8 sm:$0x3]
  %v198 = vperm.slane %v196, 0
  %v199 = vperm.slane %v196, 1
  %v202 = vmul.f32 %v173, %v198
  %v203 = vmul.f32 %v193, %v199
  %s204 = scalar_lea.vmem %s3, 32
  %205 = vst [vmem:[%s204] sm:$0x3f] %v202
  %206 = vst [vmem:[%s204 + $0x8] sm:$0x3f] %v203
  %s207 = scalar_lea.vmem %s0, 24
  %v208 = vld [vmem:[%s207] sm:$0x3f]
  %209 = vst [vmem:[#allocation1] ss:$2 sm:$0xff] %v14
  %v210 = vld.sshfl [vmem:[#allocation1] sm:$0xff pattern:$0x75316420]
  %v211 = vld.sshfl [vmem:[#allocation1 + $0x8] sm:$0xff pattern:$0x75316420]
  %v213 = vsel %vm20, %v208, 0
  %v215 = vsel %vm24, %v210, 0
  %v217 = vsel %vm24, %v211, 0
  %219 = vmatpush.msra.mxu0 0.0
  %220 = vmatpush.msra.mxu0 0.0
  %221 = vmatpush.msra.mxu0 0.0
  %222 = vmatpush.msra.mxu0 0.0
  %223 = vmatpush.msra.mxu0 0.0
  %224 = vmatpush.msra.mxu0 0.0
  %225 = vmatpush.msra.mxu0 0.0
  %226 = vmatpush.msra.mxu0 0.0
  %227 = vmatpush.msra.mxu0 0.0
  %228 = vmatpush.msra.mxu0 0.0
  %229 = vmatpush.msra.mxu0 0.0
  %230 = vmatpush.msra.mxu0 0.0
  %231 = vmatpush.msra.mxu0 0.0
  %232 = vmatpush.msra.mxu0 0.0
  %233 = vmatpush.msra.mxu0 0.0
  %234 = vmatpush.msra.mxu0 %v215
  %235 = vmatmul.f32.gmra.mxu0 %v213
  %v236 = vpop.f32.mrf.mxu0
  %v237 = vadd.f32 0.0, %v236
  %238 = vdwg.mxu0
  %239 = vmatpush.msra.mxu0 0.0
  %240 = vmatpush.msra.mxu0 0.0
  %241 = vmatpush.msra.mxu0 0.0
  %242 = vmatpush.msra.mxu0 0.0
  %243 = vmatpush.msra.mxu0 0.0
  %244 = vmatpush.msra.mxu0 0.0
  %245 = vmatpush.msra.mxu0 0.0
  %246 = vmatpush.msra.mxu0 0.0
  %247 = vmatpush.msra.mxu0 0.0
  %248 = vmatpush.msra.mxu0 0.0
  %249 = vmatpush.msra.mxu0 0.0
  %250 = vmatpush.msra.mxu0 0.0
  %251 = vmatpush.msra.mxu0 0.0
  %252 = vmatpush.msra.mxu0 0.0
  %253 = vmatpush.msra.mxu0 0.0
  %254 = vmatpush.msra.mxu0 %v217
  %255 = vmatmul.f32.gmra.mxu0 %v213
  %v256 = vpop.f32.mrf.mxu0
  %v257 = vadd.f32 0.0, %v256
  %258 = vdwg.mxu0
  %s259 = scalar_lea.vmem %s2, 3
  %v260 = vld [vmem:[%s259] ss:$8 sm:$0x3]
  %v262 = vperm.slane %v260, 0
  %v263 = vperm.slane %v260, 1
  %v266 = vmul.f32 %v237, %v262
  %v267 = vmul.f32 %v257, %v263
  %s268 = scalar_lea.vmem %s3, 48
  %269 = vst [vmem:[%s268] sm:$0x3f] %v266
  %270 = vst [vmem:[%s268 + $0x8] sm:$0x3f] %v267
  %s271 = scalar_lea.vmem %s0, 32
  %v272 = vld [vmem:[%s271] sm:$0x3f]
  %273 = vst [vmem:[#allocation1] ss:$2 sm:$0xff] %v14
  %v274 = vld.sshfl [vmem:[#allocation1] sm:$0xff pattern:$0x75316420]
  %v275 = vld.sshfl [vmem:[#allocation1 + $0x8] sm:$0xff pattern:$0x75316420]
  %v277 = vsel %vm20, %v272, 0
  %v279 = vsel %vm24, %v274, 0
  %v281 = vsel %vm24, %v275, 0
  %283 = vmatpush.msra.mxu0 0.0
  %284 = vmatpush.msra.mxu0 0.0
  %285 = vmatpush.msra.mxu0 0.0
  %286 = vmatpush.msra.mxu0 0.0
  %287 = vmatpush.msra.mxu0 0.0
  %288 = vmatpush.msra.mxu0 0.0
  %289 = vmatpush.msra.mxu0 0.0
  %290 = vmatpush.msra.mxu0 0.0
  %291 = vmatpush.msra.mxu0 0.0
  %292 = vmatpush.msra.mxu0 0.0
  %293 = vmatpush.msra.mxu0 0.0
  %294 = vmatpush.msra.mxu0 0.0
  %295 = vmatpush.msra.mxu0 0.0
  %296 = vmatpush.msra.mxu0 0.0
  %297 = vmatpush.msra.mxu0 0.0
  %298 = vmatpush.msra.mxu0 %v279
  %299 = vmatmul.f32.gmra.mxu0 %v277
  %v300 = vpop.f32.mrf.mxu0
  %v301 = vadd.f32 0.0, %v300
  %302 = vdwg.mxu0
  %303 = vmatpush.msra.mxu0 0.0
  %304 = vmatpush.msra.mxu0 0.0
  %305 = vmatpush.msra.mxu0 0.0
  %306 = vmatpush.msra.mxu0 0.0
  %307 = vmatpush.msra.mxu0 0.0
  %308 = vmatpush.msra.mxu0 0.0
  %309 = vmatpush.msra.mxu0 0.0
  %310 = vmatpush.msra.mxu0 0.0
  %311 = vmatpush.msra.mxu0 0.0
  %312 = vmatpush.msra.mxu0 0.0
  %313 = vmatpush.msra.mxu0 0.0
  %314 = vmatpush.msra.mxu0 0.0
  %315 = vmatpush.msra.mxu0 0.0
  %316 = vmatpush.msra.mxu0 0.0
  %317 = vmatpush.msra.mxu0 0.0
  %318 = vmatpush.msra.mxu0 %v281
  %319 = vmatmul.f32.gmra.mxu0 %v277
  %v320 = vpop.f32.mrf.mxu0
  %v321 = vadd.f32 0.0, %v320
  %322 = vdwg.mxu0
  %s323 = scalar_lea.vmem %s2, 4
  %v324 = vld [vmem:[%s323] ss:$8 sm:$0x3]
  %v326 = vperm.slane %v324, 0
  %v327 = vperm.slane %v324, 1
  %v330 = vmul.f32 %v301, %v326
  %v331 = vmul.f32 %v321, %v327
  %s332 = scalar_lea.vmem %s3, 64
  %333 = vst [vmem:[%s332] sm:$0x3f] %v330
  %334 = vst [vmem:[%s332 + $0x8] sm:$0x3f] %v331
  %s335 = scalar_lea.vmem %s0, 40
  %v336 = vld [vmem:[%s335] sm:$0x3f]
  %337 = vst [vmem:[#allocation1] ss:$2 sm:$0xff] %v14
  %v338 = vld.sshfl [vmem:[#allocation1] sm:$0xff pattern:$0x75316420]
  %v339 = vld.sshfl [vmem:[#allocation1 + $0x8] sm:$0xff pattern:$0x75316420]
  %v341 = vsel %vm20, %v336, 0
  %v343 = vsel %vm24, %v338, 0
  %v345 = vsel %vm24, %v339, 0
  %347 = vmatpush.msra.mxu0 0.0
  %348 = vmatpush.msra.mxu0 0.0
  %349 = vmatpush.msra.mxu0 0.0
  %350 = vmatpush.msra.mxu0 0.0
  %351 = vmatpush.msra.mxu0 0.0
  %352 = vmatpush.msra.mxu0 0.0
  %353 = vmatpush.msra.mxu0 0.0
  %354 = vmatpush.msra.mxu0 0.0
  %355 = vmatpush.msra.mxu0 0.0
  %356 = vmatpush.msra.mxu0 0.0
  %357 = vmatpush.msra.mxu0 0.0
  %358 = vmatpush.msra.mxu0 0.0
  %359 = vmatpush.msra.mxu0 0.0
  %360 = vmatpush.msra.mxu0 0.0
  %361 = vmatpush.msra.mxu0 0.0
  %362 = vmatpush.msra.mxu0 %v343
  %363 = vmatmul.f32.gmra.mxu0 %v341
  %v364 = vpop.f32.mrf.mxu0
  %v365 = vadd.f32 0.0, %v364
  %366 = vdwg.mxu0
  %367 = vmatpush.msra.mxu0 0.0
  %368 = vmatpush.msra.mxu0 0.0
  %369 = vmatpush.msra.mxu0 0.0
  %370 = vmatpush.msra.mxu0 0.0
  %371 = vmatpush.msra.mxu0 0.0
  %372 = vmatpush.msra.mxu0 0.0
  %373 = vmatpush.msra.mxu0 0.0
  %374 = vmatpush.msra.mxu0 0.0
  %375 = vmatpush.msra.mxu0 0.0
  %376 = vmatpush.msra.mxu0 0.0
  %377 = vmatpush.msra.mxu0 0.0
  %378 = vmatpush.msra.mxu0 0.0
  %379 = vmatpush.msra.mxu0 0.0
  %380 = vmatpush.msra.mxu0 0.0
  %381 = vmatpush.msra.mxu0 0.0
  %382 = vmatpush.msra.mxu0 %v345
  %383 = vmatmul.f32.gmra.mxu0 %v341
  %v384 = vpop.f32.mrf.mxu0
  %v385 = vadd.f32 0.0, %v384
  %386 = vdwg.mxu0
  %s387 = scalar_lea.vmem %s2, 5
  %v388 = vld [vmem:[%s387] ss:$8 sm:$0x3]
  %v390 = vperm.slane %v388, 0
  %v391 = vperm.slane %v388, 1
  %v394 = vmul.f32 %v365, %v390
  %v395 = vmul.f32 %v385, %v391
  %s396 = scalar_lea.vmem %s3, 80
  %397 = vst [vmem:[%s396] sm:$0x3f] %v394
  %398 = vst [vmem:[%s396 + $0x8] sm:$0x3f] %v395
  %s399 = scalar_lea.vmem %s0, 48
  %v400 = vld [vmem:[%s399] sm:$0x3f]
  %401 = vst [vmem:[#allocation1] ss:$2 sm:$0xff] %v14
  %v402 = vld.sshfl [vmem:[#allocation1] sm:$0xff pattern:$0x75316420]
  %v403 = vld.sshfl [vmem:[#allocation1 + $0x8] sm:$0xff pattern:$0x75316420]
  %v405 = vsel %vm20, %v400, 0
  %v407 = vsel %vm24, %v402, 0
  %v409 = vsel %vm24, %v403, 0
  %411 = vmatpush.msra.mxu0 0.0
  %412 = vmatpush.msra.mxu0 0.0
  %413 = vmatpush.msra.mxu0 0.0
  %414 = vmatpush.msra.mxu0 0.0
  %415 = vmatpush.msra.mxu0 0.0
  %416 = vmatpush.msra.mxu0 0.0
  %417 = vmatpush.msra.mxu0 0.0
  %418 = vmatpush.msra.mxu0 0.0
  %419 = vmatpush.msra.mxu0 0.0
  %420 = vmatpush.msra.mxu0 0.0
  %421 = vmatpush.msra.mxu0 0.0
  %422 = vmatpush.msra.mxu0 0.0
  %423 = vmatpush.msra.mxu0 0.0
  %424 = vmatpush.msra.mxu0 0.0
  %425 = vmatpush.msra.mxu0 0.0
  %426 = vmatpush.msra.mxu0 %v407
  %427 = vmatmul.f32.gmra.mxu0 %v405
  %v428 = vpop.f32.mrf.mxu0
  %v429 = vadd.f32 0.0, %v428
  %430 = vdwg.mxu0
  %431 = vmatpush.msra.mxu0 0.0
  %432 = vmatpush.msra.mxu0 0.0
  %433 = vmatpush.msra.mxu0 0.0
  %434 = vmatpush.msra.mxu0 0.0
  %435 = vmatpush.msra.mxu0 0.0
  %436 = vmatpush.msra.mxu0 0.0
  %437 = vmatpush.msra.mxu0 0.0
  %438 = vmatpush.msra.mxu0 0.0
  %439 = vmatpush.msra.mxu0 0.0
  %440 = vmatpush.msra.mxu0 0.0
  %441 = vmatpush.msra.mxu0 0.0
  %442 = vmatpush.msra.mxu0 0.0
  %443 = vmatpush.msra.mxu0 0.0
  %444 = vmatpush.msra.mxu0 0.0
  %445 = vmatpush.msra.mxu0 0.0
  %446 = vmatpush.msra.mxu0 %v409
  %447 = vmatmul.f32.gmra.mxu0 %v405
  %v448 = vpop.f32.mrf.mxu0
  %v449 = vadd.f32 0.0, %v448
  %450 = vdwg.mxu0
  %s451 = scalar_lea.vmem %s2, 6
  %v452 = vld [vmem:[%s451] ss:$8 sm:$0x3]
  %v454 = vperm.slane %v452, 0
  %v455 = vperm.slane %v452, 1
  %v458 = vmul.f32 %v429, %v454
  %v459 = vmul.f32 %v449, %v455
  %s460 = scalar_lea.vmem %s3, 96
  %461 = vst [vmem:[%s460] sm:$0x3f] %v458
  %462 = vst [vmem:[%s460 + $0x8] sm:$0x3f] %v459
  %s463 = scalar_lea.vmem %s0, 56
  %v464 = vld [vmem:[%s463] sm:$0x3f]
  %465 = vst [vmem:[#allocation1] ss:$2 sm:$0xff] %v14
  %v466 = vld.sshfl [vmem:[#allocation1] sm:$0xff pattern:$0x75316420]
  %v467 = vld.sshfl [vmem:[#allocation1 + $0x8] sm:$0xff pattern:$0x75316420]
  %v469 = vsel %vm20, %v464, 0
  %v471 = vsel %vm24, %v466, 0
  %v473 = vsel %vm24, %v467, 0
  %475 = vmatpush.msra.mxu0 0.0
  %476 = vmatpush.msra.mxu0 0.0
  %477 = vmatpush.msra.mxu0 0.0
  %478 = vmatpush.msra.mxu0 0.0
  %479 = vmatpush.msra.mxu0 0.0
  %480 = vmatpush.msra.mxu0 0.0
  %481 = vmatpush.msra.mxu0 0.0
  %482 = vmatpush.msra.mxu0 0.0
  %483 = vmatpush.msra.mxu0 0.0
  %484 = vmatpush.msra.mxu0 0.0
  %485 = vmatpush.msra.mxu0 0.0
  %486 = vmatpush.msra.mxu0 0.0
  %487 = vmatpush.msra.mxu0 0.0
  %488 = vmatpush.msra.mxu0 0.0
  %489 = vmatpush.msra.mxu0 0.0
  %490 = vmatpush.msra.mxu0 %v471
  %491 = vmatmul.f32.gmra.mxu0 %v469
  %v492 = vpop.f32.mrf.mxu0
  %v493 = vadd.f32 0.0, %v492
  %494 = vdwg.mxu0
  %495 = vmatpush.msra.mxu0 0.0
  %496 = vmatpush.msra.mxu0 0.0
  %497 = vmatpush.msra.mxu0 0.0
  %498 = vmatpush.msra.mxu0 0.0
  %499 = vmatpush.msra.mxu0 0.0
  %500 = vmatpush.msra.mxu0 0.0
  %501 = vmatpush.msra.mxu0 0.0
  %502 = vmatpush.msra.mxu0 0.0
  %503 = vmatpush.msra.mxu0 0.0
  %504 = vmatpush.msra.mxu0 0.0
  %505 = vmatpush.msra.mxu0 0.0
  %506 = vmatpush.msra.mxu0 0.0
  %507 = vmatpush.msra.mxu0 0.0
  %508 = vmatpush.msra.mxu0 0.0
  %509 = vmatpush.msra.mxu0 0.0
  %510 = vmatpush.msra.mxu0 %v473
  %511 = vmatmul.f32.gmra.mxu0 %v469
  %v512 = vpop.f32.mrf.mxu0
  %v513 = vadd.f32 0.0, %v512
  %514 = vdwg.mxu0
  %s515 = scalar_lea.vmem %s2, 7
  %v516 = vld [vmem:[%s515] ss:$8 sm:$0x3]
  %v518 = vperm.slane %v516, 0
  %v519 = vperm.slane %v516, 1
  %v522 = vmul.f32 %v493, %v518
  %v523 = vmul.f32 %v513, %v519
  %s524 = scalar_lea.vmem %s3, 112
  %525 = vst [vmem:[%s524] sm:$0x3f] %v522
  %526 = vst [vmem:[%s524 + $0x8] sm:$0x3f] %v523
  %s527 = scalar_lea.vmem %s0, 64
  %v528 = vld [vmem:[%s527] sm:$0x3f]
  %529 = vst [vmem:[#allocation1] ss:$2 sm:$0xff] %v14
  %v530 = vld.sshfl [vmem:[#allocation1] sm:$0xff pattern:$0x75316420]
  %v531 = vld.sshfl [vmem:[#allocation1 + $0x8] sm:$0xff pattern:$0x75316420]
  %v533 = vsel %vm20, %v528, 0
  %v535 = vsel %vm24, %v530, 0
  %v537 = vsel %vm24, %v531, 0
  %539 = vmatpush.msra.mxu0 0.0
  %540 = vmatpush.msra.mxu0 0.0
  %541 = vmatpush.msra.mxu0 0.0
  %542 = vmatpush.msra.mxu0 0.0
  %543 = vmatpush.msra.mxu0 0.0
  %544 = vmatpush.msra.mxu0 0.0
  %545 = vmatpush.msra.mxu0 0.0
  %546 = vmatpush.msra.mxu0 0.0
  %547 = vmatpush.msra.mxu0 0.0
  %548 = vmatpush.msra.mxu0 0.0
  %549 = vmatpush.msra.mxu0 0.0
  %550 = vmatpush.msra.mxu0 0.0
  %551 = vmatpush.msra.mxu0 0.0
  %552 = vmatpush.msra.mxu0 0.0
  %553 = vmatpush.msra.mxu0 0.0
  %554 = vmatpush.msra.mxu0 %v535
  %555 = vmatmul.f32.gmra.mxu0 %v533
  %v556 = vpop.f32.mrf.mxu0
  %v557 = vadd.f32 0.0, %v556
  %558 = vdwg.mxu0
  %559 = vmatpush.msra.mxu0 0.0
  %560 = vmatpush.msra.mxu0 0.0
  %561 = vmatpush.msra.mxu0 0.0
  %562 = vmatpush.msra.mxu0 0.0
  %563 = vmatpush.msra.mxu0 0.0
  %564 = vmatpush.msra.mxu0 0.0
  %565 = vmatpush.msra.mxu0 0.0
  %566 = vmatpush.msra.mxu0 0.0
  %567 = vmatpush.msra.mxu0 0.0
  %568 = vmatpush.msra.mxu0 0.0
  %569 = vmatpush.msra.mxu0 0.0
  %570 = vmatpush.msra.mxu0 0.0
  %571 = vmatpush.msra.mxu0 0.0
  %572 = vmatpush.msra.mxu0 0.0
  %573 = vmatpush.msra.mxu0 0.0
  %574 = vmatpush.msra.mxu0 %v537
  %575 = vmatmul.f32.gmra.mxu0 %v533
  %v576 = vpop.f32.mrf.mxu0
  %v577 = vadd.f32 0.0, %v576
  %578 = vdwg.mxu0
  %s579 = scalar_lea.vmem %s2, 16
  %v580 = vld [vmem:[%s579] ss:$8 sm:$0x3]
  %v582 = vperm.slane %v580, 0
  %v583 = vperm.slane %v580, 1
  %v586 = vmul.f32 %v557, %v582
  %v587 = vmul.f32 %v577, %v583
  %s588 = scalar_lea.vmem %s3, 128
  %589 = vst [vmem:[%s588] sm:$0x3f] %v586
  %590 = vst [vmem:[%s588 + $0x8] sm:$0x3f] %v587
  %s591 = scalar_lea.vmem %s0, 72
  %v592 = vld [vmem:[%s591] sm:$0x3f]
  %593 = vst [vmem:[#allocation1] ss:$2 sm:$0xff] %v14
  %v594 = vld.sshfl [vmem:[#allocation1] sm:$0xff pattern:$0x75316420]
  %v595 = vld.sshfl [vmem:[#allocation1 + $0x8] sm:$0xff pattern:$0x75316420]
  %v597 = vsel %vm20, %v592, 0
  %v599 = vsel %vm24, %v594, 0
  %v601 = vsel %vm24, %v595, 0
  %603 = vmatpush.msra.mxu0 0.0
  %604 = vmatpush.msra.mxu0 0.0
  %605 = vmatpush.msra.mxu0 0.0
  %606 = vmatpush.msra.mxu0 0.0
  %607 = vmatpush.msra.mxu0 0.0
  %608 = vmatpush.msra.mxu0 0.0
  %609 = vmatpush.msra.mxu0 0.0
  %610 = vmatpush.msra.mxu0 0.0
  %611 = vmatpush.msra.mxu0 0.0
  %612 = vmatpush.msra.mxu0 0.0
  %613 = vmatpush.msra.mxu0 0.0
  %614 = vmatpush.msra.mxu0 0.0
  %615 = vmatpush.msra.mxu0 0.0
  %616 = vmatpush.msra.mxu0 0.0
  %617 = vmatpush.msra.mxu0 0.0
  %618 = vmatpush.msra.mxu0 %v599
  %619 = vmatmul.f32.gmra.mxu0 %v597
  %v620 = vpop.f32.mrf.mxu0
  %v621 = vadd.f32 0.0, %v620
  %622 = vdwg.mxu0
  %623 = vmatpush.msra.mxu0 0.0
  %624 = vmatpush.msra.mxu0 0.0
  %625 = vmatpush.msra.mxu0 0.0
  %626 = vmatpush.msra.mxu0 0.0
  %627 = vmatpush.msra.mxu0 0.0
  %628 = vmatpush.msra.mxu0 0.0
  %629 = vmatpush.msra.mxu0 0.0
  %630 = vmatpush.msra.mxu0 0.0
  %631 = vmatpush.msra.mxu0 0.0
  %632 = vmatpush.msra.mxu0 0.0
  %633 = vmatpush.msra.mxu0 0.0
  %634 = vmatpush.msra.mxu0 0.0
  %635 = vmatpush.msra.mxu0 0.0
  %636 = vmatpush.msra.mxu0 0.0
  %637 = vmatpush.msra.mxu0 0.0
  %638 = vmatpush.msra.mxu0 %v601
  %639 = vmatmul.f32.gmra.mxu0 %v597
  %v640 = vpop.f32.mrf.mxu0
  %v641 = vadd.f32 0.0, %v640
  %642 = vdwg.mxu0
  %s643 = scalar_lea.vmem %s2, 17
  %v644 = vld [vmem:[%s643] ss:$8 sm:$0x3]
  %v646 = vperm.slane %v644, 0
  %v647 = vperm.slane %v644, 1
  %v650 = vmul.f32 %v621, %v646
  %v651 = vmul.f32 %v641, %v647
  %s652 = scalar_lea.vmem %s3, 144
  %653 = vst [vmem:[%s652] sm:$0x3f] %v650
  %654 = vst [vmem:[%s652 + $0x8] sm:$0x3f] %v651
  %s655 = scalar_lea.vmem %s0, 80
  %v656 = vld [vmem:[%s655] sm:$0x3f]
  %657 = vst [vmem:[#allocation1] ss:$2 sm:$0xff] %v14
  %v658 = vld.sshfl [vmem:[#allocation1] sm:$0xff pattern:$0x75316420]
  %v659 = vld.sshfl [vmem:[#allocation1 + $0x8] sm:$0xff pattern:$0x75316420]
  %v661 = vsel %vm20, %v656, 0
  %v663 = vsel %vm24, %v658, 0
  %v665 = vsel %vm24, %v659, 0
  %667 = vmatpush.msra.mxu0 0.0
  %668 = vmatpush.msra.mxu0 0.0
  %669 = vmatpush.msra.mxu0 0.0
  %670 = vmatpush.msra.mxu0 0.0
  %671 = vmatpush.msra.mxu0 0.0
  %672 = vmatpush.msra.mxu0 0.0
  %673 = vmatpush.msra.mxu0 0.0
  %674 = vmatpush.msra.mxu0 0.0
  %675 = vmatpush.msra.mxu0 0.0
  %676 = vmatpush.msra.mxu0 0.0
  %677 = vmatpush.msra.mxu0 0.0
  %678 = vmatpush.msra.mxu0 0.0
  %679 = vmatpush.msra.mxu0 0.0
  %680 = vmatpush.msra.mxu0 0.0
  %681 = vmatpush.msra.mxu0 0.0
  %682 = vmatpush.msra.mxu0 %v663
  %683 = vmatmul.f32.gmra.mxu0 %v661
  %v684 = vpop.f32.mrf.mxu0
  %v685 = vadd.f32 0.0, %v684
  %686 = vdwg.mxu0
  %687 = vmatpush.msra.mxu0 0.0
  %688 = vmatpush.msra.mxu0 0.0
  %689 = vmatpush.msra.mxu0 0.0
  %690 = vmatpush.msra.mxu0 0.0
  %691 = vmatpush.msra.mxu0 0.0
  %692 = vmatpush.msra.mxu0 0.0
  %693 = vmatpush.msra.mxu0 0.0
  %694 = vmatpush.msra.mxu0 0.0
  %695 = vmatpush.msra.mxu0 0.0
  %696 = vmatpush.msra.mxu0 0.0
  %697 = vmatpush.msra.mxu0 0.0
  %698 = vmatpush.msra.mxu0 0.0
  %699 = vmatpush.msra.mxu0 0.0
  %700 = vmatpush.msra.mxu0 0.0
  %701 = vmatpush.msra.mxu0 0.0
  %702 = vmatpush.msra.mxu0 %v665
  %703 = vmatmul.f32.gmra.mxu0 %v661
  %v704 = vpop.f32.mrf.mxu0
  %v705 = vadd.f32 0.0, %v704
  %706 = vdwg.mxu0
  %s707 = scalar_lea.vmem %s2, 18
  %v708 = vld [vmem:[%s707] ss:$8 sm:$0x3]
  %v710 = vperm.slane %v708, 0
  %v711 = vperm.slane %v708, 1
  %v714 = vmul.f32 %v685, %v710
  %v715 = vmul.f32 %v705, %v711
  %s716 = scalar_lea.vmem %s3, 160
  %717 = vst [vmem:[%s716] sm:$0x3f] %v714
  %718 = vst [vmem:[%s716 + $0x8] sm:$0x3f] %v715
  %s719 = scalar_lea.vmem %s0, 88
  %v720 = vld [vmem:[%s719] sm:$0x3f]
  %721 = vst [vmem:[#allocation1] ss:$2 sm:$0xff] %v14
  %v722 = vld.sshfl [vmem:[#allocation1] sm:$0xff pattern:$0x75316420]
  %v723 = vld.sshfl [vmem:[#allocation1 + $0x8] sm:$0xff pattern:$0x75316420]
  %v725 = vsel %vm20, %v720, 0
  %v727 = vsel %vm24, %v722, 0
  %v729 = vsel %vm24, %v723, 0
  %731 = vmatpush.msra.mxu0 0.0
  %732 = vmatpush.msra.mxu0 0.0
  %733 = vmatpush.msra.mxu0 0.0
  %734 = vmatpush.msra.mxu0 0.0
  %735 = vmatpush.msra.mxu0 0.0
  %736 = vmatpush.msra.mxu0 0.0
  %737 = vmatpush.msra.mxu0 0.0
  %738 = vmatpush.msra.mxu0 0.0
  %739 = vmatpush.msra.mxu0 0.0
  %740 = vmatpush.msra.mxu0 0.0
  %741 = vmatpush.msra.mxu0 0.0
  %742 = vmatpush.msra.mxu0 0.0
  %743 = vmatpush.msra.mxu0 0.0
  %744 = vmatpush.msra.mxu0 0.0
  %745 = vmatpush.msra.mxu0 0.0
  %746 = vmatpush.msra.mxu0 %v727
  %747 = vmatmul.f32.gmra.mxu0 %v725
  %v748 = vpop.f32.mrf.mxu0
  %v749 = vadd.f32 0.0, %v748
  %750 = vdwg.mxu0
  %751 = vmatpush.msra.mxu0 0.0
  %752 = vmatpush.msra.mxu0 0.0
  %753 = vmatpush.msra.mxu0 0.0
  %754 = vmatpush.msra.mxu0 0.0
  %755 = vmatpush.msra.mxu0 0.0
  %756 = vmatpush.msra.mxu0 0.0
  %757 = vmatpush.msra.mxu0 0.0
  %758 = vmatpush.msra.mxu0 0.0
  %759 = vmatpush.msra.mxu0 0.0
  %760 = vmatpush.msra.mxu0 0.0
  %761 = vmatpush.msra.mxu0 0.0
  %762 = vmatpush.msra.mxu0 0.0
  %763 = vmatpush.msra.mxu0 0.0
  %764 = vmatpush.msra.mxu0 0.0
  %765 = vmatpush.msra.mxu0 0.0
  %766 = vmatpush.msra.mxu0 %v729
  %767 = vmatmul.f32.gmra.mxu0 %v725
  %v768 = vpop.f32.mrf.mxu0
  %v769 = vadd.f32 0.0, %v768
  %770 = vdwg.mxu0
  %s771 = scalar_lea.vmem %s2, 19
  %v772 = vld [vmem:[%s771] ss:$8 sm:$0x3]
  %v774 = vperm.slane %v772, 0
  %v775 = vperm.slane %v772, 1
  %v778 = vmul.f32 %v749, %v774
  %v779 = vmul.f32 %v769, %v775
  %s780 = scalar_lea.vmem %s3, 176
  %781 = vst [vmem:[%s780] sm:$0x3f] %v778
  %782 = vst [vmem:[%s780 + $0x8] sm:$0x3f] %v779
  %s783 = scalar_lea.vmem %s0, 96
  %v784 = vld [vmem:[%s783] sm:$0x3f]
  %785 = vst [vmem:[#allocation1] ss:$2 sm:$0xff] %v14
  %v786 = vld.sshfl [vmem:[#allocation1] sm:$0xff pattern:$0x75316420]
  %v787 = vld.sshfl [vmem:[#allocation1 + $0x8] sm:$0xff pattern:$0x75316420]
  %v789 = vsel %vm20, %v784, 0
  %v791 = vsel %vm24, %v786, 0
  %v793 = vsel %vm24, %v787, 0
  %795 = vmatpush.msra.mxu0 0.0
  %796 = vmatpush.msra.mxu0 0.0
  %797 = vmatpush.msra.mxu0 0.0
  %798 = vmatpush.msra.mxu0 0.0
  %799 = vmatpush.msra.mxu0 0.0
  %800 = vmatpush.msra.mxu0 0.0
  %801 = vmatpush.msra.mxu0 0.0
  %802 = vmatpush.msra.mxu0 0.0
  %803 = vmatpush.msra.mxu0 0.0
  %804 = vmatpush.msra.mxu0 0.0
  %805 = vmatpush.msra.mxu0 0.0
  %806 = vmatpush.msra.mxu0 0.0
  %807 = vmatpush.msra.mxu0 0.0
  %808 = vmatpush.msra.mxu0 0.0
  %809 = vmatpush.msra.mxu0 0.0
  %810 = vmatpush.msra.mxu0 %v791
  %811 = vmatmul.f32.gmra.mxu0 %v789
  %v812 = vpop.f32.mrf.mxu0
  %v813 = vadd.f32 0.0, %v812
  %814 = vdwg.mxu0
  %815 = vmatpush.msra.mxu0 0.0
  %816 = vmatpush.msra.mxu0 0.0
  %817 = vmatpush.msra.mxu0 0.0
  %818 = vmatpush.msra.mxu0 0.0
  %819 = vmatpush.msra.mxu0 0.0
  %820 = vmatpush.msra.mxu0 0.0
  %821 = vmatpush.msra.mxu0 0.0
  %822 = vmatpush.msra.mxu0 0.0
  %823 = vmatpush.msra.mxu0 0.0
  %824 = vmatpush.msra.mxu0 0.0
  %825 = vmatpush.msra.mxu0 0.0
  %826 = vmatpush.msra.mxu0 0.0
  %827 = vmatpush.msra.mxu0 0.0
  %828 = vmatpush.msra.mxu0 0.0
  %829 = vmatpush.msra.mxu0 0.0
  %830 = vmatpush.msra.mxu0 %v793
  %831 = vmatmul.f32.gmra.mxu0 %v789
  %v832 = vpop.f32.mrf.mxu0
  %v833 = vadd.f32 0.0, %v832
  %834 = vdwg.mxu0
  %s835 = scalar_lea.vmem %s2, 20
  %v836 = vld [vmem:[%s835] ss:$8 sm:$0x3]
  %v838 = vperm.slane %v836, 0
  %v839 = vperm.slane %v836, 1
  %v842 = vmul.f32 %v813, %v838
  %v843 = vmul.f32 %v833, %v839
  %s844 = scalar_lea.vmem %s3, 192
  %845 = vst [vmem:[%s844] sm:$0x3f] %v842
  %846 = vst [vmem:[%s844 + $0x8] sm:$0x3f] %v843
  %s847 = scalar_lea.vmem %s0, 104
  %v848 = vld [vmem:[%s847] sm:$0x3f]
  %849 = vst [vmem:[#allocation1] ss:$2 sm:$0xff] %v14
  %v850 = vld.sshfl [vmem:[#allocation1] sm:$0xff pattern:$0x75316420]
  %v851 = vld.sshfl [vmem:[#allocation1 + $0x8] sm:$0xff pattern:$0x75316420]
  %v853 = vsel %vm20, %v848, 0
  %v855 = vsel %vm24, %v850, 0
  %v857 = vsel %vm24, %v851, 0
  %859 = vmatpush.msra.mxu0 0.0
  %860 = vmatpush.msra.mxu0 0.0
  %861 = vmatpush.msra.mxu0 0.0
  %862 = vmatpush.msra.mxu0 0.0
  %863 = vmatpush.msra.mxu0 0.0
  %864 = vmatpush.msra.mxu0 0.0
  %865 = vmatpush.msra.mxu0 0.0
  %866 = vmatpush.msra.mxu0 0.0
  %867 = vmatpush.msra.mxu0 0.0
  %868 = vmatpush.msra.mxu0 0.0
  %869 = vmatpush.msra.mxu0 0.0
  %870 = vmatpush.msra.mxu0 0.0
  %871 = vmatpush.msra.mxu0 0.0
  %872 = vmatpush.msra.mxu0 0.0
  %873 = vmatpush.msra.mxu0 0.0
  %874 = vmatpush.msra.mxu0 %v855
  %875 = vmatmul.f32.gmra.mxu0 %v853
  %v876 = vpop.f32.mrf.mxu0
  %v877 = vadd.f32 0.0, %v876
  %878 = vdwg.mxu0
  %879 = vmatpush.msra.mxu0 0.0
  %880 = vmatpush.msra.mxu0 0.0
  %881 = vmatpush.msra.mxu0 0.0
  %882 = vmatpush.msra.mxu0 0.0
  %883 = vmatpush.msra.mxu0 0.0
  %884 = vmatpush.msra.mxu0 0.0
  %885 = vmatpush.msra.mxu0 0.0
  %886 = vmatpush.msra.mxu0 0.0
  %887 = vmatpush.msra.mxu0 0.0
  %888 = vmatpush.msra.mxu0 0.0
  %889 = vmatpush.msra.mxu0 0.0
  %890 = vmatpush.msra.mxu0 0.0
  %891 = vmatpush.msra.mxu0 0.0
  %892 = vmatpush.msra.mxu0 0.0
  %893 = vmatpush.msra.mxu0 0.0
  %894 = vmatpush.msra.mxu0 %v857
  %895 = vmatmul.f32.gmra.mxu0 %v853
  %v896 = vpop.f32.mrf.mxu0
  %v897 = vadd.f32 0.0, %v896
  %898 = vdwg.mxu0
  %s899 = scalar_lea.vmem %s2, 21
  %v900 = vld [vmem:[%s899] ss:$8 sm:$0x3]
  %v902 = vperm.slane %v900, 0
  %v903 = vperm.slane %v900, 1
  %v906 = vmul.f32 %v877, %v902
  %v907 = vmul.f32 %v897, %v903
  %s908 = scalar_lea.vmem %s3, 208
  %909 = vst [vmem:[%s908] sm:$0x3f] %v906
  %910 = vst [vmem:[%s908 + $0x8] sm:$0x3f] %v907
  %s911 = scalar_lea.vmem %s0, 112
  %v912 = vld [vmem:[%s911] sm:$0x3f]
  %913 = vst [vmem:[#allocation1] ss:$2 sm:$0xff] %v14
  %v914 = vld.sshfl [vmem:[#allocation1] sm:$0xff pattern:$0x75316420]
  %v915 = vld.sshfl [vmem:[#allocation1 + $0x8] sm:$0xff pattern:$0x75316420]
  %v917 = vsel %vm20, %v912, 0
  %v919 = vsel %vm24, %v914, 0
  %v921 = vsel %vm24, %v915, 0
  %923 = vmatpush.msra.mxu0 0.0
  %924 = vmatpush.msra.mxu0 0.0
  %925 = vmatpush.msra.mxu0 0.0
  %926 = vmatpush.msra.mxu0 0.0
  %927 = vmatpush.msra.mxu0 0.0
  %928 = vmatpush.msra.mxu0 0.0
  %929 = vmatpush.msra.mxu0 0.0
  %930 = vmatpush.msra.mxu0 0.0
  %931 = vmatpush.msra.mxu0 0.0
  %932 = vmatpush.msra.mxu0 0.0
  %933 = vmatpush.msra.mxu0 0.0
  %934 = vmatpush.msra.mxu0 0.0
  %935 = vmatpush.msra.mxu0 0.0
  %936 = vmatpush.msra.mxu0 0.0
  %937 = vmatpush.msra.mxu0 0.0
  %938 = vmatpush.msra.mxu0 %v919
  %939 = vmatmul.f32.gmra.mxu0 %v917
  %v940 = vpop.f32.mrf.mxu0
  %v941 = vadd.f32 0.0, %v940
  %942 = vdwg.mxu0
  %943 = vmatpush.msra.mxu0 0.0
  %944 = vmatpush.msra.mxu0 0.0
  %945 = vmatpush.msra.mxu0 0.0
  %946 = vmatpush.msra.mxu0 0.0
  %947 = vmatpush.msra.mxu0 0.0
  %948 = vmatpush.msra.mxu0 0.0
  %949 = vmatpush.msra.mxu0 0.0
  %950 = vmatpush.msra.mxu0 0.0
  %951 = vmatpush.msra.mxu0 0.0
  %952 = vmatpush.msra.mxu0 0.0
  %953 = vmatpush.msra.mxu0 0.0
  %954 = vmatpush.msra.mxu0 0.0
  %955 = vmatpush.msra.mxu0 0.0
  %956 = vmatpush.msra.mxu0 0.0
  %957 = vmatpush.msra.mxu0 0.0
  %958 = vmatpush.msra.mxu0 %v921
  %959 = vmatmul.f32.gmra.mxu0 %v917
  %v960 = vpop.f32.mrf.mxu0
  %v961 = vadd.f32 0.0, %v960
  %962 = vdwg.mxu0
  %s963 = scalar_lea.vmem %s2, 22
  %v964 = vld [vmem:[%s963] ss:$8 sm:$0x3]
  %v966 = vperm.slane %v964, 0
  %v967 = vperm.slane %v964, 1
  %v970 = vmul.f32 %v941, %v966
  %v971 = vmul.f32 %v961, %v967
  %s972 = scalar_lea.vmem %s3, 224
  %973 = vst [vmem:[%s972] sm:$0x3f] %v970
  %974 = vst [vmem:[%s972 + $0x8] sm:$0x3f] %v971
  %s975 = scalar_lea.vmem %s0, 120
  %v976 = vld [vmem:[%s975] sm:$0x3f]
  %977 = vst [vmem:[#allocation1] ss:$2 sm:$0xff] %v14
  %v978 = vld.sshfl [vmem:[#allocation1] sm:$0xff pattern:$0x75316420]
  %v979 = vld.sshfl [vmem:[#allocation1 + $0x8] sm:$0xff pattern:$0x75316420]
  %v981 = vsel %vm20, %v976, 0
  %v983 = vsel %vm24, %v978, 0
  %v985 = vsel %vm24, %v979, 0
  %987 = vmatpush.msra.mxu0 0.0
  %988 = vmatpush.msra.mxu0 0.0
  %989 = vmatpush.msra.mxu0 0.0
  %990 = vmatpush.msra.mxu0 0.0
  %991 = vmatpush.msra.mxu0 0.0
  %992 = vmatpush.msra.mxu0 0.0
  %993 = vmatpush.msra.mxu0 0.0
  %994 = vmatpush.msra.mxu0 0.0
  %995 = vmatpush.msra.mxu0 0.0
  %996 = vmatpush.msra.mxu0 0.0
  %997 = vmatpush.msra.mxu0 0.0
  %998 = vmatpush.msra.mxu0 0.0
  %999 = vmatpush.msra.mxu0 0.0
  %1000 = vmatpush.msra.mxu0 0.0
  %1001 = vmatpush.msra.mxu0 0.0
  %1002 = vmatpush.msra.mxu0 %v983
  %1003 = vmatmul.f32.gmra.mxu0 %v981
  %v1004 = vpop.f32.mrf.mxu0
  %v1005 = vadd.f32 0.0, %v1004
  %1006 = vdwg.mxu0
  %1007 = vmatpush.msra.mxu0 0.0
  %1008 = vmatpush.msra.mxu0 0.0
  %1009 = vmatpush.msra.mxu0 0.0
  %1010 = vmatpush.msra.mxu0 0.0
  %1011 = vmatpush.msra.mxu0 0.0
  %1012 = vmatpush.msra.mxu0 0.0
  %1013 = vmatpush.msra.mxu0 0.0
  %1014 = vmatpush.msra.mxu0 0.0
  %1015 = vmatpush.msra.mxu0 0.0
  %1016 = vmatpush.msra.mxu0 0.0
  %1017 = vmatpush.msra.mxu0 0.0
  %1018 = vmatpush.msra.mxu0 0.0
  %1019 = vmatpush.msra.mxu0 0.0
  %1020 = vmatpush.msra.mxu0 0.0
  %1021 = vmatpush.msra.mxu0 0.0
  %1022 = vmatpush.msra.mxu0 %v985
  %1023 = vmatmul.f32.gmra.mxu0 %v981
  %v1024 = vpop.f32.mrf.mxu0
  %v1025 = vadd.f32 0.0, %v1024
  %1026 = vdwg.mxu0
  %s1027 = scalar_lea.vmem %s2, 23
  %v1028 = vld [vmem:[%s1027] ss:$8 sm:$0x3]
  %v1030 = vperm.slane %v1028, 0
  %v1031 = vperm.slane %v1028, 1
  %v1034 = vmul.f32 %v1005, %v1030
  %v1035 = vmul.f32 %v1025, %v1031
  %s1036 = scalar_lea.vmem %s3, 240
  %1037 = vst [vmem:[%s1036] sm:$0x3f] %v1034
  %1038 = vst [vmem:[%s1036 + $0x8] sm:$0x3f] %v1035
  %s1039 = scalar_lea.vmem %s0, 128
  %v1040 = vld [vmem:[%s1039] sm:$0x3f]
  %1041 = vst [vmem:[#allocation1] ss:$2 sm:$0xff] %v14
  %v1042 = vld.sshfl [vmem:[#allocation1] sm:$0xff pattern:$0x75316420]
  %v1043 = vld.sshfl [vmem:[#allocation1 + $0x8] sm:$0xff pattern:$0x75316420]
  %v1045 = vsel %vm20, %v1040, 0
  %v1047 = vsel %vm24, %v1042, 0
  %v1049 = vsel %vm24, %v1043, 0
  %1051 = vmatpush.msra.mxu0 0.0
  %1052 = vmatpush.msra.mxu0 0.0
  %1053 = vmatpush.msra.mxu0 0.0
  %1054 = vmatpush.msra.mxu0 0.0
  %1055 = vmatpush.msra.mxu0 0.0
  %1056 = vmatpush.msra.mxu0 0.0
  %1057 = vmatpush.msra.mxu0 0.0
  %1058 = vmatpush.msra.mxu0 0.0
  %1059 = vmatpush.msra.mxu0 0.0
  %1060 = vmatpush.msra.mxu0 0.0
  %1061 = vmatpush.msra.mxu0 0.0
  %1062 = vmatpush.msra.mxu0 0.0
  %1063 = vmatpush.msra.mxu0 0.0
  %1064 = vmatpush.msra.mxu0 0.0
  %1065 = vmatpush.msra.mxu0 0.0
  %1066 = vmatpush.msra.mxu0 %v1047
  %1067 = vmatmul.f32.gmra.mxu0 %v1045
  %v1068 = vpop.f32.mrf.mxu0
  %v1069 = vadd.f32 0.0, %v1068
  %1070 = vdwg.mxu0
  %1071 = vmatpush.msra.mxu0 0.0
  %1072 = vmatpush.msra.mxu0 0.0
  %1073 = vmatpush.msra.mxu0 0.0
  %1074 = vmatpush.msra.mxu0 0.0
  %1075 = vmatpush.msra.mxu0 0.0
  %1076 = vmatpush.msra.mxu0 0.0
  %1077 = vmatpush.msra.mxu0 0.0
  %1078 = vmatpush.msra.mxu0 0.0
  %1079 = vmatpush.msra.mxu0 0.0
  %1080 = vmatpush.msra.mxu0 0.0
  %1081 = vmatpush.msra.mxu0 0.0
  %1082 = vmatpush.msra.mxu0 0.0
  %1083 = vmatpush.msra.mxu0 0.0
  %1084 = vmatpush.msra.mxu0 0.0
  %1085 = vmatpush.msra.mxu0 0.0
  %1086 = vmatpush.msra.mxu0 %v1049
  %1087 = vmatmul.f32.gmra.mxu0 %v1045
  %v1088 = vpop.f32.mrf.mxu0
  %v1089 = vadd.f32 0.0, %v1088
  %1090 = vdwg.mxu0
  %s1091 = scalar_lea.vmem %s2, 32
  %v1092 = vld [vmem:[%s1091] ss:$8 sm:$0x3]
  %v1094 = vperm.slane %v1092, 0
  %v1095 = vperm.slane %v1092, 1
  %v1098 = vmul.f32 %v1069, %v1094
  %v1099 = vmul.f32 %v1089, %v1095
  %s1100 = scalar_lea.vmem %s3, 256
  %1101 = vst [vmem:[%s1100] sm:$0x3f] %v1098
  %1102 = vst [vmem:[%s1100 + $0x8] sm:$0x3f] %v1099
  %s1103 = scalar_lea.vmem %s0, 136
  %v1104 = vld [vmem:[%s1103] sm:$0x3f]
  %1105 = vst [vmem:[#allocation1] ss:$2 sm:$0xff] %v14
  %v1106 = vld.sshfl [vmem:[#allocation1] sm:$0xff pattern:$0x75316420]
  %v1107 = vld.sshfl [vmem:[#allocation1 + $0x8] sm:$0xff pattern:$0x75316420]
  %v1109 = vsel %vm20, %v1104, 0
  %v1111 = vsel %vm24, %v1106, 0
  %v1113 = vsel %vm24, %v1107, 0
  %1115 = vmatpush.msra.mxu0 0.0
  %1116 = vmatpush.msra.mxu0 0.0
  %1117 = vmatpush.msra.mxu0 0.0
  %1118 = vmatpush.msra.mxu0 0.0
  %1119 = vmatpush.msra.mxu0 0.0
  %1120 = vmatpush.msra.mxu0 0.0
  %1121 = vmatpush.msra.mxu0 0.0
  %1122 = vmatpush.msra.mxu0 0.0
  %1123 = vmatpush.msra.mxu0 0.0
  %1124 = vmatpush.msra.mxu0 0.0
  %1125 = vmatpush.msra.mxu0 0.0
  %1126 = vmatpush.msra.mxu0 0.0
  %1127 = vmatpush.msra.mxu0 0.0
  %1128 = vmatpush.msra.mxu0 0.0
  %1129 = vmatpush.msra.mxu0 0.0
  %1130 = vmatpush.msra.mxu0 %v1111
  %1131 = vmatmul.f32.gmra.mxu0 %v1109
  %v1132 = vpop.f32.mrf.mxu0
  %v1133 = vadd.f32 0.0, %v1132
  %1134 = vdwg.mxu0
  %1135 = vmatpush.msra.mxu0 0.0
  %1136 = vmatpush.msra.mxu0 0.0
  %1137 = vmatpush.msra.mxu0 0.0
  %1138 = vmatpush.msra.mxu0 0.0
  %1139 = vmatpush.msra.mxu0 0.0
  %1140 = vmatpush.msra.mxu0 0.0
  %1141 = vmatpush.msra.mxu0 0.0
  %1142 = vmatpush.msra.mxu0 0.0
  %1143 = vmatpush.msra.mxu0 0.0
  %1144 = vmatpush.msra.mxu0 0.0
  %1145 = vmatpush.msra.mxu0 0.0
  %1146 = vmatpush.msra.mxu0 0.0
  %1147 = vmatpush.msra.mxu0 0.0
  %1148 = vmatpush.msra.mxu0 0.0
  %1149 = vmatpush.msra.mxu0 0.0
  %1150 = vmatpush.msra.mxu0 %v1113
  %1151 = vmatmul.f32.gmra.mxu0 %v1109
  %v1152 = vpop.f32.mrf.mxu0
  %v1153 = vadd.f32 0.0, %v1152
  %1154 = vdwg.mxu0
  %s1155 = scalar_lea.vmem %s2, 33
  %v1156 = vld [vmem:[%s1155] ss:$8 sm:$0x3]
  %v1158 = vperm.slane %v1156, 0
  %v1159 = vperm.slane %v1156, 1
  %v1162 = vmul.f32 %v1133, %v1158
  %v1163 = vmul.f32 %v1153, %v1159
  %s1164 = scalar_lea.vmem %s3, 272
  %1165 = vst [vmem:[%s1164] sm:$0x3f] %v1162
  %1166 = vst [vmem:[%s1164 + $0x8] sm:$0x3f] %v1163
  %s1167 = scalar_lea.vmem %s0, 144
  %v1168 = vld [vmem:[%s1167] sm:$0x3f]
  %1169 = vst [vmem:[#allocation1] ss:$2 sm:$0xff] %v14
  %v1170 = vld.sshfl [vmem:[#allocation1] sm:$0xff pattern:$0x75316420]
  %v1171 = vld.sshfl [vmem:[#allocation1 + $0x8] sm:$0xff pattern:$0x75316420]
  %v1173 = vsel %vm20, %v1168, 0
  %v1175 = vsel %vm24, %v1170, 0
  %v1177 = vsel %vm24, %v1171, 0
  %1179 = vmatpush.msra.mxu0 0.0
  %1180 = vmatpush.msra.mxu0 0.0
  %1181 = vmatpush.msra.mxu0 0.0
  %1182 = vmatpush.msra.mxu0 0.0
  %1183 = vmatpush.msra.mxu0 0.0
  %1184 = vmatpush.msra.mxu0 0.0
  %1185 = vmatpush.msra.mxu0 0.0
  %1186 = vmatpush.msra.mxu0 0.0
  %1187 = vmatpush.msra.mxu0 0.0
  %1188 = vmatpush.msra.mxu0 0.0
  %1189 = vmatpush.msra.mxu0 0.0
  %1190 = vmatpush.msra.mxu0 0.0
  %1191 = vmatpush.msra.mxu0 0.0
  %1192 = vmatpush.msra.mxu0 0.0
  %1193 = vmatpush.msra.mxu0 0.0
  %1194 = vmatpush.msra.mxu0 %v1175
  %1195 = vmatmul.f32.gmra.mxu0 %v1173
  %v1196 = vpop.f32.mrf.mxu0
  %v1197 = vadd.f32 0.0, %v1196
  %1198 = vdwg.mxu0
  %1199 = vmatpush.msra.mxu0 0.0
  %1200 = vmatpush.msra.mxu0 0.0
  %1201 = vmatpush.msra.mxu0 0.0
  %1202 = vmatpush.msra.mxu0 0.0
  %1203 = vmatpush.msra.mxu0 0.0
  %1204 = vmatpush.msra.mxu0 0.0
  %1205 = vmatpush.msra.mxu0 0.0
  %1206 = vmatpush.msra.mxu0 0.0
  %1207 = vmatpush.msra.mxu0 0.0
  %1208 = vmatpush.msra.mxu0 0.0
  %1209 = vmatpush.msra.mxu0 0.0
  %1210 = vmatpush.msra.mxu0 0.0
  %1211 = vmatpush.msra.mxu0 0.0
  %1212 = vmatpush.msra.mxu0 0.0
  %1213 = vmatpush.msra.mxu0 0.0
  %1214 = vmatpush.msra.mxu0 %v1177
  %1215 = vmatmul.f32.gmra.mxu0 %v1173
  %v1216 = vpop.f32.mrf.mxu0
  %v1217 = vadd.f32 0.0, %v1216
  %1218 = vdwg.mxu0
  %s1219 = scalar_lea.vmem %s2, 34
  %v1220 = vld [vmem:[%s1219] ss:$8 sm:$0x3]
  %v1222 = vperm.slane %v1220, 0
  %v1223 = vperm.slane %v1220, 1
  %v1226 = vmul.f32 %v1197, %v1222
  %v1227 = vmul.f32 %v1217, %v1223
  %s1228 = scalar_lea.vmem %s3, 288
  %1229 = vst [vmem:[%s1228] sm:$0x3f] %v1226
  %1230 = vst [vmem:[%s1228 + $0x8] sm:$0x3f] %v1227
  %s1231 = scalar_lea.vmem %s0, 152
  %v1232 = vld [vmem:[%s1231] sm:$0x3f]
  %1233 = vst [vmem:[#allocation1] ss:$2 sm:$0xff] %v14
  %v1234 = vld.sshfl [vmem:[#allocation1] sm:$0xff pattern:$0x75316420]
  %v1235 = vld.sshfl [vmem:[#allocation1 + $0x8] sm:$0xff pattern:$0x75316420]
  %v1237 = vsel %vm20, %v1232, 0
  %v1239 = vsel %vm24, %v1234, 0
  %v1241 = vsel %vm24, %v1235, 0
  %1243 = vmatpush.msra.mxu0 0.0
  %1244 = vmatpush.msra.mxu0 0.0
  %1245 = vmatpush.msra.mxu0 0.0
  %1246 = vmatpush.msra.mxu0 0.0
  %1247 = vmatpush.msra.mxu0 0.0
  %1248 = vmatpush.msra.mxu0 0.0
  %1249 = vmatpush.msra.mxu0 0.0
  %1250 = vmatpush.msra.mxu0 0.0
  %1251 = vmatpush.msra.mxu0 0.0
  %1252 = vmatpush.msra.mxu0 0.0
  %1253 = vmatpush.msra.mxu0 0.0
  %1254 = vmatpush.msra.mxu0 0.0
  %1255 = vmatpush.msra.mxu0 0.0
  %1256 = vmatpush.msra.mxu0 0.0
  %1257 = vmatpush.msra.mxu0 0.0
  %1258 = vmatpush.msra.mxu0 %v1239
  %1259 = vmatmul.f32.gmra.mxu0 %v1237
  %v1260 = vpop.f32.mrf.mxu0
  %v1261 = vadd.f32 0.0, %v1260
  %1262 = vdwg.mxu0
  %1263 = vmatpush.msra.mxu0 0.0
  %1264 = vmatpush.msra.mxu0 0.0
  %1265 = vmatpush.msra.mxu0 0.0
  %1266 = vmatpush.msra.mxu0 0.0
  %1267 = vmatpush.msra.mxu0 0.0
  %1268 = vmatpush.msra.mxu0 0.0
  %1269 = vmatpush.msra.mxu0 0.0
  %1270 = vmatpush.msra.mxu0 0.0
  %1271 = vmatpush.msra.mxu0 0.0
  %1272 = vmatpush.msra.mxu0 0.0
  %1273 = vmatpush.msra.mxu0 0.0
  %1274 = vmatpush.msra.mxu0 0.0
  %1275 = vmatpush.msra.mxu0 0.0
  %1276 = vmatpush.msra.mxu0 0.0
  %1277 = vmatpush.msra.mxu0 0.0
  %1278 = vmatpush.msra.mxu0 %v1241
  %1279 = vmatmul.f32.gmra.mxu0 %v1237
  %v1280 = vpop.f32.mrf.mxu0
  %v1281 = vadd.f32 0.0, %v1280
  %1282 = vdwg.mxu0
  %s1283 = scalar_lea.vmem %s2, 35
  %v1284 = vld [vmem:[%s1283] ss:$8 sm:$0x3]
  %v1286 = vperm.slane %v1284, 0
  %v1287 = vperm.slane %v1284, 1
  %v1290 = vmul.f32 %v1261, %v1286
  %v1291 = vmul.f32 %v1281, %v1287
  %s1292 = scalar_lea.vmem %s3, 304
  %1293 = vst [vmem:[%s1292] sm:$0x3f] %v1290
  %1294 = vst [vmem:[%s1292 + $0x8] sm:$0x3f] %v1291
  %s1295 = scalar_lea.vmem %s0, 160
  %v1296 = vld [vmem:[%s1295] sm:$0x3f]
  %1297 = vst [vmem:[#allocation1] ss:$2 sm:$0xff] %v14
  %v1298 = vld.sshfl [vmem:[#allocation1] sm:$0xff pattern:$0x75316420]
  %v1299 = vld.sshfl [vmem:[#allocation1 + $0x8] sm:$0xff pattern:$0x75316420]
  %v1301 = vsel %vm20, %v1296, 0
  %v1303 = vsel %vm24, %v1298, 0
  %v1305 = vsel %vm24, %v1299, 0
  %1307 = vmatpush.msra.mxu0 0.0
  %1308 = vmatpush.msra.mxu0 0.0
  %1309 = vmatpush.msra.mxu0 0.0
  %1310 = vmatpush.msra.mxu0 0.0
  %1311 = vmatpush.msra.mxu0 0.0
  %1312 = vmatpush.msra.mxu0 0.0
  %1313 = vmatpush.msra.mxu0 0.0
  %1314 = vmatpush.msra.mxu0 0.0
  %1315 = vmatpush.msra.mxu0 0.0
  %1316 = vmatpush.msra.mxu0 0.0
  %1317 = vmatpush.msra.mxu0 0.0
  %1318 = vmatpush.msra.mxu0 0.0
  %1319 = vmatpush.msra.mxu0 0.0
  %1320 = vmatpush.msra.mxu0 0.0
  %1321 = vmatpush.msra.mxu0 0.0
  %1322 = vmatpush.msra.mxu0 %v1303
  %1323 = vmatmul.f32.gmra.mxu0 %v1301
  %v1324 = vpop.f32.mrf.mxu0
  %v1325 = vadd.f32 0.0, %v1324
  %1326 = vdwg.mxu0
  %1327 = vmatpush.msra.mxu0 0.0
  %1328 = vmatpush.msra.mxu0 0.0
  %1329 = vmatpush.msra.mxu0 0.0
  %1330 = vmatpush.msra.mxu0 0.0
  %1331 = vmatpush.msra.mxu0 0.0
  %1332 = vmatpush.msra.mxu0 0.0
  %1333 = vmatpush.msra.mxu0 0.0
  %1334 = vmatpush.msra.mxu0 0.0
  %1335 = vmatpush.msra.mxu0 0.0
  %1336 = vmatpush.msra.mxu0 0.0
  %1337 = vmatpush.msra.mxu0 0.0
  %1338 = vmatpush.msra.mxu0 0.0
  %1339 = vmatpush.msra.mxu0 0.0
  %1340 = vmatpush.msra.mxu0 0.0
  %1341 = vmatpush.msra.mxu0 0.0
  %1342 = vmatpush.msra.mxu0 %v1305
  %1343 = vmatmul.f32.gmra.mxu0 %v1301
  %v1344 = vpop.f32.mrf.mxu0
  %v1345 = vadd.f32 0.0, %v1344
  %1346 = vdwg.mxu0
  %s1347 = scalar_lea.vmem %s2, 36
  %v1348 = vld [vmem:[%s1347] ss:$8 sm:$0x3]
  %v1350 = vperm.slane %v1348, 0
  %v1351 = vperm.slane %v1348, 1
  %v1354 = vmul.f32 %v1325, %v1350
  %v1355 = vmul.f32 %v1345, %v1351
  %s1356 = scalar_lea.vmem %s3, 320
  %1357 = vst [vmem:[%s1356] sm:$0x3f] %v1354
  %1358 = vst [vmem:[%s1356 + $0x8] sm:$0x3f] %v1355
  %s1359 = scalar_lea.vmem %s0, 168
  %v1360 = vld [vmem:[%s1359] sm:$0x3f]
  %1361 = vst [vmem:[#allocation1] ss:$2 sm:$0xff] %v14
  %v1362 = vld.sshfl [vmem:[#allocation1] sm:$0xff pattern:$0x75316420]
  %v1363 = vld.sshfl [vmem:[#allocation1 + $0x8] sm:$0xff pattern:$0x75316420]
  %v1365 = vsel %vm20, %v1360, 0
  %v1367 = vsel %vm24, %v1362, 0
  %v1369 = vsel %vm24, %v1363, 0
  %1371 = vmatpush.msra.mxu0 0.0
  %1372 = vmatpush.msra.mxu0 0.0
  %1373 = vmatpush.msra.mxu0 0.0
  %1374 = vmatpush.msra.mxu0 0.0
  %1375 = vmatpush.msra.mxu0 0.0
  %1376 = vmatpush.msra.mxu0 0.0
  %1377 = vmatpush.msra.mxu0 0.0
  %1378 = vmatpush.msra.mxu0 0.0
  %1379 = vmatpush.msra.mxu0 0.0
  %1380 = vmatpush.msra.mxu0 0.0
  %1381 = vmatpush.msra.mxu0 0.0
  %1382 = vmatpush.msra.mxu0 0.0
  %1383 = vmatpush.msra.mxu0 0.0
  %1384 = vmatpush.msra.mxu0 0.0
  %1385 = vmatpush.msra.mxu0 0.0
  %1386 = vmatpush.msra.mxu0 %v1367
  %1387 = vmatmul.f32.gmra.mxu0 %v1365
  %v1388 = vpop.f32.mrf.mxu0
  %v1389 = vadd.f32 0.0, %v1388
  %1390 = vdwg.mxu0
  %1391 = vmatpush.msra.mxu0 0.0
  %1392 = vmatpush.msra.mxu0 0.0
  %1393 = vmatpush.msra.mxu0 0.0
  %1394 = vmatpush.msra.mxu0 0.0
  %1395 = vmatpush.msra.mxu0 0.0
  %1396 = vmatpush.msra.mxu0 0.0
  %1397 = vmatpush.msra.mxu0 0.0
  %1398 = vmatpush.msra.mxu0 0.0
  %1399 = vmatpush.msra.mxu0 0.0
  %1400 = vmatpush.msra.mxu0 0.0
  %1401 = vmatpush.msra.mxu0 0.0
  %1402 = vmatpush.msra.mxu0 0.0
  %1403 = vmatpush.msra.mxu0 0.0
  %1404 = vmatpush.msra.mxu0 0.0
  %1405 = vmatpush.msra.mxu0 0.0
  %1406 = vmatpush.msra.mxu0 %v1369
  %1407 = vmatmul.f32.gmra.mxu0 %v1365
  %v1408 = vpop.f32.mrf.mxu0
  %v1409 = vadd.f32 0.0, %v1408
  %1410 = vdwg.mxu0
  %s1411 = scalar_lea.vmem %s2, 37
  %v1412 = vld [vmem:[%s1411] ss:$8 sm:$0x3]
  %v1414 = vperm.slane %v1412, 0
  %v1415 = vperm.slane %v1412, 1
  %v1418 = vmul.f32 %v1389, %v1414
  %v1419 = vmul.f32 %v1409, %v1415
  %s1420 = scalar_lea.vmem %s3, 336
  %1421 = vst [vmem:[%s1420] sm:$0x3f] %v1418
  %1422 = vst [vmem:[%s1420 + $0x8] sm:$0x3f] %v1419
  %s1423 = scalar_lea.vmem %s0, 176
  %v1424 = vld [vmem:[%s1423] sm:$0x3f]
  %1425 = vst [vmem:[#allocation1] ss:$2 sm:$0xff] %v14
  %v1426 = vld.sshfl [vmem:[#allocation1] sm:$0xff pattern:$0x75316420]
  %v1427 = vld.sshfl [vmem:[#allocation1 + $0x8] sm:$0xff pattern:$0x75316420]
  %v1429 = vsel %vm20, %v1424, 0
  %v1431 = vsel %vm24, %v1426, 0
  %v1433 = vsel %vm24, %v1427, 0
  %1435 = vmatpush.msra.mxu0 0.0
  %1436 = vmatpush.msra.mxu0 0.0
  %1437 = vmatpush.msra.mxu0 0.0
  %1438 = vmatpush.msra.mxu0 0.0
  %1439 = vmatpush.msra.mxu0 0.0
  %1440 = vmatpush.msra.mxu0 0.0
  %1441 = vmatpush.msra.mxu0 0.0
  %1442 = vmatpush.msra.mxu0 0.0
  %1443 = vmatpush.msra.mxu0 0.0
  %1444 = vmatpush.msra.mxu0 0.0
  %1445 = vmatpush.msra.mxu0 0.0
  %1446 = vmatpush.msra.mxu0 0.0
  %1447 = vmatpush.msra.mxu0 0.0
  %1448 = vmatpush.msra.mxu0 0.0
  %1449 = vmatpush.msra.mxu0 0.0
  %1450 = vmatpush.msra.mxu0 %v1431
  %1451 = vmatmul.f32.gmra.mxu0 %v1429
  %v1452 = vpop.f32.mrf.mxu0
  %v1453 = vadd.f32 0.0, %v1452
  %1454 = vdwg.mxu0
  %1455 = vmatpush.msra.mxu0 0.0
  %1456 = vmatpush.msra.mxu0 0.0
  %1457 = vmatpush.msra.mxu0 0.0
  %1458 = vmatpush.msra.mxu0 0.0
  %1459 = vmatpush.msra.mxu0 0.0
  %1460 = vmatpush.msra.mxu0 0.0
  %1461 = vmatpush.msra.mxu0 0.0
  %1462 = vmatpush.msra.mxu0 0.0
  %1463 = vmatpush.msra.mxu0 0.0
  %1464 = vmatpush.msra.mxu0 0.0
  %1465 = vmatpush.msra.mxu0 0.0
  %1466 = vmatpush.msra.mxu0 0.0
  %1467 = vmatpush.msra.mxu0 0.0
  %1468 = vmatpush.msra.mxu0 0.0
  %1469 = vmatpush.msra.mxu0 0.0
  %1470 = vmatpush.msra.mxu0 %v1433
  %1471 = vmatmul.f32.gmra.mxu0 %v1429
  %v1472 = vpop.f32.mrf.mxu0
  %v1473 = vadd.f32 0.0, %v1472
  %1474 = vdwg.mxu0
  %s1475 = scalar_lea.vmem %s2, 38
  %v1476 = vld [vmem:[%s1475] ss:$8 sm:$0x3]
  %v1478 = vperm.slane %v1476, 0
  %v1479 = vperm.slane %v1476, 1
  %v1482 = vmul.f32 %v1453, %v1478
  %v1483 = vmul.f32 %v1473, %v1479
  %s1484 = scalar_lea.vmem %s3, 352
  %1485 = vst [vmem:[%s1484] sm:$0x3f] %v1482
  %1486 = vst [vmem:[%s1484 + $0x8] sm:$0x3f] %v1483
  %s1487 = scalar_lea.vmem %s0, 184
  %v1488 = vld [vmem:[%s1487] sm:$0x3f]
  %1489 = vst [vmem:[#allocation1] ss:$2 sm:$0xff] %v14
  %v1490 = vld.sshfl [vmem:[#allocation1] sm:$0xff pattern:$0x75316420]
  %v1491 = vld.sshfl [vmem:[#allocation1 + $0x8] sm:$0xff pattern:$0x75316420]
  %v1493 = vsel %vm20, %v1488, 0
  %v1495 = vsel %vm24, %v1490, 0
  %v1497 = vsel %vm24, %v1491, 0
  %1499 = vmatpush.msra.mxu0 0.0
  %1500 = vmatpush.msra.mxu0 0.0
  %1501 = vmatpush.msra.mxu0 0.0
  %1502 = vmatpush.msra.mxu0 0.0
  %1503 = vmatpush.msra.mxu0 0.0
  %1504 = vmatpush.msra.mxu0 0.0
  %1505 = vmatpush.msra.mxu0 0.0
  %1506 = vmatpush.msra.mxu0 0.0
  %1507 = vmatpush.msra.mxu0 0.0
  %1508 = vmatpush.msra.mxu0 0.0
  %1509 = vmatpush.msra.mxu0 0.0
  %1510 = vmatpush.msra.mxu0 0.0
  %1511 = vmatpush.msra.mxu0 0.0
  %1512 = vmatpush.msra.mxu0 0.0
  %1513 = vmatpush.msra.mxu0 0.0
  %1514 = vmatpush.msra.mxu0 %v1495
  %1515 = vmatmul.f32.gmra.mxu0 %v1493
  %v1516 = vpop.f32.mrf.mxu0
  %v1517 = vadd.f32 0.0, %v1516
  %1518 = vdwg.mxu0
  %1519 = vmatpush.msra.mxu0 0.0
  %1520 = vmatpush.msra.mxu0 0.0
  %1521 = vmatpush.msra.mxu0 0.0
  %1522 = vmatpush.msra.mxu0 0.0
  %1523 = vmatpush.msra.mxu0 0.0
  %1524 = vmatpush.msra.mxu0 0.0
  %1525 = vmatpush.msra.mxu0 0.0
  %1526 = vmatpush.msra.mxu0 0.0
  %1527 = vmatpush.msra.mxu0 0.0
  %1528 = vmatpush.msra.mxu0 0.0
  %1529 = vmatpush.msra.mxu0 0.0
  %1530 = vmatpush.msra.mxu0 0.0
  %1531 = vmatpush.msra.mxu0 0.0
  %1532 = vmatpush.msra.mxu0 0.0
  %1533 = vmatpush.msra.mxu0 0.0
  %1534 = vmatpush.msra.mxu0 %v1497
  %1535 = vmatmul.f32.gmra.mxu0 %v1493
  %v1536 = vpop.f32.mrf.mxu0
  %v1537 = vadd.f32 0.0, %v1536
  %1538 = vdwg.mxu0
  %s1539 = scalar_lea.vmem %s2, 39
  %v1540 = vld [vmem:[%s1539] ss:$8 sm:$0x3]
  %v1542 = vperm.slane %v1540, 0
  %v1543 = vperm.slane %v1540, 1
  %v1546 = vmul.f32 %v1517, %v1542
  %v1547 = vmul.f32 %v1537, %v1543
  %s1548 = scalar_lea.vmem %s3, 368
  %1549 = vst [vmem:[%s1548] sm:$0x3f] %v1546
  %1550 = vst [vmem:[%s1548 + $0x8] sm:$0x3f] %v1547
  %s1551 = scalar_lea.vmem %s0, 192
  %v1552 = vld [vmem:[%s1551] sm:$0x3f]
  %1553 = vst [vmem:[#allocation1] ss:$2 sm:$0xff] %v14
  %v1554 = vld.sshfl [vmem:[#allocation1] sm:$0xff pattern:$0x75316420]
  %v1555 = vld.sshfl [vmem:[#allocation1 + $0x8] sm:$0xff pattern:$0x75316420]
  %v1557 = vsel %vm20, %v1552, 0
  %v1559 = vsel %vm24, %v1554, 0
  %v1561 = vsel %vm24, %v1555, 0
  %1563 = vmatpush.msra.mxu0 0.0
  %1564 = vmatpush.msra.mxu0 0.0
  %1565 = vmatpush.msra.mxu0 0.0
  %1566 = vmatpush.msra.mxu0 0.0
  %1567 = vmatpush.msra.mxu0 0.0
  %1568 = vmatpush.msra.mxu0 0.0
  %1569 = vmatpush.msra.mxu0 0.0
  %1570 = vmatpush.msra.mxu0 0.0
  %1571 = vmatpush.msra.mxu0 0.0
  %1572 = vmatpush.msra.mxu0 0.0
  %1573 = vmatpush.msra.mxu0 0.0
  %1574 = vmatpush.msra.mxu0 0.0
  %1575 = vmatpush.msra.mxu0 0.0
  %1576 = vmatpush.msra.mxu0 0.0
  %1577 = vmatpush.msra.mxu0 0.0
  %1578 = vmatpush.msra.mxu0 %v1559
  %1579 = vmatmul.f32.gmra.mxu0 %v1557
  %v1580 = vpop.f32.mrf.mxu0
  %v1581 = vadd.f32 0.0, %v1580
  %1582 = vdwg.mxu0
  %1583 = vmatpush.msra.mxu0 0.0
  %1584 = vmatpush.msra.mxu0 0.0
  %1585 = vmatpush.msra.mxu0 0.0
  %1586 = vmatpush.msra.mxu0 0.0
  %1587 = vmatpush.msra.mxu0 0.0
  %1588 = vmatpush.msra.mxu0 0.0
  %1589 = vmatpush.msra.mxu0 0.0
  %1590 = vmatpush.msra.mxu0 0.0
  %1591 = vmatpush.msra.mxu0 0.0
  %1592 = vmatpush.msra.mxu0 0.0
  %1593 = vmatpush.msra.mxu0 0.0
  %1594 = vmatpush.msra.mxu0 0.0
  %1595 = vmatpush.msra.mxu0 0.0
  %1596 = vmatpush.msra.mxu0 0.0
  %1597 = vmatpush.msra.mxu0 0.0
  %1598 = vmatpush.msra.mxu0 %v1561
  %1599 = vmatmul.f32.gmra.mxu0 %v1557
  %v1600 = vpop.f32.mrf.mxu0
  %v1601 = vadd.f32 0.0, %v1600
  %1602 = vdwg.mxu0
  %s1603 = scalar_lea.vmem %s2, 48
  %v1604 = vld [vmem:[%s1603] ss:$8 sm:$0x3]
  %v1606 = vperm.slane %v1604, 0
  %v1607 = vperm.slane %v1604, 1
  %v1610 = vmul.f32 %v1581, %v1606
  %v1611 = vmul.f32 %v1601, %v1607
  %s1612 = scalar_lea.vmem %s3, 384
  %1613 = vst [vmem:[%s1612] sm:$0x3f] %v1610
  %1614 = vst [vmem:[%s1612 + $0x8] sm:$0x3f] %v1611
  %s1615 = scalar_lea.vmem %s0, 200
  %v1616 = vld [vmem:[%s1615] sm:$0x3f]
  %1617 = vst [vmem:[#allocation1] ss:$2 sm:$0xff] %v14
  %v1618 = vld.sshfl [vmem:[#allocation1] sm:$0xff pattern:$0x75316420]
  %v1619 = vld.sshfl [vmem:[#allocation1 + $0x8] sm:$0xff pattern:$0x75316420]
  %v1621 = vsel %vm20, %v1616, 0
  %v1623 = vsel %vm24, %v1618, 0
  %v1625 = vsel %vm24, %v1619, 0
  %1627 = vmatpush.msra.mxu0 0.0
  %1628 = vmatpush.msra.mxu0 0.0
  %1629 = vmatpush.msra.mxu0 0.0
  %1630 = vmatpush.msra.mxu0 0.0
  %1631 = vmatpush.msra.mxu0 0.0
  %1632 = vmatpush.msra.mxu0 0.0
  %1633 = vmatpush.msra.mxu0 0.0
  %1634 = vmatpush.msra.mxu0 0.0
  %1635 = vmatpush.msra.mxu0 0.0
  %1636 = vmatpush.msra.mxu0 0.0
  %1637 = vmatpush.msra.mxu0 0.0
  %1638 = vmatpush.msra.mxu0 0.0
  %1639 = vmatpush.msra.mxu0 0.0
  %1640 = vmatpush.msra.mxu0 0.0
  %1641 = vmatpush.msra.mxu0 0.0
  %1642 = vmatpush.msra.mxu0 %v1623
  %1643 = vmatmul.f32.gmra.mxu0 %v1621
  %v1644 = vpop.f32.mrf.mxu0
  %v1645 = vadd.f32 0.0, %v1644
  %1646 = vdwg.mxu0
  %1647 = vmatpush.msra.mxu0 0.0
  %1648 = vmatpush.msra.mxu0 0.0
  %1649 = vmatpush.msra.mxu0 0.0
  %1650 = vmatpush.msra.mxu0 0.0
  %1651 = vmatpush.msra.mxu0 0.0
  %1652 = vmatpush.msra.mxu0 0.0
  %1653 = vmatpush.msra.mxu0 0.0
  %1654 = vmatpush.msra.mxu0 0.0
  %1655 = vmatpush.msra.mxu0 0.0
  %1656 = vmatpush.msra.mxu0 0.0
  %1657 = vmatpush.msra.mxu0 0.0
  %1658 = vmatpush.msra.mxu0 0.0
  %1659 = vmatpush.msra.mxu0 0.0
  %1660 = vmatpush.msra.mxu0 0.0
  %1661 = vmatpush.msra.mxu0 0.0
  %1662 = vmatpush.msra.mxu0 %v1625
  %1663 = vmatmul.f32.gmra.mxu0 %v1621
  %v1664 = vpop.f32.mrf.mxu0
  %v1665 = vadd.f32 0.0, %v1664
  %1666 = vdwg.mxu0
  %s1667 = scalar_lea.vmem %s2, 49
  %v1668 = vld [vmem:[%s1667] ss:$8 sm:$0x3]
  %v1670 = vperm.slane %v1668, 0
  %v1671 = vperm.slane %v1668, 1
  %v1674 = vmul.f32 %v1645, %v1670
  %v1675 = vmul.f32 %v1665, %v1671
  %s1676 = scalar_lea.vmem %s3, 400
  %1677 = vst [vmem:[%s1676] sm:$0x3f] %v1674
  %1678 = vst [vmem:[%s1676 + $0x8] sm:$0x3f] %v1675
  %s1679 = scalar_lea.vmem %s0, 208
  %v1680 = vld [vmem:[%s1679] sm:$0x3f]
  %1681 = vst [vmem:[#allocation1] ss:$2 sm:$0xff] %v14
  %v1682 = vld.sshfl [vmem:[#allocation1] sm:$0xff pattern:$0x75316420]
  %v1683 = vld.sshfl [vmem:[#allocation1 + $0x8] sm:$0xff pattern:$0x75316420]
  %v1685 = vsel %vm20, %v1680, 0
  %v1687 = vsel %vm24, %v1682, 0
  %v1689 = vsel %vm24, %v1683, 0
  %1691 = vmatpush.msra.mxu0 0.0
  %1692 = vmatpush.msra.mxu0 0.0
  %1693 = vmatpush.msra.mxu0 0.0
  %1694 = vmatpush.msra.mxu0 0.0
  %1695 = vmatpush.msra.mxu0 0.0
  %1696 = vmatpush.msra.mxu0 0.0
  %1697 = vmatpush.msra.mxu0 0.0
  %1698 = vmatpush.msra.mxu0 0.0
  %1699 = vmatpush.msra.mxu0 0.0
  %1700 = vmatpush.msra.mxu0 0.0
  %1701 = vmatpush.msra.mxu0 0.0
  %1702 = vmatpush.msra.mxu0 0.0
  %1703 = vmatpush.msra.mxu0 0.0
  %1704 = vmatpush.msra.mxu0 0.0
  %1705 = vmatpush.msra.mxu0 0.0
  %1706 = vmatpush.msra.mxu0 %v1687
  %1707 = vmatmul.f32.gmra.mxu0 %v1685
  %v1708 = vpop.f32.mrf.mxu0
  %v1709 = vadd.f32 0.0, %v1708
  %1710 = vdwg.mxu0
  %1711 = vmatpush.msra.mxu0 0.0
  %1712 = vmatpush.msra.mxu0 0.0
  %1713 = vmatpush.msra.mxu0 0.0
  %1714 = vmatpush.msra.mxu0 0.0
  %1715 = vmatpush.msra.mxu0 0.0
  %1716 = vmatpush.msra.mxu0 0.0
  %1717 = vmatpush.msra.mxu0 0.0
  %1718 = vmatpush.msra.mxu0 0.0
  %1719 = vmatpush.msra.mxu0 0.0
  %1720 = vmatpush.msra.mxu0 0.0
  %1721 = vmatpush.msra.mxu0 0.0
  %1722 = vmatpush.msra.mxu0 0.0
  %1723 = vmatpush.msra.mxu0 0.0
  %1724 = vmatpush.msra.mxu0 0.0
  %1725 = vmatpush.msra.mxu0 0.0
  %1726 = vmatpush.msra.mxu0 %v1689
  %1727 = vmatmul.f32.gmra.mxu0 %v1685
  %v1728 = vpop.f32.mrf.mxu0
  %v1729 = vadd.f32 0.0, %v1728
  %1730 = vdwg.mxu0
  %s1731 = scalar_lea.vmem %s2, 50
  %v1732 = vld [vmem:[%s1731] ss:$8 sm:$0x3]
  %v1734 = vperm.slane %v1732, 0
  %v1735 = vperm.slane %v1732, 1
  %v1738 = vmul.f32 %v1709, %v1734
  %v1739 = vmul.f32 %v1729, %v1735
  %s1740 = scalar_lea.vmem %s3, 416
  %1741 = vst [vmem:[%s1740] sm:$0x3f] %v1738
  %1742 = vst [vmem:[%s1740 + $0x8] sm:$0x3f] %v1739
  %s1743 = scalar_lea.vmem %s0, 216
  %v1744 = vld [vmem:[%s1743] sm:$0x3f]
  %1745 = vst [vmem:[#allocation1] ss:$2 sm:$0xff] %v14
  %v1746 = vld.sshfl [vmem:[#allocation1] sm:$0xff pattern:$0x75316420]
  %v1747 = vld.sshfl [vmem:[#allocation1 + $0x8] sm:$0xff pattern:$0x75316420]
  %v1749 = vsel %vm20, %v1744, 0
  %v1751 = vsel %vm24, %v1746, 0
  %v1753 = vsel %vm24, %v1747, 0
  %1755 = vmatpush.msra.mxu0 0.0
  %1756 = vmatpush.msra.mxu0 0.0
  %1757 = vmatpush.msra.mxu0 0.0
  %1758 = vmatpush.msra.mxu0 0.0
  %1759 = vmatpush.msra.mxu0 0.0
  %1760 = vmatpush.msra.mxu0 0.0
  %1761 = vmatpush.msra.mxu0 0.0
  %1762 = vmatpush.msra.mxu0 0.0
  %1763 = vmatpush.msra.mxu0 0.0
  %1764 = vmatpush.msra.mxu0 0.0
  %1765 = vmatpush.msra.mxu0 0.0
  %1766 = vmatpush.msra.mxu0 0.0
  %1767 = vmatpush.msra.mxu0 0.0
  %1768 = vmatpush.msra.mxu0 0.0
  %1769 = vmatpush.msra.mxu0 0.0
  %1770 = vmatpush.msra.mxu0 %v1751
  %1771 = vmatmul.f32.gmra.mxu0 %v1749
  %v1772 = vpop.f32.mrf.mxu0
  %v1773 = vadd.f32 0.0, %v1772
  %1774 = vdwg.mxu0
  %1775 = vmatpush.msra.mxu0 0.0
  %1776 = vmatpush.msra.mxu0 0.0
  %1777 = vmatpush.msra.mxu0 0.0
  %1778 = vmatpush.msra.mxu0 0.0
  %1779 = vmatpush.msra.mxu0 0.0
  %1780 = vmatpush.msra.mxu0 0.0
  %1781 = vmatpush.msra.mxu0 0.0
  %1782 = vmatpush.msra.mxu0 0.0
  %1783 = vmatpush.msra.mxu0 0.0
  %1784 = vmatpush.msra.mxu0 0.0
  %1785 = vmatpush.msra.mxu0 0.0
  %1786 = vmatpush.msra.mxu0 0.0
  %1787 = vmatpush.msra.mxu0 0.0
  %1788 = vmatpush.msra.mxu0 0.0
  %1789 = vmatpush.msra.mxu0 0.0
  %1790 = vmatpush.msra.mxu0 %v1753
  %1791 = vmatmul.f32.gmra.mxu0 %v1749
  %v1792 = vpop.f32.mrf.mxu0
  %v1793 = vadd.f32 0.0, %v1792
  %1794 = vdwg.mxu0
  %s1795 = scalar_lea.vmem %s2, 51
  %v1796 = vld [vmem:[%s1795] ss:$8 sm:$0x3]
  %v1798 = vperm.slane %v1796, 0
  %v1799 = vperm.slane %v1796, 1
  %v1802 = vmul.f32 %v1773, %v1798
  %v1803 = vmul.f32 %v1793, %v1799
  %s1804 = scalar_lea.vmem %s3, 432
  %1805 = vst [vmem:[%s1804] sm:$0x3f] %v1802
  %1806 = vst [vmem:[%s1804 + $0x8] sm:$0x3f] %v1803
  %s1807 = scalar_lea.vmem %s0, 224
  %v1808 = vld [vmem:[%s1807] sm:$0x3f]
  %1809 = vst [vmem:[#allocation1] ss:$2 sm:$0xff] %v14
  %v1810 = vld.sshfl [vmem:[#allocation1] sm:$0xff pattern:$0x75316420]
  %v1811 = vld.sshfl [vmem:[#allocation1 + $0x8] sm:$0xff pattern:$0x75316420]
  %v1813 = vsel %vm20, %v1808, 0
  %v1815 = vsel %vm24, %v1810, 0
  %v1817 = vsel %vm24, %v1811, 0
  %1819 = vmatpush.msra.mxu0 0.0
  %1820 = vmatpush.msra.mxu0 0.0
  %1821 = vmatpush.msra.mxu0 0.0
  %1822 = vmatpush.msra.mxu0 0.0
  %1823 = vmatpush.msra.mxu0 0.0
  %1824 = vmatpush.msra.mxu0 0.0
  %1825 = vmatpush.msra.mxu0 0.0
  %1826 = vmatpush.msra.mxu0 0.0
  %1827 = vmatpush.msra.mxu0 0.0
  %1828 = vmatpush.msra.mxu0 0.0
  %1829 = vmatpush.msra.mxu0 0.0
  %1830 = vmatpush.msra.mxu0 0.0
  %1831 = vmatpush.msra.mxu0 0.0
  %1832 = vmatpush.msra.mxu0 0.0
  %1833 = vmatpush.msra.mxu0 0.0
  %1834 = vmatpush.msra.mxu0 %v1815
  %1835 = vmatmul.f32.gmra.mxu0 %v1813
  %v1836 = vpop.f32.mrf.mxu0
  %v1837 = vadd.f32 0.0, %v1836
  %1838 = vdwg.mxu0
  %1839 = vmatpush.msra.mxu0 0.0
  %1840 = vmatpush.msra.mxu0 0.0
  %1841 = vmatpush.msra.mxu0 0.0
  %1842 = vmatpush.msra.mxu0 0.0
  %1843 = vmatpush.msra.mxu0 0.0
  %1844 = vmatpush.msra.mxu0 0.0
  %1845 = vmatpush.msra.mxu0 0.0
  %1846 = vmatpush.msra.mxu0 0.0
  %1847 = vmatpush.msra.mxu0 0.0
  %1848 = vmatpush.msra.mxu0 0.0
  %1849 = vmatpush.msra.mxu0 0.0
  %1850 = vmatpush.msra.mxu0 0.0
  %1851 = vmatpush.msra.mxu0 0.0
  %1852 = vmatpush.msra.mxu0 0.0
  %1853 = vmatpush.msra.mxu0 0.0
  %1854 = vmatpush.msra.mxu0 %v1817
  %1855 = vmatmul.f32.gmra.mxu0 %v1813
  %v1856 = vpop.f32.mrf.mxu0
  %v1857 = vadd.f32 0.0, %v1856
  %1858 = vdwg.mxu0
  %s1859 = scalar_lea.vmem %s2, 52
  %v1860 = vld [vmem:[%s1859] ss:$8 sm:$0x3]
  %v1862 = vperm.slane %v1860, 0
  %v1863 = vperm.slane %v1860, 1
  %v1866 = vmul.f32 %v1837, %v1862
  %v1867 = vmul.f32 %v1857, %v1863
  %s1868 = scalar_lea.vmem %s3, 448
  %1869 = vst [vmem:[%s1868] sm:$0x3f] %v1866
  %1870 = vst [vmem:[%s1868 + $0x8] sm:$0x3f] %v1867
  %s1871 = scalar_lea.vmem %s0, 232
  %v1872 = vld [vmem:[%s1871] sm:$0x3f]
  %1873 = vst [vmem:[#allocation1] ss:$2 sm:$0xff] %v14
  %v1874 = vld.sshfl [vmem:[#allocation1] sm:$0xff pattern:$0x75316420]
  %v1875 = vld.sshfl [vmem:[#allocation1 + $0x8] sm:$0xff pattern:$0x75316420]
  %v1877 = vsel %vm20, %v1872, 0
  %v1879 = vsel %vm24, %v1874, 0
  %v1881 = vsel %vm24, %v1875, 0
  %1883 = vmatpush.msra.mxu0 0.0
  %1884 = vmatpush.msra.mxu0 0.0
  %1885 = vmatpush.msra.mxu0 0.0
  %1886 = vmatpush.msra.mxu0 0.0
  %1887 = vmatpush.msra.mxu0 0.0
  %1888 = vmatpush.msra.mxu0 0.0
  %1889 = vmatpush.msra.mxu0 0.0
  %1890 = vmatpush.msra.mxu0 0.0
  %1891 = vmatpush.msra.mxu0 0.0
  %1892 = vmatpush.msra.mxu0 0.0
  %1893 = vmatpush.msra.mxu0 0.0
  %1894 = vmatpush.msra.mxu0 0.0
  %1895 = vmatpush.msra.mxu0 0.0
  %1896 = vmatpush.msra.mxu0 0.0
  %1897 = vmatpush.msra.mxu0 0.0
  %1898 = vmatpush.msra.mxu0 %v1879
  %1899 = vmatmul.f32.gmra.mxu0 %v1877
  %v1900 = vpop.f32.mrf.mxu0
  %v1901 = vadd.f32 0.0, %v1900
  %1902 = vdwg.mxu0
  %1903 = vmatpush.msra.mxu0 0.0
  %1904 = vmatpush.msra.mxu0 0.0
  %1905 = vmatpush.msra.mxu0 0.0
  %1906 = vmatpush.msra.mxu0 0.0
  %1907 = vmatpush.msra.mxu0 0.0
  %1908 = vmatpush.msra.mxu0 0.0
  %1909 = vmatpush.msra.mxu0 0.0
  %1910 = vmatpush.msra.mxu0 0.0
  %1911 = vmatpush.msra.mxu0 0.0
  %1912 = vmatpush.msra.mxu0 0.0
  %1913 = vmatpush.msra.mxu0 0.0
  %1914 = vmatpush.msra.mxu0 0.0
  %1915 = vmatpush.msra.mxu0 0.0
  %1916 = vmatpush.msra.mxu0 0.0
  %1917 = vmatpush.msra.mxu0 0.0
  %1918 = vmatpush.msra.mxu0 %v1881
  %1919 = vmatmul.f32.gmra.mxu0 %v1877
  %v1920 = vpop.f32.mrf.mxu0
  %v1921 = vadd.f32 0.0, %v1920
  %1922 = vdwg.mxu0
  %s1923 = scalar_lea.vmem %s2, 53
  %v1924 = vld [vmem:[%s1923] ss:$8 sm:$0x3]
  %v1926 = vperm.slane %v1924, 0
  %v1927 = vperm.slane %v1924, 1
  %v1930 = vmul.f32 %v1901, %v1926
  %v1931 = vmul.f32 %v1921, %v1927
  %s1932 = scalar_lea.vmem %s3, 464
  %1933 = vst [vmem:[%s1932] sm:$0x3f] %v1930
  %1934 = vst [vmem:[%s1932 + $0x8] sm:$0x3f] %v1931
  %s1935 = scalar_lea.vmem %s0, 240
  %v1936 = vld [vmem:[%s1935] sm:$0x3f]
  %1937 = vst [vmem:[#allocation1] ss:$2 sm:$0xff] %v14
  %v1938 = vld.sshfl [vmem:[#allocation1] sm:$0xff pattern:$0x75316420]
  %v1939 = vld.sshfl [vmem:[#allocation1 + $0x8] sm:$0xff pattern:$0x75316420]
  %v1941 = vsel %vm20, %v1936, 0
  %v1943 = vsel %vm24, %v1938, 0
  %v1945 = vsel %vm24, %v1939, 0
  %1947 = vmatpush.msra.mxu0 0.0
  %1948 = vmatpush.msra.mxu0 0.0
  %1949 = vmatpush.msra.mxu0 0.0
  %1950 = vmatpush.msra.mxu0 0.0
  %1951 = vmatpush.msra.mxu0 0.0
  %1952 = vmatpush.msra.mxu0 0.0
  %1953 = vmatpush.msra.mxu0 0.0
  %1954 = vmatpush.msra.mxu0 0.0
  %1955 = vmatpush.msra.mxu0 0.0
  %1956 = vmatpush.msra.mxu0 0.0
  %1957 = vmatpush.msra.mxu0 0.0
  %1958 = vmatpush.msra.mxu0 0.0
  %1959 = vmatpush.msra.mxu0 0.0
  %1960 = vmatpush.msra.mxu0 0.0
  %1961 = vmatpush.msra.mxu0 0.0
  %1962 = vmatpush.msra.mxu0 %v1943
  %1963 = vmatmul.f32.gmra.mxu0 %v1941
  %v1964 = vpop.f32.mrf.mxu0
  %v1965 = vadd.f32 0.0, %v1964
  %1966 = vdwg.mxu0
  %1967 = vmatpush.msra.mxu0 0.0
  %1968 = vmatpush.msra.mxu0 0.0
  %1969 = vmatpush.msra.mxu0 0.0
  %1970 = vmatpush.msra.mxu0 0.0
  %1971 = vmatpush.msra.mxu0 0.0
  %1972 = vmatpush.msra.mxu0 0.0
  %1973 = vmatpush.msra.mxu0 0.0
  %1974 = vmatpush.msra.mxu0 0.0
  %1975 = vmatpush.msra.mxu0 0.0
  %1976 = vmatpush.msra.mxu0 0.0
  %1977 = vmatpush.msra.mxu0 0.0
  %1978 = vmatpush.msra.mxu0 0.0
  %1979 = vmatpush.msra.mxu0 0.0
  %1980 = vmatpush.msra.mxu0 0.0
  %1981 = vmatpush.msra.mxu0 0.0
  %1982 = vmatpush.msra.mxu0 %v1945
  %1983 = vmatmul.f32.gmra.mxu0 %v1941
  %v1984 = vpop.f32.mrf.mxu0
  %v1985 = vadd.f32 0.0, %v1984
  %1986 = vdwg.mxu0
  %s1987 = scalar_lea.vmem %s2, 54
  %v1988 = vld [vmem:[%s1987] ss:$8 sm:$0x3]
  %v1990 = vperm.slane %v1988, 0
  %v1991 = vperm.slane %v1988, 1
  %v1994 = vmul.f32 %v1965, %v1990
  %v1995 = vmul.f32 %v1985, %v1991
  %s1996 = scalar_lea.vmem %s3, 480
  %1997 = vst [vmem:[%s1996] sm:$0x3f] %v1994
  %1998 = vst [vmem:[%s1996 + $0x8] sm:$0x3f] %v1995
  %s1999 = scalar_lea.vmem %s0, 248
  %v2000 = vld [vmem:[%s1999] sm:$0x3f]
  %2001 = vst [vmem:[#allocation1] ss:$2 sm:$0xff] %v14
  %v2002 = vld.sshfl [vmem:[#allocation1] sm:$0xff pattern:$0x75316420]
  %v2003 = vld.sshfl [vmem:[#allocation1 + $0x8] sm:$0xff pattern:$0x75316420]
  %v2005 = vsel %vm20, %v2000, 0
  %v2007 = vsel %vm24, %v2002, 0
  %v2009 = vsel %vm24, %v2003, 0
  %2011 = vmatpush.msra.mxu0 0.0
  %2012 = vmatpush.msra.mxu0 0.0
  %2013 = vmatpush.msra.mxu0 0.0
  %2014 = vmatpush.msra.mxu0 0.0
  %2015 = vmatpush.msra.mxu0 0.0
  %2016 = vmatpush.msra.mxu0 0.0
  %2017 = vmatpush.msra.mxu0 0.0
  %2018 = vmatpush.msra.mxu0 0.0
  %2019 = vmatpush.msra.mxu0 0.0
  %2020 = vmatpush.msra.mxu0 0.0
  %2021 = vmatpush.msra.mxu0 0.0
  %2022 = vmatpush.msra.mxu0 0.0
  %2023 = vmatpush.msra.mxu0 0.0
  %2024 = vmatpush.msra.mxu0 0.0
  %2025 = vmatpush.msra.mxu0 0.0
  %2026 = vmatpush.msra.mxu0 %v2007
  %2027 = vmatmul.f32.gmra.mxu0 %v2005
  %v2028 = vpop.f32.mrf.mxu0
  %v2029 = vadd.f32 0.0, %v2028
  %2030 = vdwg.mxu0
  %2031 = vmatpush.msra.mxu0 0.0
  %2032 = vmatpush.msra.mxu0 0.0
  %2033 = vmatpush.msra.mxu0 0.0
  %2034 = vmatpush.msra.mxu0 0.0
  %2035 = vmatpush.msra.mxu0 0.0
  %2036 = vmatpush.msra.mxu0 0.0
  %2037 = vmatpush.msra.mxu0 0.0
  %2038 = vmatpush.msra.mxu0 0.0
  %2039 = vmatpush.msra.mxu0 0.0
  %2040 = vmatpush.msra.mxu0 0.0
  %2041 = vmatpush.msra.mxu0 0.0
  %2042 = vmatpush.msra.mxu0 0.0
  %2043 = vmatpush.msra.mxu0 0.0
  %2044 = vmatpush.msra.mxu0 0.0
  %2045 = vmatpush.msra.mxu0 0.0
  %2046 = vmatpush.msra.mxu0 %v2009
  %2047 = vmatmul.f32.gmra.mxu0 %v2005
  %v2048 = vpop.f32.mrf.mxu0
  %v2049 = vadd.f32 0.0, %v2048
  %2050 = vdwg.mxu0
  %s2051 = scalar_lea.vmem %s2, 55
  %v2052 = vld [vmem:[%s2051] ss:$8 sm:$0x3]
  %v2054 = vperm.slane %v2052, 0
  %v2055 = vperm.slane %v2052, 1
  %v2058 = vmul.f32 %v2029, %v2054
  %v2059 = vmul.f32 %v2049, %v2055
  %s2060 = scalar_lea.vmem %s3, 496
  %2061 = vst [vmem:[%s2060] sm:$0x3f] %v2058
  %2062 = vst [vmem:[%s2060 + $0x8] sm:$0x3f] %v2059
  %s2063 = scalar_lea.vmem %s0, 256
  %v2064 = vld [vmem:[%s2063] sm:$0x3f]
  %2065 = vst [vmem:[#allocation1] ss:$2 sm:$0xff] %v14
  %v2066 = vld.sshfl [vmem:[#allocation1] sm:$0xff pattern:$0x75316420]
  %v2067 = vld.sshfl [vmem:[#allocation1 + $0x8] sm:$0xff pattern:$0x75316420]
  %v2069 = vsel %vm20, %v2064, 0
  %v2071 = vsel %vm24, %v2066, 0
  %v2073 = vsel %vm24, %v2067, 0
  %2075 = vmatpush.msra.mxu0 0.0
  %2076 = vmatpush.msra.mxu0 0.0
  %2077 = vmatpush.msra.mxu0 0.0
  %2078 = vmatpush.msra.mxu0 0.0
  %2079 = vmatpush.msra.mxu0 0.0
  %2080 = vmatpush.msra.mxu0 0.0
  %2081 = vmatpush.msra.mxu0 0.0
  %2082 = vmatpush.msra.mxu0 0.0
  %2083 = vmatpush.msra.mxu0 0.0
  %2084 = vmatpush.msra.mxu0 0.0
  %2085 = vmatpush.msra.mxu0 0.0
  %2086 = vmatpush.msra.mxu0 0.0
  %2087 = vmatpush.msra.mxu0 0.0
  %2088 = vmatpush.msra.mxu0 0.0
  %2089 = vmatpush.msra.mxu0 0.0
  %2090 = vmatpush.msra.mxu0 %v2071
  %2091 = vmatmul.f32.gmra.mxu0 %v2069
  %v2092 = vpop.f32.mrf.mxu0
  %v2093 = vadd.f32 0.0, %v2092
  %2094 = vdwg.mxu0
  %2095 = vmatpush.msra.mxu0 0.0
  %2096 = vmatpush.msra.mxu0 0.0
  %2097 = vmatpush.msra.mxu0 0.0
  %2098 = vmatpush.msra.mxu0 0.0
  %2099 = vmatpush.msra.mxu0 0.0
  %2100 = vmatpush.msra.mxu0 0.0
  %2101 = vmatpush.msra.mxu0 0.0
  %2102 = vmatpush.msra.mxu0 0.0
  %2103 = vmatpush.msra.mxu0 0.0
  %2104 = vmatpush.msra.mxu0 0.0
  %2105 = vmatpush.msra.mxu0 0.0
  %2106 = vmatpush.msra.mxu0 0.0
  %2107 = vmatpush.msra.mxu0 0.0
  %2108 = vmatpush.msra.mxu0 0.0
  %2109 = vmatpush.msra.mxu0 0.0
  %2110 = vmatpush.msra.mxu0 %v2073
  %2111 = vmatmul.f32.gmra.mxu0 %v2069
  %v2112 = vpop.f32.mrf.mxu0
  %v2113 = vadd.f32 0.0, %v2112
  %2114 = vdwg.mxu0
  %s2115 = scalar_lea.vmem %s2, 64
  %v2116 = vld [vmem:[%s2115] ss:$8 sm:$0x3]
  %v2118 = vperm.slane %v2116, 0
  %v2119 = vperm.slane %v2116, 1
  %v2122 = vmul.f32 %v2093, %v2118
  %v2123 = vmul.f32 %v2113, %v2119
  %s2124 = scalar_lea.vmem %s3, 512
  %2125 = vst [vmem:[%s2124] sm:$0x3f] %v2122
  %2126 = vst [vmem:[%s2124 + $0x8] sm:$0x3f] %v2123
  %s2127 = scalar_lea.vmem %s0, 264
  %v2128 = vld [vmem:[%s2127] sm:$0x3f]
  %2129 = vst [vmem:[#allocation1] ss:$2 sm:$0xff] %v14
  %v2130 = vld.sshfl [vmem:[#allocation1] sm:$0xff pattern:$0x75316420]
  %v2131 = vld.sshfl [vmem:[#allocation1 + $0x8] sm:$0xff pattern:$0x75316420]
  %v2133 = vsel %vm20, %v2128, 0
  %v2135 = vsel %vm24, %v2130, 0
  %v2137 = vsel %vm24, %v2131, 0
  %2139 = vmatpush.msra.mxu0 0.0
  %2140 = vmatpush.msra.mxu0 0.0
  %2141 = vmatpush.msra.mxu0 0.0
  %2142 = vmatpush.msra.mxu0 0.0
  %2143 = vmatpush.msra.mxu0 0.0
  %2144 = vmatpush.msra.mxu0 0.0
  %2145 = vmatpush.msra.mxu0 0.0
  %2146 = vmatpush.msra.mxu0 0.0
  %2147 = vmatpush.msra.mxu0 0.0
  %2148 = vmatpush.msra.mxu0 0.0
  %2149 = vmatpush.msra.mxu0 0.0
  %2150 = vmatpush.msra.mxu0 0.0
  %2151 = vmatpush.msra.mxu0 0.0
  %2152 = vmatpush.msra.mxu0 0.0
  %2153 = vmatpush.msra.mxu0 0.0
  %2154 = vmatpush.msra.mxu0 %v2135
  %2155 = vmatmul.f32.gmra.mxu0 %v2133
  %v2156 = vpop.f32.mrf.mxu0
  %v2157 = vadd.f32 0.0, %v2156
  %2158 = vdwg.mxu0
  %2159 = vmatpush.msra.mxu0 0.0
  %2160 = vmatpush.msra.mxu0 0.0
  %2161 = vmatpush.msra.mxu0 0.0
  %2162 = vmatpush.msra.mxu0 0.0
  %2163 = vmatpush.msra.mxu0 0.0
  %2164 = vmatpush.msra.mxu0 0.0
  %2165 = vmatpush.msra.mxu0 0.0
  %2166 = vmatpush.msra.mxu0 0.0
  %2167 = vmatpush.msra.mxu0 0.0
  %2168 = vmatpush.msra.mxu0 0.0
  %2169 = vmatpush.msra.mxu0 0.0
  %2170 = vmatpush.msra.mxu0 0.0
  %2171 = vmatpush.msra.mxu0 0.0
  %2172 = vmatpush.msra.mxu0 0.0
  %2173 = vmatpush.msra.mxu0 0.0
  %2174 = vmatpush.msra.mxu0 %v2137
  %2175 = vmatmul.f32.gmra.mxu0 %v2133
  %v2176 = vpop.f32.mrf.mxu0
  %v2177 = vadd.f32 0.0, %v2176
  %2178 = vdwg.mxu0
  %s2179 = scalar_lea.vmem %s2, 65
  %v2180 = vld [vmem:[%s2179] ss:$8 sm:$0x3]
  %v2182 = vperm.slane %v2180, 0
  %v2183 = vperm.slane %v2180, 1
  %v2186 = vmul.f32 %v2157, %v2182
  %v2187 = vmul.f32 %v2177, %v2183
  %s2188 = scalar_lea.vmem %s3, 528
  %2189 = vst [vmem:[%s2188] sm:$0x3f] %v2186
  %2190 = vst [vmem:[%s2188 + $0x8] sm:$0x3f] %v2187
  %s2191 = scalar_lea.vmem %s0, 272
  %v2192 = vld [vmem:[%s2191] sm:$0x3f]
  %2193 = vst [vmem:[#allocation1] ss:$2 sm:$0xff] %v14
  %v2194 = vld.sshfl [vmem:[#allocation1] sm:$0xff pattern:$0x75316420]
  %v2195 = vld.sshfl [vmem:[#allocation1 + $0x8] sm:$0xff pattern:$0x75316420]
  %v2197 = vsel %vm20, %v2192, 0
  %v2199 = vsel %vm24, %v2194, 0
  %v2201 = vsel %vm24, %v2195, 0
  %2203 = vmatpush.msra.mxu0 0.0
  %2204 = vmatpush.msra.mxu0 0.0
  %2205 = vmatpush.msra.mxu0 0.0
  %2206 = vmatpush.msra.mxu0 0.0
  %2207 = vmatpush.msra.mxu0 0.0
  %2208 = vmatpush.msra.mxu0 0.0
  %2209 = vmatpush.msra.mxu0 0.0
  %2210 = vmatpush.msra.mxu0 0.0
  %2211 = vmatpush.msra.mxu0 0.0
  %2212 = vmatpush.msra.mxu0 0.0
  %2213 = vmatpush.msra.mxu0 0.0
  %2214 = vmatpush.msra.mxu0 0.0
  %2215 = vmatpush.msra.mxu0 0.0
  %2216 = vmatpush.msra.mxu0 0.0
  %2217 = vmatpush.msra.mxu0 0.0
  %2218 = vmatpush.msra.mxu0 %v2199
  %2219 = vmatmul.f32.gmra.mxu0 %v2197
  %v2220 = vpop.f32.mrf.mxu0
  %v2221 = vadd.f32 0.0, %v2220
  %2222 = vdwg.mxu0
  %2223 = vmatpush.msra.mxu0 0.0
  %2224 = vmatpush.msra.mxu0 0.0
  %2225 = vmatpush.msra.mxu0 0.0
  %2226 = vmatpush.msra.mxu0 0.0
  %2227 = vmatpush.msra.mxu0 0.0
  %2228 = vmatpush.msra.mxu0 0.0
  %2229 = vmatpush.msra.mxu0 0.0
  %2230 = vmatpush.msra.mxu0 0.0
  %2231 = vmatpush.msra.mxu0 0.0
  %2232 = vmatpush.msra.mxu0 0.0
  %2233 = vmatpush.msra.mxu0 0.0
  %2234 = vmatpush.msra.mxu0 0.0
  %2235 = vmatpush.msra.mxu0 0.0
  %2236 = vmatpush.msra.mxu0 0.0
  %2237 = vmatpush.msra.mxu0 0.0
  %2238 = vmatpush.msra.mxu0 %v2201
  %2239 = vmatmul.f32.gmra.mxu0 %v2197
  %v2240 = vpop.f32.mrf.mxu0
  %v2241 = vadd.f32 0.0, %v2240
  %2242 = vdwg.mxu0
  %s2243 = scalar_lea.vmem %s2, 66
  %v2244 = vld [vmem:[%s2243] ss:$8 sm:$0x3]
  %v2246 = vperm.slane %v2244, 0
  %v2247 = vperm.slane %v2244, 1
  %v2250 = vmul.f32 %v2221, %v2246
  %v2251 = vmul.f32 %v2241, %v2247
  %s2252 = scalar_lea.vmem %s3, 544
  %2253 = vst [vmem:[%s2252] sm:$0x3f] %v2250
  %2254 = vst [vmem:[%s2252 + $0x8] sm:$0x3f] %v2251
  %s2255 = scalar_lea.vmem %s0, 280
  %v2256 = vld [vmem:[%s2255] sm:$0x3f]
  %2257 = vst [vmem:[#allocation1] ss:$2 sm:$0xff] %v14
  %v2258 = vld.sshfl [vmem:[#allocation1] sm:$0xff pattern:$0x75316420]
  %v2259 = vld.sshfl [vmem:[#allocation1 + $0x8] sm:$0xff pattern:$0x75316420]
  %v2261 = vsel %vm20, %v2256, 0
  %v2263 = vsel %vm24, %v2258, 0
  %v2265 = vsel %vm24, %v2259, 0
  %2267 = vmatpush.msra.mxu0 0.0
  %2268 = vmatpush.msra.mxu0 0.0
  %2269 = vmatpush.msra.mxu0 0.0
  %2270 = vmatpush.msra.mxu0 0.0
  %2271 = vmatpush.msra.mxu0 0.0
  %2272 = vmatpush.msra.mxu0 0.0
  %2273 = vmatpush.msra.mxu0 0.0
  %2274 = vmatpush.msra.mxu0 0.0
  %2275 = vmatpush.msra.mxu0 0.0
  %2276 = vmatpush.msra.mxu0 0.0
  %2277 = vmatpush.msra.mxu0 0.0
  %2278 = vmatpush.msra.mxu0 0.0
  %2279 = vmatpush.msra.mxu0 0.0
  %2280 = vmatpush.msra.mxu0 0.0
  %2281 = vmatpush.msra.mxu0 0.0
  %2282 = vmatpush.msra.mxu0 %v2263
  %2283 = vmatmul.f32.gmra.mxu0 %v2261
  %v2284 = vpop.f32.mrf.mxu0
  %v2285 = vadd.f32 0.0, %v2284
  %2286 = vdwg.mxu0
  %2287 = vmatpush.msra.mxu0 0.0
  %2288 = vmatpush.msra.mxu0 0.0
  %2289 = vmatpush.msra.mxu0 0.0
  %2290 = vmatpush.msra.mxu0 0.0
  %2291 = vmatpush.msra.mxu0 0.0
  %2292 = vmatpush.msra.mxu0 0.0
  %2293 = vmatpush.msra.mxu0 0.0
  %2294 = vmatpush.msra.mxu0 0.0
  %2295 = vmatpush.msra.mxu0 0.0
  %2296 = vmatpush.msra.mxu0 0.0
  %2297 = vmatpush.msra.mxu0 0.0
  %2298 = vmatpush.msra.mxu0 0.0
  %2299 = vmatpush.msra.mxu0 0.0
  %2300 = vmatpush.msra.mxu0 0.0
  %2301 = vmatpush.msra.mxu0 0.0
  %2302 = vmatpush.msra.mxu0 %v2265
  %2303 = vmatmul.f32.gmra.mxu0 %v2261
  %v2304 = vpop.f32.mrf.mxu0
  %v2305 = vadd.f32 0.0, %v2304
  %2306 = vdwg.mxu0
  %s2307 = scalar_lea.vmem %s2, 67
  %v2308 = vld [vmem:[%s2307] ss:$8 sm:$0x3]
  %v2310 = vperm.slane %v2308, 0
  %v2311 = vperm.slane %v2308, 1
  %v2314 = vmul.f32 %v2285, %v2310
  %v2315 = vmul.f32 %v2305, %v2311
  %s2316 = scalar_lea.vmem %s3, 560
  %2317 = vst [vmem:[%s2316] sm:$0x3f] %v2314
  %2318 = vst [vmem:[%s2316 + $0x8] sm:$0x3f] %v2315
  %s2319 = scalar_lea.vmem %s0, 288
  %v2320 = vld [vmem:[%s2319] sm:$0x3f]
  %2321 = vst [vmem:[#allocation1] ss:$2 sm:$0xff] %v14
  %v2322 = vld.sshfl [vmem:[#allocation1] sm:$0xff pattern:$0x75316420]
  %v2323 = vld.sshfl [vmem:[#allocation1 + $0x8] sm:$0xff pattern:$0x75316420]
  %v2325 = vsel %vm20, %v2320, 0
  %v2327 = vsel %vm24, %v2322, 0
  %v2329 = vsel %vm24, %v2323, 0
  %2331 = vmatpush.msra.mxu0 0.0
  %2332 = vmatpush.msra.mxu0 0.0
  %2333 = vmatpush.msra.mxu0 0.0
  %2334 = vmatpush.msra.mxu0 0.0
  %2335 = vmatpush.msra.mxu0 0.0
  %2336 = vmatpush.msra.mxu0 0.0
  %2337 = vmatpush.msra.mxu0 0.0
  %2338 = vmatpush.msra.mxu0 0.0
  %2339 = vmatpush.msra.mxu0 0.0
  %2340 = vmatpush.msra.mxu0 0.0
  %2341 = vmatpush.msra.mxu0 0.0
  %2342 = vmatpush.msra.mxu0 0.0
  %2343 = vmatpush.msra.mxu0 0.0
  %2344 = vmatpush.msra.mxu0 0.0
  %2345 = vmatpush.msra.mxu0 0.0
  %2346 = vmatpush.msra.mxu0 %v2327
  %2347 = vmatmul.f32.gmra.mxu0 %v2325
  %v2348 = vpop.f32.mrf.mxu0
  %v2349 = vadd.f32 0.0, %v2348
  %2350 = vdwg.mxu0
  %2351 = vmatpush.msra.mxu0 0.0
  %2352 = vmatpush.msra.mxu0 0.0
  %2353 = vmatpush.msra.mxu0 0.0
  %2354 = vmatpush.msra.mxu0 0.0
  %2355 = vmatpush.msra.mxu0 0.0
  %2356 = vmatpush.msra.mxu0 0.0
  %2357 = vmatpush.msra.mxu0 0.0
  %2358 = vmatpush.msra.mxu0 0.0
  %2359 = vmatpush.msra.mxu0 0.0
  %2360 = vmatpush.msra.mxu0 0.0
  %2361 = vmatpush.msra.mxu0 0.0
  %2362 = vmatpush.msra.mxu0 0.0
  %2363 = vmatpush.msra.mxu0 0.0
  %2364 = vmatpush.msra.mxu0 0.0
  %2365 = vmatpush.msra.mxu0 0.0
  %2366 = vmatpush.msra.mxu0 %v2329
  %2367 = vmatmul.f32.gmra.mxu0 %v2325
  %v2368 = vpop.f32.mrf.mxu0
  %v2369 = vadd.f32 0.0, %v2368
  %2370 = vdwg.mxu0
  %s2371 = scalar_lea.vmem %s2, 68
  %v2372 = vld [vmem:[%s2371] ss:$8 sm:$0x3]
  %v2374 = vperm.slane %v2372, 0
  %v2375 = vperm.slane %v2372, 1
  %v2378 = vmul.f32 %v2349, %v2374
  %v2379 = vmul.f32 %v2369, %v2375
  %s2380 = scalar_lea.vmem %s3, 576
  %2381 = vst [vmem:[%s2380] sm:$0x3f] %v2378
  %2382 = vst [vmem:[%s2380 + $0x8] sm:$0x3f] %v2379
  %s2383 = scalar_lea.vmem %s0, 296
  %v2384 = vld [vmem:[%s2383] sm:$0x3f]
  %2385 = vst [vmem:[#allocation1] ss:$2 sm:$0xff] %v14
  %v2386 = vld.sshfl [vmem:[#allocation1] sm:$0xff pattern:$0x75316420]
  %v2387 = vld.sshfl [vmem:[#allocation1 + $0x8] sm:$0xff pattern:$0x75316420]
  %v2389 = vsel %vm20, %v2384, 0
  %v2391 = vsel %vm24, %v2386, 0
  %v2393 = vsel %vm24, %v2387, 0
  %2395 = vmatpush.msra.mxu0 0.0
  %2396 = vmatpush.msra.mxu0 0.0
  %2397 = vmatpush.msra.mxu0 0.0
  %2398 = vmatpush.msra.mxu0 0.0
  %2399 = vmatpush.msra.mxu0 0.0
  %2400 = vmatpush.msra.mxu0 0.0
  %2401 = vmatpush.msra.mxu0 0.0
  %2402 = vmatpush.msra.mxu0 0.0
  %2403 = vmatpush.msra.mxu0 0.0
  %2404 = vmatpush.msra.mxu0 0.0
  %2405 = vmatpush.msra.mxu0 0.0
  %2406 = vmatpush.msra.mxu0 0.0
  %2407 = vmatpush.msra.mxu0 0.0
  %2408 = vmatpush.msra.mxu0 0.0
  %2409 = vmatpush.msra.mxu0 0.0
  %2410 = vmatpush.msra.mxu0 %v2391
  %2411 = vmatmul.f32.gmra.mxu0 %v2389
  %v2412 = vpop.f32.mrf.mxu0
  %v2413 = vadd.f32 0.0, %v2412
  %2414 = vdwg.mxu0
  %2415 = vmatpush.msra.mxu0 0.0
  %2416 = vmatpush.msra.mxu0 0.0
  %2417 = vmatpush.msra.mxu0 0.0
  %2418 = vmatpush.msra.mxu0 0.0
  %2419 = vmatpush.msra.mxu0 0.0
  %2420 = vmatpush.msra.mxu0 0.0
  %2421 = vmatpush.msra.mxu0 0.0
  %2422 = vmatpush.msra.mxu0 0.0
  %2423 = vmatpush.msra.mxu0 0.0
  %2424 = vmatpush.msra.mxu0 0.0
  %2425 = vmatpush.msra.mxu0 0.0
  %2426 = vmatpush.msra.mxu0 0.0
  %2427 = vmatpush.msra.mxu0 0.0
  %2428 = vmatpush.msra.mxu0 0.0
  %2429 = vmatpush.msra.mxu0 0.0
  %2430 = vmatpush.msra.mxu0 %v2393
  %2431 = vmatmul.f32.gmra.mxu0 %v2389
  %v2432 = vpop.f32.mrf.mxu0
  %v2433 = vadd.f32 0.0, %v2432
  %2434 = vdwg.mxu0
  %s2435 = scalar_lea.vmem %s2, 69
  %v2436 = vld [vmem:[%s2435] ss:$8 sm:$0x3]
  %v2438 = vperm.slane %v2436, 0
  %v2439 = vperm.slane %v2436, 1
  %v2442 = vmul.f32 %v2413, %v2438
  %v2443 = vmul.f32 %v2433, %v2439
  %s2444 = scalar_lea.vmem %s3, 592
  %2445 = vst [vmem:[%s2444] sm:$0x3f] %v2442
  %2446 = vst [vmem:[%s2444 + $0x8] sm:$0x3f] %v2443
  %s2447 = scalar_lea.vmem %s0, 304
  %v2448 = vld [vmem:[%s2447] sm:$0x3f]
  %2449 = vst [vmem:[#allocation1] ss:$2 sm:$0xff] %v14
  %v2450 = vld.sshfl [vmem:[#allocation1] sm:$0xff pattern:$0x75316420]
  %v2451 = vld.sshfl [vmem:[#allocation1 + $0x8] sm:$0xff pattern:$0x75316420]
  %v2453 = vsel %vm20, %v2448, 0
  %v2455 = vsel %vm24, %v2450, 0
  %v2457 = vsel %vm24, %v2451, 0
  %2459 = vmatpush.msra.mxu0 0.0
  %2460 = vmatpush.msra.mxu0 0.0
  %2461 = vmatpush.msra.mxu0 0.0
  %2462 = vmatpush.msra.mxu0 0.0
  %2463 = vmatpush.msra.mxu0 0.0
  %2464 = vmatpush.msra.mxu0 0.0
  %2465 = vmatpush.msra.mxu0 0.0
  %2466 = vmatpush.msra.mxu0 0.0
  %2467 = vmatpush.msra.mxu0 0.0
  %2468 = vmatpush.msra.mxu0 0.0
  %2469 = vmatpush.msra.mxu0 0.0
  %2470 = vmatpush.msra.mxu0 0.0
  %2471 = vmatpush.msra.mxu0 0.0
  %2472 = vmatpush.msra.mxu0 0.0
  %2473 = vmatpush.msra.mxu0 0.0
  %2474 = vmatpush.msra.mxu0 %v2455
  %2475 = vmatmul.f32.gmra.mxu0 %v2453
  %v2476 = vpop.f32.mrf.mxu0
  %v2477 = vadd.f32 0.0, %v2476
  %2478 = vdwg.mxu0
  %2479 = vmatpush.msra.mxu0 0.0
  %2480 = vmatpush.msra.mxu0 0.0
  %2481 = vmatpush.msra.mxu0 0.0
  %2482 = vmatpush.msra.mxu0 0.0
  %2483 = vmatpush.msra.mxu0 0.0
  %2484 = vmatpush.msra.mxu0 0.0
  %2485 = vmatpush.msra.mxu0 0.0
  %2486 = vmatpush.msra.mxu0 0.0
  %2487 = vmatpush.msra.mxu0 0.0
  %2488 = vmatpush.msra.mxu0 0.0
  %2489 = vmatpush.msra.mxu0 0.0
  %2490 = vmatpush.msra.mxu0 0.0
  %2491 = vmatpush.msra.mxu0 0.0
  %2492 = vmatpush.msra.mxu0 0.0
  %2493 = vmatpush.msra.mxu0 0.0
  %2494 = vmatpush.msra.mxu0 %v2457
  %2495 = vmatmul.f32.gmra.mxu0 %v2453
  %v2496 = vpop.f32.mrf.mxu0
  %v2497 = vadd.f32 0.0, %v2496
  %2498 = vdwg.mxu0
  %s2499 = scalar_lea.vmem %s2, 70
  %v2500 = vld [vmem:[%s2499] ss:$8 sm:$0x3]
  %v2502 = vperm.slane %v2500, 0
  %v2503 = vperm.slane %v2500, 1
  %v2506 = vmul.f32 %v2477, %v2502
  %v2507 = vmul.f32 %v2497, %v2503
  %s2508 = scalar_lea.vmem %s3, 608
  %2509 = vst [vmem:[%s2508] sm:$0x3f] %v2506
  %2510 = vst [vmem:[%s2508 + $0x8] sm:$0x3f] %v2507
  %s2511 = scalar_lea.vmem %s0, 312
  %v2512 = vld [vmem:[%s2511] sm:$0x3f]
  %2513 = vst [vmem:[#allocation1] ss:$2 sm:$0xff] %v14
  %v2514 = vld.sshfl [vmem:[#allocation1] sm:$0xff pattern:$0x75316420]
  %v2515 = vld.sshfl [vmem:[#allocation1 + $0x8] sm:$0xff pattern:$0x75316420]
  %v2517 = vsel %vm20, %v2512, 0
  %v2519 = vsel %vm24, %v2514, 0
  %v2521 = vsel %vm24, %v2515, 0
  %2523 = vmatpush.msra.mxu0 0.0
  %2524 = vmatpush.msra.mxu0 0.0
  %2525 = vmatpush.msra.mxu0 0.0
  %2526 = vmatpush.msra.mxu0 0.0
  %2527 = vmatpush.msra.mxu0 0.0
  %2528 = vmatpush.msra.mxu0 0.0
  %2529 = vmatpush.msra.mxu0 0.0
  %2530 = vmatpush.msra.mxu0 0.0
  %2531 = vmatpush.msra.mxu0 0.0
  %2532 = vmatpush.msra.mxu0 0.0
  %2533 = vmatpush.msra.mxu0 0.0
  %2534 = vmatpush.msra.mxu0 0.0
  %2535 = vmatpush.msra.mxu0 0.0
  %2536 = vmatpush.msra.mxu0 0.0
  %2537 = vmatpush.msra.mxu0 0.0
  %2538 = vmatpush.msra.mxu0 %v2519
  %2539 = vmatmul.f32.gmra.mxu0 %v2517
  %v2540 = vpop.f32.mrf.mxu0
  %v2541 = vadd.f32 0.0, %v2540
  %2542 = vdwg.mxu0
  %2543 = vmatpush.msra.mxu0 0.0
  %2544 = vmatpush.msra.mxu0 0.0
  %2545 = vmatpush.msra.mxu0 0.0
  %2546 = vmatpush.msra.mxu0 0.0
  %2547 = vmatpush.msra.mxu0 0.0
  %2548 = vmatpush.msra.mxu0 0.0
  %2549 = vmatpush.msra.mxu0 0.0
  %2550 = vmatpush.msra.mxu0 0.0
  %2551 = vmatpush.msra.mxu0 0.0
  %2552 = vmatpush.msra.mxu0 0.0
  %2553 = vmatpush.msra.mxu0 0.0
  %2554 = vmatpush.msra.mxu0 0.0
  %2555 = vmatpush.msra.mxu0 0.0
  %2556 = vmatpush.msra.mxu0 0.0
  %2557 = vmatpush.msra.mxu0 0.0
  %2558 = vmatpush.msra.mxu0 %v2521
  %2559 = vmatmul.f32.gmra.mxu0 %v2517
  %v2560 = vpop.f32.mrf.mxu0
  %v2561 = vadd.f32 0.0, %v2560
  %2562 = vdwg.mxu0
  %s2563 = scalar_lea.vmem %s2, 71
  %v2564 = vld [vmem:[%s2563] ss:$8 sm:$0x3]
  %v2566 = vperm.slane %v2564, 0
  %v2567 = vperm.slane %v2564, 1
  %v2570 = vmul.f32 %v2541, %v2566
  %v2571 = vmul.f32 %v2561, %v2567
  %s2572 = scalar_lea.vmem %s3, 624
  %2573 = vst [vmem:[%s2572] sm:$0x3f] %v2570
  %2574 = vst [vmem:[%s2572 + $0x8] sm:$0x3f] %v2571
  %s2575 = scalar_lea.vmem %s0, 320
  %v2576 = vld [vmem:[%s2575] sm:$0x3f]
  %2577 = vst [vmem:[#allocation1] ss:$2 sm:$0xff] %v14
  %v2578 = vld.sshfl [vmem:[#allocation1] sm:$0xff pattern:$0x75316420]
  %v2579 = vld.sshfl [vmem:[#allocation1 + $0x8] sm:$0xff pattern:$0x75316420]
  %v2581 = vsel %vm20, %v2576, 0
  %v2583 = vsel %vm24, %v2578, 0
  %v2585 = vsel %vm24, %v2579, 0
  %2587 = vmatpush.msra.mxu0 0.0
  %2588 = vmatpush.msra.mxu0 0.0
  %2589 = vmatpush.msra.mxu0 0.0
  %2590 = vmatpush.msra.mxu0 0.0
  %2591 = vmatpush.msra.mxu0 0.0
  %2592 = vmatpush.msra.mxu0 0.0
  %2593 = vmatpush.msra.mxu0 0.0
  %2594 = vmatpush.msra.mxu0 0.0
  %2595 = vmatpush.msra.mxu0 0.0
  %2596 = vmatpush.msra.mxu0 0.0
  %2597 = vmatpush.msra.mxu0 0.0
  %2598 = vmatpush.msra.mxu0 0.0
  %2599 = vmatpush.msra.mxu0 0.0
  %2600 = vmatpush.msra.mxu0 0.0
  %2601 = vmatpush.msra.mxu0 0.0
  %2602 = vmatpush.msra.mxu0 %v2583
  %2603 = vmatmul.f32.gmra.mxu0 %v2581
  %v2604 = vpop.f32.mrf.mxu0
  %v2605 = vadd.f32 0.0, %v2604
  %2606 = vdwg.mxu0
  %2607 = vmatpush.msra.mxu0 0.0
  %2608 = vmatpush.msra.mxu0 0.0
  %2609 = vmatpush.msra.mxu0 0.0
  %2610 = vmatpush.msra.mxu0 0.0
  %2611 = vmatpush.msra.mxu0 0.0
  %2612 = vmatpush.msra.mxu0 0.0
  %2613 = vmatpush.msra.mxu0 0.0
  %2614 = vmatpush.msra.mxu0 0.0
  %2615 = vmatpush.msra.mxu0 0.0
  %2616 = vmatpush.msra.mxu0 0.0
  %2617 = vmatpush.msra.mxu0 0.0
  %2618 = vmatpush.msra.mxu0 0.0
  %2619 = vmatpush.msra.mxu0 0.0
  %2620 = vmatpush.msra.mxu0 0.0
  %2621 = vmatpush.msra.mxu0 0.0
  %2622 = vmatpush.msra.mxu0 %v2585
  %2623 = vmatmul.f32.gmra.mxu0 %v2581
  %v2624 = vpop.f32.mrf.mxu0
  %v2625 = vadd.f32 0.0, %v2624
  %2626 = vdwg.mxu0
  %s2627 = scalar_lea.vmem %s2, 80
  %v2628 = vld [vmem:[%s2627] ss:$8 sm:$0x3]
  %v2630 = vperm.slane %v2628, 0
  %v2631 = vperm.slane %v2628, 1
  %v2634 = vmul.f32 %v2605, %v2630
  %v2635 = vmul.f32 %v2625, %v2631
  %s2636 = scalar_lea.vmem %s3, 640
  %2637 = vst [vmem:[%s2636] sm:$0x3f] %v2634
  %2638 = vst [vmem:[%s2636 + $0x8] sm:$0x3f] %v2635
  %s2639 = scalar_lea.vmem %s0, 328
  %v2640 = vld [vmem:[%s2639] sm:$0x3f]
  %2641 = vst [vmem:[#allocation1] ss:$2 sm:$0xff] %v14
  %v2642 = vld.sshfl [vmem:[#allocation1] sm:$0xff pattern:$0x75316420]
  %v2643 = vld.sshfl [vmem:[#allocation1 + $0x8] sm:$0xff pattern:$0x75316420]
  %v2645 = vsel %vm20, %v2640, 0
  %v2647 = vsel %vm24, %v2642, 0
  %v2649 = vsel %vm24, %v2643, 0
  %2651 = vmatpush.msra.mxu0 0.0
  %2652 = vmatpush.msra.mxu0 0.0
  %2653 = vmatpush.msra.mxu0 0.0
  %2654 = vmatpush.msra.mxu0 0.0
  %2655 = vmatpush.msra.mxu0 0.0
  %2656 = vmatpush.msra.mxu0 0.0
  %2657 = vmatpush.msra.mxu0 0.0
  %2658 = vmatpush.msra.mxu0 0.0
  %2659 = vmatpush.msra.mxu0 0.0
  %2660 = vmatpush.msra.mxu0 0.0
  %2661 = vmatpush.msra.mxu0 0.0
  %2662 = vmatpush.msra.mxu0 0.0
  %2663 = vmatpush.msra.mxu0 0.0
  %2664 = vmatpush.msra.mxu0 0.0
  %2665 = vmatpush.msra.mxu0 0.0
  %2666 = vmatpush.msra.mxu0 %v2647
  %2667 = vmatmul.f32.gmra.mxu0 %v2645
  %v2668 = vpop.f32.mrf.mxu0
  %v2669 = vadd.f32 0.0, %v2668
  %2670 = vdwg.mxu0
  %2671 = vmatpush.msra.mxu0 0.0
  %2672 = vmatpush.msra.mxu0 0.0
  %2673 = vmatpush.msra.mxu0 0.0
  %2674 = vmatpush.msra.mxu0 0.0
  %2675 = vmatpush.msra.mxu0 0.0
  %2676 = vmatpush.msra.mxu0 0.0
  %2677 = vmatpush.msra.mxu0 0.0
  %2678 = vmatpush.msra.mxu0 0.0
  %2679 = vmatpush.msra.mxu0 0.0
  %2680 = vmatpush.msra.mxu0 0.0
  %2681 = vmatpush.msra.mxu0 0.0
  %2682 = vmatpush.msra.mxu0 0.0
  %2683 = vmatpush.msra.mxu0 0.0
  %2684 = vmatpush.msra.mxu0 0.0
  %2685 = vmatpush.msra.mxu0 0.0
  %2686 = vmatpush.msra.mxu0 %v2649
  %2687 = vmatmul.f32.gmra.mxu0 %v2645
  %v2688 = vpop.f32.mrf.mxu0
  %v2689 = vadd.f32 0.0, %v2688
  %2690 = vdwg.mxu0
  %s2691 = scalar_lea.vmem %s2, 81
  %v2692 = vld [vmem:[%s2691] ss:$8 sm:$0x3]
  %v2694 = vperm.slane %v2692, 0
  %v2695 = vperm.slane %v2692, 1
  %v2698 = vmul.f32 %v2669, %v2694
  %v2699 = vmul.f32 %v2689, %v2695
  %s2700 = scalar_lea.vmem %s3, 656
  %2701 = vst [vmem:[%s2700] sm:$0x3f] %v2698
  %2702 = vst [vmem:[%s2700 + $0x8] sm:$0x3f] %v2699
  %s2703 = scalar_lea.vmem %s0, 336
  %v2704 = vld [vmem:[%s2703] sm:$0x3f]
  %2705 = vst [vmem:[#allocation1] ss:$2 sm:$0xff] %v14
  %v2706 = vld.sshfl [vmem:[#allocation1] sm:$0xff pattern:$0x75316420]
  %v2707 = vld.sshfl [vmem:[#allocation1 + $0x8] sm:$0xff pattern:$0x75316420]
  %v2709 = vsel %vm20, %v2704, 0
  %v2711 = vsel %vm24, %v2706, 0
  %v2713 = vsel %vm24, %v2707, 0
  %2715 = vmatpush.msra.mxu0 0.0
  %2716 = vmatpush.msra.mxu0 0.0
  %2717 = vmatpush.msra.mxu0 0.0
  %2718 = vmatpush.msra.mxu0 0.0
  %2719 = vmatpush.msra.mxu0 0.0
  %2720 = vmatpush.msra.mxu0 0.0
  %2721 = vmatpush.msra.mxu0 0.0
  %2722 = vmatpush.msra.mxu0 0.0
  %2723 = vmatpush.msra.mxu0 0.0
  %2724 = vmatpush.msra.mxu0 0.0
  %2725 = vmatpush.msra.mxu0 0.0
  %2726 = vmatpush.msra.mxu0 0.0
  %2727 = vmatpush.msra.mxu0 0.0
  %2728 = vmatpush.msra.mxu0 0.0
  %2729 = vmatpush.msra.mxu0 0.0
  %2730 = vmatpush.msra.mxu0 %v2711
  %2731 = vmatmul.f32.gmra.mxu0 %v2709
  %v2732 = vpop.f32.mrf.mxu0
  %v2733 = vadd.f32 0.0, %v2732
  %2734 = vdwg.mxu0
  %2735 = vmatpush.msra.mxu0 0.0
  %2736 = vmatpush.msra.mxu0 0.0
  %2737 = vmatpush.msra.mxu0 0.0
  %2738 = vmatpush.msra.mxu0 0.0
  %2739 = vmatpush.msra.mxu0 0.0
  %2740 = vmatpush.msra.mxu0 0.0
  %2741 = vmatpush.msra.mxu0 0.0
  %2742 = vmatpush.msra.mxu0 0.0
  %2743 = vmatpush.msra.mxu0 0.0
  %2744 = vmatpush.msra.mxu0 0.0
  %2745 = vmatpush.msra.mxu0 0.0
  %2746 = vmatpush.msra.mxu0 0.0
  %2747 = vmatpush.msra.mxu0 0.0
  %2748 = vmatpush.msra.mxu0 0.0
  %2749 = vmatpush.msra.mxu0 0.0
  %2750 = vmatpush.msra.mxu0 %v2713
  %2751 = vmatmul.f32.gmra.mxu0 %v2709
  %v2752 = vpop.f32.mrf.mxu0
  %v2753 = vadd.f32 0.0, %v2752
  %2754 = vdwg.mxu0
  %s2755 = scalar_lea.vmem %s2, 82
  %v2756 = vld [vmem:[%s2755] ss:$8 sm:$0x3]
  %v2758 = vperm.slane %v2756, 0
  %v2759 = vperm.slane %v2756, 1
  %v2762 = vmul.f32 %v2733, %v2758
  %v2763 = vmul.f32 %v2753, %v2759
  %s2764 = scalar_lea.vmem %s3, 672
  %2765 = vst [vmem:[%s2764] sm:$0x3f] %v2762
  %2766 = vst [vmem:[%s2764 + $0x8] sm:$0x3f] %v2763
  %s2767 = scalar_lea.vmem %s0, 344
  %v2768 = vld [vmem:[%s2767] sm:$0x3f]
  %2769 = vst [vmem:[#allocation1] ss:$2 sm:$0xff] %v14
  %v2770 = vld.sshfl [vmem:[#allocation1] sm:$0xff pattern:$0x75316420]
  %v2771 = vld.sshfl [vmem:[#allocation1 + $0x8] sm:$0xff pattern:$0x75316420]
  %v2773 = vsel %vm20, %v2768, 0
  %v2775 = vsel %vm24, %v2770, 0
  %v2777 = vsel %vm24, %v2771, 0
  %2779 = vmatpush.msra.mxu0 0.0
  %2780 = vmatpush.msra.mxu0 0.0
  %2781 = vmatpush.msra.mxu0 0.0
  %2782 = vmatpush.msra.mxu0 0.0
  %2783 = vmatpush.msra.mxu0 0.0
  %2784 = vmatpush.msra.mxu0 0.0
  %2785 = vmatpush.msra.mxu0 0.0
  %2786 = vmatpush.msra.mxu0 0.0
  %2787 = vmatpush.msra.mxu0 0.0
  %2788 = vmatpush.msra.mxu0 0.0
  %2789 = vmatpush.msra.mxu0 0.0
  %2790 = vmatpush.msra.mxu0 0.0
  %2791 = vmatpush.msra.mxu0 0.0
  %2792 = vmatpush.msra.mxu0 0.0
  %2793 = vmatpush.msra.mxu0 0.0
  %2794 = vmatpush.msra.mxu0 %v2775
  %2795 = vmatmul.f32.gmra.mxu0 %v2773
  %v2796 = vpop.f32.mrf.mxu0
  %v2797 = vadd.f32 0.0, %v2796
  %2798 = vdwg.mxu0
  %2799 = vmatpush.msra.mxu0 0.0
  %2800 = vmatpush.msra.mxu0 0.0
  %2801 = vmatpush.msra.mxu0 0.0
  %2802 = vmatpush.msra.mxu0 0.0
  %2803 = vmatpush.msra.mxu0 0.0
  %2804 = vmatpush.msra.mxu0 0.0
  %2805 = vmatpush.msra.mxu0 0.0
  %2806 = vmatpush.msra.mxu0 0.0
  %2807 = vmatpush.msra.mxu0 0.0
  %2808 = vmatpush.msra.mxu0 0.0
  %2809 = vmatpush.msra.mxu0 0.0
  %2810 = vmatpush.msra.mxu0 0.0
  %2811 = vmatpush.msra.mxu0 0.0
  %2812 = vmatpush.msra.mxu0 0.0
  %2813 = vmatpush.msra.mxu0 0.0
  %2814 = vmatpush.msra.mxu0 %v2777
  %2815 = vmatmul.f32.gmra.mxu0 %v2773
  %v2816 = vpop.f32.mrf.mxu0
  %v2817 = vadd.f32 0.0, %v2816
  %2818 = vdwg.mxu0
  %s2819 = scalar_lea.vmem %s2, 83
  %v2820 = vld [vmem:[%s2819] ss:$8 sm:$0x3]
  %v2822 = vperm.slane %v2820, 0
  %v2823 = vperm.slane %v2820, 1
  %v2826 = vmul.f32 %v2797, %v2822
  %v2827 = vmul.f32 %v2817, %v2823
  %s2828 = scalar_lea.vmem %s3, 688
  %2829 = vst [vmem:[%s2828] sm:$0x3f] %v2826
  %2830 = vst [vmem:[%s2828 + $0x8] sm:$0x3f] %v2827
  %s2831 = scalar_lea.vmem %s0, 352
  %v2832 = vld [vmem:[%s2831] sm:$0x3f]
  %2833 = vst [vmem:[#allocation1] ss:$2 sm:$0xff] %v14
  %v2834 = vld.sshfl [vmem:[#allocation1] sm:$0xff pattern:$0x75316420]
  %v2835 = vld.sshfl [vmem:[#allocation1 + $0x8] sm:$0xff pattern:$0x75316420]
  %v2837 = vsel %vm20, %v2832, 0
  %v2839 = vsel %vm24, %v2834, 0
  %v2841 = vsel %vm24, %v2835, 0
  %2843 = vmatpush.msra.mxu0 0.0
  %2844 = vmatpush.msra.mxu0 0.0
  %2845 = vmatpush.msra.mxu0 0.0
  %2846 = vmatpush.msra.mxu0 0.0
  %2847 = vmatpush.msra.mxu0 0.0
  %2848 = vmatpush.msra.mxu0 0.0
  %2849 = vmatpush.msra.mxu0 0.0
  %2850 = vmatpush.msra.mxu0 0.0
  %2851 = vmatpush.msra.mxu0 0.0
  %2852 = vmatpush.msra.mxu0 0.0
  %2853 = vmatpush.msra.mxu0 0.0
  %2854 = vmatpush.msra.mxu0 0.0
  %2855 = vmatpush.msra.mxu0 0.0
  %2856 = vmatpush.msra.mxu0 0.0
  %2857 = vmatpush.msra.mxu0 0.0
  %2858 = vmatpush.msra.mxu0 %v2839
  %2859 = vmatmul.f32.gmra.mxu0 %v2837
  %v2860 = vpop.f32.mrf.mxu0
  %v2861 = vadd.f32 0.0, %v2860
  %2862 = vdwg.mxu0
  %2863 = vmatpush.msra.mxu0 0.0
  %2864 = vmatpush.msra.mxu0 0.0
  %2865 = vmatpush.msra.mxu0 0.0
  %2866 = vmatpush.msra.mxu0 0.0
  %2867 = vmatpush.msra.mxu0 0.0
  %2868 = vmatpush.msra.mxu0 0.0
  %2869 = vmatpush.msra.mxu0 0.0
  %2870 = vmatpush.msra.mxu0 0.0
  %2871 = vmatpush.msra.mxu0 0.0
  %2872 = vmatpush.msra.mxu0 0.0
  %2873 = vmatpush.msra.mxu0 0.0
  %2874 = vmatpush.msra.mxu0 0.0
  %2875 = vmatpush.msra.mxu0 0.0
  %2876 = vmatpush.msra.mxu0 0.0
  %2877 = vmatpush.msra.mxu0 0.0
  %2878 = vmatpush.msra.mxu0 %v2841
  %2879 = vmatmul.f32.gmra.mxu0 %v2837
  %v2880 = vpop.f32.mrf.mxu0
  %v2881 = vadd.f32 0.0, %v2880
  %2882 = vdwg.mxu0
  %s2883 = scalar_lea.vmem %s2, 84
  %v2884 = vld [vmem:[%s2883] ss:$8 sm:$0x3]
  %v2886 = vperm.slane %v2884, 0
  %v2887 = vperm.slane %v2884, 1
  %v2890 = vmul.f32 %v2861, %v2886
  %v2891 = vmul.f32 %v2881, %v2887
  %s2892 = scalar_lea.vmem %s3, 704
  %2893 = vst [vmem:[%s2892] sm:$0x3f] %v2890
  %2894 = vst [vmem:[%s2892 + $0x8] sm:$0x3f] %v2891
  %s2895 = scalar_lea.vmem %s0, 360
  %v2896 = vld [vmem:[%s2895] sm:$0x3f]
  %2897 = vst [vmem:[#allocation1] ss:$2 sm:$0xff] %v14
  %v2898 = vld.sshfl [vmem:[#allocation1] sm:$0xff pattern:$0x75316420]
  %v2899 = vld.sshfl [vmem:[#allocation1 + $0x8] sm:$0xff pattern:$0x75316420]
  %v2901 = vsel %vm20, %v2896, 0
  %v2903 = vsel %vm24, %v2898, 0
  %v2905 = vsel %vm24, %v2899, 0
  %2907 = vmatpush.msra.mxu0 0.0
  %2908 = vmatpush.msra.mxu0 0.0
  %2909 = vmatpush.msra.mxu0 0.0
  %2910 = vmatpush.msra.mxu0 0.0
  %2911 = vmatpush.msra.mxu0 0.0
  %2912 = vmatpush.msra.mxu0 0.0
  %2913 = vmatpush.msra.mxu0 0.0
  %2914 = vmatpush.msra.mxu0 0.0
  %2915 = vmatpush.msra.mxu0 0.0
  %2916 = vmatpush.msra.mxu0 0.0
  %2917 = vmatpush.msra.mxu0 0.0
  %2918 = vmatpush.msra.mxu0 0.0
  %2919 = vmatpush.msra.mxu0 0.0
  %2920 = vmatpush.msra.mxu0 0.0
  %2921 = vmatpush.msra.mxu0 0.0
  %2922 = vmatpush.msra.mxu0 %v2903
  %2923 = vmatmul.f32.gmra.mxu0 %v2901
  %v2924 = vpop.f32.mrf.mxu0
  %v2925 = vadd.f32 0.0, %v2924
  %2926 = vdwg.mxu0
  %2927 = vmatpush.msra.mxu0 0.0
  %2928 = vmatpush.msra.mxu0 0.0
  %2929 = vmatpush.msra.mxu0 0.0
  %2930 = vmatpush.msra.mxu0 0.0
  %2931 = vmatpush.msra.mxu0 0.0
  %2932 = vmatpush.msra.mxu0 0.0
  %2933 = vmatpush.msra.mxu0 0.0
  %2934 = vmatpush.msra.mxu0 0.0
  %2935 = vmatpush.msra.mxu0 0.0
  %2936 = vmatpush.msra.mxu0 0.0
  %2937 = vmatpush.msra.mxu0 0.0
  %2938 = vmatpush.msra.mxu0 0.0
  %2939 = vmatpush.msra.mxu0 0.0
  %2940 = vmatpush.msra.mxu0 0.0
  %2941 = vmatpush.msra.mxu0 0.0
  %2942 = vmatpush.msra.mxu0 %v2905
  %2943 = vmatmul.f32.gmra.mxu0 %v2901
  %v2944 = vpop.f32.mrf.mxu0
  %v2945 = vadd.f32 0.0, %v2944
  %2946 = vdwg.mxu0
  %s2947 = scalar_lea.vmem %s2, 85
  %v2948 = vld [vmem:[%s2947] ss:$8 sm:$0x3]
  %v2950 = vperm.slane %v2948, 0
  %v2951 = vperm.slane %v2948, 1
  %v2954 = vmul.f32 %v2925, %v2950
  %v2955 = vmul.f32 %v2945, %v2951
  %s2956 = scalar_lea.vmem %s3, 720
  %2957 = vst [vmem:[%s2956] sm:$0x3f] %v2954
  %2958 = vst [vmem:[%s2956 + $0x8] sm:$0x3f] %v2955
  %s2959 = scalar_lea.vmem %s0, 368
  %v2960 = vld [vmem:[%s2959] sm:$0x3f]
  %2961 = vst [vmem:[#allocation1] ss:$2 sm:$0xff] %v14
  %v2962 = vld.sshfl [vmem:[#allocation1] sm:$0xff pattern:$0x75316420]
  %v2963 = vld.sshfl [vmem:[#allocation1 + $0x8] sm:$0xff pattern:$0x75316420]
  %v2965 = vsel %vm20, %v2960, 0
  %v2967 = vsel %vm24, %v2962, 0
  %v2969 = vsel %vm24, %v2963, 0
  %2971 = vmatpush.msra.mxu0 0.0
  %2972 = vmatpush.msra.mxu0 0.0
  %2973 = vmatpush.msra.mxu0 0.0
  %2974 = vmatpush.msra.mxu0 0.0
  %2975 = vmatpush.msra.mxu0 0.0
  %2976 = vmatpush.msra.mxu0 0.0
  %2977 = vmatpush.msra.mxu0 0.0
  %2978 = vmatpush.msra.mxu0 0.0
  %2979 = vmatpush.msra.mxu0 0.0
  %2980 = vmatpush.msra.mxu0 0.0
  %2981 = vmatpush.msra.mxu0 0.0
  %2982 = vmatpush.msra.mxu0 0.0
  %2983 = vmatpush.msra.mxu0 0.0
  %2984 = vmatpush.msra.mxu0 0.0
  %2985 = vmatpush.msra.mxu0 0.0
  %2986 = vmatpush.msra.mxu0 %v2967
  %2987 = vmatmul.f32.gmra.mxu0 %v2965
  %v2988 = vpop.f32.mrf.mxu0
  %v2989 = vadd.f32 0.0, %v2988
  %2990 = vdwg.mxu0
  %2991 = vmatpush.msra.mxu0 0.0
  %2992 = vmatpush.msra.mxu0 0.0
  %2993 = vmatpush.msra.mxu0 0.0
  %2994 = vmatpush.msra.mxu0 0.0
  %2995 = vmatpush.msra.mxu0 0.0
  %2996 = vmatpush.msra.mxu0 0.0
  %2997 = vmatpush.msra.mxu0 0.0
  %2998 = vmatpush.msra.mxu0 0.0
  %2999 = vmatpush.msra.mxu0 0.0
  %3000 = vmatpush.msra.mxu0 0.0
  %3001 = vmatpush.msra.mxu0 0.0
  %3002 = vmatpush.msra.mxu0 0.0
  %3003 = vmatpush.msra.mxu0 0.0
  %3004 = vmatpush.msra.mxu0 0.0
  %3005 = vmatpush.msra.mxu0 0.0
  %3006 = vmatpush.msra.mxu0 %v2969
  %3007 = vmatmul.f32.gmra.mxu0 %v2965
  %v3008 = vpop.f32.mrf.mxu0
  %v3009 = vadd.f32 0.0, %v3008
  %3010 = vdwg.mxu0
  %s3011 = scalar_lea.vmem %s2, 86
  %v3012 = vld [vmem:[%s3011] ss:$8 sm:$0x3]
  %v3014 = vperm.slane %v3012, 0
  %v3015 = vperm.slane %v3012, 1
  %v3018 = vmul.f32 %v2989, %v3014
  %v3019 = vmul.f32 %v3009, %v3015
  %s3020 = scalar_lea.vmem %s3, 736
  %3021 = vst [vmem:[%s3020] sm:$0x3f] %v3018
  %3022 = vst [vmem:[%s3020 + $0x8] sm:$0x3f] %v3019
  %s3023 = scalar_lea.vmem %s0, 376
  %v3024 = vld [vmem:[%s3023] sm:$0x3f]
  %3025 = vst [vmem:[#allocation1] ss:$2 sm:$0xff] %v14
  %v3026 = vld.sshfl [vmem:[#allocation1] sm:$0xff pattern:$0x75316420]
  %v3027 = vld.sshfl [vmem:[#allocation1 + $0x8] sm:$0xff pattern:$0x75316420]
  %v3029 = vsel %vm20, %v3024, 0
  %v3031 = vsel %vm24, %v3026, 0
  %v3033 = vsel %vm24, %v3027, 0
  %3035 = vmatpush.msra.mxu0 0.0
  %3036 = vmatpush.msra.mxu0 0.0
  %3037 = vmatpush.msra.mxu0 0.0
  %3038 = vmatpush.msra.mxu0 0.0
  %3039 = vmatpush.msra.mxu0 0.0
  %3040 = vmatpush.msra.mxu0 0.0
  %3041 = vmatpush.msra.mxu0 0.0
  %3042 = vmatpush.msra.mxu0 0.0
  %3043 = vmatpush.msra.mxu0 0.0
  %3044 = vmatpush.msra.mxu0 0.0
  %3045 = vmatpush.msra.mxu0 0.0
  %3046 = vmatpush.msra.mxu0 0.0
  %3047 = vmatpush.msra.mxu0 0.0
  %3048 = vmatpush.msra.mxu0 0.0
  %3049 = vmatpush.msra.mxu0 0.0
  %3050 = vmatpush.msra.mxu0 %v3031
  %3051 = vmatmul.f32.gmra.mxu0 %v3029
  %v3052 = vpop.f32.mrf.mxu0
  %v3053 = vadd.f32 0.0, %v3052
  %3054 = vdwg.mxu0
  %3055 = vmatpush.msra.mxu0 0.0
  %3056 = vmatpush.msra.mxu0 0.0
  %3057 = vmatpush.msra.mxu0 0.0
  %3058 = vmatpush.msra.mxu0 0.0
  %3059 = vmatpush.msra.mxu0 0.0
  %3060 = vmatpush.msra.mxu0 0.0
  %3061 = vmatpush.msra.mxu0 0.0
  %3062 = vmatpush.msra.mxu0 0.0
  %3063 = vmatpush.msra.mxu0 0.0
  %3064 = vmatpush.msra.mxu0 0.0
  %3065 = vmatpush.msra.mxu0 0.0
  %3066 = vmatpush.msra.mxu0 0.0
  %3067 = vmatpush.msra.mxu0 0.0
  %3068 = vmatpush.msra.mxu0 0.0
  %3069 = vmatpush.msra.mxu0 0.0
  %3070 = vmatpush.msra.mxu0 %v3033
  %3071 = vmatmul.f32.gmra.mxu0 %v3029
  %v3072 = vpop.f32.mrf.mxu0
  %v3073 = vadd.f32 0.0, %v3072
  %3074 = vdwg.mxu0
  %s3075 = scalar_lea.vmem %s2, 87
  %v3076 = vld [vmem:[%s3075] ss:$8 sm:$0x3]
  %v3078 = vperm.slane %v3076, 0
  %v3079 = vperm.slane %v3076, 1
  %v3082 = vmul.f32 %v3053, %v3078
  %v3083 = vmul.f32 %v3073, %v3079
  %s3084 = scalar_lea.vmem %s3, 752
  %3085 = vst [vmem:[%s3084] sm:$0x3f] %v3082
  %3086 = vst [vmem:[%s3084 + $0x8] sm:$0x3f] %v3083
  %s3087 = scalar_lea.vmem %s0, 384
  %v3088 = vld [vmem:[%s3087] sm:$0x3f]
  %3089 = vst [vmem:[#allocation1] ss:$2 sm:$0xff] %v14
  %v3090 = vld.sshfl [vmem:[#allocation1] sm:$0xff pattern:$0x75316420]
  %v3091 = vld.sshfl [vmem:[#allocation1 + $0x8] sm:$0xff pattern:$0x75316420]
  %v3093 = vsel %vm20, %v3088, 0
  %v3095 = vsel %vm24, %v3090, 0
  %v3097 = vsel %vm24, %v3091, 0
  %3099 = vmatpush.msra.mxu0 0.0
  %3100 = vmatpush.msra.mxu0 0.0
  %3101 = vmatpush.msra.mxu0 0.0
  %3102 = vmatpush.msra.mxu0 0.0
  %3103 = vmatpush.msra.mxu0 0.0
  %3104 = vmatpush.msra.mxu0 0.0
  %3105 = vmatpush.msra.mxu0 0.0
  %3106 = vmatpush.msra.mxu0 0.0
  %3107 = vmatpush.msra.mxu0 0.0
  %3108 = vmatpush.msra.mxu0 0.0
  %3109 = vmatpush.msra.mxu0 0.0
  %3110 = vmatpush.msra.mxu0 0.0
  %3111 = vmatpush.msra.mxu0 0.0
  %3112 = vmatpush.msra.mxu0 0.0
  %3113 = vmatpush.msra.mxu0 0.0
  %3114 = vmatpush.msra.mxu0 %v3095
  %3115 = vmatmul.f32.gmra.mxu0 %v3093
  %v3116 = vpop.f32.mrf.mxu0
  %v3117 = vadd.f32 0.0, %v3116
  %3118 = vdwg.mxu0
  %3119 = vmatpush.msra.mxu0 0.0
  %3120 = vmatpush.msra.mxu0 0.0
  %3121 = vmatpush.msra.mxu0 0.0
  %3122 = vmatpush.msra.mxu0 0.0
  %3123 = vmatpush.msra.mxu0 0.0
  %3124 = vmatpush.msra.mxu0 0.0
  %3125 = vmatpush.msra.mxu0 0.0
  %3126 = vmatpush.msra.mxu0 0.0
  %3127 = vmatpush.msra.mxu0 0.0
  %3128 = vmatpush.msra.mxu0 0.0
  %3129 = vmatpush.msra.mxu0 0.0
  %3130 = vmatpush.msra.mxu0 0.0
  %3131 = vmatpush.msra.mxu0 0.0
  %3132 = vmatpush.msra.mxu0 0.0
  %3133 = vmatpush.msra.mxu0 0.0
  %3134 = vmatpush.msra.mxu0 %v3097
  %3135 = vmatmul.f32.gmra.mxu0 %v3093
  %v3136 = vpop.f32.mrf.mxu0
  %v3137 = vadd.f32 0.0, %v3136
  %3138 = vdwg.mxu0
  %s3139 = scalar_lea.vmem %s2, 96
  %v3140 = vld [vmem:[%s3139] ss:$8 sm:$0x3]
  %v3142 = vperm.slane %v3140, 0
  %v3143 = vperm.slane %v3140, 1
  %v3146 = vmul.f32 %v3117, %v3142
  %v3147 = vmul.f32 %v3137, %v3143
  %s3148 = scalar_lea.vmem %s3, 768
  %3149 = vst [vmem:[%s3148] sm:$0x3f] %v3146
  %3150 = vst [vmem:[%s3148 + $0x8] sm:$0x3f] %v3147
  %s3151 = scalar_lea.vmem %s0, 392
  %v3152 = vld [vmem:[%s3151] sm:$0x3f]
  %3153 = vst [vmem:[#allocation1] ss:$2 sm:$0xff] %v14
  %v3154 = vld.sshfl [vmem:[#allocation1] sm:$0xff pattern:$0x75316420]
  %v3155 = vld.sshfl [vmem:[#allocation1 + $0x8] sm:$0xff pattern:$0x75316420]
  %v3157 = vsel %vm20, %v3152, 0
  %v3159 = vsel %vm24, %v3154, 0
  %v3161 = vsel %vm24, %v3155, 0
  %3163 = vmatpush.msra.mxu0 0.0
  %3164 = vmatpush.msra.mxu0 0.0
  %3165 = vmatpush.msra.mxu0 0.0
  %3166 = vmatpush.msra.mxu0 0.0
  %3167 = vmatpush.msra.mxu0 0.0
  %3168 = vmatpush.msra.mxu0 0.0
  %3169 = vmatpush.msra.mxu0 0.0
  %3170 = vmatpush.msra.mxu0 0.0
  %3171 = vmatpush.msra.mxu0 0.0
  %3172 = vmatpush.msra.mxu0 0.0
  %3173 = vmatpush.msra.mxu0 0.0
  %3174 = vmatpush.msra.mxu0 0.0
  %3175 = vmatpush.msra.mxu0 0.0
  %3176 = vmatpush.msra.mxu0 0.0
  %3177 = vmatpush.msra.mxu0 0.0
  %3178 = vmatpush.msra.mxu0 %v3159
  %3179 = vmatmul.f32.gmra.mxu0 %v3157
  %v3180 = vpop.f32.mrf.mxu0
  %v3181 = vadd.f32 0.0, %v3180
  %3182 = vdwg.mxu0
  %3183 = vmatpush.msra.mxu0 0.0
  %3184 = vmatpush.msra.mxu0 0.0
  %3185 = vmatpush.msra.mxu0 0.0
  %3186 = vmatpush.msra.mxu0 0.0
  %3187 = vmatpush.msra.mxu0 0.0
  %3188 = vmatpush.msra.mxu0 0.0
  %3189 = vmatpush.msra.mxu0 0.0
  %3190 = vmatpush.msra.mxu0 0.0
  %3191 = vmatpush.msra.mxu0 0.0
  %3192 = vmatpush.msra.mxu0 0.0
  %3193 = vmatpush.msra.mxu0 0.0
  %3194 = vmatpush.msra.mxu0 0.0
  %3195 = vmatpush.msra.mxu0 0.0
  %3196 = vmatpush.msra.mxu0 0.0
  %3197 = vmatpush.msra.mxu0 0.0
  %3198 = vmatpush.msra.mxu0 %v3161
  %3199 = vmatmul.f32.gmra.mxu0 %v3157
  %v3200 = vpop.f32.mrf.mxu0
  %v3201 = vadd.f32 0.0, %v3200
  %3202 = vdwg.mxu0
  %s3203 = scalar_lea.vmem %s2, 97
  %v3204 = vld [vmem:[%s3203] ss:$8 sm:$0x3]
  %v3206 = vperm.slane %v3204, 0
  %v3207 = vperm.slane %v3204, 1
  %v3210 = vmul.f32 %v3181, %v3206
  %v3211 = vmul.f32 %v3201, %v3207
  %s3212 = scalar_lea.vmem %s3, 784
  %3213 = vst [vmem:[%s3212] sm:$0x3f] %v3210
  %3214 = vst [vmem:[%s3212 + $0x8] sm:$0x3f] %v3211
  %s3215 = scalar_lea.vmem %s0, 400
  %v3216 = vld [vmem:[%s3215] sm:$0x3f]
  %3217 = vst [vmem:[#allocation1] ss:$2 sm:$0xff] %v14
  %v3218 = vld.sshfl [vmem:[#allocation1] sm:$0xff pattern:$0x75316420]
  %v3219 = vld.sshfl [vmem:[#allocation1 + $0x8] sm:$0xff pattern:$0x75316420]
  %v3221 = vsel %vm20, %v3216, 0
  %v3223 = vsel %vm24, %v3218, 0
  %v3225 = vsel %vm24, %v3219, 0
  %3227 = vmatpush.msra.mxu0 0.0
  %3228 = vmatpush.msra.mxu0 0.0
  %3229 = vmatpush.msra.mxu0 0.0
  %3230 = vmatpush.msra.mxu0 0.0
  %3231 = vmatpush.msra.mxu0 0.0
  %3232 = vmatpush.msra.mxu0 0.0
  %3233 = vmatpush.msra.mxu0 0.0
  %3234 = vmatpush.msra.mxu0 0.0
  %3235 = vmatpush.msra.mxu0 0.0
  %3236 = vmatpush.msra.mxu0 0.0
  %3237 = vmatpush.msra.mxu0 0.0
  %3238 = vmatpush.msra.mxu0 0.0
  %3239 = vmatpush.msra.mxu0 0.0
  %3240 = vmatpush.msra.mxu0 0.0
  %3241 = vmatpush.msra.mxu0 0.0
  %3242 = vmatpush.msra.mxu0 %v3223
  %3243 = vmatmul.f32.gmra.mxu0 %v3221
  %v3244 = vpop.f32.mrf.mxu0
  %v3245 = vadd.f32 0.0, %v3244
  %3246 = vdwg.mxu0
  %3247 = vmatpush.msra.mxu0 0.0
  %3248 = vmatpush.msra.mxu0 0.0
  %3249 = vmatpush.msra.mxu0 0.0
  %3250 = vmatpush.msra.mxu0 0.0
  %3251 = vmatpush.msra.mxu0 0.0
  %3252 = vmatpush.msra.mxu0 0.0
  %3253 = vmatpush.msra.mxu0 0.0
  %3254 = vmatpush.msra.mxu0 0.0
  %3255 = vmatpush.msra.mxu0 0.0
  %3256 = vmatpush.msra.mxu0 0.0
  %3257 = vmatpush.msra.mxu0 0.0
  %3258 = vmatpush.msra.mxu0 0.0
  %3259 = vmatpush.msra.mxu0 0.0
  %3260 = vmatpush.msra.mxu0 0.0
  %3261 = vmatpush.msra.mxu0 0.0
  %3262 = vmatpush.msra.mxu0 %v3225
  %3263 = vmatmul.f32.gmra.mxu0 %v3221
  %v3264 = vpop.f32.mrf.mxu0
  %v3265 = vadd.f32 0.0, %v3264
  %3266 = vdwg.mxu0
  %s3267 = scalar_lea.vmem %s2, 98
  %v3268 = vld [vmem:[%s3267] ss:$8 sm:$0x3]
  %v3270 = vperm.slane %v3268, 0
  %v3271 = vperm.slane %v3268, 1
  %v3274 = vmul.f32 %v3245, %v3270
  %v3275 = vmul.f32 %v3265, %v3271
  %s3276 = scalar_lea.vmem %s3, 800
  %3277 = vst [vmem:[%s3276] sm:$0x3f] %v3274
  %3278 = vst [vmem:[%s3276 + $0x8] sm:$0x3f] %v3275
  %s3279 = scalar_lea.vmem %s0, 408
  %v3280 = vld [vmem:[%s3279] sm:$0x3f]
  %3281 = vst [vmem:[#allocation1] ss:$2 sm:$0xff] %v14
  %v3282 = vld.sshfl [vmem:[#allocation1] sm:$0xff pattern:$0x75316420]
  %v3283 = vld.sshfl [vmem:[#allocation1 + $0x8] sm:$0xff pattern:$0x75316420]
  %v3285 = vsel %vm20, %v3280, 0
  %v3287 = vsel %vm24, %v3282, 0
  %v3289 = vsel %vm24, %v3283, 0
  %3291 = vmatpush.msra.mxu0 0.0
  %3292 = vmatpush.msra.mxu0 0.0
  %3293 = vmatpush.msra.mxu0 0.0
  %3294 = vmatpush.msra.mxu0 0.0
  %3295 = vmatpush.msra.mxu0 0.0
  %3296 = vmatpush.msra.mxu0 0.0
  %3297 = vmatpush.msra.mxu0 0.0
  %3298 = vmatpush.msra.mxu0 0.0
  %3299 = vmatpush.msra.mxu0 0.0
  %3300 = vmatpush.msra.mxu0 0.0
  %3301 = vmatpush.msra.mxu0 0.0
  %3302 = vmatpush.msra.mxu0 0.0
  %3303 = vmatpush.msra.mxu0 0.0
  %3304 = vmatpush.msra.mxu0 0.0
  %3305 = vmatpush.msra.mxu0 0.0
  %3306 = vmatpush.msra.mxu0 %v3287
  %3307 = vmatmul.f32.gmra.mxu0 %v3285
  %v3308 = vpop.f32.mrf.mxu0
  %v3309 = vadd.f32 0.0, %v3308
  %3310 = vdwg.mxu0
  %3311 = vmatpush.msra.mxu0 0.0
  %3312 = vmatpush.msra.mxu0 0.0
  %3313 = vmatpush.msra.mxu0 0.0
  %3314 = vmatpush.msra.mxu0 0.0
  %3315 = vmatpush.msra.mxu0 0.0
  %3316 = vmatpush.msra.mxu0 0.0
  %3317 = vmatpush.msra.mxu0 0.0
  %3318 = vmatpush.msra.mxu0 0.0
  %3319 = vmatpush.msra.mxu0 0.0
  %3320 = vmatpush.msra.mxu0 0.0
  %3321 = vmatpush.msra.mxu0 0.0
  %3322 = vmatpush.msra.mxu0 0.0
  %3323 = vmatpush.msra.mxu0 0.0
  %3324 = vmatpush.msra.mxu0 0.0
  %3325 = vmatpush.msra.mxu0 0.0
  %3326 = vmatpush.msra.mxu0 %v3289
  %3327 = vmatmul.f32.gmra.mxu0 %v3285
  %v3328 = vpop.f32.mrf.mxu0
  %v3329 = vadd.f32 0.0, %v3328
  %3330 = vdwg.mxu0
  %s3331 = scalar_lea.vmem %s2, 99
  %v3332 = vld [vmem:[%s3331] ss:$8 sm:$0x3]
  %v3334 = vperm.slane %v3332, 0
  %v3335 = vperm.slane %v3332, 1
  %v3338 = vmul.f32 %v3309, %v3334
  %v3339 = vmul.f32 %v3329, %v3335
  %s3340 = scalar_lea.vmem %s3, 816
  %3341 = vst [vmem:[%s3340] sm:$0x3f] %v3338
  %3342 = vst [vmem:[%s3340 + $0x8] sm:$0x3f] %v3339
  %s3343 = scalar_lea.vmem %s0, 416
  %v3344 = vld [vmem:[%s3343] sm:$0x3f]
  %3345 = vst [vmem:[#allocation1] ss:$2 sm:$0xff] %v14
  %v3346 = vld.sshfl [vmem:[#allocation1] sm:$0xff pattern:$0x75316420]
  %v3347 = vld.sshfl [vmem:[#allocation1 + $0x8] sm:$0xff pattern:$0x75316420]
  %v3349 = vsel %vm20, %v3344, 0
  %v3351 = vsel %vm24, %v3346, 0
  %v3353 = vsel %vm24, %v3347, 0
  %3355 = vmatpush.msra.mxu0 0.0
  %3356 = vmatpush.msra.mxu0 0.0
  %3357 = vmatpush.msra.mxu0 0.0
  %3358 = vmatpush.msra.mxu0 0.0
  %3359 = vmatpush.msra.mxu0 0.0
  %3360 = vmatpush.msra.mxu0 0.0
  %3361 = vmatpush.msra.mxu0 0.0
  %3362 = vmatpush.msra.mxu0 0.0
  %3363 = vmatpush.msra.mxu0 0.0
  %3364 = vmatpush.msra.mxu0 0.0
  %3365 = vmatpush.msra.mxu0 0.0
  %3366 = vmatpush.msra.mxu0 0.0
  %3367 = vmatpush.msra.mxu0 0.0
  %3368 = vmatpush.msra.mxu0 0.0
  %3369 = vmatpush.msra.mxu0 0.0
  %3370 = vmatpush.msra.mxu0 %v3351
  %3371 = vmatmul.f32.gmra.mxu0 %v3349
  %v3372 = vpop.f32.mrf.mxu0
  %v3373 = vadd.f32 0.0, %v3372
  %3374 = vdwg.mxu0
  %3375 = vmatpush.msra.mxu0 0.0
  %3376 = vmatpush.msra.mxu0 0.0
  %3377 = vmatpush.msra.mxu0 0.0
  %3378 = vmatpush.msra.mxu0 0.0
  %3379 = vmatpush.msra.mxu0 0.0
  %3380 = vmatpush.msra.mxu0 0.0
  %3381 = vmatpush.msra.mxu0 0.0
  %3382 = vmatpush.msra.mxu0 0.0
  %3383 = vmatpush.msra.mxu0 0.0
  %3384 = vmatpush.msra.mxu0 0.0
  %3385 = vmatpush.msra.mxu0 0.0
  %3386 = vmatpush.msra.mxu0 0.0
  %3387 = vmatpush.msra.mxu0 0.0
  %3388 = vmatpush.msra.mxu0 0.0
  %3389 = vmatpush.msra.mxu0 0.0
  %3390 = vmatpush.msra.mxu0 %v3353
  %3391 = vmatmul.f32.gmra.mxu0 %v3349
  %v3392 = vpop.f32.mrf.mxu0
  %v3393 = vadd.f32 0.0, %v3392
  %3394 = vdwg.mxu0
  %s3395 = scalar_lea.vmem %s2, 100
  %v3396 = vld [vmem:[%s3395] ss:$8 sm:$0x3]
  %v3398 = vperm.slane %v3396, 0
  %v3399 = vperm.slane %v3396, 1
  %v3402 = vmul.f32 %v3373, %v3398
  %v3403 = vmul.f32 %v3393, %v3399
  %s3404 = scalar_lea.vmem %s3, 832
  %3405 = vst [vmem:[%s3404] sm:$0x3f] %v3402
  %3406 = vst [vmem:[%s3404 + $0x8] sm:$0x3f] %v3403
  %s3407 = scalar_lea.vmem %s0, 424
  %v3408 = vld [vmem:[%s3407] sm:$0x3f]
  %3409 = vst [vmem:[#allocation1] ss:$2 sm:$0xff] %v14
  %v3410 = vld.sshfl [vmem:[#allocation1] sm:$0xff pattern:$0x75316420]
  %v3411 = vld.sshfl [vmem:[#allocation1 + $0x8] sm:$0xff pattern:$0x75316420]
  %v3413 = vsel %vm20, %v3408, 0
  %v3415 = vsel %vm24, %v3410, 0
  %v3417 = vsel %vm24, %v3411, 0
  %3419 = vmatpush.msra.mxu0 0.0
  %3420 = vmatpush.msra.mxu0 0.0
  %3421 = vmatpush.msra.mxu0 0.0
  %3422 = vmatpush.msra.mxu0 0.0
  %3423 = vmatpush.msra.mxu0 0.0
  %3424 = vmatpush.msra.mxu0 0.0
  %3425 = vmatpush.msra.mxu0 0.0
  %3426 = vmatpush.msra.mxu0 0.0
  %3427 = vmatpush.msra.mxu0 0.0
  %3428 = vmatpush.msra.mxu0 0.0
  %3429 = vmatpush.msra.mxu0 0.0
  %3430 = vmatpush.msra.mxu0 0.0
  %3431 = vmatpush.msra.mxu0 0.0
  %3432 = vmatpush.msra.mxu0 0.0
  %3433 = vmatpush.msra.mxu0 0.0
  %3434 = vmatpush.msra.mxu0 %v3415
  %3435 = vmatmul.f32.gmra.mxu0 %v3413
  %v3436 = vpop.f32.mrf.mxu0
  %v3437 = vadd.f32 0.0, %v3436
  %3438 = vdwg.mxu0
  %3439 = vmatpush.msra.mxu0 0.0
  %3440 = vmatpush.msra.mxu0 0.0
  %3441 = vmatpush.msra.mxu0 0.0
  %3442 = vmatpush.msra.mxu0 0.0
  %3443 = vmatpush.msra.mxu0 0.0
  %3444 = vmatpush.msra.mxu0 0.0
  %3445 = vmatpush.msra.mxu0 0.0
  %3446 = vmatpush.msra.mxu0 0.0
  %3447 = vmatpush.msra.mxu0 0.0
  %3448 = vmatpush.msra.mxu0 0.0
  %3449 = vmatpush.msra.mxu0 0.0
  %3450 = vmatpush.msra.mxu0 0.0
  %3451 = vmatpush.msra.mxu0 0.0
  %3452 = vmatpush.msra.mxu0 0.0
  %3453 = vmatpush.msra.mxu0 0.0
  %3454 = vmatpush.msra.mxu0 %v3417
  %3455 = vmatmul.f32.gmra.mxu0 %v3413
  %v3456 = vpop.f32.mrf.mxu0
  %v3457 = vadd.f32 0.0, %v3456
  %3458 = vdwg.mxu0
  %s3459 = scalar_lea.vmem %s2, 101
  %v3460 = vld [vmem:[%s3459] ss:$8 sm:$0x3]
  %v3462 = vperm.slane %v3460, 0
  %v3463 = vperm.slane %v3460, 1
  %v3466 = vmul.f32 %v3437, %v3462
  %v3467 = vmul.f32 %v3457, %v3463
  %s3468 = scalar_lea.vmem %s3, 848
  %3469 = vst [vmem:[%s3468] sm:$0x3f] %v3466
  %3470 = vst [vmem:[%s3468 + $0x8] sm:$0x3f] %v3467
  %s3471 = scalar_lea.vmem %s0, 432
  %v3472 = vld [vmem:[%s3471] sm:$0x3f]
  %3473 = vst [vmem:[#allocation1] ss:$2 sm:$0xff] %v14
  %v3474 = vld.sshfl [vmem:[#allocation1] sm:$0xff pattern:$0x75316420]
  %v3475 = vld.sshfl [vmem:[#allocation1 + $0x8] sm:$0xff pattern:$0x75316420]
  %v3477 = vsel %vm20, %v3472, 0
  %v3479 = vsel %vm24, %v3474, 0
  %v3481 = vsel %vm24, %v3475, 0
  %3483 = vmatpush.msra.mxu0 0.0
  %3484 = vmatpush.msra.mxu0 0.0
  %3485 = vmatpush.msra.mxu0 0.0
  %3486 = vmatpush.msra.mxu0 0.0
  %3487 = vmatpush.msra.mxu0 0.0
  %3488 = vmatpush.msra.mxu0 0.0
  %3489 = vmatpush.msra.mxu0 0.0
  %3490 = vmatpush.msra.mxu0 0.0
  %3491 = vmatpush.msra.mxu0 0.0
  %3492 = vmatpush.msra.mxu0 0.0
  %3493 = vmatpush.msra.mxu0 0.0
  %3494 = vmatpush.msra.mxu0 0.0
  %3495 = vmatpush.msra.mxu0 0.0
  %3496 = vmatpush.msra.mxu0 0.0
  %3497 = vmatpush.msra.mxu0 0.0
  %3498 = vmatpush.msra.mxu0 %v3479
  %3499 = vmatmul.f32.gmra.mxu0 %v3477
  %v3500 = vpop.f32.mrf.mxu0
  %v3501 = vadd.f32 0.0, %v3500
  %3502 = vdwg.mxu0
  %3503 = vmatpush.msra.mxu0 0.0
  %3504 = vmatpush.msra.mxu0 0.0
  %3505 = vmatpush.msra.mxu0 0.0
  %3506 = vmatpush.msra.mxu0 0.0
  %3507 = vmatpush.msra.mxu0 0.0
  %3508 = vmatpush.msra.mxu0 0.0
  %3509 = vmatpush.msra.mxu0 0.0
  %3510 = vmatpush.msra.mxu0 0.0
  %3511 = vmatpush.msra.mxu0 0.0
  %3512 = vmatpush.msra.mxu0 0.0
  %3513 = vmatpush.msra.mxu0 0.0
  %3514 = vmatpush.msra.mxu0 0.0
  %3515 = vmatpush.msra.mxu0 0.0
  %3516 = vmatpush.msra.mxu0 0.0
  %3517 = vmatpush.msra.mxu0 0.0
  %3518 = vmatpush.msra.mxu0 %v3481
  %3519 = vmatmul.f32.gmra.mxu0 %v3477
  %v3520 = vpop.f32.mrf.mxu0
  %v3521 = vadd.f32 0.0, %v3520
  %3522 = vdwg.mxu0
  %s3523 = scalar_lea.vmem %s2, 102
  %v3524 = vld [vmem:[%s3523] ss:$8 sm:$0x3]
  %v3526 = vperm.slane %v3524, 0
  %v3527 = vperm.slane %v3524, 1
  %v3530 = vmul.f32 %v3501, %v3526
  %v3531 = vmul.f32 %v3521, %v3527
  %s3532 = scalar_lea.vmem %s3, 864
  %3533 = vst [vmem:[%s3532] sm:$0x3f] %v3530
  %3534 = vst [vmem:[%s3532 + $0x8] sm:$0x3f] %v3531
  %s3535 = scalar_lea.vmem %s0, 440
  %v3536 = vld [vmem:[%s3535] sm:$0x3f]
  %3537 = vst [vmem:[#allocation1] ss:$2 sm:$0xff] %v14
  %v3538 = vld.sshfl [vmem:[#allocation1] sm:$0xff pattern:$0x75316420]
  %v3539 = vld.sshfl [vmem:[#allocation1 + $0x8] sm:$0xff pattern:$0x75316420]
  %v3541 = vsel %vm20, %v3536, 0
  %v3543 = vsel %vm24, %v3538, 0
  %v3545 = vsel %vm24, %v3539, 0
  %3547 = vmatpush.msra.mxu0 0.0
  %3548 = vmatpush.msra.mxu0 0.0
  %3549 = vmatpush.msra.mxu0 0.0
  %3550 = vmatpush.msra.mxu0 0.0
  %3551 = vmatpush.msra.mxu0 0.0
  %3552 = vmatpush.msra.mxu0 0.0
  %3553 = vmatpush.msra.mxu0 0.0
  %3554 = vmatpush.msra.mxu0 0.0
  %3555 = vmatpush.msra.mxu0 0.0
  %3556 = vmatpush.msra.mxu0 0.0
  %3557 = vmatpush.msra.mxu0 0.0
  %3558 = vmatpush.msra.mxu0 0.0
  %3559 = vmatpush.msra.mxu0 0.0
  %3560 = vmatpush.msra.mxu0 0.0
  %3561 = vmatpush.msra.mxu0 0.0
  %3562 = vmatpush.msra.mxu0 %v3543
  %3563 = vmatmul.f32.gmra.mxu0 %v3541
  %v3564 = vpop.f32.mrf.mxu0
  %v3565 = vadd.f32 0.0, %v3564
  %3566 = vdwg.mxu0
  %3567 = vmatpush.msra.mxu0 0.0
  %3568 = vmatpush.msra.mxu0 0.0
  %3569 = vmatpush.msra.mxu0 0.0
  %3570 = vmatpush.msra.mxu0 0.0
  %3571 = vmatpush.msra.mxu0 0.0
  %3572 = vmatpush.msra.mxu0 0.0
  %3573 = vmatpush.msra.mxu0 0.0
  %3574 = vmatpush.msra.mxu0 0.0
  %3575 = vmatpush.msra.mxu0 0.0
  %3576 = vmatpush.msra.mxu0 0.0
  %3577 = vmatpush.msra.mxu0 0.0
  %3578 = vmatpush.msra.mxu0 0.0
  %3579 = vmatpush.msra.mxu0 0.0
  %3580 = vmatpush.msra.mxu0 0.0
  %3581 = vmatpush.msra.mxu0 0.0
  %3582 = vmatpush.msra.mxu0 %v3545
  %3583 = vmatmul.f32.gmra.mxu0 %v3541
  %v3584 = vpop.f32.mrf.mxu0
  %v3585 = vadd.f32 0.0, %v3584
  %3586 = vdwg.mxu0
  %s3587 = scalar_lea.vmem %s2, 103
  %v3588 = vld [vmem:[%s3587] ss:$8 sm:$0x3]
  %v3590 = vperm.slane %v3588, 0
  %v3591 = vperm.slane %v3588, 1
  %v3594 = vmul.f32 %v3565, %v3590
  %v3595 = vmul.f32 %v3585, %v3591
  %s3596 = scalar_lea.vmem %s3, 880
  %3597 = vst [vmem:[%s3596] sm:$0x3f] %v3594
  %3598 = vst [vmem:[%s3596 + $0x8] sm:$0x3f] %v3595
  %s3599 = scalar_lea.vmem %s0, 448
  %v3600 = vld [vmem:[%s3599] sm:$0x3f]
  %3601 = vst [vmem:[#allocation1] ss:$2 sm:$0xff] %v14
  %v3602 = vld.sshfl [vmem:[#allocation1] sm:$0xff pattern:$0x75316420]
  %v3603 = vld.sshfl [vmem:[#allocation1 + $0x8] sm:$0xff pattern:$0x75316420]
  %v3605 = vsel %vm20, %v3600, 0
  %v3607 = vsel %vm24, %v3602, 0
  %v3609 = vsel %vm24, %v3603, 0
  %3611 = vmatpush.msra.mxu0 0.0
  %3612 = vmatpush.msra.mxu0 0.0
  %3613 = vmatpush.msra.mxu0 0.0
  %3614 = vmatpush.msra.mxu0 0.0
  %3615 = vmatpush.msra.mxu0 0.0
  %3616 = vmatpush.msra.mxu0 0.0
  %3617 = vmatpush.msra.mxu0 0.0
  %3618 = vmatpush.msra.mxu0 0.0
  %3619 = vmatpush.msra.mxu0 0.0
  %3620 = vmatpush.msra.mxu0 0.0
  %3621 = vmatpush.msra.mxu0 0.0
  %3622 = vmatpush.msra.mxu0 0.0
  %3623 = vmatpush.msra.mxu0 0.0
  %3624 = vmatpush.msra.mxu0 0.0
  %3625 = vmatpush.msra.mxu0 0.0
  %3626 = vmatpush.msra.mxu0 %v3607
  %3627 = vmatmul.f32.gmra.mxu0 %v3605
  %v3628 = vpop.f32.mrf.mxu0
  %v3629 = vadd.f32 0.0, %v3628
  %3630 = vdwg.mxu0
  %3631 = vmatpush.msra.mxu0 0.0
  %3632 = vmatpush.msra.mxu0 0.0
  %3633 = vmatpush.msra.mxu0 0.0
  %3634 = vmatpush.msra.mxu0 0.0
  %3635 = vmatpush.msra.mxu0 0.0
  %3636 = vmatpush.msra.mxu0 0.0
  %3637 = vmatpush.msra.mxu0 0.0
  %3638 = vmatpush.msra.mxu0 0.0
  %3639 = vmatpush.msra.mxu0 0.0
  %3640 = vmatpush.msra.mxu0 0.0
  %3641 = vmatpush.msra.mxu0 0.0
  %3642 = vmatpush.msra.mxu0 0.0
  %3643 = vmatpush.msra.mxu0 0.0
  %3644 = vmatpush.msra.mxu0 0.0
  %3645 = vmatpush.msra.mxu0 0.0
  %3646 = vmatpush.msra.mxu0 %v3609
  %3647 = vmatmul.f32.gmra.mxu0 %v3605
  %v3648 = vpop.f32.mrf.mxu0
  %v3649 = vadd.f32 0.0, %v3648
  %3650 = vdwg.mxu0
  %s3651 = scalar_lea.vmem %s2, 112
  %v3652 = vld [vmem:[%s3651] ss:$8 sm:$0x3]
  %v3654 = vperm.slane %v3652, 0
  %v3655 = vperm.slane %v3652, 1
  %v3658 = vmul.f32 %v3629, %v3654
  %v3659 = vmul.f32 %v3649, %v3655
  %s3660 = scalar_lea.vmem %s3, 896
  %3661 = vst [vmem:[%s3660] sm:$0x3f] %v3658
  %3662 = vst [vmem:[%s3660 + $0x8] sm:$0x3f] %v3659
  %s3663 = scalar_lea.vmem %s0, 456
  %v3664 = vld [vmem:[%s3663] sm:$0x3f]
  %3665 = vst [vmem:[#allocation1] ss:$2 sm:$0xff] %v14
  %v3666 = vld.sshfl [vmem:[#allocation1] sm:$0xff pattern:$0x75316420]
  %v3667 = vld.sshfl [vmem:[#allocation1 + $0x8] sm:$0xff pattern:$0x75316420]
  %v3669 = vsel %vm20, %v3664, 0
  %v3671 = vsel %vm24, %v3666, 0
  %v3673 = vsel %vm24, %v3667, 0
  %3675 = vmatpush.msra.mxu0 0.0
  %3676 = vmatpush.msra.mxu0 0.0
  %3677 = vmatpush.msra.mxu0 0.0
  %3678 = vmatpush.msra.mxu0 0.0
  %3679 = vmatpush.msra.mxu0 0.0
  %3680 = vmatpush.msra.mxu0 0.0
  %3681 = vmatpush.msra.mxu0 0.0
  %3682 = vmatpush.msra.mxu0 0.0
  %3683 = vmatpush.msra.mxu0 0.0
  %3684 = vmatpush.msra.mxu0 0.0
  %3685 = vmatpush.msra.mxu0 0.0
  %3686 = vmatpush.msra.mxu0 0.0
  %3687 = vmatpush.msra.mxu0 0.0
  %3688 = vmatpush.msra.mxu0 0.0
  %3689 = vmatpush.msra.mxu0 0.0
  %3690 = vmatpush.msra.mxu0 %v3671
  %3691 = vmatmul.f32.gmra.mxu0 %v3669
  %v3692 = vpop.f32.mrf.mxu0
  %v3693 = vadd.f32 0.0, %v3692
  %3694 = vdwg.mxu0
  %3695 = vmatpush.msra.mxu0 0.0
  %3696 = vmatpush.msra.mxu0 0.0
  %3697 = vmatpush.msra.mxu0 0.0
  %3698 = vmatpush.msra.mxu0 0.0
  %3699 = vmatpush.msra.mxu0 0.0
  %3700 = vmatpush.msra.mxu0 0.0
  %3701 = vmatpush.msra.mxu0 0.0
  %3702 = vmatpush.msra.mxu0 0.0
  %3703 = vmatpush.msra.mxu0 0.0
  %3704 = vmatpush.msra.mxu0 0.0
  %3705 = vmatpush.msra.mxu0 0.0
  %3706 = vmatpush.msra.mxu0 0.0
  %3707 = vmatpush.msra.mxu0 0.0
  %3708 = vmatpush.msra.mxu0 0.0
  %3709 = vmatpush.msra.mxu0 0.0
  %3710 = vmatpush.msra.mxu0 %v3673
  %3711 = vmatmul.f32.gmra.mxu0 %v3669
  %v3712 = vpop.f32.mrf.mxu0
  %v3713 = vadd.f32 0.0, %v3712
  %3714 = vdwg.mxu0
  %s3715 = scalar_lea.vmem %s2, 113
  %v3716 = vld [vmem:[%s3715] ss:$8 sm:$0x3]
  %v3718 = vperm.slane %v3716, 0
  %v3719 = vperm.slane %v3716, 1
  %v3722 = vmul.f32 %v3693, %v3718
  %v3723 = vmul.f32 %v3713, %v3719
  %s3724 = scalar_lea.vmem %s3, 912
  %3725 = vst [vmem:[%s3724] sm:$0x3f] %v3722
  %3726 = vst [vmem:[%s3724 + $0x8] sm:$0x3f] %v3723
  %s3727 = scalar_lea.vmem %s0, 464
  %v3728 = vld [vmem:[%s3727] sm:$0x3f]
  %3729 = vst [vmem:[#allocation1] ss:$2 sm:$0xff] %v14
  %v3730 = vld.sshfl [vmem:[#allocation1] sm:$0xff pattern:$0x75316420]
  %v3731 = vld.sshfl [vmem:[#allocation1 + $0x8] sm:$0xff pattern:$0x75316420]
  %v3733 = vsel %vm20, %v3728, 0
  %v3735 = vsel %vm24, %v3730, 0
  %v3737 = vsel %vm24, %v3731, 0
  %3739 = vmatpush.msra.mxu0 0.0
  %3740 = vmatpush.msra.mxu0 0.0
  %3741 = vmatpush.msra.mxu0 0.0
  %3742 = vmatpush.msra.mxu0 0.0
  %3743 = vmatpush.msra.mxu0 0.0
  %3744 = vmatpush.msra.mxu0 0.0
  %3745 = vmatpush.msra.mxu0 0.0
  %3746 = vmatpush.msra.mxu0 0.0
  %3747 = vmatpush.msra.mxu0 0.0
  %3748 = vmatpush.msra.mxu0 0.0
  %3749 = vmatpush.msra.mxu0 0.0
  %3750 = vmatpush.msra.mxu0 0.0
  %3751 = vmatpush.msra.mxu0 0.0
  %3752 = vmatpush.msra.mxu0 0.0
  %3753 = vmatpush.msra.mxu0 0.0
  %3754 = vmatpush.msra.mxu0 %v3735
  %3755 = vmatmul.f32.gmra.mxu0 %v3733
  %v3756 = vpop.f32.mrf.mxu0
  %v3757 = vadd.f32 0.0, %v3756
  %3758 = vdwg.mxu0
  %3759 = vmatpush.msra.mxu0 0.0
  %3760 = vmatpush.msra.mxu0 0.0
  %3761 = vmatpush.msra.mxu0 0.0
  %3762 = vmatpush.msra.mxu0 0.0
  %3763 = vmatpush.msra.mxu0 0.0
  %3764 = vmatpush.msra.mxu0 0.0
  %3765 = vmatpush.msra.mxu0 0.0
  %3766 = vmatpush.msra.mxu0 0.0
  %3767 = vmatpush.msra.mxu0 0.0
  %3768 = vmatpush.msra.mxu0 0.0
  %3769 = vmatpush.msra.mxu0 0.0
  %3770 = vmatpush.msra.mxu0 0.0
  %3771 = vmatpush.msra.mxu0 0.0
  %3772 = vmatpush.msra.mxu0 0.0
  %3773 = vmatpush.msra.mxu0 0.0
  %3774 = vmatpush.msra.mxu0 %v3737
  %3775 = vmatmul.f32.gmra.mxu0 %v3733
  %v3776 = vpop.f32.mrf.mxu0
  %v3777 = vadd.f32 0.0, %v3776
  %3778 = vdwg.mxu0
  %s3779 = scalar_lea.vmem %s2, 114
  %v3780 = vld [vmem:[%s3779] ss:$8 sm:$0x3]
  %v3782 = vperm.slane %v3780, 0
  %v3783 = vperm.slane %v3780, 1
  %v3786 = vmul.f32 %v3757, %v3782
  %v3787 = vmul.f32 %v3777, %v3783
  %s3788 = scalar_lea.vmem %s3, 928
  %3789 = vst [vmem:[%s3788] sm:$0x3f] %v3786
  %3790 = vst [vmem:[%s3788 + $0x8] sm:$0x3f] %v3787
  %s3791 = scalar_lea.vmem %s0, 472
  %v3792 = vld [vmem:[%s3791] sm:$0x3f]
  %3793 = vst [vmem:[#allocation1] ss:$2 sm:$0xff] %v14
  %v3794 = vld.sshfl [vmem:[#allocation1] sm:$0xff pattern:$0x75316420]
  %v3795 = vld.sshfl [vmem:[#allocation1 + $0x8] sm:$0xff pattern:$0x75316420]
  %v3797 = vsel %vm20, %v3792, 0
  %v3799 = vsel %vm24, %v3794, 0
  %v3801 = vsel %vm24, %v3795, 0
  %3803 = vmatpush.msra.mxu0 0.0
  %3804 = vmatpush.msra.mxu0 0.0
  %3805 = vmatpush.msra.mxu0 0.0
  %3806 = vmatpush.msra.mxu0 0.0
  %3807 = vmatpush.msra.mxu0 0.0
  %3808 = vmatpush.msra.mxu0 0.0
  %3809 = vmatpush.msra.mxu0 0.0
  %3810 = vmatpush.msra.mxu0 0.0
  %3811 = vmatpush.msra.mxu0 0.0
  %3812 = vmatpush.msra.mxu0 0.0
  %3813 = vmatpush.msra.mxu0 0.0
  %3814 = vmatpush.msra.mxu0 0.0
  %3815 = vmatpush.msra.mxu0 0.0
  %3816 = vmatpush.msra.mxu0 0.0
  %3817 = vmatpush.msra.mxu0 0.0
  %3818 = vmatpush.msra.mxu0 %v3799
  %3819 = vmatmul.f32.gmra.mxu0 %v3797
  %v3820 = vpop.f32.mrf.mxu0
  %v3821 = vadd.f32 0.0, %v3820
  %3822 = vdwg.mxu0
  %3823 = vmatpush.msra.mxu0 0.0
  %3824 = vmatpush.msra.mxu0 0.0
  %3825 = vmatpush.msra.mxu0 0.0
  %3826 = vmatpush.msra.mxu0 0.0
  %3827 = vmatpush.msra.mxu0 0.0
  %3828 = vmatpush.msra.mxu0 0.0
  %3829 = vmatpush.msra.mxu0 0.0
  %3830 = vmatpush.msra.mxu0 0.0
  %3831 = vmatpush.msra.mxu0 0.0
  %3832 = vmatpush.msra.mxu0 0.0
  %3833 = vmatpush.msra.mxu0 0.0
  %3834 = vmatpush.msra.mxu0 0.0
  %3835 = vmatpush.msra.mxu0 0.0
  %3836 = vmatpush.msra.mxu0 0.0
  %3837 = vmatpush.msra.mxu0 0.0
  %3838 = vmatpush.msra.mxu0 %v3801
  %3839 = vmatmul.f32.gmra.mxu0 %v3797
  %v3840 = vpop.f32.mrf.mxu0
  %v3841 = vadd.f32 0.0, %v3840
  %3842 = vdwg.mxu0
  %s3843 = scalar_lea.vmem %s2, 115
  %v3844 = vld [vmem:[%s3843] ss:$8 sm:$0x3]
  %v3846 = vperm.slane %v3844, 0
  %v3847 = vperm.slane %v3844, 1
  %v3850 = vmul.f32 %v3821, %v3846
  %v3851 = vmul.f32 %v3841, %v3847
  %s3852 = scalar_lea.vmem %s3, 944
  %3853 = vst [vmem:[%s3852] sm:$0x3f] %v3850
  %3854 = vst [vmem:[%s3852 + $0x8] sm:$0x3f] %v3851
  %s3855 = scalar_lea.vmem %s0, 480
  %v3856 = vld [vmem:[%s3855] sm:$0x3f]
  %3857 = vst [vmem:[#allocation1] ss:$2 sm:$0xff] %v14
  %v3858 = vld.sshfl [vmem:[#allocation1] sm:$0xff pattern:$0x75316420]
  %v3859 = vld.sshfl [vmem:[#allocation1 + $0x8] sm:$0xff pattern:$0x75316420]
  %v3861 = vsel %vm20, %v3856, 0
  %v3863 = vsel %vm24, %v3858, 0
  %v3865 = vsel %vm24, %v3859, 0
  %3867 = vmatpush.msra.mxu0 0.0
  %3868 = vmatpush.msra.mxu0 0.0
  %3869 = vmatpush.msra.mxu0 0.0
  %3870 = vmatpush.msra.mxu0 0.0
  %3871 = vmatpush.msra.mxu0 0.0
  %3872 = vmatpush.msra.mxu0 0.0
  %3873 = vmatpush.msra.mxu0 0.0
  %3874 = vmatpush.msra.mxu0 0.0
  %3875 = vmatpush.msra.mxu0 0.0
  %3876 = vmatpush.msra.mxu0 0.0
  %3877 = vmatpush.msra.mxu0 0.0
  %3878 = vmatpush.msra.mxu0 0.0
  %3879 = vmatpush.msra.mxu0 0.0
  %3880 = vmatpush.msra.mxu0 0.0
  %3881 = vmatpush.msra.mxu0 0.0
  %3882 = vmatpush.msra.mxu0 %v3863
  %3883 = vmatmul.f32.gmra.mxu0 %v3861
  %v3884 = vpop.f32.mrf.mxu0
  %v3885 = vadd.f32 0.0, %v3884
  %3886 = vdwg.mxu0
  %3887 = vmatpush.msra.mxu0 0.0
  %3888 = vmatpush.msra.mxu0 0.0
  %3889 = vmatpush.msra.mxu0 0.0
  %3890 = vmatpush.msra.mxu0 0.0
  %3891 = vmatpush.msra.mxu0 0.0
  %3892 = vmatpush.msra.mxu0 0.0
  %3893 = vmatpush.msra.mxu0 0.0
  %3894 = vmatpush.msra.mxu0 0.0
  %3895 = vmatpush.msra.mxu0 0.0
  %3896 = vmatpush.msra.mxu0 0.0
  %3897 = vmatpush.msra.mxu0 0.0
  %3898 = vmatpush.msra.mxu0 0.0
  %3899 = vmatpush.msra.mxu0 0.0
  %3900 = vmatpush.msra.mxu0 0.0
  %3901 = vmatpush.msra.mxu0 0.0
  %3902 = vmatpush.msra.mxu0 %v3865
  %3903 = vmatmul.f32.gmra.mxu0 %v3861
  %v3904 = vpop.f32.mrf.mxu0
  %v3905 = vadd.f32 0.0, %v3904
  %3906 = vdwg.mxu0
  %s3907 = scalar_lea.vmem %s2, 116
  %v3908 = vld [vmem:[%s3907] ss:$8 sm:$0x3]
  %v3910 = vperm.slane %v3908, 0
  %v3911 = vperm.slane %v3908, 1
  %v3914 = vmul.f32 %v3885, %v3910
  %v3915 = vmul.f32 %v3905, %v3911
  %s3916 = scalar_lea.vmem %s3, 960
  %3917 = vst [vmem:[%s3916] sm:$0x3f] %v3914
  %3918 = vst [vmem:[%s3916 + $0x8] sm:$0x3f] %v3915
  %s3919 = scalar_lea.vmem %s0, 488
  %v3920 = vld [vmem:[%s3919] sm:$0x3f]
  %3921 = vst [vmem:[#allocation1] ss:$2 sm:$0xff] %v14
  %v3922 = vld.sshfl [vmem:[#allocation1] sm:$0xff pattern:$0x75316420]
  %v3923 = vld.sshfl [vmem:[#allocation1 + $0x8] sm:$0xff pattern:$0x75316420]
  %v3925 = vsel %vm20, %v3920, 0
  %v3927 = vsel %vm24, %v3922, 0
  %v3929 = vsel %vm24, %v3923, 0
  %3931 = vmatpush.msra.mxu0 0.0
  %3932 = vmatpush.msra.mxu0 0.0
  %3933 = vmatpush.msra.mxu0 0.0
  %3934 = vmatpush.msra.mxu0 0.0
  %3935 = vmatpush.msra.mxu0 0.0
  %3936 = vmatpush.msra.mxu0 0.0
  %3937 = vmatpush.msra.mxu0 0.0
  %3938 = vmatpush.msra.mxu0 0.0
  %3939 = vmatpush.msra.mxu0 0.0
  %3940 = vmatpush.msra.mxu0 0.0
  %3941 = vmatpush.msra.mxu0 0.0
  %3942 = vmatpush.msra.mxu0 0.0
  %3943 = vmatpush.msra.mxu0 0.0
  %3944 = vmatpush.msra.mxu0 0.0
  %3945 = vmatpush.msra.mxu0 0.0
  %3946 = vmatpush.msra.mxu0 %v3927
  %3947 = vmatmul.f32.gmra.mxu0 %v3925
  %v3948 = vpop.f32.mrf.mxu0
  %v3949 = vadd.f32 0.0, %v3948
  %3950 = vdwg.mxu0
  %3951 = vmatpush.msra.mxu0 0.0
  %3952 = vmatpush.msra.mxu0 0.0
  %3953 = vmatpush.msra.mxu0 0.0
  %3954 = vmatpush.msra.mxu0 0.0
  %3955 = vmatpush.msra.mxu0 0.0
  %3956 = vmatpush.msra.mxu0 0.0
  %3957 = vmatpush.msra.mxu0 0.0
  %3958 = vmatpush.msra.mxu0 0.0
  %3959 = vmatpush.msra.mxu0 0.0
  %3960 = vmatpush.msra.mxu0 0.0
  %3961 = vmatpush.msra.mxu0 0.0
  %3962 = vmatpush.msra.mxu0 0.0
  %3963 = vmatpush.msra.mxu0 0.0
  %3964 = vmatpush.msra.mxu0 0.0
  %3965 = vmatpush.msra.mxu0 0.0
  %3966 = vmatpush.msra.mxu0 %v3929
  %3967 = vmatmul.f32.gmra.mxu0 %v3925
  %v3968 = vpop.f32.mrf.mxu0
  %v3969 = vadd.f32 0.0, %v3968
  %3970 = vdwg.mxu0
  %s3971 = scalar_lea.vmem %s2, 117
  %v3972 = vld [vmem:[%s3971] ss:$8 sm:$0x3]
  %v3974 = vperm.slane %v3972, 0
  %v3975 = vperm.slane %v3972, 1
  %v3978 = vmul.f32 %v3949, %v3974
  %v3979 = vmul.f32 %v3969, %v3975
  %s3980 = scalar_lea.vmem %s3, 976
  %3981 = vst [vmem:[%s3980] sm:$0x3f] %v3978
  %3982 = vst [vmem:[%s3980 + $0x8] sm:$0x3f] %v3979
  %s3983 = scalar_lea.vmem %s0, 496
  %v3984 = vld [vmem:[%s3983] sm:$0x3f]
  %3985 = vst [vmem:[#allocation1] ss:$2 sm:$0xff] %v14
  %v3986 = vld.sshfl [vmem:[#allocation1] sm:$0xff pattern:$0x75316420]
  %v3987 = vld.sshfl [vmem:[#allocation1 + $0x8] sm:$0xff pattern:$0x75316420]
  %v3989 = vsel %vm20, %v3984, 0
  %v3991 = vsel %vm24, %v3986, 0
  %v3993 = vsel %vm24, %v3987, 0
  %3995 = vmatpush.msra.mxu0 0.0
  %3996 = vmatpush.msra.mxu0 0.0
  %3997 = vmatpush.msra.mxu0 0.0
  %3998 = vmatpush.msra.mxu0 0.0
  %3999 = vmatpush.msra.mxu0 0.0
  %4000 = vmatpush.msra.mxu0 0.0
  %4001 = vmatpush.msra.mxu0 0.0
  %4002 = vmatpush.msra.mxu0 0.0
  %4003 = vmatpush.msra.mxu0 0.0
  %4004 = vmatpush.msra.mxu0 0.0
  %4005 = vmatpush.msra.mxu0 0.0
  %4006 = vmatpush.msra.mxu0 0.0
  %4007 = vmatpush.msra.mxu0 0.0
  %4008 = vmatpush.msra.mxu0 0.0
  %4009 = vmatpush.msra.mxu0 0.0
  %4010 = vmatpush.msra.mxu0 %v3991
  %4011 = vmatmul.f32.gmra.mxu0 %v3989
  %v4012 = vpop.f32.mrf.mxu0
  %v4013 = vadd.f32 0.0, %v4012
  %4014 = vdwg.mxu0
  %4015 = vmatpush.msra.mxu0 0.0
  %4016 = vmatpush.msra.mxu0 0.0
  %4017 = vmatpush.msra.mxu0 0.0
  %4018 = vmatpush.msra.mxu0 0.0
  %4019 = vmatpush.msra.mxu0 0.0
  %4020 = vmatpush.msra.mxu0 0.0
  %4021 = vmatpush.msra.mxu0 0.0
  %4022 = vmatpush.msra.mxu0 0.0
  %4023 = vmatpush.msra.mxu0 0.0
  %4024 = vmatpush.msra.mxu0 0.0
  %4025 = vmatpush.msra.mxu0 0.0
  %4026 = vmatpush.msra.mxu0 0.0
  %4027 = vmatpush.msra.mxu0 0.0
  %4028 = vmatpush.msra.mxu0 0.0
  %4029 = vmatpush.msra.mxu0 0.0
  %4030 = vmatpush.msra.mxu0 %v3993
  %4031 = vmatmul.f32.gmra.mxu0 %v3989
  %v4032 = vpop.f32.mrf.mxu0
  %v4033 = vadd.f32 0.0, %v4032
  %4034 = vdwg.mxu0
  %s4035 = scalar_lea.vmem %s2, 118
  %v4036 = vld [vmem:[%s4035] ss:$8 sm:$0x3]
  %v4038 = vperm.slane %v4036, 0
  %v4039 = vperm.slane %v4036, 1
  %v4042 = vmul.f32 %v4013, %v4038
  %v4043 = vmul.f32 %v4033, %v4039
  %s4044 = scalar_lea.vmem %s3, 992
  %4045 = vst [vmem:[%s4044] sm:$0x3f] %v4042
  %4046 = vst [vmem:[%s4044 + $0x8] sm:$0x3f] %v4043
  %s4047 = scalar_lea.vmem %s0, 504
  %v4048 = vld [vmem:[%s4047] sm:$0x3f]
  %4049 = vst [vmem:[#allocation1] ss:$2 sm:$0xff] %v14
  %v4050 = vld.sshfl [vmem:[#allocation1] sm:$0xff pattern:$0x75316420]
  %v4051 = vld.sshfl [vmem:[#allocation1 + $0x8] sm:$0xff pattern:$0x75316420]
  %v4053 = vsel %vm20, %v4048, 0
  %v4055 = vsel %vm24, %v4050, 0
  %v4057 = vsel %vm24, %v4051, 0
  %4059 = vmatpush.msra.mxu0 0.0
  %4060 = vmatpush.msra.mxu0 0.0
  %4061 = vmatpush.msra.mxu0 0.0
  %4062 = vmatpush.msra.mxu0 0.0
  %4063 = vmatpush.msra.mxu0 0.0
  %4064 = vmatpush.msra.mxu0 0.0
  %4065 = vmatpush.msra.mxu0 0.0
  %4066 = vmatpush.msra.mxu0 0.0
  %4067 = vmatpush.msra.mxu0 0.0
  %4068 = vmatpush.msra.mxu0 0.0
  %4069 = vmatpush.msra.mxu0 0.0
  %4070 = vmatpush.msra.mxu0 0.0
  %4071 = vmatpush.msra.mxu0 0.0
  %4072 = vmatpush.msra.mxu0 0.0
  %4073 = vmatpush.msra.mxu0 0.0
  %4074 = vmatpush.msra.mxu0 %v4055
  %4075 = vmatmul.f32.gmra.mxu0 %v4053
  %v4076 = vpop.f32.mrf.mxu0
  %v4077 = vadd.f32 0.0, %v4076
  %4078 = vdwg.mxu0
  %4079 = vmatpush.msra.mxu0 0.0
  %4080 = vmatpush.msra.mxu0 0.0
  %4081 = vmatpush.msra.mxu0 0.0
  %4082 = vmatpush.msra.mxu0 0.0
  %4083 = vmatpush.msra.mxu0 0.0
  %4084 = vmatpush.msra.mxu0 0.0
  %4085 = vmatpush.msra.mxu0 0.0
  %4086 = vmatpush.msra.mxu0 0.0
  %4087 = vmatpush.msra.mxu0 0.0
  %4088 = vmatpush.msra.mxu0 0.0
  %4089 = vmatpush.msra.mxu0 0.0
  %4090 = vmatpush.msra.mxu0 0.0
  %4091 = vmatpush.msra.mxu0 0.0
  %4092 = vmatpush.msra.mxu0 0.0
  %4093 = vmatpush.msra.mxu0 0.0
  %4094 = vmatpush.msra.mxu0 %v4057
  %4095 = vmatmul.f32.gmra.mxu0 %v4053
  %v4096 = vpop.f32.mrf.mxu0
  %v4097 = vadd.f32 0.0, %v4096
  %4098 = vdwg.mxu0
  %s4099 = scalar_lea.vmem %s2, 119
  %v4100 = vld [vmem:[%s4099] ss:$8 sm:$0x3]
  %v4102 = vperm.slane %v4100, 0
  %v4103 = vperm.slane %v4100, 1
  %v4106 = vmul.f32 %v4077, %v4102
  %v4107 = vmul.f32 %v4097, %v4103
  %s4108 = scalar_lea.vmem %s3, 1008
  %4109 = vst [vmem:[%s4108] sm:$0x3f] %v4106
  %4110 = vst [vmem:[%s4108 + $0x8] sm:$0x3f] %v4107
  // Predicated region
  $region14: #{_lambda_.3} parent=0 // pred_check
    _
  $region15: #{_lambda_.3} parent=0 // pred_check_branch
    %4112 = sbr.rel (0) target = $region17
  $region16: #{_lambda_.3} parent=0 // pred_region
    _
  $region17: #{_lambda_.3} parent=0 // pred_fallthru
    _
  // Predicated region
  $region18: #{_lambda_.3} parent=0 // pred_check
    _
  $region19: #{_lambda_.3} parent=0 // pred_check_branch
    %4114 = sbr.rel (0) target = $region21
  $region20: #{_lambda_.3} parent=0 // pred_region
    _
  $region21: #{_lambda_.3} parent=0 // pred_fallthru
    _

</llo_original>
